<compile_context>
chip_gen: v7x
topology: tpu7x:2x2x1
jax: 0.10.0
libtpu: 0.0.40
codegen_flags: <defaults>
</compile_context>

<pallas_src>
import numpy as np
import jax
import jax.numpy as jnp
from jax.experimental import pallas as pl
from jax.experimental.pallas import tpu as pltpu

LEAKY_SLOPE = 0.1
CDT = jnp.bfloat16          # MXU compute dtype (f32 accumulation)


def _leaky(x):
    return jnp.where(x >= 0, x, LEAKY_SLOPE * x)


# ConvTranspose2d(k=4, s=2, p=1): output row oy = 2*m + a reads the padded
# input at row offset `ro` with kernel row `ky` (two taps per parity).
_DECONV_TAPS = (((1, 1), (0, 3)),    # output parity 0
                ((2, 0), (1, 2)))    # output parity 1
# est_normal 3x3 conv (pad=1) evaluated directly on the 2x-upsampled signal
# kept as padded parity planes: for output parity a and dy = -1, 0, +1
# (i.e. ky = 0, 1, 2) -> (source plane row-parity, padded row start).
_NORM_TAPS = (((1, 0), (0, 1), (1, 1)),   # output parity 0
              ((0, 1), (1, 1), (0, 2)))   # output parity 1
# 3x3 same-padding conv taps: padded offset == kernel index.
_CONV3_TAPS = tuple((k, k) for k in range(3))


# ------------------------------ fused kernel ---------------------------------
def _regressor_kernel(x_ref, w1_ref, b1_ref, w2_ref, b2_ref, wt_ref, wn_ref,
                      o_ref, pad128_ref, pad64_ref):
    D, H, W, C = x_ref.shape
    Ct = pad64_ref.shape[-1]
    HW = H * W

    # Zero the padded scratch buffers once per grid step; the interiors are
    # fully overwritten below, so only the 1-px zero borders must persist.
    pad128_ref[...] = jnp.zeros(pad128_ref.shape, pad128_ref.dtype)
    pad64_ref[...] = jnp.zeros(pad64_ref.shape, pad64_ref.dtype)

    # avg_pool3d(kernel=[D,1,1]) + squeeze == mean over D (f32).
    xm = jnp.mean(x_ref[...], axis=0)                        # (H, W, C) f32
    pad128_ref[1:H + 1, 1:W + 1, :] = xm

    def patches128(taps_r, taps_c):
        # im2col from the padded 128-channel buffer -> (HW, n_taps*C) bf16.
        cols = []
        for (ro, _) in taps_r:
            for (co, _) in taps_c:
                cols.append(pad128_ref[ro:ro + H, co:co + W, :]
                            .reshape(HW, C).astype(CDT))
        return jnp.concatenate(cols, axis=-1)

    # deconv1 / deconv2: 3x3 conv 128->128, bias + leaky.  One K=9*128 dot each.
    for w_ref, b_ref in ((w1_ref, b1_ref), (w2_ref, b2_ref)):
        p = patches128(_CONV3_TAPS, _CONV3_TAPS)              # (HW, 9C)
        acc = jnp.dot(p, w_ref[...], preferred_element_type=jnp.float32)
        acc = _leaky(acc + b_ref[...])                        # (HW, C) f32
        pad128_ref[1:H + 1, 1:W + 1, :] = acc.reshape(H, W, C)

    # deconv3: ConvTranspose2d(128->64, k=4, s=2, p=1) + leaky.
    # y[2m+a, 2n+b, :] is computed per output parity (a, b) with one K=4*128
    # dot and written straight into padded parity-plane scratch (stays in VMEM).
    for a in range(2):
        for b in range(2):
            p = patches128(_DECONV_TAPS[a], _DECONV_TAPS[b])  # (HW, 4C)
            acc = jnp.dot(p, wt_ref[a, b], preferred_element_type=jnp.float32)
            y = _leaky(acc)                                   # (HW, Ct) f32
            pad64_ref[a, b, 1:H + 1, 1:W + 1, :] = y.reshape(H, W, Ct)

    # est_normal: 3x3 conv 64->3 (no bias) on the 2x-upsampled activation,
    # evaluated per output parity from the padded parity planes, then
    # torch-style L2 normalize over channels.
    for a in range(2):
        for b in range(2):
            cols = []
            for (pr, rs) in _NORM_TAPS[a]:
                for (pc, cs) in _NORM_TAPS[b]:
                    cols.append(pad64_ref[pr, pc, rs:rs + H, cs:cs + W, :]
                                .reshape(HW, Ct).astype(CDT))
            p = jnp.concatenate(cols, axis=-1)                # (HW, 9*Ct)
            v = jnp.dot(p, wn_ref[...], preferred_element_type=jnp.float32)
            n2 = jnp.sum(v * v, axis=-1, keepdims=True)
            # F.normalize(p=2, dim=channel, eps=1e-12): v / max(|v|, 1e-12)
            v = v * jax.lax.rsqrt(jnp.maximum(n2, 1e-24))
            o_ref[a, b] = v.reshape(H, W, 3)


def regressor_pallas(x, kparams):
    w1i, b1, w2i, b2, wt4, wn9 = kparams
    N, D, H, W, C = x.shape
    Ct = wt4.shape[-1]
    sub = pl.pallas_call(
        _regressor_kernel,
        out_shape=jax.ShapeDtypeStruct((N, 2, 2, H, W, 3), jnp.float32),
        grid_spec=pltpu.PrefetchScalarGridSpec(
            num_scalar_prefetch=0,
            grid=(N,),
            in_specs=[
                pl.BlockSpec((None, D, H, W, C), lambda n: (n, 0, 0, 0, 0)),
                pl.BlockSpec((9 * C, C), lambda n: (0, 0)),
                pl.BlockSpec((1, C), lambda n: (0, 0)),
                pl.BlockSpec((9 * C, C), lambda n: (0, 0)),
                pl.BlockSpec((1, C), lambda n: (0, 0)),
                pl.BlockSpec((2, 2, 4 * C, Ct), lambda n: (0, 0, 0, 0)),
                pl.BlockSpec((9 * Ct, 3), lambda n: (0, 0)),
            ],
            out_specs=pl.BlockSpec((None, 2, 2, H, W, 3),
                                   lambda n: (n, 0, 0, 0, 0, 0)),
            scratch_shapes=[
                pltpu.VMEM((H + 2, W + 2, C), jnp.float32),       # padded act
                pltpu.VMEM((2, 2, H + 2, W + 2, Ct), jnp.float32),  # parity planes
            ],
        ),
        compiler_params=pltpu.CompilerParams(
            dimension_semantics=("parallel",)),   # v7x: 2 TCs split the batch
    )(x, w1i, b1, w2i, b2, wt4, wn9)
    # Tiny (N*2H*2W*3 floats) parity interleave done by XLA in the wrapper:
    # out[n, 2m+a, 2q+b, c] = sub[n, a, b, m, q, c]
    return jnp.transpose(sub, (0, 3, 1, 4, 2, 5)).reshape(N, 2 * H, 2 * W, 3)


# ------------------------- host-side weight packing ---------------------------
def pack_params(w1, b1, w2, b2, wt, wn):
    """Reshape HWIO weights into im2col matrices and cast to bf16."""
    C = w1.shape[2]
    Ct = wt.shape[3]
    w1i = w1.reshape(9 * C, C).astype(CDT)                    # (9C, C)
    w2i = w2.reshape(9 * C, C).astype(CDT)
    wn9 = wn.reshape(9 * Ct, wn.shape[-1]).astype(CDT)        # (9*Ct, 3)
    mats = []
    for a in range(2):
        row = []
        for b in range(2):
            blocks = [wt[ky, kx] for (_, ky) in _DECONV_TAPS[a]
                      for (_, kx) in _DECONV_TAPS[b]]
            row.append(jnp.concatenate(blocks, axis=0))       # (4C, Ct)
        mats.append(jnp.stack(row, axis=0))
    wt4 = jnp.stack(mats, axis=0).astype(CDT)                 # (2, 2, 4C, Ct)
    return (w1i, b1.astype(jnp.float32), w2i, b2.astype(jnp.float32), wt4, wn9)


# ----------------------------- pure-JAX reference ------------------------------
def regressor_reference(x, params):
    w1, b1, w2, b2, wt, wn = params
    dn = ('NHWC', 'HWIO', 'NHWC')
    P = jax.lax.Precision.HIGHEST
    # The kernel feeds bf16 operands to the MXU with f32 accumulation; quantize
    # the reference's conv operands at the same points so products match exactly
    # and only f32-accumulation order differs.
    q = lambda t: t.astype(jnp.bfloat16).astype(jnp.float32)
    xm = jnp.mean(x, axis=1)
    h = jax.lax.conv_general_dilated(q(xm), q(w1), (1, 1), ((1, 1), (1, 1)),
                                     dimension_numbers=dn, precision=P)
    h = _leaky(h + b1.reshape(1, 1, 1, -1))
    h = jax.lax.conv_general_dilated(q(h), q(w2), (1, 1), ((1, 1), (1, 1)),
                                     dimension_numbers=dn, precision=P)
    h = _leaky(h + b2.reshape(1, 1, 1, -1))
    # ConvTranspose2d(k=4,s=2,p=1) == dilated conv with spatially-flipped kernel
    h = jax.lax.conv_general_dilated(q(h), q(wt)[::-1, ::-1, :, :], (1, 1),
                                     ((2, 2), (2, 2)), lhs_dilation=(2, 2),
                                     dimension_numbers=dn, precision=P)
    h = _leaky(h)
    v = jax.lax.conv_general_dilated(q(h), q(wn), (1, 1), ((1, 1), (1, 1)),
                                     dimension_numbers=dn, precision=P)
    norm = jnp.sqrt(jnp.sum(v * v, axis=-1, keepdims=True))
    return v / jnp.maximum(norm, 1e-12)


if __name__ == "__main__":
    N, D, H, W = 2, 4, 8, 8                       # small sequence/spatial sizes
    C1, C3, CN = 128, 64, 3                       # channel sizes fixed by module

    key = jax.random.PRNGKey(0)
    ks = jax.random.split(key, 7)

    def kaiming(k, shape, fan_in):
        return (jax.random.normal(k, shape, jnp.float32)
                * np.sqrt(2.0 / fan_in)).astype(jnp.float32)

    w1 = kaiming(ks[0], (3, 3, C1, C1), 3 * 3 * C1)
    b1 = 0.01 * jax.random.normal(ks[1], (1, C1), jnp.float32)
    w2 = kaiming(ks[2], (3, 3, C1, C1), 3 * 3 * C1)
    b2 = 0.01 * jax.random.normal(ks[3], (1, C1), jnp.float32)
    wt = kaiming(ks[4], (4, 4, C1, C3), 4 * 4 * C1)   # ConvTranspose2d(128,64,4,2,1)
    wn = kaiming(ks[5], (3, 3, C3, CN), 3 * 3 * C3)   # est_normal, bias=False
    x = jax.random.normal(ks[6], (N, D, H, W, C1), jnp.float32)

    raw_params = (w1, b1, w2, b2, wt, wn)
    kparams = pack_params(*raw_params)

    fwd = jax.jit(regressor_pallas)
    out = jax.block_until_ready(fwd(x, kparams))
    ref = jax.block_until_ready(regressor_reference(x, raw_params))

    assert out.shape == (N, 2 * H, 2 * W, CN), out.shape
    # bf16 products / f32 accumulation in both paths; residual diffs come only
    # from accumulation order (amplified slightly by the final normalize).
    np.testing.assert_allclose(np.asarray(out), np.asarray(ref),
                               rtol=5e-3, atol=5e-3)
    print("KERNEL_OK")
</pallas_src>

<mosaic_0001>
module attributes {stable_mosaic.version = 11 : i64} {
  func.func @_regressor_kernel(%arg0: i32, %arg1: memref<1x4x8x8x128xf32, #tpu.memory_space<vmem>>, %arg2: memref<1152x128xbf16, #tpu.memory_space<vmem>>, %arg3: memref<1x128xf32, #tpu.memory_space<vmem>>, %arg4: memref<1152x128xbf16, #tpu.memory_space<vmem>>, %arg5: memref<1x128xf32, #tpu.memory_space<vmem>>, %arg6: memref<2x2x512x64xbf16, #tpu.memory_space<vmem>>, %arg7: memref<576x3xbf16, #tpu.memory_space<vmem>>, %arg8: memref<1x2x2x8x8x3xf32, #tpu.memory_space<vmem>>, %arg9: memref<10x10x128xf32, #tpu.memory_space<vmem>>, %arg10: memref<2x2x10x10x64xf32, #tpu.memory_space<vmem>>) attributes {dimension_semantics = [#tpu.dimension_semantics<parallel>], iteration_bounds = array<i64: 2>, scalar_prefetch = 0 : i64, scratch_operands = 2 : i64, tpu.core_type = #tpu.core_type<tc>, window_params = [{transform_indices = @transform_0, window_bounds = array<i64: 1, 4, 8, 8, 128>}, {pipeline_mode = #tpu.pipeline_mode<synchronous>, transform_indices = @transform_1, window_bounds = array<i64: 1152, 128>}, {pipeline_mode = #tpu.pipeline_mode<synchronous>, transform_indices = @transform_2, window_bounds = array<i64: 1, 128>}, {pipeline_mode = #tpu.pipeline_mode<synchronous>, transform_indices = @transform_3, window_bounds = array<i64: 1152, 128>}, {pipeline_mode = #tpu.pipeline_mode<synchronous>, transform_indices = @transform_4, window_bounds = array<i64: 1, 128>}, {pipeline_mode = #tpu.pipeline_mode<synchronous>, transform_indices = @transform_5, window_bounds = array<i64: 2, 2, 512, 64>}, {pipeline_mode = #tpu.pipeline_mode<synchronous>, transform_indices = @transform_6, window_bounds = array<i64: 576, 3>}, {transform_indices = @transform_7, window_bounds = array<i64: 1, 2, 2, 8, 8, 3>}]} {
    %cst = arith.constant 0.000000e+00 : f32
    %0 = vector.broadcast %cst : f32 to vector<10x10x128xf32>
    %c0 = arith.constant 0 : index
    %c0_0 = arith.constant 0 : index
    %c0_1 = arith.constant 0 : index
    %1 = vector.load %arg9[%c0, %c0_0, %c0_1] : memref<10x10x128xf32, #tpu.memory_space<vmem>>, vector<10x10x128xf32>
    tpu.vector_store %arg9[%c0, %c0_0, %c0_1], %0 {strides = array<i32>} : memref<10x10x128xf32, #tpu.memory_space<vmem>>, vector<10x10x128xf32>,
    %cst_2 = arith.constant 0.000000e+00 : f32
    %2 = vector.broadcast %cst_2 : f32 to vector<2x2x10x10x64xf32>
    %c0_3 = arith.constant 0 : index
    %c0_4 = arith.constant 0 : index
    %c0_5 = arith.constant 0 : index
    %c0_6 = arith.constant 0 : index
    %c0_7 = arith.constant 0 : index
    %3 = vector.load %arg10[%c0_3, %c0_4, %c0_5, %c0_6, %c0_7] : memref<2x2x10x10x64xf32, #tpu.memory_space<vmem>>, vector<2x2x10x10x64xf32>
    tpu.vector_store %arg10[%c0_3, %c0_4, %c0_5, %c0_6, %c0_7], %2 {strides = array<i32>} : memref<2x2x10x10x64xf32, #tpu.memory_space<vmem>>, vector<2x2x10x10x64xf32>,
    %c0_8 = arith.constant 0 : index
    %c0_9 = arith.constant 0 : index
    %c0_10 = arith.constant 0 : index
    %c0_11 = arith.constant 0 : index
    %c0_12 = arith.constant 0 : index
    %4 = vector.load %arg1[%c0_8, %c0_9, %c0_10, %c0_11, %c0_12] : memref<1x4x8x8x128xf32, #tpu.memory_space<vmem>>, vector<1x4x8x8x128xf32>
    %5 = vector.shape_cast %4 : vector<1x4x8x8x128xf32> to vector<4x8x8x128xf32>
    %cst_13 = arith.constant dense<0.000000e+00> : vector<8x8x128xf32>
    %6 = vector.multi_reduction <add>, %5, %cst_13 [0] : vector<4x8x8x128xf32> to vector<8x8x128xf32>
    %cst_14 = arith.constant 4.000000e+00 : f32
    %7 = vector.broadcast %cst_14 : f32 to vector<8x8x128xf32>
    %8 = arith.divf %6, %7 : vector<8x8x128xf32>
    %c1 = arith.constant 1 : index
    %c1_15 = arith.constant 1 : index
    %c0_16 = arith.constant 0 : index
    %9 = vector.load %arg9[%c1, %c1_15, %c0_16] : memref<10x10x128xf32, #tpu.memory_space<vmem>>, vector<8x8x128xf32>
    tpu.vector_store %arg9[%c1, %c1_15, %c0_16], %8 {strides = array<i32>} : memref<10x10x128xf32, #tpu.memory_space<vmem>>, vector<8x8x128xf32>,
    %c0_17 = arith.constant 0 : index
    %c0_18 = arith.constant 0 : index
    %c0_19 = arith.constant 0 : index
    %10 = vector.load %arg9[%c0_17, %c0_18, %c0_19] : memref<10x10x128xf32, #tpu.memory_space<vmem>>, vector<8x8x128xf32>
    %11 = vector.shape_cast %10 : vector<8x8x128xf32> to vector<64x128xf32>
    %12 = arith.truncf %11 : vector<64x128xf32> to vector<64x128xbf16>
    %c0_20 = arith.constant 0 : index
    %c1_21 = arith.constant 1 : index
    %c0_22 = arith.constant 0 : index
    %13 = vector.load %arg9[%c0_20, %c1_21, %c0_22] : memref<10x10x128xf32, #tpu.memory_space<vmem>>, vector<8x8x128xf32>
    %14 = vector.shape_cast %13 : vector<8x8x128xf32> to vector<64x128xf32>
    %15 = arith.truncf %14 : vector<64x128xf32> to vector<64x128xbf16>
    %c0_23 = arith.constant 0 : index
    %c2 = arith.constant 2 : index
    %c0_24 = arith.constant 0 : index
    %16 = vector.load %arg9[%c0_23, %c2, %c0_24] : memref<10x10x128xf32, #tpu.memory_space<vmem>>, vector<8x8x128xf32>
    %17 = vector.shape_cast %16 : vector<8x8x128xf32> to vector<64x128xf32>
    %18 = arith.truncf %17 : vector<64x128xf32> to vector<64x128xbf16>
    %c1_25 = arith.constant 1 : index
    %c0_26 = arith.constant 0 : index
    %c0_27 = arith.constant 0 : index
    %19 = vector.load %arg9[%c1_25, %c0_26, %c0_27] : memref<10x10x128xf32, #tpu.memory_space<vmem>>, vector<8x8x128xf32>
    %20 = vector.shape_cast %19 : vector<8x8x128xf32> to vector<64x128xf32>
    %21 = arith.truncf %20 : vector<64x128xf32> to vector<64x128xbf16>
    %c1_28 = arith.constant 1 : index
    %c1_29 = arith.constant 1 : index
    %c0_30 = arith.constant 0 : index
    %22 = vector.load %arg9[%c1_28, %c1_29, %c0_30] : memref<10x10x128xf32, #tpu.memory_space<vmem>>, vector<8x8x128xf32>
    %23 = vector.shape_cast %22 : vector<8x8x128xf32> to vector<64x128xf32>
    %24 = arith.truncf %23 : vector<64x128xf32> to vector<64x128xbf16>
    %c1_31 = arith.constant 1 : index
    %c2_32 = arith.constant 2 : index
    %c0_33 = arith.constant 0 : index
    %25 = vector.load %arg9[%c1_31, %c2_32, %c0_33] : memref<10x10x128xf32, #tpu.memory_space<vmem>>, vector<8x8x128xf32>
    %26 = vector.shape_cast %25 : vector<8x8x128xf32> to vector<64x128xf32>
    %27 = arith.truncf %26 : vector<64x128xf32> to vector<64x128xbf16>
    %c2_34 = arith.constant 2 : index
    %c0_35 = arith.constant 0 : index
    %c0_36 = arith.constant 0 : index
    %28 = vector.load %arg9[%c2_34, %c0_35, %c0_36] : memref<10x10x128xf32, #tpu.memory_space<vmem>>, vector<8x8x128xf32>
    %29 = vector.shape_cast %28 : vector<8x8x128xf32> to vector<64x128xf32>
    %30 = arith.truncf %29 : vector<64x128xf32> to vector<64x128xbf16>
    %c2_37 = arith.constant 2 : index
    %c1_38 = arith.constant 1 : index
    %c0_39 = arith.constant 0 : index
    %31 = vector.load %arg9[%c2_37, %c1_38, %c0_39] : memref<10x10x128xf32, #tpu.memory_space<vmem>>, vector<8x8x128xf32>
    %32 = vector.shape_cast %31 : vector<8x8x128xf32> to vector<64x128xf32>
    %33 = arith.truncf %32 : vector<64x128xf32> to vector<64x128xbf16>
    %c2_40 = arith.constant 2 : index
    %c2_41 = arith.constant 2 : index
    %c0_42 = arith.constant 0 : index
    %34 = vector.load %arg9[%c2_40, %c2_41, %c0_42] : memref<10x10x128xf32, #tpu.memory_space<vmem>>, vector<8x8x128xf32>
    %35 = vector.shape_cast %34 : vector<8x8x128xf32> to vector<64x128xf32>
    %36 = arith.truncf %35 : vector<64x128xf32> to vector<64x128xbf16>
    %37 = tpu.concatenate %12, %15, %18, %21, %24, %27, %30, %33, %36 in 1 : vector<64x128xbf16>, vector<64x128xbf16>, vector<64x128xbf16>, vector<64x128xbf16>, vector<64x128xbf16>, vector<64x128xbf16>, vector<64x128xbf16>, vector<64x128xbf16>, vector<64x128xbf16> -> vector<64x1152xbf16>
    %c0_43 = arith.constant 0 : index
    %c0_44 = arith.constant 0 : index
    %38 = vector.load %arg2[%c0_43, %c0_44] : memref<1152x128xbf16, #tpu.memory_space<vmem>>, vector<1152x128xbf16>
    %cst_45 = arith.constant dense<0.000000e+00> : vector<64x128xf32>
    %39 = tpu.matmul %37, %38, %cst_45 {dimension_numbers = #tpu.dot_dimension_numbers<[1], [0], [0], [1], [0, 0, 1, 1], [], []>} : vector<64x1152xbf16>, vector<1152x128xbf16>, vector<64x128xf32> -> vector<64x128xf32>
    %c0_46 = arith.constant 0 : index
    %c0_47 = arith.constant 0 : index
    %40 = vector.load %arg3[%c0_46, %c0_47] : memref<1x128xf32, #tpu.memory_space<vmem>>, vector<1x128xf32>
    %41 = vector.broadcast %40 : vector<1x128xf32> to vector<64x128xf32>
    %42 = arith.addf %39, %41 : vector<64x128xf32>
    %cst_48 = arith.constant 0.000000e+00 : f32
    %43 = vector.broadcast %cst_48 : f32 to vector<64x128xf32>
    %44 = arith.cmpf oge, %42, %43 : vector<64x128xf32>
    %cst_49 = arith.constant 1.000000e-01 : f32
    %45 = vector.broadcast %cst_49 : f32 to vector<64x128xf32>
    %46 = arith.mulf %45, %42 : vector<64x128xf32>
    %47 = arith.select %44, %42, %46 : vector<64x128xi1>, vector<64x128xf32>
    %48 = vector.shape_cast %47 : vector<64x128xf32> to vector<8x8x128xf32>
    %c1_50 = arith.constant 1 : index
    %c1_51 = arith.constant 1 : index
    %c0_52 = arith.constant 0 : index
    %49 = vector.load %arg9[%c1_50, %c1_51, %c0_52] : memref<10x10x128xf32, #tpu.memory_space<vmem>>, vector<8x8x128xf32>
    tpu.vector_store %arg9[%c1_50, %c1_51, %c0_52], %48 {strides = array<i32>} : memref<10x10x128xf32, #tpu.memory_space<vmem>>, vector<8x8x128xf32>,
    %c0_53 = arith.constant 0 : index
    %c0_54 = arith.constant 0 : index
    %c0_55 = arith.constant 0 : index
    %50 = vector.load %arg9[%c0_53, %c0_54, %c0_55] : memref<10x10x128xf32, #tpu.memory_space<vmem>>, vector<8x8x128xf32>
    %51 = vector.shape_cast %50 : vector<8x8x128xf32> to vector<64x128xf32>
    %52 = arith.truncf %51 : vector<64x128xf32> to vector<64x128xbf16>
    %c0_56 = arith.constant 0 : index
    %c1_57 = arith.constant 1 : index
    %c0_58 = arith.constant 0 : index
    %53 = vector.load %arg9[%c0_56, %c1_57, %c0_58] : memref<10x10x128xf32, #tpu.memory_space<vmem>>, vector<8x8x128xf32>
    %54 = vector.shape_cast %53 : vector<8x8x128xf32> to vector<64x128xf32>
    %55 = arith.truncf %54 : vector<64x128xf32> to vector<64x128xbf16>
    %c0_59 = arith.constant 0 : index
    %c2_60 = arith.constant 2 : index
    %c0_61 = arith.constant 0 : index
    %56 = vector.load %arg9[%c0_59, %c2_60, %c0_61] : memref<10x10x128xf32, #tpu.memory_space<vmem>>, vector<8x8x128xf32>
    %57 = vector.shape_cast %56 : vector<8x8x128xf32> to vector<64x128xf32>
    %58 = arith.truncf %57 : vector<64x128xf32> to vector<64x128xbf16>
    %c1_62 = arith.constant 1 : index
    %c0_63 = arith.constant 0 : index
    %c0_64 = arith.constant 0 : index
    %59 = vector.load %arg9[%c1_62, %c0_63, %c0_64] : memref<10x10x128xf32, #tpu.memory_space<vmem>>, vector<8x8x128xf32>
    %60 = vector.shape_cast %59 : vector<8x8x128xf32> to vector<64x128xf32>
    %61 = arith.truncf %60 : vector<64x128xf32> to vector<64x128xbf16>
    %c1_65 = arith.constant 1 : index
    %c1_66 = arith.constant 1 : index
    %c0_67 = arith.constant 0 : index
    %62 = vector.load %arg9[%c1_65, %c1_66, %c0_67] : memref<10x10x128xf32, #tpu.memory_space<vmem>>, vector<8x8x128xf32>
    %63 = vector.shape_cast %62 : vector<8x8x128xf32> to vector<64x128xf32>
    %64 = arith.truncf %63 : vector<64x128xf32> to vector<64x128xbf16>
    %c1_68 = arith.constant 1 : index
    %c2_69 = arith.constant 2 : index
    %c0_70 = arith.constant 0 : index
    %65 = vector.load %arg9[%c1_68, %c2_69, %c0_70] : memref<10x10x128xf32, #tpu.memory_space<vmem>>, vector<8x8x128xf32>
    %66 = vector.shape_cast %65 : vector<8x8x128xf32> to vector<64x128xf32>
    %67 = arith.truncf %66 : vector<64x128xf32> to vector<64x128xbf16>
    %c2_71 = arith.constant 2 : index
    %c0_72 = arith.constant 0 : index
    %c0_73 = arith.constant 0 : index
    %68 = vector.load %arg9[%c2_71, %c0_72, %c0_73] : memref<10x10x128xf32, #tpu.memory_space<vmem>>, vector<8x8x128xf32>
    %69 = vector.shape_cast %68 : vector<8x8x128xf32> to vector<64x128xf32>
    %70 = arith.truncf %69 : vector<64x128xf32> to vector<64x128xbf16>
    %c2_74 = arith.constant 2 : index
    %c1_75 = arith.constant 1 : index
    %c0_76 = arith.constant 0 : index
    %71 = vector.load %arg9[%c2_74, %c1_75, %c0_76] : memref<10x10x128xf32, #tpu.memory_space<vmem>>, vector<8x8x128xf32>
    %72 = vector.shape_cast %71 : vector<8x8x128xf32> to vector<64x128xf32>
    %73 = arith.truncf %72 : vector<64x128xf32> to vector<64x128xbf16>
    %c2_77 = arith.constant 2 : index
    %c2_78 = arith.constant 2 : index
    %c0_79 = arith.constant 0 : index
    %74 = vector.load %arg9[%c2_77, %c2_78, %c0_79] : memref<10x10x128xf32, #tpu.memory_space<vmem>>, vector<8x8x128xf32>
    %75 = vector.shape_cast %74 : vector<8x8x128xf32> to vector<64x128xf32>
    %76 = arith.truncf %75 : vector<64x128xf32> to vector<64x128xbf16>
    %77 = tpu.concatenate %52, %55, %58, %61, %64, %67, %70, %73, %76 in 1 : vector<64x128xbf16>, vector<64x128xbf16>, vector<64x128xbf16>, vector<64x128xbf16>, vector<64x128xbf16>, vector<64x128xbf16>, vector<64x128xbf16>, vector<64x128xbf16>, vector<64x128xbf16> -> vector<64x1152xbf16>
    %c0_80 = arith.constant 0 : index
    %c0_81 = arith.constant 0 : index
    %78 = vector.load %arg4[%c0_80, %c0_81] : memref<1152x128xbf16, #tpu.memory_space<vmem>>, vector<1152x128xbf16>
    %cst_82 = arith.constant dense<0.000000e+00> : vector<64x128xf32>
    %79 = tpu.matmul %77, %78, %cst_82 {dimension_numbers = #tpu.dot_dimension_numbers<[1], [0], [0], [1], [0, 0, 1, 1], [], []>} : vector<64x1152xbf16>, vector<1152x128xbf16>, vector<64x128xf32> -> vector<64x128xf32>
    %c0_83 = arith.constant 0 : index
    %c0_84 = arith.constant 0 : index
    %80 = vector.load %arg5[%c0_83, %c0_84] : memref<1x128xf32, #tpu.memory_space<vmem>>, vector<1x128xf32>
    %81 = vector.broadcast %80 : vector<1x128xf32> to vector<64x128xf32>
    %82 = arith.addf %79, %81 : vector<64x128xf32>
    %cst_85 = arith.constant 0.000000e+00 : f32
    %83 = vector.broadcast %cst_85 : f32 to vector<64x128xf32>
    %84 = arith.cmpf oge, %82, %83 : vector<64x128xf32>
    %cst_86 = arith.constant 1.000000e-01 : f32
    %85 = vector.broadcast %cst_86 : f32 to vector<64x128xf32>
    %86 = arith.mulf %85, %82 : vector<64x128xf32>
    %87 = arith.select %84, %82, %86 : vector<64x128xi1>, vector<64x128xf32>
    %88 = vector.shape_cast %87 : vector<64x128xf32> to vector<8x8x128xf32>
    %c1_87 = arith.constant 1 : index
    %c1_88 = arith.constant 1 : index
    %c0_89 = arith.constant 0 : index
    %89 = vector.load %arg9[%c1_87, %c1_88, %c0_89] : memref<10x10x128xf32, #tpu.memory_space<vmem>>, vector<8x8x128xf32>
    tpu.vector_store %arg9[%c1_87, %c1_88, %c0_89], %88 {strides = array<i32>} : memref<10x10x128xf32, #tpu.memory_space<vmem>>, vector<8x8x128xf32>,
    %c1_90 = arith.constant 1 : index
    %c1_91 = arith.constant 1 : index
    %c0_92 = arith.constant 0 : index
    %90 = vector.load %arg9[%c1_90, %c1_91, %c0_92] : memref<10x10x128xf32, #tpu.memory_space<vmem>>, vector<8x8x128xf32>
    %91 = vector.shape_cast %90 : vector<8x8x128xf32> to vector<64x128xf32>
    %92 = arith.truncf %91 : vector<64x128xf32> to vector<64x128xbf16>
    %c1_93 = arith.constant 1 : index
    %c0_94 = arith.constant 0 : index
    %c0_95 = arith.constant 0 : index
    %93 = vector.load %arg9[%c1_93, %c0_94, %c0_95] : memref<10x10x128xf32, #tpu.memory_space<vmem>>, vector<8x8x128xf32>
    %94 = vector.shape_cast %93 : vector<8x8x128xf32> to vector<64x128xf32>
    %95 = arith.truncf %94 : vector<64x128xf32> to vector<64x128xbf16>
    %c0_96 = arith.constant 0 : index
    %c1_97 = arith.constant 1 : index
    %c0_98 = arith.constant 0 : index
    %96 = vector.load %arg9[%c0_96, %c1_97, %c0_98] : memref<10x10x128xf32, #tpu.memory_space<vmem>>, vector<8x8x128xf32>
    %97 = vector.shape_cast %96 : vector<8x8x128xf32> to vector<64x128xf32>
    %98 = arith.truncf %97 : vector<64x128xf32> to vector<64x128xbf16>
    %c0_99 = arith.constant 0 : index
    %c0_100 = arith.constant 0 : index
    %c0_101 = arith.constant 0 : index
    %99 = vector.load %arg9[%c0_99, %c0_100, %c0_101] : memref<10x10x128xf32, #tpu.memory_space<vmem>>, vector<8x8x128xf32>
    %100 = vector.shape_cast %99 : vector<8x8x128xf32> to vector<64x128xf32>
    %101 = arith.truncf %100 : vector<64x128xf32> to vector<64x128xbf16>
    %102 = tpu.concatenate %92, %95, %98, %101 in 1 : vector<64x128xbf16>, vector<64x128xbf16>, vector<64x128xbf16>, vector<64x128xbf16> -> vector<64x512xbf16>
    %c0_102 = arith.constant 0 : index
    %c0_103 = arith.constant 0 : index
    %c0_104 = arith.constant 0 : index
    %c0_105 = arith.constant 0 : index
    %103 = vector.load %arg6[%c0_102, %c0_103, %c0_104, %c0_105] : memref<2x2x512x64xbf16, #tpu.memory_space<vmem>>, vector<1x1x512x64xbf16>
    %104 = vector.shape_cast %103 : vector<1x1x512x64xbf16> to vector<512x64xbf16>
    %cst_106 = arith.constant dense<0.000000e+00> : vector<64x64xf32>
    %105 = tpu.matmul %102, %104, %cst_106 {dimension_numbers = #tpu.dot_dimension_numbers<[1], [0], [0], [1], [0, 0, 1, 1], [], []>} : vector<64x512xbf16>, vector<512x64xbf16>, vector<64x64xf32> -> vector<64x64xf32>
    %cst_107 = arith.constant 0.000000e+00 : f32
    %106 = vector.broadcast %cst_107 : f32 to vector<64x64xf32>
    %107 = arith.cmpf oge, %105, %106 : vector<64x64xf32>
    %cst_108 = arith.constant 1.000000e-01 : f32
    %108 = vector.broadcast %cst_108 : f32 to vector<64x64xf32>
    %109 = arith.mulf %108, %105 : vector<64x64xf32>
    %110 = arith.select %107, %105, %109 : vector<64x64xi1>, vector<64x64xf32>
    %111 = vector.shape_cast %110 : vector<64x64xf32> to vector<8x8x64xf32>
    %c0_109 = arith.constant 0 : index
    %c0_110 = arith.constant 0 : index
    %c1_111 = arith.constant 1 : index
    %c1_112 = arith.constant 1 : index
    %c0_113 = arith.constant 0 : index
    %112 = vector.load %arg10[%c0_109, %c0_110, %c1_111, %c1_112, %c0_113] : memref<2x2x10x10x64xf32, #tpu.memory_space<vmem>>, vector<1x1x8x8x64xf32>
    %113 = vector.shape_cast %112 : vector<1x1x8x8x64xf32> to vector<8x8x64xf32>
    %114 = vector.shape_cast %111 : vector<8x8x64xf32> to vector<1x1x8x8x64xf32>
    tpu.vector_store %arg10[%c0_109, %c0_110, %c1_111, %c1_112, %c0_113], %114 {strides = array<i32>} : memref<2x2x10x10x64xf32, #tpu.memory_space<vmem>>, vector<1x1x8x8x64xf32>,
    %c1_114 = arith.constant 1 : index
    %c2_115 = arith.constant 2 : index
    %c0_116 = arith.constant 0 : index
    %115 = vector.load %arg9[%c1_114, %c2_115, %c0_116] : memref<10x10x128xf32, #tpu.memory_space<vmem>>, vector<8x8x128xf32>
    %116 = vector.shape_cast %115 : vector<8x8x128xf32> to vector<64x128xf32>
    %117 = arith.truncf %116 : vector<64x128xf32> to vector<64x128xbf16>
    %c1_117 = arith.constant 1 : index
    %c1_118 = arith.constant 1 : index
    %c0_119 = arith.constant 0 : index
    %118 = vector.load %arg9[%c1_117, %c1_118, %c0_119] : memref<10x10x128xf32, #tpu.memory_space<vmem>>, vector<8x8x128xf32>
    %119 = vector.shape_cast %118 : vector<8x8x128xf32> to vector<64x128xf32>
    %120 = arith.truncf %119 : vector<64x128xf32> to vector<64x128xbf16>
    %c0_120 = arith.constant 0 : index
    %c2_121 = arith.constant 2 : index
    %c0_122 = arith.constant 0 : index
    %121 = vector.load %arg9[%c0_120, %c2_121, %c0_122] : memref<10x10x128xf32, #tpu.memory_space<vmem>>, vector<8x8x128xf32>
    %122 = vector.shape_cast %121 : vector<8x8x128xf32> to vector<64x128xf32>
    %123 = arith.truncf %122 : vector<64x128xf32> to vector<64x128xbf16>
    %c0_123 = arith.constant 0 : index
    %c1_124 = arith.constant 1 : index
    %c0_125 = arith.constant 0 : index
    %124 = vector.load %arg9[%c0_123, %c1_124, %c0_125] : memref<10x10x128xf32, #tpu.memory_space<vmem>>, vector<8x8x128xf32>
    %125 = vector.shape_cast %124 : vector<8x8x128xf32> to vector<64x128xf32>
    %126 = arith.truncf %125 : vector<64x128xf32> to vector<64x128xbf16>
    %127 = tpu.concatenate %117, %120, %123, %126 in 1 : vector<64x128xbf16>, vector<64x128xbf16>, vector<64x128xbf16>, vector<64x128xbf16> -> vector<64x512xbf16>
    %c0_126 = arith.constant 0 : index
    %c1_127 = arith.constant 1 : index
    %c0_128 = arith.constant 0 : index
    %c0_129 = arith.constant 0 : index
    %128 = vector.load %arg6[%c0_126, %c1_127, %c0_128, %c0_129] : memref<2x2x512x64xbf16, #tpu.memory_space<vmem>>, vector<1x1x512x64xbf16>
    %129 = vector.shape_cast %128 : vector<1x1x512x64xbf16> to vector<512x64xbf16>
    %cst_130 = arith.constant dense<0.000000e+00> : vector<64x64xf32>
    %130 = tpu.matmul %127, %129, %cst_130 {dimension_numbers = #tpu.dot_dimension_numbers<[1], [0], [0], [1], [0, 0, 1, 1], [], []>} : vector<64x512xbf16>, vector<512x64xbf16>, vector<64x64xf32> -> vector<64x64xf32>
    %cst_131 = arith.constant 0.000000e+00 : f32
    %131 = vector.broadcast %cst_131 : f32 to vector<64x64xf32>
    %132 = arith.cmpf oge, %130, %131 : vector<64x64xf32>
    %cst_132 = arith.constant 1.000000e-01 : f32
    %133 = vector.broadcast %cst_132 : f32 to vector<64x64xf32>
    %134 = arith.mulf %133, %130 : vector<64x64xf32>
    %135 = arith.select %132, %130, %134 : vector<64x64xi1>, vector<64x64xf32>
    %136 = vector.shape_cast %135 : vector<64x64xf32> to vector<8x8x64xf32>
    %c0_133 = arith.constant 0 : index
    %c1_134 = arith.constant 1 : index
    %c1_135 = arith.constant 1 : index
    %c1_136 = arith.constant 1 : index
    %c0_137 = arith.constant 0 : index
    %137 = vector.load %arg10[%c0_133, %c1_134, %c1_135, %c1_136, %c0_137] : memref<2x2x10x10x64xf32, #tpu.memory_space<vmem>>, vector<1x1x8x8x64xf32>
    %138 = vector.shape_cast %137 : vector<1x1x8x8x64xf32> to vector<8x8x64xf32>
    %139 = vector.shape_cast %136 : vector<8x8x64xf32> to vector<1x1x8x8x64xf32>
    tpu.vector_store %arg10[%c0_133, %c1_134, %c1_135, %c1_136, %c0_137], %139 {strides = array<i32>} : memref<2x2x10x10x64xf32, #tpu.memory_space<vmem>>, vector<1x1x8x8x64xf32>,
    %c2_138 = arith.constant 2 : index
    %c1_139 = arith.constant 1 : index
    %c0_140 = arith.constant 0 : index
    %140 = vector.load %arg9[%c2_138, %c1_139, %c0_140] : memref<10x10x128xf32, #tpu.memory_space<vmem>>, vector<8x8x128xf32>
    %141 = vector.shape_cast %140 : vector<8x8x128xf32> to vector<64x128xf32>
    %142 = arith.truncf %141 : vector<64x128xf32> to vector<64x128xbf16>
    %c2_141 = arith.constant 2 : index
    %c0_142 = arith.constant 0 : index
    %c0_143 = arith.constant 0 : index
    %143 = vector.load %arg9[%c2_141, %c0_142, %c0_143] : memref<10x10x128xf32, #tpu.memory_space<vmem>>, vector<8x8x128xf32>
    %144 = vector.shape_cast %143 : vector<8x8x128xf32> to vector<64x128xf32>
    %145 = arith.truncf %144 : vector<64x128xf32> to vector<64x128xbf16>
    %c1_144 = arith.constant 1 : index
    %c1_145 = arith.constant 1 : index
    %c0_146 = arith.constant 0 : index
    %146 = vector.load %arg9[%c1_144, %c1_145, %c0_146] : memref<10x10x128xf32, #tpu.memory_space<vmem>>, vector<8x8x128xf32>
    %147 = vector.shape_cast %146 : vector<8x8x128xf32> to vector<64x128xf32>
    %148 = arith.truncf %147 : vector<64x128xf32> to vector<64x128xbf16>
    %c1_147 = arith.constant 1 : index
    %c0_148 = arith.constant 0 : index
    %c0_149 = arith.constant 0 : index
    %149 = vector.load %arg9[%c1_147, %c0_148, %c0_149] : memref<10x10x128xf32, #tpu.memory_space<vmem>>, vector<8x8x128xf32>
    %150 = vector.shape_cast %149 : vector<8x8x128xf32> to vector<64x128xf32>
    %151 = arith.truncf %150 : vector<64x128xf32> to vector<64x128xbf16>
    %152 = tpu.concatenate %142, %145, %148, %151 in 1 : vector<64x128xbf16>, vector<64x128xbf16>, vector<64x128xbf16>, vector<64x128xbf16> -> vector<64x512xbf16>
    %c1_150 = arith.constant 1 : index
    %c0_151 = arith.constant 0 : index
    %c0_152 = arith.constant 0 : index
    %c0_153 = arith.constant 0 : index
    %153 = vector.load %arg6[%c1_150, %c0_151, %c0_152, %c0_153] : memref<2x2x512x64xbf16, #tpu.memory_space<vmem>>, vector<1x1x512x64xbf16>
    %154 = vector.shape_cast %153 : vector<1x1x512x64xbf16> to vector<512x64xbf16>
    %cst_154 = arith.constant dense<0.000000e+00> : vector<64x64xf32>
    %155 = tpu.matmul %152, %154, %cst_154 {dimension_numbers = #tpu.dot_dimension_numbers<[1], [0], [0], [1], [0, 0, 1, 1], [], []>} : vector<64x512xbf16>, vector<512x64xbf16>, vector<64x64xf32> -> vector<64x64xf32>
    %cst_155 = arith.constant 0.000000e+00 : f32
    %156 = vector.broadcast %cst_155 : f32 to vector<64x64xf32>
    %157 = arith.cmpf oge, %155, %156 : vector<64x64xf32>
    %cst_156 = arith.constant 1.000000e-01 : f32
    %158 = vector.broadcast %cst_156 : f32 to vector<64x64xf32>
    %159 = arith.mulf %158, %155 : vector<64x64xf32>
    %160 = arith.select %157, %155, %159 : vector<64x64xi1>, vector<64x64xf32>
    %161 = vector.shape_cast %160 : vector<64x64xf32> to vector<8x8x64xf32>
    %c1_157 = arith.constant 1 : index
    %c0_158 = arith.constant 0 : index
    %c1_159 = arith.constant 1 : index
    %c1_160 = arith.constant 1 : index
    %c0_161 = arith.constant 0 : index
    %162 = vector.load %arg10[%c1_157, %c0_158, %c1_159, %c1_160, %c0_161] : memref<2x2x10x10x64xf32, #tpu.memory_space<vmem>>, vector<1x1x8x8x64xf32>
    %163 = vector.shape_cast %162 : vector<1x1x8x8x64xf32> to vector<8x8x64xf32>
    %164 = vector.shape_cast %161 : vector<8x8x64xf32> to vector<1x1x8x8x64xf32>
    tpu.vector_store %arg10[%c1_157, %c0_158, %c1_159, %c1_160, %c0_161], %164 {strides = array<i32>} : memref<2x2x10x10x64xf32, #tpu.memory_space<vmem>>, vector<1x1x8x8x64xf32>,
    %c2_162 = arith.constant 2 : index
    %c2_163 = arith.constant 2 : index
    %c0_164 = arith.constant 0 : index
    %165 = vector.load %arg9[%c2_162, %c2_163, %c0_164] : memref<10x10x128xf32, #tpu.memory_space<vmem>>, vector<8x8x128xf32>
    %166 = vector.shape_cast %165 : vector<8x8x128xf32> to vector<64x128xf32>
    %167 = arith.truncf %166 : vector<64x128xf32> to vector<64x128xbf16>
    %c2_165 = arith.constant 2 : index
    %c1_166 = arith.constant 1 : index
    %c0_167 = arith.constant 0 : index
    %168 = vector.load %arg9[%c2_165, %c1_166, %c0_167] : memref<10x10x128xf32, #tpu.memory_space<vmem>>, vector<8x8x128xf32>
    %169 = vector.shape_cast %168 : vector<8x8x128xf32> to vector<64x128xf32>
    %170 = arith.truncf %169 : vector<64x128xf32> to vector<64x128xbf16>
    %c1_168 = arith.constant 1 : index
    %c2_169 = arith.constant 2 : index
    %c0_170 = arith.constant 0 : index
    %171 = vector.load %arg9[%c1_168, %c2_169, %c0_170] : memref<10x10x128xf32, #tpu.memory_space<vmem>>, vector<8x8x128xf32>
    %172 = vector.shape_cast %171 : vector<8x8x128xf32> to vector<64x128xf32>
    %173 = arith.truncf %172 : vector<64x128xf32> to vector<64x128xbf16>
    %c1_171 = arith.constant 1 : index
    %c1_172 = arith.constant 1 : index
    %c0_173 = arith.constant 0 : index
    %174 = vector.load %arg9[%c1_171, %c1_172, %c0_173] : memref<10x10x128xf32, #tpu.memory_space<vmem>>, vector<8x8x128xf32>
    %175 = vector.shape_cast %174 : vector<8x8x128xf32> to vector<64x128xf32>
    %176 = arith.truncf %175 : vector<64x128xf32> to vector<64x128xbf16>
    %177 = tpu.concatenate %167, %170, %173, %176 in 1 : vector<64x128xbf16>, vector<64x128xbf16>, vector<64x128xbf16>, vector<64x128xbf16> -> vector<64x512xbf16>
    %c1_174 = arith.constant 1 : index
    %c1_175 = arith.constant 1 : index
    %c0_176 = arith.constant 0 : index
    %c0_177 = arith.constant 0 : index
    %178 = vector.load %arg6[%c1_174, %c1_175, %c0_176, %c0_177] : memref<2x2x512x64xbf16, #tpu.memory_space<vmem>>, vector<1x1x512x64xbf16>
    %179 = vector.shape_cast %178 : vector<1x1x512x64xbf16> to vector<512x64xbf16>
    %cst_178 = arith.constant dense<0.000000e+00> : vector<64x64xf32>
    %180 = tpu.matmul %177, %179, %cst_178 {dimension_numbers = #tpu.dot_dimension_numbers<[1], [0], [0], [1], [0, 0, 1, 1], [], []>} : vector<64x512xbf16>, vector<512x64xbf16>, vector<64x64xf32> -> vector<64x64xf32>
    %cst_179 = arith.constant 0.000000e+00 : f32
    %181 = vector.broadcast %cst_179 : f32 to vector<64x64xf32>
    %182 = arith.cmpf oge, %180, %181 : vector<64x64xf32>
    %cst_180 = arith.constant 1.000000e-01 : f32
    %183 = vector.broadcast %cst_180 : f32 to vector<64x64xf32>
    %184 = arith.mulf %183, %180 : vector<64x64xf32>
    %185 = arith.select %182, %180, %184 : vector<64x64xi1>, vector<64x64xf32>
    %186 = vector.shape_cast %185 : vector<64x64xf32> to vector<8x8x64xf32>
    %c1_181 = arith.constant 1 : index
    %c1_182 = arith.constant 1 : index
    %c1_183 = arith.constant 1 : index
    %c1_184 = arith.constant 1 : index
    %c0_185 = arith.constant 0 : index
    %187 = vector.load %arg10[%c1_181, %c1_182, %c1_183, %c1_184, %c0_185] : memref<2x2x10x10x64xf32, #tpu.memory_space<vmem>>, vector<1x1x8x8x64xf32>
    %188 = vector.shape_cast %187 : vector<1x1x8x8x64xf32> to vector<8x8x64xf32>
    %189 = vector.shape_cast %186 : vector<8x8x64xf32> to vector<1x1x8x8x64xf32>
    tpu.vector_store %arg10[%c1_181, %c1_182, %c1_183, %c1_184, %c0_185], %189 {strides = array<i32>} : memref<2x2x10x10x64xf32, #tpu.memory_space<vmem>>, vector<1x1x8x8x64xf32>,
    %c1_186 = arith.constant 1 : index
    %c1_187 = arith.constant 1 : index
    %c0_188 = arith.constant 0 : index
    %c0_189 = arith.constant 0 : index
    %c0_190 = arith.constant 0 : index
    %190 = vector.load %arg10[%c1_186, %c1_187, %c0_188, %c0_189, %c0_190] : memref<2x2x10x10x64xf32, #tpu.memory_space<vmem>>, vector<1x1x8x8x64xf32>
    %191 = vector.shape_cast %190 : vector<1x1x8x8x64xf32> to vector<8x8x64xf32>
    %192 = vector.shape_cast %191 : vector<8x8x64xf32> to vector<64x64xf32>
    %193 = arith.truncf %192 : vector<64x64xf32> to vector<64x64xbf16>
    %c1_191 = arith.constant 1 : index
    %c0_192 = arith.constant 0 : index
    %c0_193 = arith.constant 0 : index
    %c1_194 = arith.constant 1 : index
    %c0_195 = arith.constant 0 : index
    %194 = vector.load %arg10[%c1_191, %c0_192, %c0_193, %c1_194, %c0_195] : memref<2x2x10x10x64xf32, #tpu.memory_space<vmem>>, vector<1x1x8x8x64xf32>
    %195 = vector.shape_cast %194 : vector<1x1x8x8x64xf32> to vector<8x8x64xf32>
    %196 = vector.shape_cast %195 : vector<8x8x64xf32> to vector<64x64xf32>
    %197 = arith.truncf %196 : vector<64x64xf32> to vector<64x64xbf16>
    %c1_196 = arith.constant 1 : index
    %c1_197 = arith.constant 1 : index
    %c0_198 = arith.constant 0 : index
    %c1_199 = arith.constant 1 : index
    %c0_200 = arith.constant 0 : index
    %198 = vector.load %arg10[%c1_196, %c1_197, %c0_198, %c1_199, %c0_200] : memref<2x2x10x10x64xf32, #tpu.memory_space<vmem>>, vector<1x1x8x8x64xf32>
    %199 = vector.shape_cast %198 : vector<1x1x8x8x64xf32> to vector<8x8x64xf32>
    %200 = vector.shape_cast %199 : vector<8x8x64xf32> to vector<64x64xf32>
    %201 = arith.truncf %200 : vector<64x64xf32> to vector<64x64xbf16>
    %c0_201 = arith.constant 0 : index
    %c1_202 = arith.constant 1 : index
    %c1_203 = arith.constant 1 : index
    %c0_204 = arith.constant 0 : index
    %c0_205 = arith.constant 0 : index
    %202 = vector.load %arg10[%c0_201, %c1_202, %c1_203, %c0_204, %c0_205] : memref<2x2x10x10x64xf32, #tpu.memory_space<vmem>>, vector<1x1x8x8x64xf32>
    %203 = vector.shape_cast %202 : vector<1x1x8x8x64xf32> to vector<8x8x64xf32>
    %204 = vector.shape_cast %203 : vector<8x8x64xf32> to vector<64x64xf32>
    %205 = arith.truncf %204 : vector<64x64xf32> to vector<64x64xbf16>
    %c0_206 = arith.constant 0 : index
    %c0_207 = arith.constant 0 : index
    %c1_208 = arith.constant 1 : index
    %c1_209 = arith.constant 1 : index
    %c0_210 = arith.constant 0 : index
    %206 = vector.load %arg10[%c0_206, %c0_207, %c1_208, %c1_209, %c0_210] : memref<2x2x10x10x64xf32, #tpu.memory_space<vmem>>, vector<1x1x8x8x64xf32>
    %207 = vector.shape_cast %206 : vector<1x1x8x8x64xf32> to vector<8x8x64xf32>
    %208 = vector.shape_cast %207 : vector<8x8x64xf32> to vector<64x64xf32>
    %209 = arith.truncf %208 : vector<64x64xf32> to vector<64x64xbf16>
    %c0_211 = arith.constant 0 : index
    %c1_212 = arith.constant 1 : index
    %c1_213 = arith.constant 1 : index
    %c1_214 = arith.constant 1 : index
    %c0_215 = arith.constant 0 : index
    %210 = vector.load %arg10[%c0_211, %c1_212, %c1_213, %c1_214, %c0_215] : memref<2x2x10x10x64xf32, #tpu.memory_space<vmem>>, vector<1x1x8x8x64xf32>
    %211 = vector.shape_cast %210 : vector<1x1x8x8x64xf32> to vector<8x8x64xf32>
    %212 = vector.shape_cast %211 : vector<8x8x64xf32> to vector<64x64xf32>
    %213 = arith.truncf %212 : vector<64x64xf32> to vector<64x64xbf16>
    %c1_216 = arith.constant 1 : index
    %c1_217 = arith.constant 1 : index
    %c1_218 = arith.constant 1 : index
    %c0_219 = arith.constant 0 : index
    %c0_220 = arith.constant 0 : index
    %214 = vector.load %arg10[%c1_216, %c1_217, %c1_218, %c0_219, %c0_220] : memref<2x2x10x10x64xf32, #tpu.memory_space<vmem>>, vector<1x1x8x8x64xf32>
    %215 = vector.shape_cast %214 : vector<1x1x8x8x64xf32> to vector<8x8x64xf32>
    %216 = vector.shape_cast %215 : vector<8x8x64xf32> to vector<64x64xf32>
    %217 = arith.truncf %216 : vector<64x64xf32> to vector<64x64xbf16>
    %c1_221 = arith.constant 1 : index
    %c0_222 = arith.constant 0 : index
    %c1_223 = arith.constant 1 : index
    %c1_224 = arith.constant 1 : index
    %c0_225 = arith.constant 0 : index
    %218 = vector.load %arg10[%c1_221, %c0_222, %c1_223, %c1_224, %c0_225] : memref<2x2x10x10x64xf32, #tpu.memory_space<vmem>>, vector<1x1x8x8x64xf32>
    %219 = vector.shape_cast %218 : vector<1x1x8x8x64xf32> to vector<8x8x64xf32>
    %220 = vector.shape_cast %219 : vector<8x8x64xf32> to vector<64x64xf32>
    %221 = arith.truncf %220 : vector<64x64xf32> to vector<64x64xbf16>
    %c1_226 = arith.constant 1 : index
    %c1_227 = arith.constant 1 : index
    %c1_228 = arith.constant 1 : index
    %c1_229 = arith.constant 1 : index
    %c0_230 = arith.constant 0 : index
    %222 = vector.load %arg10[%c1_226, %c1_227, %c1_228, %c1_229, %c0_230] : memref<2x2x10x10x64xf32, #tpu.memory_space<vmem>>, vector<1x1x8x8x64xf32>
    %223 = vector.shape_cast %222 : vector<1x1x8x8x64xf32> to vector<8x8x64xf32>
    %224 = vector.shape_cast %223 : vector<8x8x64xf32> to vector<64x64xf32>
    %225 = arith.truncf %224 : vector<64x64xf32> to vector<64x64xbf16>
    %226 = tpu.concatenate %193, %197, %201, %205, %209, %213, %217, %221, %225 in 1 : vector<64x64xbf16>, vector<64x64xbf16>, vector<64x64xbf16>, vector<64x64xbf16>, vector<64x64xbf16>, vector<64x64xbf16>, vector<64x64xbf16>, vector<64x64xbf16>, vector<64x64xbf16> -> vector<64x576xbf16>
    %c0_231 = arith.constant 0 : index
    %c0_232 = arith.constant 0 : index
    %227 = vector.load %arg7[%c0_231, %c0_232] : memref<576x3xbf16, #tpu.memory_space<vmem>>, vector<576x3xbf16>
    %cst_233 = arith.constant dense<0.000000e+00> : vector<64x3xf32>
    %228 = tpu.matmul %226, %227, %cst_233 {dimension_numbers = #tpu.dot_dimension_numbers<[1], [0], [0], [1], [0, 0, 1, 1], [], []>} : vector<64x576xbf16>, vector<576x3xbf16>, vector<64x3xf32> -> vector<64x3xf32>
    %229 = arith.mulf %228, %228 : vector<64x3xf32>
    %cst_234 = arith.constant dense<0.000000e+00> : vector<64xf32>
    %230 = vector.multi_reduction <add>, %229, %cst_234 [1] : vector<64x3xf32> to vector<64xf32>
    %231 = vector.shape_cast %230 : vector<64xf32> to vector<64x1xf32>
    %cst_235 = arith.constant 1.000000e-24 : f32
    %232 = vector.broadcast %cst_235 : f32 to vector<64x1xf32>
    %233 = arith.maximumf %231, %232 : vector<64x1xf32>
    %234 = math.rsqrt %233 : vector<64x1xf32>
    %235 = vector.broadcast %234 : vector<64x1xf32> to vector<64x3xf32>
    %236 = arith.mulf %228, %235 : vector<64x3xf32>
    %237 = vector.shape_cast %236 : vector<64x3xf32> to vector<8x8x3xf32>
    %c0_236 = arith.constant 0 : index
    %c0_237 = arith.constant 0 : index
    %c0_238 = arith.constant 0 : index
    %c0_239 = arith.constant 0 : index
    %c0_240 = arith.constant 0 : index
    %c0_241 = arith.constant 0 : index
    %238 = vector.load %arg8[%c0_236, %c0_237, %c0_238, %c0_239, %c0_240, %c0_241] : memref<1x2x2x8x8x3xf32, #tpu.memory_space<vmem>>, vector<1x1x1x8x8x3xf32>
    %239 = vector.shape_cast %238 : vector<1x1x1x8x8x3xf32> to vector<8x8x3xf32>
    %240 = vector.shape_cast %237 : vector<8x8x3xf32> to vector<1x1x1x8x8x3xf32>
    tpu.vector_store %arg8[%c0_236, %c0_237, %c0_238, %c0_239, %c0_240, %c0_241], %240 {strides = array<i32>} : memref<1x2x2x8x8x3xf32, #tpu.memory_space<vmem>>, vector<1x1x1x8x8x3xf32>,
    %c1_242 = arith.constant 1 : index
    %c0_243 = arith.constant 0 : index
    %c0_244 = arith.constant 0 : index
    %c1_245 = arith.constant 1 : index
    %c0_246 = arith.constant 0 : index
    %241 = vector.load %arg10[%c1_242, %c0_243, %c0_244, %c1_245, %c0_246] : memref<2x2x10x10x64xf32, #tpu.memory_space<vmem>>, vector<1x1x8x8x64xf32>
    %242 = vector.shape_cast %241 : vector<1x1x8x8x64xf32> to vector<8x8x64xf32>
    %243 = vector.shape_cast %242 : vector<8x8x64xf32> to vector<64x64xf32>
    %244 = arith.truncf %243 : vector<64x64xf32> to vector<64x64xbf16>
    %c1_247 = arith.constant 1 : index
    %c1_248 = arith.constant 1 : index
    %c0_249 = arith.constant 0 : index
    %c1_250 = arith.constant 1 : index
    %c0_251 = arith.constant 0 : index
    %245 = vector.load %arg10[%c1_247, %c1_248, %c0_249, %c1_250, %c0_251] : memref<2x2x10x10x64xf32, #tpu.memory_space<vmem>>, vector<1x1x8x8x64xf32>
    %246 = vector.shape_cast %245 : vector<1x1x8x8x64xf32> to vector<8x8x64xf32>
    %247 = vector.shape_cast %246 : vector<8x8x64xf32> to vector<64x64xf32>
    %248 = arith.truncf %247 : vector<64x64xf32> to vector<64x64xbf16>
    %c1_252 = arith.constant 1 : index
    %c0_253 = arith.constant 0 : index
    %c0_254 = arith.constant 0 : index
    %c2_255 = arith.constant 2 : index
    %c0_256 = arith.constant 0 : index
    %249 = vector.load %arg10[%c1_252, %c0_253, %c0_254, %c2_255, %c0_256] : memref<2x2x10x10x64xf32, #tpu.memory_space<vmem>>, vector<1x1x8x8x64xf32>
    %250 = vector.shape_cast %249 : vector<1x1x8x8x64xf32> to vector<8x8x64xf32>
    %251 = vector.shape_cast %250 : vector<8x8x64xf32> to vector<64x64xf32>
    %252 = arith.truncf %251 : vector<64x64xf32> to vector<64x64xbf16>
    %c0_257 = arith.constant 0 : index
    %c0_258 = arith.constant 0 : index
    %c1_259 = arith.constant 1 : index
    %c1_260 = arith.constant 1 : index
    %c0_261 = arith.constant 0 : index
    %253 = vector.load %arg10[%c0_257, %c0_258, %c1_259, %c1_260, %c0_261] : memref<2x2x10x10x64xf32, #tpu.memory_space<vmem>>, vector<1x1x8x8x64xf32>
    %254 = vector.shape_cast %253 : vector<1x1x8x8x64xf32> to vector<8x8x64xf32>
    %255 = vector.shape_cast %254 : vector<8x8x64xf32> to vector<64x64xf32>
    %256 = arith.truncf %255 : vector<64x64xf32> to vector<64x64xbf16>
    %c0_262 = arith.constant 0 : index
    %c1_263 = arith.constant 1 : index
    %c1_264 = arith.constant 1 : index
    %c1_265 = arith.constant 1 : index
    %c0_266 = arith.constant 0 : index
    %257 = vector.load %arg10[%c0_262, %c1_263, %c1_264, %c1_265, %c0_266] : memref<2x2x10x10x64xf32, #tpu.memory_space<vmem>>, vector<1x1x8x8x64xf32>
    %258 = vector.shape_cast %257 : vector<1x1x8x8x64xf32> to vector<8x8x64xf32>
    %259 = vector.shape_cast %258 : vector<8x8x64xf32> to vector<64x64xf32>
    %260 = arith.truncf %259 : vector<64x64xf32> to vector<64x64xbf16>
    %c0_267 = arith.constant 0 : index
    %c0_268 = arith.constant 0 : index
    %c1_269 = arith.constant 1 : index
    %c2_270 = arith.constant 2 : index
    %c0_271 = arith.constant 0 : index
    %261 = vector.load %arg10[%c0_267, %c0_268, %c1_269, %c2_270, %c0_271] : memref<2x2x10x10x64xf32, #tpu.memory_space<vmem>>, vector<1x1x8x8x64xf32>
    %262 = vector.shape_cast %261 : vector<1x1x8x8x64xf32> to vector<8x8x64xf32>
    %263 = vector.shape_cast %262 : vector<8x8x64xf32> to vector<64x64xf32>
    %264 = arith.truncf %263 : vector<64x64xf32> to vector<64x64xbf16>
    %c1_272 = arith.constant 1 : index
    %c0_273 = arith.constant 0 : index
    %c1_274 = arith.constant 1 : index
    %c1_275 = arith.constant 1 : index
    %c0_276 = arith.constant 0 : index
    %265 = vector.load %arg10[%c1_272, %c0_273, %c1_274, %c1_275, %c0_276] : memref<2x2x10x10x64xf32, #tpu.memory_space<vmem>>, vector<1x1x8x8x64xf32>
    %266 = vector.shape_cast %265 : vector<1x1x8x8x64xf32> to vector<8x8x64xf32>
    %267 = vector.shape_cast %266 : vector<8x8x64xf32> to vector<64x64xf32>
    %268 = arith.truncf %267 : vector<64x64xf32> to vector<64x64xbf16>
    %c1_277 = arith.constant 1 : index
    %c1_278 = arith.constant 1 : index
    %c1_279 = arith.constant 1 : index
    %c1_280 = arith.constant 1 : index
    %c0_281 = arith.constant 0 : index
    %269 = vector.load %arg10[%c1_277, %c1_278, %c1_279, %c1_280, %c0_281] : memref<2x2x10x10x64xf32, #tpu.memory_space<vmem>>, vector<1x1x8x8x64xf32>
    %270 = vector.shape_cast %269 : vector<1x1x8x8x64xf32> to vector<8x8x64xf32>
    %271 = vector.shape_cast %270 : vector<8x8x64xf32> to vector<64x64xf32>
    %272 = arith.truncf %271 : vector<64x64xf32> to vector<64x64xbf16>
    %c1_282 = arith.constant 1 : index
    %c0_283 = arith.constant 0 : index
    %c1_284 = arith.constant 1 : index
    %c2_285 = arith.constant 2 : index
    %c0_286 = arith.constant 0 : index
    %273 = vector.load %arg10[%c1_282, %c0_283, %c1_284, %c2_285, %c0_286] : memref<2x2x10x10x64xf32, #tpu.memory_space<vmem>>, vector<1x1x8x8x64xf32>
    %274 = vector.shape_cast %273 : vector<1x1x8x8x64xf32> to vector<8x8x64xf32>
    %275 = vector.shape_cast %274 : vector<8x8x64xf32> to vector<64x64xf32>
    %276 = arith.truncf %275 : vector<64x64xf32> to vector<64x64xbf16>
    %277 = tpu.concatenate %244, %248, %252, %256, %260, %264, %268, %272, %276 in 1 : vector<64x64xbf16>, vector<64x64xbf16>, vector<64x64xbf16>, vector<64x64xbf16>, vector<64x64xbf16>, vector<64x64xbf16>, vector<64x64xbf16>, vector<64x64xbf16>, vector<64x64xbf16> -> vector<64x576xbf16>
    %c0_287 = arith.constant 0 : index
    %c0_288 = arith.constant 0 : index
    %278 = vector.load %arg7[%c0_287, %c0_288] : memref<576x3xbf16, #tpu.memory_space<vmem>>, vector<576x3xbf16>
    %cst_289 = arith.constant dense<0.000000e+00> : vector<64x3xf32>
    %279 = tpu.matmul %277, %278, %cst_289 {dimension_numbers = #tpu.dot_dimension_numbers<[1], [0], [0], [1], [0, 0, 1, 1], [], []>} : vector<64x576xbf16>, vector<576x3xbf16>, vector<64x3xf32> -> vector<64x3xf32>
    %280 = arith.mulf %279, %279 : vector<64x3xf32>
    %cst_290 = arith.constant dense<0.000000e+00> : vector<64xf32>
    %281 = vector.multi_reduction <add>, %280, %cst_290 [1] : vector<64x3xf32> to vector<64xf32>
    %282 = vector.shape_cast %281 : vector<64xf32> to vector<64x1xf32>
    %cst_291 = arith.constant 1.000000e-24 : f32
    %283 = vector.broadcast %cst_291 : f32 to vector<64x1xf32>
    %284 = arith.maximumf %282, %283 : vector<64x1xf32>
    %285 = math.rsqrt %284 : vector<64x1xf32>
    %286 = vector.broadcast %285 : vector<64x1xf32> to vector<64x3xf32>
    %287 = arith.mulf %279, %286 : vector<64x3xf32>
    %288 = vector.shape_cast %287 : vector<64x3xf32> to vector<8x8x3xf32>
    %c0_292 = arith.constant 0 : index
    %c0_293 = arith.constant 0 : index
    %c1_294 = arith.constant 1 : index
    %c0_295 = arith.constant 0 : index
    %c0_296 = arith.constant 0 : index
    %c0_297 = arith.constant 0 : index
    %289 = vector.load %arg8[%c0_292, %c0_293, %c1_294, %c0_295, %c0_296, %c0_297] : memref<1x2x2x8x8x3xf32, #tpu.memory_space<vmem>>, vector<1x1x1x8x8x3xf32>
    %290 = vector.shape_cast %289 : vector<1x1x1x8x8x3xf32> to vector<8x8x3xf32>
    %291 = vector.shape_cast %288 : vector<8x8x3xf32> to vector<1x1x1x8x8x3xf32>
    tpu.vector_store %arg8[%c0_292, %c0_293, %c1_294, %c0_295, %c0_296, %c0_297], %291 {strides = array<i32>} : memref<1x2x2x8x8x3xf32, #tpu.memory_space<vmem>>, vector<1x1x1x8x8x3xf32>,
    %c0_298 = arith.constant 0 : index
    %c1_299 = arith.constant 1 : index
    %c1_300 = arith.constant 1 : index
    %c0_301 = arith.constant 0 : index
    %c0_302 = arith.constant 0 : index
    %292 = vector.load %arg10[%c0_298, %c1_299, %c1_300, %c0_301, %c0_302] : memref<2x2x10x10x64xf32, #tpu.memory_space<vmem>>, vector<1x1x8x8x64xf32>
    %293 = vector.shape_cast %292 : vector<1x1x8x8x64xf32> to vector<8x8x64xf32>
    %294 = vector.shape_cast %293 : vector<8x8x64xf32> to vector<64x64xf32>
    %295 = arith.truncf %294 : vector<64x64xf32> to vector<64x64xbf16>
    %c0_303 = arith.constant 0 : index
    %c0_304 = arith.constant 0 : index
    %c1_305 = arith.constant 1 : index
    %c1_306 = arith.constant 1 : index
    %c0_307 = arith.constant 0 : index
    %296 = vector.load %arg10[%c0_303, %c0_304, %c1_305, %c1_306, %c0_307] : memref<2x2x10x10x64xf32, #tpu.memory_space<vmem>>, vector<1x1x8x8x64xf32>
    %297 = vector.shape_cast %296 : vector<1x1x8x8x64xf32> to vector<8x8x64xf32>
    %298 = vector.shape_cast %297 : vector<8x8x64xf32> to vector<64x64xf32>
    %299 = arith.truncf %298 : vector<64x64xf32> to vector<64x64xbf16>
    %c0_308 = arith.constant 0 : index
    %c1_309 = arith.constant 1 : index
    %c1_310 = arith.constant 1 : index
    %c1_311 = arith.constant 1 : index
    %c0_312 = arith.constant 0 : index
    %300 = vector.load %arg10[%c0_308, %c1_309, %c1_310, %c1_311, %c0_312] : memref<2x2x10x10x64xf32, #tpu.memory_space<vmem>>, vector<1x1x8x8x64xf32>
    %301 = vector.shape_cast %300 : vector<1x1x8x8x64xf32> to vector<8x8x64xf32>
    %302 = vector.shape_cast %301 : vector<8x8x64xf32> to vector<64x64xf32>
    %303 = arith.truncf %302 : vector<64x64xf32> to vector<64x64xbf16>
    %c1_313 = arith.constant 1 : index
    %c1_314 = arith.constant 1 : index
    %c1_315 = arith.constant 1 : index
    %c0_316 = arith.constant 0 : index
    %c0_317 = arith.constant 0 : index
    %304 = vector.load %arg10[%c1_313, %c1_314, %c1_315, %c0_316, %c0_317] : memref<2x2x10x10x64xf32, #tpu.memory_space<vmem>>, vector<1x1x8x8x64xf32>
    %305 = vector.shape_cast %304 : vector<1x1x8x8x64xf32> to vector<8x8x64xf32>
    %306 = vector.shape_cast %305 : vector<8x8x64xf32> to vector<64x64xf32>
    %307 = arith.truncf %306 : vector<64x64xf32> to vector<64x64xbf16>
    %c1_318 = arith.constant 1 : index
    %c0_319 = arith.constant 0 : index
    %c1_320 = arith.constant 1 : index
    %c1_321 = arith.constant 1 : index
    %c0_322 = arith.constant 0 : index
    %308 = vector.load %arg10[%c1_318, %c0_319, %c1_320, %c1_321, %c0_322] : memref<2x2x10x10x64xf32, #tpu.memory_space<vmem>>, vector<1x1x8x8x64xf32>
    %309 = vector.shape_cast %308 : vector<1x1x8x8x64xf32> to vector<8x8x64xf32>
    %310 = vector.shape_cast %309 : vector<8x8x64xf32> to vector<64x64xf32>
    %311 = arith.truncf %310 : vector<64x64xf32> to vector<64x64xbf16>
    %c1_323 = arith.constant 1 : index
    %c1_324 = arith.constant 1 : index
    %c1_325 = arith.constant 1 : index
    %c1_326 = arith.constant 1 : index
    %c0_327 = arith.constant 0 : index
    %312 = vector.load %arg10[%c1_323, %c1_324, %c1_325, %c1_326, %c0_327] : memref<2x2x10x10x64xf32, #tpu.memory_space<vmem>>, vector<1x1x8x8x64xf32>
    %313 = vector.shape_cast %312 : vector<1x1x8x8x64xf32> to vector<8x8x64xf32>
    %314 = vector.shape_cast %313 : vector<8x8x64xf32> to vector<64x64xf32>
    %315 = arith.truncf %314 : vector<64x64xf32> to vector<64x64xbf16>
    %c0_328 = arith.constant 0 : index
    %c1_329 = arith.constant 1 : index
    %c2_330 = arith.constant 2 : index
    %c0_331 = arith.constant 0 : index
    %c0_332 = arith.constant 0 : index
    %316 = vector.load %arg10[%c0_328, %c1_329, %c2_330, %c0_331, %c0_332] : memref<2x2x10x10x64xf32, #tpu.memory_space<vmem>>, vector<1x1x8x8x64xf32>
    %317 = vector.shape_cast %316 : vector<1x1x8x8x64xf32> to vector<8x8x64xf32>
    %318 = vector.shape_cast %317 : vector<8x8x64xf32> to vector<64x64xf32>
    %319 = arith.truncf %318 : vector<64x64xf32> to vector<64x64xbf16>
    %c0_333 = arith.constant 0 : index
    %c0_334 = arith.constant 0 : index
    %c2_335 = arith.constant 2 : index
    %c1_336 = arith.constant 1 : index
    %c0_337 = arith.constant 0 : index
    %320 = vector.load %arg10[%c0_333, %c0_334, %c2_335, %c1_336, %c0_337] : memref<2x2x10x10x64xf32, #tpu.memory_space<vmem>>, vector<1x1x8x8x64xf32>
    %321 = vector.shape_cast %320 : vector<1x1x8x8x64xf32> to vector<8x8x64xf32>
    %322 = vector.shape_cast %321 : vector<8x8x64xf32> to vector<64x64xf32>
    %323 = arith.truncf %322 : vector<64x64xf32> to vector<64x64xbf16>
    %c0_338 = arith.constant 0 : index
    %c1_339 = arith.constant 1 : index
    %c2_340 = arith.constant 2 : index
    %c1_341 = arith.constant 1 : index
    %c0_342 = arith.constant 0 : index
    %324 = vector.load %arg10[%c0_338, %c1_339, %c2_340, %c1_341, %c0_342] : memref<2x2x10x10x64xf32, #tpu.memory_space<vmem>>, vector<1x1x8x8x64xf32>
    %325 = vector.shape_cast %324 : vector<1x1x8x8x64xf32> to vector<8x8x64xf32>
    %326 = vector.shape_cast %325 : vector<8x8x64xf32> to vector<64x64xf32>
    %327 = arith.truncf %326 : vector<64x64xf32> to vector<64x64xbf16>
    %328 = tpu.concatenate %295, %299, %303, %307, %311, %315, %319, %323, %327 in 1 : vector<64x64xbf16>, vector<64x64xbf16>, vector<64x64xbf16>, vector<64x64xbf16>, vector<64x64xbf16>, vector<64x64xbf16>, vector<64x64xbf16>, vector<64x64xbf16>, vector<64x64xbf16> -> vector<64x576xbf16>
    %c0_343 = arith.constant 0 : index
    %c0_344 = arith.constant 0 : index
    %329 = vector.load %arg7[%c0_343, %c0_344] : memref<576x3xbf16, #tpu.memory_space<vmem>>, vector<576x3xbf16>
    %cst_345 = arith.constant dense<0.000000e+00> : vector<64x3xf32>
    %330 = tpu.matmul %328, %329, %cst_345 {dimension_numbers = #tpu.dot_dimension_numbers<[1], [0], [0], [1], [0, 0, 1, 1], [], []>} : vector<64x576xbf16>, vector<576x3xbf16>, vector<64x3xf32> -> vector<64x3xf32>
    %331 = arith.mulf %330, %330 : vector<64x3xf32>
    %cst_346 = arith.constant dense<0.000000e+00> : vector<64xf32>
    %332 = vector.multi_reduction <add>, %331, %cst_346 [1] : vector<64x3xf32> to vector<64xf32>
    %333 = vector.shape_cast %332 : vector<64xf32> to vector<64x1xf32>
    %cst_347 = arith.constant 1.000000e-24 : f32
    %334 = vector.broadcast %cst_347 : f32 to vector<64x1xf32>
    %335 = arith.maximumf %333, %334 : vector<64x1xf32>
    %336 = math.rsqrt %335 : vector<64x1xf32>
    %337 = vector.broadcast %336 : vector<64x1xf32> to vector<64x3xf32>
    %338 = arith.mulf %330, %337 : vector<64x3xf32>
    %339 = vector.shape_cast %338 : vector<64x3xf32> to vector<8x8x3xf32>
    %c0_348 = arith.constant 0 : index
    %c1_349 = arith.constant 1 : index
    %c0_350 = arith.constant 0 : index
    %c0_351 = arith.constant 0 : index
    %c0_352 = arith.constant 0 : index
    %c0_353 = arith.constant 0 : index
    %340 = vector.load %arg8[%c0_348, %c1_349, %c0_350, %c0_351, %c0_352, %c0_353] : memref<1x2x2x8x8x3xf32, #tpu.memory_space<vmem>>, vector<1x1x1x8x8x3xf32>
    %341 = vector.shape_cast %340 : vector<1x1x1x8x8x3xf32> to vector<8x8x3xf32>
    %342 = vector.shape_cast %339 : vector<8x8x3xf32> to vector<1x1x1x8x8x3xf32>
    tpu.vector_store %arg8[%c0_348, %c1_349, %c0_350, %c0_351, %c0_352, %c0_353], %342 {strides = array<i32>} : memref<1x2x2x8x8x3xf32, #tpu.memory_space<vmem>>, vector<1x1x1x8x8x3xf32>,
    %c0_354 = arith.constant 0 : index
    %c0_355 = arith.constant 0 : index
    %c1_356 = arith.constant 1 : index
    %c1_357 = arith.constant 1 : index
    %c0_358 = arith.constant 0 : index
    %343 = vector.load %arg10[%c0_354, %c0_355, %c1_356, %c1_357, %c0_358] : memref<2x2x10x10x64xf32, #tpu.memory_space<vmem>>, vector<1x1x8x8x64xf32>
    %344 = vector.shape_cast %343 : vector<1x1x8x8x64xf32> to vector<8x8x64xf32>
    %345 = vector.shape_cast %344 : vector<8x8x64xf32> to vector<64x64xf32>
    %346 = arith.truncf %345 : vector<64x64xf32> to vector<64x64xbf16>
    %c0_359 = arith.constant 0 : index
    %c1_360 = arith.constant 1 : index
    %c1_361 = arith.constant 1 : index
    %c1_362 = arith.constant 1 : index
    %c0_363 = arith.constant 0 : index
    %347 = vector.load %arg10[%c0_359, %c1_360, %c1_361, %c1_362, %c0_363] : memref<2x2x10x10x64xf32, #tpu.memory_space<vmem>>, vector<1x1x8x8x64xf32>
    %348 = vector.shape_cast %347 : vector<1x1x8x8x64xf32> to vector<8x8x64xf32>
    %349 = vector.shape_cast %348 : vector<8x8x64xf32> to vector<64x64xf32>
    %350 = arith.truncf %349 : vector<64x64xf32> to vector<64x64xbf16>
    %c0_364 = arith.constant 0 : index
    %c0_365 = arith.constant 0 : index
    %c1_366 = arith.constant 1 : index
    %c2_367 = arith.constant 2 : index
    %c0_368 = arith.constant 0 : index
    %351 = vector.load %arg10[%c0_364, %c0_365, %c1_366, %c2_367, %c0_368] : memref<2x2x10x10x64xf32, #tpu.memory_space<vmem>>, vector<1x1x8x8x64xf32>
    %352 = vector.shape_cast %351 : vector<1x1x8x8x64xf32> to vector<8x8x64xf32>
    %353 = vector.shape_cast %352 : vector<8x8x64xf32> to vector<64x64xf32>
    %354 = arith.truncf %353 : vector<64x64xf32> to vector<64x64xbf16>
    %c1_369 = arith.constant 1 : index
    %c0_370 = arith.constant 0 : index
    %c1_371 = arith.constant 1 : index
    %c1_372 = arith.constant 1 : index
    %c0_373 = arith.constant 0 : index
    %355 = vector.load %arg10[%c1_369, %c0_370, %c1_371, %c1_372, %c0_373] : memref<2x2x10x10x64xf32, #tpu.memory_space<vmem>>, vector<1x1x8x8x64xf32>
    %356 = vector.shape_cast %355 : vector<1x1x8x8x64xf32> to vector<8x8x64xf32>
    %357 = vector.shape_cast %356 : vector<8x8x64xf32> to vector<64x64xf32>
    %358 = arith.truncf %357 : vector<64x64xf32> to vector<64x64xbf16>
    %c1_374 = arith.constant 1 : index
    %c1_375 = arith.constant 1 : index
    %c1_376 = arith.constant 1 : index
    %c1_377 = arith.constant 1 : index
    %c0_378 = arith.constant 0 : index
    %359 = vector.load %arg10[%c1_374, %c1_375, %c1_376, %c1_377, %c0_378] : memref<2x2x10x10x64xf32, #tpu.memory_space<vmem>>, vector<1x1x8x8x64xf32>
    %360 = vector.shape_cast %359 : vector<1x1x8x8x64xf32> to vector<8x8x64xf32>
    %361 = vector.shape_cast %360 : vector<8x8x64xf32> to vector<64x64xf32>
    %362 = arith.truncf %361 : vector<64x64xf32> to vector<64x64xbf16>
    %c1_379 = arith.constant 1 : index
    %c0_380 = arith.constant 0 : index
    %c1_381 = arith.constant 1 : index
    %c2_382 = arith.constant 2 : index
    %c0_383 = arith.constant 0 : index
    %363 = vector.load %arg10[%c1_379, %c0_380, %c1_381, %c2_382, %c0_383] : memref<2x2x10x10x64xf32, #tpu.memory_space<vmem>>, vector<1x1x8x8x64xf32>
    %364 = vector.shape_cast %363 : vector<1x1x8x8x64xf32> to vector<8x8x64xf32>
    %365 = vector.shape_cast %364 : vector<8x8x64xf32> to vector<64x64xf32>
    %366 = arith.truncf %365 : vector<64x64xf32> to vector<64x64xbf16>
    %c0_384 = arith.constant 0 : index
    %c0_385 = arith.constant 0 : index
    %c2_386 = arith.constant 2 : index
    %c1_387 = arith.constant 1 : index
    %c0_388 = arith.constant 0 : index
    %367 = vector.load %arg10[%c0_384, %c0_385, %c2_386, %c1_387, %c0_388] : memref<2x2x10x10x64xf32, #tpu.memory_space<vmem>>, vector<1x1x8x8x64xf32>
    %368 = vector.shape_cast %367 : vector<1x1x8x8x64xf32> to vector<8x8x64xf32>
    %369 = vector.shape_cast %368 : vector<8x8x64xf32> to vector<64x64xf32>
    %370 = arith.truncf %369 : vector<64x64xf32> to vector<64x64xbf16>
    %c0_389 = arith.constant 0 : index
    %c1_390 = arith.constant 1 : index
    %c2_391 = arith.constant 2 : index
    %c1_392 = arith.constant 1 : index
    %c0_393 = arith.constant 0 : index
    %371 = vector.load %arg10[%c0_389, %c1_390, %c2_391, %c1_392, %c0_393] : memref<2x2x10x10x64xf32, #tpu.memory_space<vmem>>, vector<1x1x8x8x64xf32>
    %372 = vector.shape_cast %371 : vector<1x1x8x8x64xf32> to vector<8x8x64xf32>
    %373 = vector.shape_cast %372 : vector<8x8x64xf32> to vector<64x64xf32>
    %374 = arith.truncf %373 : vector<64x64xf32> to vector<64x64xbf16>
    %c0_394 = arith.constant 0 : index
    %c0_395 = arith.constant 0 : index
    %c2_396 = arith.constant 2 : index
    %c2_397 = arith.constant 2 : index
    %c0_398 = arith.constant 0 : index
    %375 = vector.load %arg10[%c0_394, %c0_395, %c2_396, %c2_397, %c0_398] : memref<2x2x10x10x64xf32, #tpu.memory_space<vmem>>, vector<1x1x8x8x64xf32>
    %376 = vector.shape_cast %375 : vector<1x1x8x8x64xf32> to vector<8x8x64xf32>
    %377 = vector.shape_cast %376 : vector<8x8x64xf32> to vector<64x64xf32>
    %378 = arith.truncf %377 : vector<64x64xf32> to vector<64x64xbf16>
    %379 = tpu.concatenate %346, %350, %354, %358, %362, %366, %370, %374, %378 in 1 : vector<64x64xbf16>, vector<64x64xbf16>, vector<64x64xbf16>, vector<64x64xbf16>, vector<64x64xbf16>, vector<64x64xbf16>, vector<64x64xbf16>, vector<64x64xbf16>, vector<64x64xbf16> -> vector<64x576xbf16>
    %c0_399 = arith.constant 0 : index
    %c0_400 = arith.constant 0 : index
    %380 = vector.load %arg7[%c0_399, %c0_400] : memref<576x3xbf16, #tpu.memory_space<vmem>>, vector<576x3xbf16>
    %cst_401 = arith.constant dense<0.000000e+00> : vector<64x3xf32>
    %381 = tpu.matmul %379, %380, %cst_401 {dimension_numbers = #tpu.dot_dimension_numbers<[1], [0], [0], [1], [0, 0, 1, 1], [], []>} : vector<64x576xbf16>, vector<576x3xbf16>, vector<64x3xf32> -> vector<64x3xf32>
    %382 = arith.mulf %381, %381 : vector<64x3xf32>
    %cst_402 = arith.constant dense<0.000000e+00> : vector<64xf32>
    %383 = vector.multi_reduction <add>, %382, %cst_402 [1] : vector<64x3xf32> to vector<64xf32>
    %384 = vector.shape_cast %383 : vector<64xf32> to vector<64x1xf32>
    %cst_403 = arith.constant 1.000000e-24 : f32
    %385 = vector.broadcast %cst_403 : f32 to vector<64x1xf32>
    %386 = arith.maximumf %384, %385 : vector<64x1xf32>
    %387 = math.rsqrt %386 : vector<64x1xf32>
    %388 = vector.broadcast %387 : vector<64x1xf32> to vector<64x3xf32>
    %389 = arith.mulf %381, %388 : vector<64x3xf32>
    %390 = vector.shape_cast %389 : vector<64x3xf32> to vector<8x8x3xf32>
    %c0_404 = arith.constant 0 : index
    %c1_405 = arith.constant 1 : index
    %c1_406 = arith.constant 1 : index
    %c0_407 = arith.constant 0 : index
    %c0_408 = arith.constant 0 : index
    %c0_409 = arith.constant 0 : index
    %391 = vector.load %arg8[%c0_404, %c1_405, %c1_406, %c0_407, %c0_408, %c0_409] : memref<1x2x2x8x8x3xf32, #tpu.memory_space<vmem>>, vector<1x1x1x8x8x3xf32>
    %392 = vector.shape_cast %391 : vector<1x1x1x8x8x3xf32> to vector<8x8x3xf32>
    %393 = vector.shape_cast %390 : vector<8x8x3xf32> to vector<1x1x1x8x8x3xf32>
    tpu.vector_store %arg8[%c0_404, %c1_405, %c1_406, %c0_407, %c0_408, %c0_409], %393 {strides = array<i32>} : memref<1x2x2x8x8x3xf32, #tpu.memory_space<vmem>>, vector<1x1x1x8x8x3xf32>,
    return
  }
  func.func @transform_0(%arg0: i32) -> (i32, i32, i32, i32, i32) {
    %c0_i32 = arith.constant 0 : i32
    %c0_i32_0 = arith.constant 0 : i32
    %c0_i32_1 = arith.constant 0 : i32
    %c0_i32_2 = arith.constant 0 : i32
    %c0_i32_3 = arith.constant 0 : i32
    return %arg0, %c0_i32, %c0_i32_0, %c0_i32_1, %c0_i32_2 : i32, i32, i32, i32, i32
  }
  func.func @transform_1(%arg0: i32) -> (i32, i32) {
    %c0_i32 = arith.constant 0 : i32
    %c0_i32_0 = arith.constant 0 : i32
    %c0_i32_1 = arith.constant 0 : i32
    return %c0_i32, %c0_i32_0 : i32, i32
  }
  func.func @transform_2(%arg0: i32) -> (i32, i32) {
    %c0_i32 = arith.constant 0 : i32
    %c0_i32_0 = arith.constant 0 : i32
    %c0_i32_1 = arith.constant 0 : i32
    return %c0_i32, %c0_i32_0 : i32, i32
  }
  func.func @transform_3(%arg0: i32) -> (i32, i32) {
    %c0_i32 = arith.constant 0 : i32
    %c0_i32_0 = arith.constant 0 : i32
    %c0_i32_1 = arith.constant 0 : i32
    return %c0_i32, %c0_i32_0 : i32, i32
  }
  func.func @transform_4(%arg0: i32) -> (i32, i32) {
    %c0_i32 = arith.constant 0 : i32
    %c0_i32_0 = arith.constant 0 : i32
    %c0_i32_1 = arith.constant 0 : i32
    return %c0_i32, %c0_i32_0 : i32, i32
  }
  func.func @transform_5(%arg0: i32) -> (i32, i32, i32, i32) {
    %c0_i32 = arith.constant 0 : i32
    %c0_i32_0 = arith.constant 0 : i32
    %c0_i32_1 = arith.constant 0 : i32
    %c0_i32_2 = arith.constant 0 : i32
    %c0_i32_3 = arith.constant 0 : i32
    return %c0_i32, %c0_i32_0, %c0_i32_1, %c0_i32_2 : i32, i32, i32, i32
  }
  func.func @transform_6(%arg0: i32) -> (i32, i32) {
    %c0_i32 = arith.constant 0 : i32
    %c0_i32_0 = arith.constant 0 : i32
    %c0_i32_1 = arith.constant 0 : i32
    return %c0_i32, %c0_i32_0 : i32, i32
  }
  func.func @transform_7(%arg0: i32) -> (i32, i32, i32, i32, i32, i32) {
    %c0_i32 = arith.constant 0 : i32
    %c0_i32_0 = arith.constant 0 : i32
    %c0_i32_1 = arith.constant 0 : i32
    %c0_i32_2 = arith.constant 0 : i32
    %c0_i32_3 = arith.constant 0 : i32
    %c0_i32_4 = arith.constant 0 : i32
    return %arg0, %c0_i32, %c0_i32_0, %c0_i32_1, %c0_i32_2, %c0_i32_3 : i32, i32, i32, i32, i32, i32
  }
}

</mosaic_0001>

<llo_original>
// kernel: regressor_pallas.1
$region0: #{regressor_pallas.1}
  #allocation0 [shape = 'u32[]', space=smem, size = 0x4, offset = 0x4, fixed_abs, tag = 'smem constant byte address 0x4 - core index']
  #allocation1 [shape = 'u32[144,128]{1,0:T(1,128)}', space=vmem, size = 0x12000, scoped, tag = 'internal scratch']
  #allocation2 [shape = 'f32[10,10,128]{2,1,0:T(8,128)}', space=vmem, size = 0x14000, scoped, tag = 'scratch operand']
  #allocation3 [shape = 'f32[2,2,10,10,64]{4,3,2,1,0:T(8,128)}', space=vmem, size = 0x50000, scoped, tag = 'scratch operand']
  %s0 = inlined_call_operand.vmem [shape: f32[2,4,8,8,128], index: 0, kind: input, shape index: {}]
  %s1 = inlined_call_operand.vmem [shape: bf16[1152,128], index: 1, kind: input, shape index: {}]
  %s2 = inlined_call_operand.vmem [shape: f32[1,128], index: 2, kind: input, shape index: {}]
  %s3 = inlined_call_operand.vmem [shape: bf16[1152,128], index: 3, kind: input, shape index: {}]
  %s4 = inlined_call_operand.vmem [shape: f32[1,128], index: 4, kind: input, shape index: {}]
  %s5 = inlined_call_operand.vmem [shape: bf16[2,2,512,64], index: 5, kind: input, shape index: {}]
  %s6 = inlined_call_operand.vmem [shape: bf16[576,3], index: 6, kind: input, shape index: {}]
  %s7 = inlined_call_operand.vmem [shape: f32[2,2,2,8,8,3], index: 7, kind: output, shape index: {}]
  %s8 = sld [smem:[#allocation0]]
  $region61: #{regressor_pallas.1} parent=0
    _
  %s10 = ssub.s32 1, %s8
  %s11 = scalar_select 0, %s10, %s8
  loop: start=0, step=1, limit=4
  $region2: #{regressor_pallas.1} parent=0 // loop_pre_header
    _
  $region3: #{regressor_pallas.1} parent=0 // loop_header
    %s13 = sphi 0, %s17
    %p14 = scmp.ge.s32.totalorder %s13, 4
    %s23 = sphi 0, %s25
    %s26 = sphi 0, %s23
    %s27 = sphi 0, %s26
    %s43 = sphi 0, %s27
    %s47 = sphi 0, %s47
    %s49 = sphi 0, %s47
    %s50 = sphi 0, %s49
    %s64 = sphi 0, %s50
    %s68 = sphi 0, %s68
    %s70 = sphi 0, %s68
    %s71 = sphi 0, %s70
    %s85 = sphi 0, %s71
    %s89 = sphi 0, %s89
    %s91 = sphi 0, %s89
    %s92 = sphi 0, %s91
    %s106 = sphi 0, %s92
    %s110 = sphi 0, %s110
    %s112 = sphi 0, %s110
    %s113 = sphi 0, %s112
    %s127 = sphi 0, %s113
    %s131 = sphi 0, %s131
    %s133 = sphi 0, %s131
    %s134 = sphi 0, %s133
    %s148 = sphi 0, %s134
    %s152 = sphi 0, %s152
    %s154 = sphi 0, %s152
    %s155 = sphi 0, %s154
    %s169 = sphi 0, %s155
    %s175 = sphi 0, %s177
    %s178 = sphi 0, %s175
    %s179 = sphi 0, %s178
    %s195 = sphi 0, %s179
  $region4: #{regressor_pallas.1} parent=0 // loop_header_branch
    %16 = sbr.rel (%p14) target = $region8
  $region5: #{regressor_pallas.1} parent=0 // loop_body
    %s18 = ssub.s32 %s13, 1
    %s19 = ssub.s32 %s13, 2
    %s20 = sadd.s32 %s13, 1
    %s21 = ssub.s32 %s13, %s20
    %p22 = scmp.eq.s32.totalorder %s21, 0
    %s24 = sadd.s32 %s23, 1
    %s25 = scalar_select %p22, %s23, %s24
    %p28 = pneg %p22
    %p29 = scmp.eq.s32.totalorder %s13, 1
    %p30 = por %p28, %p29
    %p31 = scmp.ne.s32.totalorder %s23, %s26
    %p32 = scmp.eq.s32.totalorder %s13, 0
    %p33 = por %p31, %p32
    %p34 = scmp.ne.s32.totalorder %s23, %s26
    %p35 = scmp.eq.s32.totalorder %s18, 1
    %p36 = por %p34, %p35
    %p37 = scmp.ne.s32.totalorder %s26, %s27
    %p38 = scmp.eq.s32.totalorder %s18, 0
    %p39 = por %p37, %p38
    %p40 = scmp.ne.s32.totalorder %s26, %s27
    %p41 = scmp.eq.s32.totalorder %s19, 1
    %p42 = por %p40, %p41
    %p44 = scmp.ne.s32.totalorder %s27, %s43
    %p45 = scmp.eq.s32.totalorder %s19, 0
    %p46 = por %p44, %p45
    %s48 = sadd.s32 %s47, 1
    %p51 = scmp.eq.s32.totalorder %s13, 1
    %p52 = scmp.ne.s32.totalorder %s47, %s49
    %p53 = scmp.eq.s32.totalorder %s13, 0
    %p54 = por %p52, %p53
    %p55 = scmp.ne.s32.totalorder %s47, %s49
    %p56 = scmp.eq.s32.totalorder %s18, 1
    %p57 = por %p55, %p56
    %p58 = scmp.ne.s32.totalorder %s49, %s50
    %p59 = scmp.eq.s32.totalorder %s18, 0
    %p60 = por %p58, %p59
    %p61 = scmp.ne.s32.totalorder %s49, %s50
    %p62 = scmp.eq.s32.totalorder %s19, 1
    %p63 = por %p61, %p62
    %p65 = scmp.ne.s32.totalorder %s50, %s64
    %p66 = scmp.eq.s32.totalorder %s19, 0
    %p67 = por %p65, %p66
    %s69 = sadd.s32 %s68, 1
    %p72 = scmp.eq.s32.totalorder %s13, 1
    %p73 = scmp.ne.s32.totalorder %s68, %s70
    %p74 = scmp.eq.s32.totalorder %s13, 0
    %p75 = por %p73, %p74
    %p76 = scmp.ne.s32.totalorder %s68, %s70
    %p77 = scmp.eq.s32.totalorder %s18, 1
    %p78 = por %p76, %p77
    %p79 = scmp.ne.s32.totalorder %s70, %s71
    %p80 = scmp.eq.s32.totalorder %s18, 0
    %p81 = por %p79, %p80
    %p82 = scmp.ne.s32.totalorder %s70, %s71
    %p83 = scmp.eq.s32.totalorder %s19, 1
    %p84 = por %p82, %p83
    %p86 = scmp.ne.s32.totalorder %s71, %s85
    %p87 = scmp.eq.s32.totalorder %s19, 0
    %p88 = por %p86, %p87
    %s90 = sadd.s32 %s89, 1
    %p93 = scmp.eq.s32.totalorder %s13, 1
    %p94 = scmp.ne.s32.totalorder %s89, %s91
    %p95 = scmp.eq.s32.totalorder %s13, 0
    %p96 = por %p94, %p95
    %p97 = scmp.ne.s32.totalorder %s89, %s91
    %p98 = scmp.eq.s32.totalorder %s18, 1
    %p99 = por %p97, %p98
    %p100 = scmp.ne.s32.totalorder %s91, %s92
    %p101 = scmp.eq.s32.totalorder %s18, 0
    %p102 = por %p100, %p101
    %p103 = scmp.ne.s32.totalorder %s91, %s92
    %p104 = scmp.eq.s32.totalorder %s19, 1
    %p105 = por %p103, %p104
    %p107 = scmp.ne.s32.totalorder %s92, %s106
    %p108 = scmp.eq.s32.totalorder %s19, 0
    %p109 = por %p107, %p108
    %s111 = sadd.s32 %s110, 1
    %p114 = scmp.eq.s32.totalorder %s13, 1
    %p115 = scmp.ne.s32.totalorder %s110, %s112
    %p116 = scmp.eq.s32.totalorder %s13, 0
    %p117 = por %p115, %p116
    %p118 = scmp.ne.s32.totalorder %s110, %s112
    %p119 = scmp.eq.s32.totalorder %s18, 1
    %p120 = por %p118, %p119
    %p121 = scmp.ne.s32.totalorder %s112, %s113
    %p122 = scmp.eq.s32.totalorder %s18, 0
    %p123 = por %p121, %p122
    %p124 = scmp.ne.s32.totalorder %s112, %s113
    %p125 = scmp.eq.s32.totalorder %s19, 1
    %p126 = por %p124, %p125
    %p128 = scmp.ne.s32.totalorder %s113, %s127
    %p129 = scmp.eq.s32.totalorder %s19, 0
    %p130 = por %p128, %p129
    %s132 = sadd.s32 %s131, 1
    %p135 = scmp.eq.s32.totalorder %s13, 1
    %p136 = scmp.ne.s32.totalorder %s131, %s133
    %p137 = scmp.eq.s32.totalorder %s13, 0
    %p138 = por %p136, %p137
    %p139 = scmp.ne.s32.totalorder %s131, %s133
    %p140 = scmp.eq.s32.totalorder %s18, 1
    %p141 = por %p139, %p140
    %p142 = scmp.ne.s32.totalorder %s133, %s134
    %p143 = scmp.eq.s32.totalorder %s18, 0
    %p144 = por %p142, %p143
    %p145 = scmp.ne.s32.totalorder %s133, %s134
    %p146 = scmp.eq.s32.totalorder %s19, 1
    %p147 = por %p145, %p146
    %p149 = scmp.ne.s32.totalorder %s134, %s148
    %p150 = scmp.eq.s32.totalorder %s19, 0
    %p151 = por %p149, %p150
    %s153 = sadd.s32 %s152, 1
    %p156 = scmp.eq.s32.totalorder %s13, 1
    %p157 = scmp.ne.s32.totalorder %s152, %s154
    %p158 = scmp.eq.s32.totalorder %s13, 0
    %p159 = por %p157, %p158
    %p160 = scmp.ne.s32.totalorder %s152, %s154
    %p161 = scmp.eq.s32.totalorder %s18, 1
    %p162 = por %p160, %p161
    %p163 = scmp.ne.s32.totalorder %s154, %s155
    %p164 = scmp.eq.s32.totalorder %s18, 0
    %p165 = por %p163, %p164
    %p166 = scmp.ne.s32.totalorder %s154, %s155
    %p167 = scmp.eq.s32.totalorder %s19, 1
    %p168 = por %p166, %p167
    %p170 = scmp.ne.s32.totalorder %s155, %s169
    %p171 = scmp.eq.s32.totalorder %s19, 0
    %p172 = por %p170, %p171
    %s173 = ssub.s32 %s13, %s20
    %p174 = scmp.eq.s32.totalorder %s173, 0
    %s176 = sadd.s32 %s175, 1
    %s177 = scalar_select %p174, %s175, %s176
    %p180 = pneg %p174
    %p181 = scmp.eq.s32.totalorder %s13, 1
    %p182 = por %p180, %p181
    %p183 = scmp.ne.s32.totalorder %s175, %s178
    %p184 = scmp.eq.s32.totalorder %s13, 0
    %p185 = por %p183, %p184
    %p186 = scmp.ne.s32.totalorder %s175, %s178
    %p187 = scmp.eq.s32.totalorder %s18, 1
    %p188 = por %p186, %p187
    %p189 = scmp.ne.s32.totalorder %s178, %s179
    %p190 = scmp.eq.s32.totalorder %s18, 0
    %p191 = por %p189, %p190
    %p192 = scmp.ne.s32.totalorder %s178, %s179
    %p193 = scmp.eq.s32.totalorder %s19, 1
    %p194 = por %p192, %p193
    %p196 = scmp.ne.s32.totalorder %s179, %s195
    %p197 = scmp.eq.s32.totalorder %s19, 0
    %p198 = por %p196, %p197
    %p199 = scmp.le.s32.totalorder 1, %s13
    %p200 = scmp.lt.s32.totalorder %s13, 3
    %p201 = pnand %p199, %p200
    %p202 = pneg %p201
    // Predicated region
    $region9: #{regressor_pallas.1} parent=5 // pred_check
      _
    $region10: #{regressor_pallas.1} parent=5 // pred_check_branch
      %204 = sbr.rel (%p201) target = $region12
    $region11: #{regressor_pallas.1} parent=5 // pred_region
      %s205 = ssub.s32 %s13, 1
      // Predicated region
      $region13: #{regressor_pallas.1} parent=11 // pred_check
        %p206 = pneg %p60
      $region14: #{regressor_pallas.1} parent=11 // pred_check_branch
        %208 = sbr.rel (%p206) target = $region16
      $region15: #{regressor_pallas.1} parent=11 // pred_region
        _
      $region16: #{regressor_pallas.1} parent=11 // pred_fallthru
        _
      // Predicated region
      $region17: #{regressor_pallas.1} parent=11 // pred_check
        %p209 = pneg %p81
      $region18: #{regressor_pallas.1} parent=11 // pred_check_branch
        %211 = sbr.rel (%p209) target = $region20
      $region19: #{regressor_pallas.1} parent=11 // pred_region
        _
      $region20: #{regressor_pallas.1} parent=11 // pred_fallthru
        _
      // Predicated region
      $region21: #{regressor_pallas.1} parent=11 // pred_check
        %p212 = pneg %p102
      $region22: #{regressor_pallas.1} parent=11 // pred_check_branch
        %214 = sbr.rel (%p212) target = $region24
      $region23: #{regressor_pallas.1} parent=11 // pred_region
        _
      $region24: #{regressor_pallas.1} parent=11 // pred_fallthru
        _
      // Predicated region
      $region25: #{regressor_pallas.1} parent=11 // pred_check
        %p215 = pneg %p123
      $region26: #{regressor_pallas.1} parent=11 // pred_check_branch
        %217 = sbr.rel (%p215) target = $region28
      $region27: #{regressor_pallas.1} parent=11 // pred_region
        _
      $region28: #{regressor_pallas.1} parent=11 // pred_fallthru
        _
      // Predicated region
      $region29: #{regressor_pallas.1} parent=11 // pred_check
        %p218 = pneg %p144
      $region30: #{regressor_pallas.1} parent=11 // pred_check_branch
        %220 = sbr.rel (%p218) target = $region32
      $region31: #{regressor_pallas.1} parent=11 // pred_region
        _
      $region32: #{regressor_pallas.1} parent=11 // pred_fallthru
        _
      // Predicated region
      $region33: #{regressor_pallas.1} parent=11 // pred_check
        %p221 = pneg %p165
      $region34: #{regressor_pallas.1} parent=11 // pred_check_branch
        %223 = sbr.rel (%p221) target = $region36
      $region35: #{regressor_pallas.1} parent=11 // pred_region
        _
      $region36: #{regressor_pallas.1} parent=11 // pred_fallthru
        _
    $region12: #{regressor_pallas.1} parent=5 // pred_fallthru
      _
    %p224 = scmp.lt.s32.totalorder %s13, 2
    // Predicated region
    $region37: #{regressor_pallas.1} parent=5 // pred_check
      %p225 = pneg %p224
    $region38: #{regressor_pallas.1} parent=5 // pred_check_branch
      %227 = sbr.rel (%p225) target = $region40
    $region39: #{regressor_pallas.1} parent=5 // pred_region
      // Predicated region
      $region41: #{regressor_pallas.1} parent=39 // pred_check
        %p228 = pneg %p33
      $region42: #{regressor_pallas.1} parent=39 // pred_check_branch
        %230 = sbr.rel (%p228) target = $region44
      $region43: #{regressor_pallas.1} parent=39 // pred_region
        %p231 = scmp.lt.s32.totalorder %s13, 1
        %s232 = scalar_select %p231, %s13, 1
        %s233 = smul.addr %s232, 32
        %s234 = smul.addr %s233, 8
        %s235 = scalar_lea.vmem %s0, %s234
      $region44: #{regressor_pallas.1} parent=39 // pred_fallthru
        _
    $region40: #{regressor_pallas.1} parent=5 // pred_fallthru
      _
    %p236 = scmp.le.s32.totalorder 1, %s13
    %p237 = scmp.lt.s32.totalorder %s13, 3
    %p238 = pnand %p236, %p237
    %p239 = pneg %p238
    // Predicated region
    $region45: #{regressor_pallas.1} parent=5 // pred_check
      _
    $region46: #{regressor_pallas.1} parent=5 // pred_check_branch
      %241 = sbr.rel (%p238) target = $region48
    $region47: #{regressor_pallas.1} parent=5 // pred_region
      %s242 = ssub.s32 %s13, 1
      %p243 = scmp.lt.s32.totalorder %s18, 1
      %s244 = scalar_select %p243, %s18, 1
      %s245 = smul.addr %s244, 32
      %s246 = smul.addr %s245, 8
      %s247 = scalar_lea.vmem %s0, %s246
      %p248 = pneg %p39
      %p249 = pneg %p36
      %p250 = pneg %p60
      %p251 = pneg %p57
      %p252 = pneg %p81
      %p253 = pneg %p78
      %p254 = pneg %p102
      %p255 = pneg %p99
      %p256 = pneg %p123
      %p257 = pneg %p120
      %p258 = pneg %p144
      %p259 = pneg %p141
      %p260 = pneg %p165
      %p261 = pneg %p162
      %p262 = pneg %p191
      %p263 = pneg %p188
      %p264 = scmp.lt.s32.totalorder %s18, 1
      %s265 = scalar_select %p264, %s18, 1
      %s266 = smul.addr %s265, 32
      %s267 = smul.addr %s266, 8
      %s268 = scalar_lea.vmem %s7, %s267
      %p269 = scmp.lt.s32.totalorder %s18, 1
      %s270 = scalar_select %p269, %s18, 1
      %s271 = smul.addr %s270, 32
      %s272 = smul.addr %s271, 8
      %s273 = scalar_lea.vmem %s0, %s272
      %p274 = scmp.lt.s32.totalorder %s18, 1
      %s275 = scalar_select %p274, %s18, 1
      %s276 = smul.addr %s275, 32
      %s277 = smul.addr %s276, 8
      %s278 = scalar_lea.vmem %s7, %s277
      %280 = vst [vmem:[#allocation2] sm:$0xff] 0.0
      %281 = vst [vmem:[#allocation2 + $0x8] sm:$0x3] 0.0
      %282 = vst [vmem:[#allocation2 + $0x10] sm:$0xff] 0.0
      %283 = vst [vmem:[#allocation2 + $0x18] sm:$0x3] 0.0
      %284 = vst [vmem:[#allocation2 + $0x20] sm:$0xff] 0.0
      %285 = vst [vmem:[#allocation2 + $0x28] sm:$0x3] 0.0
      %286 = vst [vmem:[#allocation2 + $0x30] sm:$0xff] 0.0
      %287 = vst [vmem:[#allocation2 + $0x38] sm:$0x3] 0.0
      %288 = vst [vmem:[#allocation2 + $0x40] sm:$0xff] 0.0
      %289 = vst [vmem:[#allocation2 + $0x48] sm:$0x3] 0.0
      %290 = vst [vmem:[#allocation2 + $0x50] sm:$0xff] 0.0
      %291 = vst [vmem:[#allocation2 + $0x58] sm:$0x3] 0.0
      %292 = vst [vmem:[#allocation2 + $0x60] sm:$0xff] 0.0
      %293 = vst [vmem:[#allocation2 + $0x68] sm:$0x3] 0.0
      %294 = vst [vmem:[#allocation2 + $0x70] sm:$0xff] 0.0
      %295 = vst [vmem:[#allocation2 + $0x78] sm:$0x3] 0.0
      %296 = vst [vmem:[#allocation2 + $0x80] sm:$0xff] 0.0
      %297 = vst [vmem:[#allocation2 + $0x88] sm:$0x3] 0.0
      %298 = vst [vmem:[#allocation2 + $0x90] sm:$0xff] 0.0
      %299 = vst [vmem:[#allocation2 + $0x98] sm:$0x3] 0.0
      %vm300 = vcmask 523264
      %301 = vst.msk [vmem:[#allocation3] sm:$0xff] %vm300, 0.0
      %vm302 = vcmask 517120
      %303 = vst.msk [vmem:[#allocation3 + $0x8] sm:$0x3] %vm302, 0.0
      %304 = vst.msk [vmem:[#allocation3 + $0x10] sm:$0xff] %vm300, 0.0
      %305 = vst.msk [vmem:[#allocation3 + $0x18] sm:$0x3] %vm302, 0.0
      %306 = vst.msk [vmem:[#allocation3 + $0x20] sm:$0xff] %vm300, 0.0
      %307 = vst.msk [vmem:[#allocation3 + $0x28] sm:$0x3] %vm302, 0.0
      %308 = vst.msk [vmem:[#allocation3 + $0x30] sm:$0xff] %vm300, 0.0
      %309 = vst.msk [vmem:[#allocation3 + $0x38] sm:$0x3] %vm302, 0.0
      %310 = vst.msk [vmem:[#allocation3 + $0x40] sm:$0xff] %vm300, 0.0
      %311 = vst.msk [vmem:[#allocation3 + $0x48] sm:$0x3] %vm302, 0.0
      %312 = vst.msk [vmem:[#allocation3 + $0x50] sm:$0xff] %vm300, 0.0
      %313 = vst.msk [vmem:[#allocation3 + $0x58] sm:$0x3] %vm302, 0.0
      %314 = vst.msk [vmem:[#allocation3 + $0x60] sm:$0xff] %vm300, 0.0
      %315 = vst.msk [vmem:[#allocation3 + $0x68] sm:$0x3] %vm302, 0.0
      %316 = vst.msk [vmem:[#allocation3 + $0x70] sm:$0xff] %vm300, 0.0
      %317 = vst.msk [vmem:[#allocation3 + $0x78] sm:$0x3] %vm302, 0.0
      %318 = vst.msk [vmem:[#allocation3 + $0x80] sm:$0xff] %vm300, 0.0
      %319 = vst.msk [vmem:[#allocation3 + $0x88] sm:$0x3] %vm302, 0.0
      %320 = vst.msk [vmem:[#allocation3 + $0x90] sm:$0xff] %vm300, 0.0
      %321 = vst.msk [vmem:[#allocation3 + $0x98] sm:$0x3] %vm302, 0.0
      %322 = vst.msk [vmem:[#allocation3 + $0xa0] sm:$0xff] %vm300, 0.0
      %323 = vst.msk [vmem:[#allocation3 + $0xa8] sm:$0x3] %vm302, 0.0
      %324 = vst.msk [vmem:[#allocation3 + $0xb0] sm:$0xff] %vm300, 0.0
      %325 = vst.msk [vmem:[#allocation3 + $0xb8] sm:$0x3] %vm302, 0.0
      %326 = vst.msk [vmem:[#allocation3 + $0xc0] sm:$0xff] %vm300, 0.0
      %327 = vst.msk [vmem:[#allocation3 + $0xc8] sm:$0x3] %vm302, 0.0
      %328 = vst.msk [vmem:[#allocation3 + $0xd0] sm:$0xff] %vm300, 0.0
      %329 = vst.msk [vmem:[#allocation3 + $0xd8] sm:$0x3] %vm302, 0.0
      %330 = vst.msk [vmem:[#allocation3 + $0xe0] sm:$0xff] %vm300, 0.0
      %331 = vst.msk [vmem:[#allocation3 + $0xe8] sm:$0x3] %vm302, 0.0
      %332 = vst.msk [vmem:[#allocation3 + $0xf0] sm:$0xff] %vm300, 0.0
      %333 = vst.msk [vmem:[#allocation3 + $0xf8] sm:$0x3] %vm302, 0.0
      %334 = vst.msk [vmem:[#allocation3 + $0x100] sm:$0xff] %vm300, 0.0
      %335 = vst.msk [vmem:[#allocation3 + $0x108] sm:$0x3] %vm302, 0.0
      %336 = vst.msk [vmem:[#allocation3 + $0x110] sm:$0xff] %vm300, 0.0
      %337 = vst.msk [vmem:[#allocation3 + $0x118] sm:$0x3] %vm302, 0.0
      %338 = vst.msk [vmem:[#allocation3 + $0x120] sm:$0xff] %vm300, 0.0
      %339 = vst.msk [vmem:[#allocation3 + $0x128] sm:$0x3] %vm302, 0.0
      %340 = vst.msk [vmem:[#allocation3 + $0x130] sm:$0xff] %vm300, 0.0
      %341 = vst.msk [vmem:[#allocation3 + $0x138] sm:$0x3] %vm302, 0.0
      %342 = vst.msk [vmem:[#allocation3 + $0x140] sm:$0xff] %vm300, 0.0
      %343 = vst.msk [vmem:[#allocation3 + $0x148] sm:$0x3] %vm302, 0.0
      %344 = vst.msk [vmem:[#allocation3 + $0x150] sm:$0xff] %vm300, 0.0
      %345 = vst.msk [vmem:[#allocation3 + $0x158] sm:$0x3] %vm302, 0.0
      %346 = vst.msk [vmem:[#allocation3 + $0x160] sm:$0xff] %vm300, 0.0
      %347 = vst.msk [vmem:[#allocation3 + $0x168] sm:$0x3] %vm302, 0.0
      %348 = vst.msk [vmem:[#allocation3 + $0x170] sm:$0xff] %vm300, 0.0
      %349 = vst.msk [vmem:[#allocation3 + $0x178] sm:$0x3] %vm302, 0.0
      %350 = vst.msk [vmem:[#allocation3 + $0x180] sm:$0xff] %vm300, 0.0
      %351 = vst.msk [vmem:[#allocation3 + $0x188] sm:$0x3] %vm302, 0.0
      %352 = vst.msk [vmem:[#allocation3 + $0x190] sm:$0xff] %vm300, 0.0
      %353 = vst.msk [vmem:[#allocation3 + $0x198] sm:$0x3] %vm302, 0.0
      %354 = vst.msk [vmem:[#allocation3 + $0x1a0] sm:$0xff] %vm300, 0.0
      %355 = vst.msk [vmem:[#allocation3 + $0x1a8] sm:$0x3] %vm302, 0.0
      %356 = vst.msk [vmem:[#allocation3 + $0x1b0] sm:$0xff] %vm300, 0.0
      %357 = vst.msk [vmem:[#allocation3 + $0x1b8] sm:$0x3] %vm302, 0.0
      %358 = vst.msk [vmem:[#allocation3 + $0x1c0] sm:$0xff] %vm300, 0.0
      %359 = vst.msk [vmem:[#allocation3 + $0x1c8] sm:$0x3] %vm302, 0.0
      %360 = vst.msk [vmem:[#allocation3 + $0x1d0] sm:$0xff] %vm300, 0.0
      %361 = vst.msk [vmem:[#allocation3 + $0x1d8] sm:$0x3] %vm302, 0.0
      %362 = vst.msk [vmem:[#allocation3 + $0x1e0] sm:$0xff] %vm300, 0.0
      %363 = vst.msk [vmem:[#allocation3 + $0x1e8] sm:$0x3] %vm302, 0.0
      %364 = vst.msk [vmem:[#allocation3 + $0x1f0] sm:$0xff] %vm300, 0.0
      %365 = vst.msk [vmem:[#allocation3 + $0x1f8] sm:$0x3] %vm302, 0.0
      %366 = vst.msk [vmem:[#allocation3 + $0x200] sm:$0xff] %vm300, 0.0
      %367 = vst.msk [vmem:[#allocation3 + $0x208] sm:$0x3] %vm302, 0.0
      %368 = vst.msk [vmem:[#allocation3 + $0x210] sm:$0xff] %vm300, 0.0
      %369 = vst.msk [vmem:[#allocation3 + $0x218] sm:$0x3] %vm302, 0.0
      %370 = vst.msk [vmem:[#allocation3 + $0x220] sm:$0xff] %vm300, 0.0
      %371 = vst.msk [vmem:[#allocation3 + $0x228] sm:$0x3] %vm302, 0.0
      %372 = vst.msk [vmem:[#allocation3 + $0x230] sm:$0xff] %vm300, 0.0
      %373 = vst.msk [vmem:[#allocation3 + $0x238] sm:$0x3] %vm302, 0.0
      %374 = vst.msk [vmem:[#allocation3 + $0x240] sm:$0xff] %vm300, 0.0
      %375 = vst.msk [vmem:[#allocation3 + $0x248] sm:$0x3] %vm302, 0.0
      %376 = vst.msk [vmem:[#allocation3 + $0x250] sm:$0xff] %vm300, 0.0
      %377 = vst.msk [vmem:[#allocation3 + $0x258] sm:$0x3] %vm302, 0.0
      %378 = vst.msk [vmem:[#allocation3 + $0x260] sm:$0xff] %vm300, 0.0
      %379 = vst.msk [vmem:[#allocation3 + $0x268] sm:$0x3] %vm302, 0.0
      %380 = vst.msk [vmem:[#allocation3 + $0x270] sm:$0xff] %vm300, 0.0
      %381 = vst.msk [vmem:[#allocation3 + $0x278] sm:$0x3] %vm302, 0.0
      %v382 = vld [vmem:[%s273] sm:$0xff]
      %v383 = vld [vmem:[%s273 + $0x8] sm:$0xff]
      %v384 = vld [vmem:[%s273 + $0x10] sm:$0xff]
      %v385 = vld [vmem:[%s273 + $0x18] sm:$0xff]
      %v386 = vld [vmem:[%s273 + $0x20] sm:$0xff]
      %v387 = vld [vmem:[%s273 + $0x28] sm:$0xff]
      %v388 = vld [vmem:[%s273 + $0x30] sm:$0xff]
      %v389 = vld [vmem:[%s273 + $0x38] sm:$0xff]
      %v390 = vld [vmem:[%s273 + $0x40] sm:$0xff]
      %v391 = vld [vmem:[%s273 + $0x48] sm:$0xff]
      %v392 = vld [vmem:[%s273 + $0x50] sm:$0xff]
      %v393 = vld [vmem:[%s273 + $0x58] sm:$0xff]
      %v394 = vld [vmem:[%s273 + $0x60] sm:$0xff]
      %v395 = vld [vmem:[%s273 + $0x68] sm:$0xff]
      %v396 = vld [vmem:[%s273 + $0x70] sm:$0xff]
      %v397 = vld [vmem:[%s273 + $0x78] sm:$0xff]
      %v398 = vld [vmem:[%s273 + $0x80] sm:$0xff]
      %v399 = vld [vmem:[%s273 + $0x88] sm:$0xff]
      %v400 = vld [vmem:[%s273 + $0x90] sm:$0xff]
      %v401 = vld [vmem:[%s273 + $0x98] sm:$0xff]
      %v402 = vld [vmem:[%s273 + $0xa0] sm:$0xff]
      %v403 = vld [vmem:[%s273 + $0xa8] sm:$0xff]
      %v404 = vld [vmem:[%s273 + $0xb0] sm:$0xff]
      %v405 = vld [vmem:[%s273 + $0xb8] sm:$0xff]
      %v406 = vld [vmem:[%s273 + $0xc0] sm:$0xff]
      %v407 = vld [vmem:[%s273 + $0xc8] sm:$0xff]
      %v408 = vld [vmem:[%s273 + $0xd0] sm:$0xff]
      %v409 = vld [vmem:[%s273 + $0xd8] sm:$0xff]
      %v410 = vld [vmem:[%s273 + $0xe0] sm:$0xff]
      %v411 = vld [vmem:[%s273 + $0xe8] sm:$0xff]
      %v412 = vld [vmem:[%s273 + $0xf0] sm:$0xff]
      %v413 = vld [vmem:[%s273 + $0xf8] sm:$0xff]
      %v414 = vadd.f32 %v382, %v390
      %v415 = vadd.f32 %v414, %v398
      %v416 = vadd.f32 %v415, %v406
      %v417 = vadd.f32 %v383, %v391
      %v418 = vadd.f32 %v417, %v399
      %v419 = vadd.f32 %v418, %v407
      %v420 = vadd.f32 %v384, %v392
      %v421 = vadd.f32 %v420, %v400
      %v422 = vadd.f32 %v421, %v408
      %v423 = vadd.f32 %v385, %v393
      %v424 = vadd.f32 %v423, %v401
      %v425 = vadd.f32 %v424, %v409
      %v426 = vadd.f32 %v386, %v394
      %v427 = vadd.f32 %v426, %v402
      %v428 = vadd.f32 %v427, %v410
      %v429 = vadd.f32 %v387, %v395
      %v430 = vadd.f32 %v429, %v403
      %v431 = vadd.f32 %v430, %v411
      %v432 = vadd.f32 %v388, %v396
      %v433 = vadd.f32 %v432, %v404
      %v434 = vadd.f32 %v433, %v412
      %v435 = vadd.f32 %v389, %v397
      %v436 = vadd.f32 %v435, %v405
      %v437 = vadd.f32 %v436, %v413
      %v438 = vrcp.pop 4.0
      %v439 = vmul.f32 %v416, %v438
      %v440 = vmul.f32 %v419, %v438
      %v441 = vmul.f32 %v422, %v438
      %v442 = vmul.f32 %v425, %v438
      %v443 = vmul.f32 %v428, %v438
      %v444 = vmul.f32 %v431, %v438
      %v445 = vmul.f32 %v434, %v438
      %v446 = vmul.f32 %v437, %v438
      %s447 = scalar_lea.vmem [#allocation2], 16
      %448 = vst [vmem:[%s447 + $0x1] sm:$0xff] %v439
      %449 = vst [vmem:[%s447 + $0x11] sm:$0xff] %v440
      %450 = vst [vmem:[%s447 + $0x21] sm:$0xff] %v441
      %451 = vst [vmem:[%s447 + $0x31] sm:$0xff] %v442
      %452 = vst [vmem:[%s447 + $0x41] sm:$0xff] %v443
      %453 = vst [vmem:[%s447 + $0x51] sm:$0xff] %v444
      %454 = vst [vmem:[%s447 + $0x61] sm:$0xff] %v445
      %455 = vst [vmem:[%s447 + $0x71] sm:$0xff] %v446
      %v456 = vld [vmem:[#allocation2] sm:$0xff]
      %v457 = vld [vmem:[#allocation2 + $0x10] sm:$0xff]
      %v458 = vld [vmem:[#allocation2 + $0x20] sm:$0xff]
      %v459 = vld [vmem:[#allocation2 + $0x30] sm:$0xff]
      %v460 = vld [vmem:[#allocation2 + $0x40] sm:$0xff]
      %v461 = vld [vmem:[#allocation2 + $0x50] sm:$0xff]
      %v462 = vld [vmem:[#allocation2 + $0x60] sm:$0xff]
      %v463 = vld [vmem:[#allocation2 + $0x70] sm:$0xff]
      %v464 = vpack.c.bf16 %v457, %v456
      %v465 = vpack.c.bf16 %v459, %v458
      %v466 = vpack.c.bf16 %v461, %v460
      %v467 = vpack.c.bf16 %v463, %v462
      %v468 = vld [vmem:[#allocation2 + $0x1] sm:$0xff]
      %v469 = vld [vmem:[#allocation2 + $0x11] sm:$0xff]
      %v470 = vld [vmem:[#allocation2 + $0x21] sm:$0xff]
      %v471 = vld [vmem:[#allocation2 + $0x31] sm:$0xff]
      %v472 = vld [vmem:[#allocation2 + $0x41] sm:$0xff]
      %v473 = vld [vmem:[#allocation2 + $0x51] sm:$0xff]
      %v474 = vld [vmem:[#allocation2 + $0x61] sm:$0xff]
      %v475 = vld [vmem:[#allocation2 + $0x71] sm:$0xff]
      %v476 = vpack.c.bf16 %v469, %v468
      %v477 = vpack.c.bf16 %v471, %v470
      %v478 = vpack.c.bf16 %v473, %v472
      %v479 = vpack.c.bf16 %v475, %v474
      %v480 = vld [vmem:[#allocation2 + $0x2] sm:$0xff]
      %v481 = vld [vmem:[#allocation2 + $0x12] sm:$0xff]
      %v482 = vld [vmem:[#allocation2 + $0x22] sm:$0xff]
      %v483 = vld [vmem:[#allocation2 + $0x32] sm:$0xff]
      %v484 = vld [vmem:[#allocation2 + $0x42] sm:$0xff]
      %v485 = vld [vmem:[#allocation2 + $0x52] sm:$0xff]
      %v486 = vld [vmem:[#allocation2 + $0x62] sm:$0xff]
      %v487 = vld [vmem:[#allocation2 + $0x72] sm:$0xff]
      %v488 = vpack.c.bf16 %v481, %v480
      %v489 = vpack.c.bf16 %v483, %v482
      %v490 = vpack.c.bf16 %v485, %v484
      %v491 = vpack.c.bf16 %v487, %v486
      %v492 = vld [vmem:[%s447] sm:$0xff]
      %v493 = vld [vmem:[%s447 + $0x10] sm:$0xff]
      %v494 = vld [vmem:[%s447 + $0x20] sm:$0xff]
      %v495 = vld [vmem:[%s447 + $0x30] sm:$0xff]
      %v496 = vld [vmem:[%s447 + $0x40] sm:$0xff]
      %v497 = vld [vmem:[%s447 + $0x50] sm:$0xff]
      %v498 = vld [vmem:[%s447 + $0x60] sm:$0xff]
      %v499 = vld [vmem:[%s447 + $0x70] sm:$0xff]
      %v500 = vpack.c.bf16 %v493, %v492
      %v501 = vpack.c.bf16 %v495, %v494
      %v502 = vpack.c.bf16 %v497, %v496
      %v503 = vpack.c.bf16 %v499, %v498
      %v504 = vld [vmem:[%s447 + $0x1] sm:$0xff]
      %v505 = vld [vmem:[%s447 + $0x11] sm:$0xff]
      %v506 = vld [vmem:[%s447 + $0x21] sm:$0xff]
      %v507 = vld [vmem:[%s447 + $0x31] sm:$0xff]
      %v508 = vld [vmem:[%s447 + $0x41] sm:$0xff]
      %v509 = vld [vmem:[%s447 + $0x51] sm:$0xff]
      %v510 = vld [vmem:[%s447 + $0x61] sm:$0xff]
      %v511 = vld [vmem:[%s447 + $0x71] sm:$0xff]
      %v512 = vpack.c.bf16 %v505, %v504
      %v513 = vpack.c.bf16 %v507, %v506
      %v514 = vpack.c.bf16 %v509, %v508
      %v515 = vpack.c.bf16 %v511, %v510
      %v516 = vld [vmem:[%s447 + $0x2] sm:$0xff]
      %v517 = vld [vmem:[%s447 + $0x12] sm:$0xff]
      %v518 = vld [vmem:[%s447 + $0x22] sm:$0xff]
      %v519 = vld [vmem:[%s447 + $0x32] sm:$0xff]
      %v520 = vld [vmem:[%s447 + $0x42] sm:$0xff]
      %v521 = vld [vmem:[%s447 + $0x52] sm:$0xff]
      %v522 = vld [vmem:[%s447 + $0x62] sm:$0xff]
      %v523 = vld [vmem:[%s447 + $0x72] sm:$0xff]
      %v524 = vpack.c.bf16 %v517, %v516
      %v525 = vpack.c.bf16 %v519, %v518
      %v526 = vpack.c.bf16 %v521, %v520
      %v527 = vpack.c.bf16 %v523, %v522
      %s528 = scalar_lea.vmem [#allocation2], 32
      %v529 = vld [vmem:[%s528] sm:$0xff]
      %v530 = vld [vmem:[%s528 + $0x10] sm:$0xff]
      %v531 = vld [vmem:[%s528 + $0x20] sm:$0xff]
      %v532 = vld [vmem:[%s528 + $0x30] sm:$0xff]
      %v533 = vld [vmem:[%s528 + $0x40] sm:$0xff]
      %v534 = vld [vmem:[%s528 + $0x50] sm:$0xff]
      %v535 = vld [vmem:[%s528 + $0x60] sm:$0xff]
      %v536 = vld [vmem:[%s528 + $0x70] sm:$0xff]
      %v537 = vpack.c.bf16 %v530, %v529
      %v538 = vpack.c.bf16 %v532, %v531
      %v539 = vpack.c.bf16 %v534, %v533
      %v540 = vpack.c.bf16 %v536, %v535
      %v541 = vld [vmem:[%s528 + $0x1] sm:$0xff]
      %v542 = vld [vmem:[%s528 + $0x11] sm:$0xff]
      %v543 = vld [vmem:[%s528 + $0x21] sm:$0xff]
      %v544 = vld [vmem:[%s528 + $0x31] sm:$0xff]
      %v545 = vld [vmem:[%s528 + $0x41] sm:$0xff]
      %v546 = vld [vmem:[%s528 + $0x51] sm:$0xff]
      %v547 = vld [vmem:[%s528 + $0x61] sm:$0xff]
      %v548 = vld [vmem:[%s528 + $0x71] sm:$0xff]
      %v549 = vpack.c.bf16 %v542, %v541
      %v550 = vpack.c.bf16 %v544, %v543
      %v551 = vpack.c.bf16 %v546, %v545
      %v552 = vpack.c.bf16 %v548, %v547
      %v553 = vld [vmem:[%s528 + $0x2] sm:$0xff]
      %v554 = vld [vmem:[%s528 + $0x12] sm:$0xff]
      %v555 = vld [vmem:[%s528 + $0x22] sm:$0xff]
      %v556 = vld [vmem:[%s528 + $0x32] sm:$0xff]
      %v557 = vld [vmem:[%s528 + $0x42] sm:$0xff]
      %v558 = vld [vmem:[%s528 + $0x52] sm:$0xff]
      %v559 = vld [vmem:[%s528 + $0x62] sm:$0xff]
      %v560 = vld [vmem:[%s528 + $0x72] sm:$0xff]
      %v561 = vpack.c.bf16 %v554, %v553
      %v562 = vpack.c.bf16 %v556, %v555
      %v563 = vpack.c.bf16 %v558, %v557
      %v564 = vpack.c.bf16 %v560, %v559
      %v565 = vld [vmem:[%s1] sm:$0xf]
      %v566 = vld [vmem:[%s1 + $0x4] sm:$0xf]
      %v567 = vld [vmem:[%s1 + $0x8] sm:$0xf]
      %v568 = vld [vmem:[%s1 + $0xc] sm:$0xf]
      %v569 = vld [vmem:[%s1 + $0x10] sm:$0xf]
      %v570 = vld [vmem:[%s1 + $0x14] sm:$0xf]
      %v571 = vld [vmem:[%s1 + $0x18] sm:$0xf]
      %v572 = vld [vmem:[%s1 + $0x1c] sm:$0xf]
      %v573 = vld [vmem:[%s1 + $0x20] sm:$0xf]
      %v574 = vld [vmem:[%s1 + $0x24] sm:$0xf]
      %v575 = vld [vmem:[%s1 + $0x28] sm:$0xf]
      %v576 = vld [vmem:[%s1 + $0x2c] sm:$0xf]
      %v577 = vld [vmem:[%s1 + $0x30] sm:$0xf]
      %v578 = vld [vmem:[%s1 + $0x34] sm:$0xf]
      %v579 = vld [vmem:[%s1 + $0x38] sm:$0xf]
      %v580 = vld [vmem:[%s1 + $0x3c] sm:$0xf]
      %v581 = vld [vmem:[%s1 + $0x40] sm:$0xf]
      %v582 = vld [vmem:[%s1 + $0x44] sm:$0xf]
      %v583 = vld [vmem:[%s1 + $0x48] sm:$0xf]
      %v584 = vld [vmem:[%s1 + $0x4c] sm:$0xf]
      %v585 = vld [vmem:[%s1 + $0x50] sm:$0xf]
      %v586 = vld [vmem:[%s1 + $0x54] sm:$0xf]
      %v587 = vld [vmem:[%s1 + $0x58] sm:$0xf]
      %v588 = vld [vmem:[%s1 + $0x5c] sm:$0xf]
      %v589 = vld [vmem:[%s1 + $0x60] sm:$0xf]
      %v590 = vld [vmem:[%s1 + $0x64] sm:$0xf]
      %v591 = vld [vmem:[%s1 + $0x68] sm:$0xf]
      %v592 = vld [vmem:[%s1 + $0x6c] sm:$0xf]
      %v593 = vld [vmem:[%s1 + $0x70] sm:$0xf]
      %v594 = vld [vmem:[%s1 + $0x74] sm:$0xf]
      %v595 = vld [vmem:[%s1 + $0x78] sm:$0xf]
      %v596 = vld [vmem:[%s1 + $0x7c] sm:$0xf]
      %v597 = vld [vmem:[%s1 + $0x80] sm:$0xf]
      %v598 = vld [vmem:[%s1 + $0x84] sm:$0xf]
      %v599 = vld [vmem:[%s1 + $0x88] sm:$0xf]
      %v600 = vld [vmem:[%s1 + $0x8c] sm:$0xf]
      %v601 = vld [vmem:[%s1 + $0x90] sm:$0xf]
      %v602 = vld [vmem:[%s1 + $0x94] sm:$0xf]
      %v603 = vld [vmem:[%s1 + $0x98] sm:$0xf]
      %v604 = vld [vmem:[%s1 + $0x9c] sm:$0xf]
      %v605 = vld [vmem:[%s1 + $0xa0] sm:$0xf]
      %v606 = vld [vmem:[%s1 + $0xa4] sm:$0xf]
      %v607 = vld [vmem:[%s1 + $0xa8] sm:$0xf]
      %v608 = vld [vmem:[%s1 + $0xac] sm:$0xf]
      %v609 = vld [vmem:[%s1 + $0xb0] sm:$0xf]
      %v610 = vld [vmem:[%s1 + $0xb4] sm:$0xf]
      %v611 = vld [vmem:[%s1 + $0xb8] sm:$0xf]
      %v612 = vld [vmem:[%s1 + $0xbc] sm:$0xf]
      %v613 = vld [vmem:[%s1 + $0xc0] sm:$0xf]
      %v614 = vld [vmem:[%s1 + $0xc4] sm:$0xf]
      %v615 = vld [vmem:[%s1 + $0xc8] sm:$0xf]
      %v616 = vld [vmem:[%s1 + $0xcc] sm:$0xf]
      %v617 = vld [vmem:[%s1 + $0xd0] sm:$0xf]
      %v618 = vld [vmem:[%s1 + $0xd4] sm:$0xf]
      %v619 = vld [vmem:[%s1 + $0xd8] sm:$0xf]
      %v620 = vld [vmem:[%s1 + $0xdc] sm:$0xf]
      %v621 = vld [vmem:[%s1 + $0xe0] sm:$0xf]
      %v622 = vld [vmem:[%s1 + $0xe4] sm:$0xf]
      %v623 = vld [vmem:[%s1 + $0xe8] sm:$0xf]
      %v624 = vld [vmem:[%s1 + $0xec] sm:$0xf]
      %v625 = vld [vmem:[%s1 + $0xf0] sm:$0xf]
      %v626 = vld [vmem:[%s1 + $0xf4] sm:$0xf]
      %v627 = vld [vmem:[%s1 + $0xf8] sm:$0xf]
      %v628 = vld [vmem:[%s1 + $0xfc] sm:$0xf]
      %v629 = vld [vmem:[%s1 + $0x100] sm:$0xf]
      %v630 = vld [vmem:[%s1 + $0x104] sm:$0xf]
      %v631 = vld [vmem:[%s1 + $0x108] sm:$0xf]
      %v632 = vld [vmem:[%s1 + $0x10c] sm:$0xf]
      %v633 = vld [vmem:[%s1 + $0x110] sm:$0xf]
      %v634 = vld [vmem:[%s1 + $0x114] sm:$0xf]
      %v635 = vld [vmem:[%s1 + $0x118] sm:$0xf]
      %v636 = vld [vmem:[%s1 + $0x11c] sm:$0xf]
      %v637 = vld [vmem:[%s1 + $0x120] sm:$0xf]
      %v638 = vld [vmem:[%s1 + $0x124] sm:$0xf]
      %v639 = vld [vmem:[%s1 + $0x128] sm:$0xf]
      %v640 = vld [vmem:[%s1 + $0x12c] sm:$0xf]
      %v641 = vld [vmem:[%s1 + $0x130] sm:$0xf]
      %v642 = vld [vmem:[%s1 + $0x134] sm:$0xf]
      %v643 = vld [vmem:[%s1 + $0x138] sm:$0xf]
      %v644 = vld [vmem:[%s1 + $0x13c] sm:$0xf]
      %v645 = vld [vmem:[%s1 + $0x140] sm:$0xf]
      %v646 = vld [vmem:[%s1 + $0x144] sm:$0xf]
      %v647 = vld [vmem:[%s1 + $0x148] sm:$0xf]
      %v648 = vld [vmem:[%s1 + $0x14c] sm:$0xf]
      %v649 = vld [vmem:[%s1 + $0x150] sm:$0xf]
      %v650 = vld [vmem:[%s1 + $0x154] sm:$0xf]
      %v651 = vld [vmem:[%s1 + $0x158] sm:$0xf]
      %v652 = vld [vmem:[%s1 + $0x15c] sm:$0xf]
      %v653 = vld [vmem:[%s1 + $0x160] sm:$0xf]
      %v654 = vld [vmem:[%s1 + $0x164] sm:$0xf]
      %v655 = vld [vmem:[%s1 + $0x168] sm:$0xf]
      %v656 = vld [vmem:[%s1 + $0x16c] sm:$0xf]
      %v657 = vld [vmem:[%s1 + $0x170] sm:$0xf]
      %v658 = vld [vmem:[%s1 + $0x174] sm:$0xf]
      %v659 = vld [vmem:[%s1 + $0x178] sm:$0xf]
      %v660 = vld [vmem:[%s1 + $0x17c] sm:$0xf]
      %v661 = vld [vmem:[%s1 + $0x180] sm:$0xf]
      %v662 = vld [vmem:[%s1 + $0x184] sm:$0xf]
      %v663 = vld [vmem:[%s1 + $0x188] sm:$0xf]
      %v664 = vld [vmem:[%s1 + $0x18c] sm:$0xf]
      %v665 = vld [vmem:[%s1 + $0x190] sm:$0xf]
      %v666 = vld [vmem:[%s1 + $0x194] sm:$0xf]
      %v667 = vld [vmem:[%s1 + $0x198] sm:$0xf]
      %v668 = vld [vmem:[%s1 + $0x19c] sm:$0xf]
      %v669 = vld [vmem:[%s1 + $0x1a0] sm:$0xf]
      %v670 = vld [vmem:[%s1 + $0x1a4] sm:$0xf]
      %v671 = vld [vmem:[%s1 + $0x1a8] sm:$0xf]
      %v672 = vld [vmem:[%s1 + $0x1ac] sm:$0xf]
      %v673 = vld [vmem:[%s1 + $0x1b0] sm:$0xf]
      %v674 = vld [vmem:[%s1 + $0x1b4] sm:$0xf]
      %v675 = vld [vmem:[%s1 + $0x1b8] sm:$0xf]
      %v676 = vld [vmem:[%s1 + $0x1bc] sm:$0xf]
      %v677 = vld [vmem:[%s1 + $0x1c0] sm:$0xf]
      %v678 = vld [vmem:[%s1 + $0x1c4] sm:$0xf]
      %v679 = vld [vmem:[%s1 + $0x1c8] sm:$0xf]
      %v680 = vld [vmem:[%s1 + $0x1cc] sm:$0xf]
      %v681 = vld [vmem:[%s1 + $0x1d0] sm:$0xf]
      %v682 = vld [vmem:[%s1 + $0x1d4] sm:$0xf]
      %v683 = vld [vmem:[%s1 + $0x1d8] sm:$0xf]
      %v684 = vld [vmem:[%s1 + $0x1dc] sm:$0xf]
      %v685 = vld [vmem:[%s1 + $0x1e0] sm:$0xf]
      %v686 = vld [vmem:[%s1 + $0x1e4] sm:$0xf]
      %v687 = vld [vmem:[%s1 + $0x1e8] sm:$0xf]
      %v688 = vld [vmem:[%s1 + $0x1ec] sm:$0xf]
      %v689 = vld [vmem:[%s1 + $0x1f0] sm:$0xf]
      %v690 = vld [vmem:[%s1 + $0x1f4] sm:$0xf]
      %v691 = vld [vmem:[%s1 + $0x1f8] sm:$0xf]
      %v692 = vld [vmem:[%s1 + $0x1fc] sm:$0xf]
      %v693 = vld [vmem:[%s1 + $0x200] sm:$0xf]
      %v694 = vld [vmem:[%s1 + $0x204] sm:$0xf]
      %v695 = vld [vmem:[%s1 + $0x208] sm:$0xf]
      %v696 = vld [vmem:[%s1 + $0x20c] sm:$0xf]
      %v697 = vld [vmem:[%s1 + $0x210] sm:$0xf]
      %v698 = vld [vmem:[%s1 + $0x214] sm:$0xf]
      %v699 = vld [vmem:[%s1 + $0x218] sm:$0xf]
      %v700 = vld [vmem:[%s1 + $0x21c] sm:$0xf]
      %v701 = vld [vmem:[%s1 + $0x220] sm:$0xf]
      %v702 = vld [vmem:[%s1 + $0x224] sm:$0xf]
      %v703 = vld [vmem:[%s1 + $0x228] sm:$0xf]
      %v704 = vld [vmem:[%s1 + $0x22c] sm:$0xf]
      %v705 = vld [vmem:[%s1 + $0x230] sm:$0xf]
      %v706 = vld [vmem:[%s1 + $0x234] sm:$0xf]
      %v707 = vld [vmem:[%s1 + $0x238] sm:$0xf]
      %v708 = vld [vmem:[%s1 + $0x23c] sm:$0xf]
      %v709 = vld [vmem:[%s2] sm:$0x1]
      %v711 = vlaneseq
      %v712 = vshrl.u32 %v711, 7
      %v713 = vsub.s32 0, %v712
      %v714 = vrot.slane %v709, %v713
      %v860 = vunpack.c.l.b16 %v565
      %v861 = vunpack.c.l.b16 %v566
      %v862 = vunpack.c.l.b16 %v567
      %v863 = vunpack.c.l.b16 %v568
      %v864 = vunpack.c.l.b16 %v569
      %v865 = vunpack.c.l.b16 %v570
      %v866 = vunpack.c.l.b16 %v571
      %v867 = vunpack.c.l.b16 %v572
      %v868 = vunpack.c.l.b16 %v573
      %v869 = vunpack.c.l.b16 %v574
      %v870 = vunpack.c.l.b16 %v575
      %v871 = vunpack.c.l.b16 %v576
      %v872 = vunpack.c.l.b16 %v577
      %v873 = vunpack.c.l.b16 %v578
      %v874 = vunpack.c.l.b16 %v579
      %v875 = vunpack.c.l.b16 %v580
      %v876 = vunpack.c.l.b16 %v581
      %v877 = vunpack.c.l.b16 %v582
      %v878 = vunpack.c.l.b16 %v583
      %v879 = vunpack.c.l.b16 %v584
      %v880 = vunpack.c.l.b16 %v585
      %v881 = vunpack.c.l.b16 %v586
      %v882 = vunpack.c.l.b16 %v587
      %v883 = vunpack.c.l.b16 %v588
      %v884 = vunpack.c.l.b16 %v589
      %v885 = vunpack.c.l.b16 %v590
      %v886 = vunpack.c.l.b16 %v591
      %v887 = vunpack.c.l.b16 %v592
      %v888 = vunpack.c.l.b16 %v593
      %v889 = vunpack.c.l.b16 %v594
      %v890 = vunpack.c.l.b16 %v595
      %v891 = vunpack.c.l.b16 %v596
      %v892 = vunpack.c.l.b16 %v597
      %v893 = vunpack.c.l.b16 %v598
      %v894 = vunpack.c.l.b16 %v599
      %v895 = vunpack.c.l.b16 %v600
      %v896 = vunpack.c.l.b16 %v601
      %v897 = vunpack.c.l.b16 %v602
      %v898 = vunpack.c.l.b16 %v603
      %v899 = vunpack.c.l.b16 %v604
      %v900 = vunpack.c.l.b16 %v605
      %v901 = vunpack.c.l.b16 %v606
      %v902 = vunpack.c.l.b16 %v607
      %v903 = vunpack.c.l.b16 %v608
      %v904 = vunpack.c.l.b16 %v609
      %v905 = vunpack.c.l.b16 %v610
      %v906 = vunpack.c.l.b16 %v611
      %v907 = vunpack.c.l.b16 %v612
      %v908 = vunpack.c.l.b16 %v613
      %v909 = vunpack.c.l.b16 %v614
      %v910 = vunpack.c.l.b16 %v615
      %v911 = vunpack.c.l.b16 %v616
      %v912 = vunpack.c.l.b16 %v617
      %v913 = vunpack.c.l.b16 %v618
      %v914 = vunpack.c.l.b16 %v619
      %v915 = vunpack.c.l.b16 %v620
      %v916 = vunpack.c.l.b16 %v621
      %v917 = vunpack.c.l.b16 %v622
      %v918 = vunpack.c.l.b16 %v623
      %v919 = vunpack.c.l.b16 %v624
      %v920 = vunpack.c.l.b16 %v625
      %v921 = vunpack.c.l.b16 %v626
      %v922 = vunpack.c.l.b16 %v627
      %v923 = vunpack.c.l.b16 %v628
      %v924 = vunpack.c.l.b16 %v629
      %v925 = vunpack.c.l.b16 %v630
      %v926 = vunpack.c.l.b16 %v631
      %v927 = vunpack.c.l.b16 %v632
      %v928 = vunpack.c.l.b16 %v633
      %v929 = vunpack.c.l.b16 %v634
      %v930 = vunpack.c.l.b16 %v635
      %v931 = vunpack.c.l.b16 %v636
      %v932 = vunpack.c.l.b16 %v637
      %v933 = vunpack.c.l.b16 %v638
      %v934 = vunpack.c.l.b16 %v639
      %v935 = vunpack.c.l.b16 %v640
      %v936 = vunpack.c.l.b16 %v641
      %v937 = vunpack.c.l.b16 %v642
      %v938 = vunpack.c.l.b16 %v643
      %v939 = vunpack.c.l.b16 %v644
      %v940 = vunpack.c.l.b16 %v645
      %v941 = vunpack.c.l.b16 %v646
      %v942 = vunpack.c.l.b16 %v647
      %v943 = vunpack.c.l.b16 %v648
      %v944 = vunpack.c.l.b16 %v649
      %v945 = vunpack.c.l.b16 %v650
      %v946 = vunpack.c.l.b16 %v651
      %v947 = vunpack.c.l.b16 %v652
      %v948 = vunpack.c.l.b16 %v653
      %v949 = vunpack.c.l.b16 %v654
      %v950 = vunpack.c.l.b16 %v655
      %v951 = vunpack.c.l.b16 %v656
      %v952 = vunpack.c.l.b16 %v657
      %v953 = vunpack.c.l.b16 %v658
      %v954 = vunpack.c.l.b16 %v659
      %v955 = vunpack.c.l.b16 %v660
      %v956 = vunpack.c.l.b16 %v661
      %v957 = vunpack.c.l.b16 %v662
      %v958 = vunpack.c.l.b16 %v663
      %v959 = vunpack.c.l.b16 %v664
      %v960 = vunpack.c.l.b16 %v665
      %v961 = vunpack.c.l.b16 %v666
      %v962 = vunpack.c.l.b16 %v667
      %v963 = vunpack.c.l.b16 %v668
      %v964 = vunpack.c.l.b16 %v669
      %v965 = vunpack.c.l.b16 %v670
      %v966 = vunpack.c.l.b16 %v671
      %v967 = vunpack.c.l.b16 %v672
      %v968 = vunpack.c.l.b16 %v673
      %v969 = vunpack.c.l.b16 %v674
      %v970 = vunpack.c.l.b16 %v675
      %v971 = vunpack.c.l.b16 %v676
      %v972 = vunpack.c.l.b16 %v677
      %v973 = vunpack.c.l.b16 %v678
      %v974 = vunpack.c.l.b16 %v679
      %v975 = vunpack.c.l.b16 %v680
      %v976 = vunpack.c.l.b16 %v681
      %v977 = vunpack.c.l.b16 %v682
      %v978 = vunpack.c.l.b16 %v683
      %v979 = vunpack.c.l.b16 %v684
      %v980 = vunpack.c.l.b16 %v685
      %v981 = vunpack.c.l.b16 %v686
      %v982 = vunpack.c.l.b16 %v687
      %v983 = vunpack.c.l.b16 %v688
      %v984 = vunpack.c.l.b16 %v689
      %v985 = vunpack.c.l.b16 %v690
      %v986 = vunpack.c.l.b16 %v691
      %v987 = vunpack.c.l.b16 %v692
      %v988 = vunpack.c.l.b16 %v693
      %v989 = vunpack.c.l.b16 %v694
      %v990 = vunpack.c.l.b16 %v695
      %v991 = vunpack.c.l.b16 %v696
      %v992 = vunpack.c.l.b16 %v697
      %v993 = vunpack.c.l.b16 %v698
      %v994 = vunpack.c.l.b16 %v699
      %v995 = vunpack.c.l.b16 %v700
      %v996 = vunpack.c.l.b16 %v701
      %v997 = vunpack.c.l.b16 %v702
      %v998 = vunpack.c.l.b16 %v703
      %v999 = vunpack.c.l.b16 %v704
      %v1000 = vunpack.c.l.b16 %v705
      %v1001 = vunpack.c.l.b16 %v706
      %v1002 = vunpack.c.l.b16 %v707
      %v1003 = vunpack.c.l.b16 %v708
      %v1004 = vpack.c.b16 %v861, %v860
      %v1005 = vpack.c.b16 %v863, %v862
      %v1006 = vpack.c.b16 %v865, %v864
      %v1007 = vpack.c.b16 %v867, %v866
      %v1008 = vpack.c.b16 %v869, %v868
      %v1009 = vpack.c.b16 %v871, %v870
      %v1010 = vpack.c.b16 %v873, %v872
      %v1011 = vpack.c.b16 %v875, %v874
      %v1012 = vpack.c.b16 %v877, %v876
      %v1013 = vpack.c.b16 %v879, %v878
      %v1014 = vpack.c.b16 %v881, %v880
      %v1015 = vpack.c.b16 %v883, %v882
      %v1016 = vpack.c.b16 %v885, %v884
      %v1017 = vpack.c.b16 %v887, %v886
      %v1018 = vpack.c.b16 %v889, %v888
      %v1019 = vpack.c.b16 %v891, %v890
      %v1020 = vpack.c.b16 %v893, %v892
      %v1021 = vpack.c.b16 %v895, %v894
      %v1022 = vpack.c.b16 %v897, %v896
      %v1023 = vpack.c.b16 %v899, %v898
      %v1024 = vpack.c.b16 %v901, %v900
      %v1025 = vpack.c.b16 %v903, %v902
      %v1026 = vpack.c.b16 %v905, %v904
      %v1027 = vpack.c.b16 %v907, %v906
      %v1028 = vpack.c.b16 %v909, %v908
      %v1029 = vpack.c.b16 %v911, %v910
      %v1030 = vpack.c.b16 %v913, %v912
      %v1031 = vpack.c.b16 %v915, %v914
      %v1032 = vpack.c.b16 %v917, %v916
      %v1033 = vpack.c.b16 %v919, %v918
      %v1034 = vpack.c.b16 %v921, %v920
      %v1035 = vpack.c.b16 %v923, %v922
      %v1036 = vpack.c.b16 %v925, %v924
      %v1037 = vpack.c.b16 %v927, %v926
      %v1038 = vpack.c.b16 %v929, %v928
      %v1039 = vpack.c.b16 %v931, %v930
      %v1040 = vpack.c.b16 %v933, %v932
      %v1041 = vpack.c.b16 %v935, %v934
      %v1042 = vpack.c.b16 %v937, %v936
      %v1043 = vpack.c.b16 %v939, %v938
      %v1044 = vpack.c.b16 %v941, %v940
      %v1045 = vpack.c.b16 %v943, %v942
      %v1046 = vpack.c.b16 %v945, %v944
      %v1047 = vpack.c.b16 %v947, %v946
      %v1048 = vpack.c.b16 %v949, %v948
      %v1049 = vpack.c.b16 %v951, %v950
      %v1050 = vpack.c.b16 %v953, %v952
      %v1051 = vpack.c.b16 %v955, %v954
      %v1052 = vpack.c.b16 %v957, %v956
      %v1053 = vpack.c.b16 %v959, %v958
      %v1054 = vpack.c.b16 %v961, %v960
      %v1055 = vpack.c.b16 %v963, %v962
      %v1056 = vpack.c.b16 %v965, %v964
      %v1057 = vpack.c.b16 %v967, %v966
      %v1058 = vpack.c.b16 %v969, %v968
      %v1059 = vpack.c.b16 %v971, %v970
      %v1060 = vpack.c.b16 %v973, %v972
      %v1061 = vpack.c.b16 %v975, %v974
      %v1062 = vpack.c.b16 %v977, %v976
      %v1063 = vpack.c.b16 %v979, %v978
      %v1064 = vpack.c.b16 %v981, %v980
      %v1065 = vpack.c.b16 %v983, %v982
      %v1066 = vpack.c.b16 %v985, %v984
      %v1067 = vpack.c.b16 %v987, %v986
      %v1068 = vpack.c.b16 %v989, %v988
      %v1069 = vpack.c.b16 %v991, %v990
      %v1070 = vpack.c.b16 %v993, %v992
      %v1071 = vpack.c.b16 %v995, %v994
      %v1072 = vpack.c.b16 %v997, %v996
      %v1073 = vpack.c.b16 %v999, %v998
      %v1074 = vpack.c.b16 %v1001, %v1000
      %v1075 = vpack.c.b16 %v1003, %v1002
      %1148 = vmatprep.subr.bf16.mxu0 0
      %1149 = vmatpush1.bf16.msra.mxu0 %v1004
      %1150 = vmatprep.subr.bf16.mxu0 0
      %1151 = vmatpush1.bf16.msra.mxu0 %v1005
      %1152 = vmatprep.subr.bf16.mxu0 0
      %1153 = vmatpush1.bf16.msra.mxu0 %v1006
      %1154 = vmatprep.subr.bf16.mxu0 0
      %1155 = vmatpush1.bf16.msra.mxu0 %v1007
      %1156 = vmatprep.subr.bf16.mxu0 0
      %1157 = vmatpush1.bf16.msra.mxu0 %v1008
      %1158 = vmatprep.subr.bf16.mxu0 0
      %1159 = vmatpush1.bf16.msra.mxu0 %v1009
      %1160 = vmatprep.subr.bf16.mxu0 0
      %1161 = vmatpush1.bf16.msra.mxu0 %v1010
      %1162 = vmatprep.subr.bf16.mxu0 0
      %1163 = vmatpush1.bf16.msra.mxu0 %v1011
      %1164 = vmatprep.subr.bf16.mxu0 0
      %1165 = vmatpush1.bf16.msra.mxu0 %v1012
      %1166 = vmatprep.subr.bf16.mxu0 0
      %1167 = vmatpush1.bf16.msra.mxu0 %v1013
      %1168 = vmatprep.subr.bf16.mxu0 0
      %1169 = vmatpush1.bf16.msra.mxu0 %v1014
      %1170 = vmatprep.subr.bf16.mxu0 0
      %1171 = vmatpush1.bf16.msra.mxu0 %v1015
      %1172 = vmatprep.subr.bf16.mxu0 0
      %1173 = vmatpush1.bf16.msra.mxu0 %v1016
      %1174 = vmatprep.subr.bf16.mxu0 0
      %1175 = vmatpush1.bf16.msra.mxu0 %v1017
      %1176 = vmatprep.subr.bf16.mxu0 0
      %1177 = vmatpush1.bf16.msra.mxu0 %v1018
      %1178 = vmatprep.subr.bf16.mxu0 0
      %1179 = vmatpush1.bf16.msra.mxu0 %v1019
      %1180 = vmatprep.mubr.bf16.mxu0 %v476
      %1181 = vmatmul.mubr.bf16.gmra.mrb[0].mxu0 %v464
      %v1182 = vpop.f32.mrb[0].mxu0
      %v1183 = vadd.f32 %v714, %v1182
      %v1184 = vpop.f32.mrb[0].mxu0
      %v1185 = vpop.f32.mrb[0].mxu0
      %v1186 = vadd.f32 %v714, %v1185
      %v1187 = vpop.f32.mrb[0].mxu0
      %1188 = vmatprep.mubr.bf16.mxu0 %v477
      %1189 = vmatmul.mubr.bf16.gmra.mrb[0].mxu0 %v465
      %v1190 = vpop.f32.mrb[0].mxu0
      %v1191 = vadd.f32 %v714, %v1190
      %v1192 = vpop.f32.mrb[0].mxu0
      %v1193 = vpop.f32.mrb[0].mxu0
      %v1194 = vadd.f32 %v714, %v1193
      %v1195 = vpop.f32.mrb[0].mxu0
      %1196 = vmatprep.mubr.bf16.mxu0 %v478
      %1197 = vmatmul.mubr.bf16.gmra.mrb[0].mxu0 %v466
      %v1198 = vpop.f32.mrb[0].mxu0
      %v1199 = vadd.f32 %v714, %v1198
      %v1200 = vpop.f32.mrb[0].mxu0
      %v1201 = vpop.f32.mrb[0].mxu0
      %v1202 = vadd.f32 %v714, %v1201
      %v1203 = vpop.f32.mrb[0].mxu0
      %1204 = vmatprep.mubr.bf16.mxu0 %v479
      %1205 = vmatmul.mubr.bf16.gmra.mrb[0].mxu0 %v467
      %v1206 = vpop.f32.mrb[0].mxu0
      %v1207 = vadd.f32 %v714, %v1206
      %v1208 = vpop.f32.mrb[0].mxu0
      %v1209 = vpop.f32.mrb[0].mxu0
      %v1210 = vadd.f32 %v714, %v1209
      %v1211 = vpop.f32.mrb[0].mxu0
      %1212 = vdwg.mxu0
      %1213 = vmatprep.subr.bf16.mxu0 0
      %1214 = vmatpush1.bf16.msra.mxu0 %v1020
      %1215 = vmatprep.subr.bf16.mxu0 0
      %1216 = vmatpush1.bf16.msra.mxu0 %v1021
      %1217 = vmatprep.subr.bf16.mxu0 0
      %1218 = vmatpush1.bf16.msra.mxu0 %v1022
      %1219 = vmatprep.subr.bf16.mxu0 0
      %1220 = vmatpush1.bf16.msra.mxu0 %v1023
      %1221 = vmatprep.subr.bf16.mxu0 0
      %1222 = vmatpush1.bf16.msra.mxu0 %v1024
      %1223 = vmatprep.subr.bf16.mxu0 0
      %1224 = vmatpush1.bf16.msra.mxu0 %v1025
      %1225 = vmatprep.subr.bf16.mxu0 0
      %1226 = vmatpush1.bf16.msra.mxu0 %v1026
      %1227 = vmatprep.subr.bf16.mxu0 0
      %1228 = vmatpush1.bf16.msra.mxu0 %v1027
      %1229 = vmatprep.subr.bf16.mxu0 0
      %1230 = vmatpush1.bf16.msra.mxu0 %v1028
      %1231 = vmatprep.subr.bf16.mxu0 0
      %1232 = vmatpush1.bf16.msra.mxu0 %v1029
      %1233 = vmatprep.subr.bf16.mxu0 0
      %1234 = vmatpush1.bf16.msra.mxu0 %v1030
      %1235 = vmatprep.subr.bf16.mxu0 0
      %1236 = vmatpush1.bf16.msra.mxu0 %v1031
      %1237 = vmatprep.subr.bf16.mxu0 0
      %1238 = vmatpush1.bf16.msra.mxu0 %v1032
      %1239 = vmatprep.subr.bf16.mxu0 0
      %1240 = vmatpush1.bf16.msra.mxu0 %v1033
      %1241 = vmatprep.subr.bf16.mxu0 0
      %1242 = vmatpush1.bf16.msra.mxu0 %v1034
      %1243 = vmatprep.subr.bf16.mxu0 0
      %1244 = vmatpush1.bf16.msra.mxu0 %v1035
      %1245 = vmatprep.mubr.bf16.mxu0 %v500
      %1246 = vmatmul.mubr.bf16.gmra.mrb[0].mxu0 %v488
      %v1247 = vpop.f32.mrb[0].mxu0
      %v1248 = vadd.f32 %v1183, %v1247
      %v1249 = vpop.f32.mrb[0].mxu0
      %v1250 = vpop.f32.mrb[0].mxu0
      %v1251 = vadd.f32 %v1186, %v1250
      %v1252 = vpop.f32.mrb[0].mxu0
      %1253 = vmatprep.mubr.bf16.mxu0 %v501
      %1254 = vmatmul.mubr.bf16.gmra.mrb[0].mxu0 %v489
      %v1255 = vpop.f32.mrb[0].mxu0
      %v1256 = vadd.f32 %v1191, %v1255
      %v1257 = vpop.f32.mrb[0].mxu0
      %v1258 = vpop.f32.mrb[0].mxu0
      %v1259 = vadd.f32 %v1194, %v1258
      %v1260 = vpop.f32.mrb[0].mxu0
      %1261 = vmatprep.mubr.bf16.mxu0 %v502
      %1262 = vmatmul.mubr.bf16.gmra.mrb[0].mxu0 %v490
      %v1263 = vpop.f32.mrb[0].mxu0
      %v1264 = vadd.f32 %v1199, %v1263
      %v1265 = vpop.f32.mrb[0].mxu0
      %v1266 = vpop.f32.mrb[0].mxu0
      %v1267 = vadd.f32 %v1202, %v1266
      %v1268 = vpop.f32.mrb[0].mxu0
      %1269 = vmatprep.mubr.bf16.mxu0 %v503
      %1270 = vmatmul.mubr.bf16.gmra.mrb[0].mxu0 %v491
      %v1271 = vpop.f32.mrb[0].mxu0
      %v1272 = vadd.f32 %v1207, %v1271
      %v1273 = vpop.f32.mrb[0].mxu0
      %v1274 = vpop.f32.mrb[0].mxu0
      %v1275 = vadd.f32 %v1210, %v1274
      %v1276 = vpop.f32.mrb[0].mxu0
      %1277 = vdwg.mxu0
      %1278 = vmatprep.subr.bf16.mxu0 0
      %1279 = vmatpush1.bf16.msra.mxu0 %v1036
      %1280 = vmatprep.subr.bf16.mxu0 0
      %1281 = vmatpush1.bf16.msra.mxu0 %v1037
      %1282 = vmatprep.subr.bf16.mxu0 0
      %1283 = vmatpush1.bf16.msra.mxu0 %v1038
      %1284 = vmatprep.subr.bf16.mxu0 0
      %1285 = vmatpush1.bf16.msra.mxu0 %v1039
      %1286 = vmatprep.subr.bf16.mxu0 0
      %1287 = vmatpush1.bf16.msra.mxu0 %v1040
      %1288 = vmatprep.subr.bf16.mxu0 0
      %1289 = vmatpush1.bf16.msra.mxu0 %v1041
      %1290 = vmatprep.subr.bf16.mxu0 0
      %1291 = vmatpush1.bf16.msra.mxu0 %v1042
      %1292 = vmatprep.subr.bf16.mxu0 0
      %1293 = vmatpush1.bf16.msra.mxu0 %v1043
      %1294 = vmatprep.subr.bf16.mxu0 0
      %1295 = vmatpush1.bf16.msra.mxu0 %v1044
      %1296 = vmatprep.subr.bf16.mxu0 0
      %1297 = vmatpush1.bf16.msra.mxu0 %v1045
      %1298 = vmatprep.subr.bf16.mxu0 0
      %1299 = vmatpush1.bf16.msra.mxu0 %v1046
      %1300 = vmatprep.subr.bf16.mxu0 0
      %1301 = vmatpush1.bf16.msra.mxu0 %v1047
      %1302 = vmatprep.subr.bf16.mxu0 0
      %1303 = vmatpush1.bf16.msra.mxu0 %v1048
      %1304 = vmatprep.subr.bf16.mxu0 0
      %1305 = vmatpush1.bf16.msra.mxu0 %v1049
      %1306 = vmatprep.subr.bf16.mxu0 0
      %1307 = vmatpush1.bf16.msra.mxu0 %v1050
      %1308 = vmatprep.subr.bf16.mxu0 0
      %1309 = vmatpush1.bf16.msra.mxu0 %v1051
      %1310 = vmatprep.mubr.bf16.mxu0 %v524
      %1311 = vmatmul.mubr.bf16.gmra.mrb[0].mxu0 %v512
      %v1312 = vpop.f32.mrb[0].mxu0
      %v1313 = vadd.f32 %v1248, %v1312
      %v1314 = vpop.f32.mrb[0].mxu0
      %v1315 = vpop.f32.mrb[0].mxu0
      %v1316 = vadd.f32 %v1251, %v1315
      %v1317 = vpop.f32.mrb[0].mxu0
      %1318 = vmatprep.mubr.bf16.mxu0 %v525
      %1319 = vmatmul.mubr.bf16.gmra.mrb[0].mxu0 %v513
      %v1320 = vpop.f32.mrb[0].mxu0
      %v1321 = vadd.f32 %v1256, %v1320
      %v1322 = vpop.f32.mrb[0].mxu0
      %v1323 = vpop.f32.mrb[0].mxu0
      %v1324 = vadd.f32 %v1259, %v1323
      %v1325 = vpop.f32.mrb[0].mxu0
      %1326 = vmatprep.mubr.bf16.mxu0 %v526
      %1327 = vmatmul.mubr.bf16.gmra.mrb[0].mxu0 %v514
      %v1328 = vpop.f32.mrb[0].mxu0
      %v1329 = vadd.f32 %v1264, %v1328
      %v1330 = vpop.f32.mrb[0].mxu0
      %v1331 = vpop.f32.mrb[0].mxu0
      %v1332 = vadd.f32 %v1267, %v1331
      %v1333 = vpop.f32.mrb[0].mxu0
      %1334 = vmatprep.mubr.bf16.mxu0 %v527
      %1335 = vmatmul.mubr.bf16.gmra.mrb[0].mxu0 %v515
      %v1336 = vpop.f32.mrb[0].mxu0
      %v1337 = vadd.f32 %v1272, %v1336
      %v1338 = vpop.f32.mrb[0].mxu0
      %v1339 = vpop.f32.mrb[0].mxu0
      %v1340 = vadd.f32 %v1275, %v1339
      %v1341 = vpop.f32.mrb[0].mxu0
      %1342 = vdwg.mxu0
      %1343 = vmatprep.subr.bf16.mxu0 0
      %1344 = vmatpush1.bf16.msra.mxu0 %v1052
      %1345 = vmatprep.subr.bf16.mxu0 0
      %1346 = vmatpush1.bf16.msra.mxu0 %v1053
      %1347 = vmatprep.subr.bf16.mxu0 0
      %1348 = vmatpush1.bf16.msra.mxu0 %v1054
      %1349 = vmatprep.subr.bf16.mxu0 0
      %1350 = vmatpush1.bf16.msra.mxu0 %v1055
      %1351 = vmatprep.subr.bf16.mxu0 0
      %1352 = vmatpush1.bf16.msra.mxu0 %v1056
      %1353 = vmatprep.subr.bf16.mxu0 0
      %1354 = vmatpush1.bf16.msra.mxu0 %v1057
      %1355 = vmatprep.subr.bf16.mxu0 0
      %1356 = vmatpush1.bf16.msra.mxu0 %v1058
      %1357 = vmatprep.subr.bf16.mxu0 0
      %1358 = vmatpush1.bf16.msra.mxu0 %v1059
      %1359 = vmatprep.subr.bf16.mxu0 0
      %1360 = vmatpush1.bf16.msra.mxu0 %v1060
      %1361 = vmatprep.subr.bf16.mxu0 0
      %1362 = vmatpush1.bf16.msra.mxu0 %v1061
      %1363 = vmatprep.subr.bf16.mxu0 0
      %1364 = vmatpush1.bf16.msra.mxu0 %v1062
      %1365 = vmatprep.subr.bf16.mxu0 0
      %1366 = vmatpush1.bf16.msra.mxu0 %v1063
      %1367 = vmatprep.subr.bf16.mxu0 0
      %1368 = vmatpush1.bf16.msra.mxu0 %v1064
      %1369 = vmatprep.subr.bf16.mxu0 0
      %1370 = vmatpush1.bf16.msra.mxu0 %v1065
      %1371 = vmatprep.subr.bf16.mxu0 0
      %1372 = vmatpush1.bf16.msra.mxu0 %v1066
      %1373 = vmatprep.subr.bf16.mxu0 0
      %1374 = vmatpush1.bf16.msra.mxu0 %v1067
      %1375 = vmatprep.mubr.bf16.mxu0 %v549
      %1376 = vmatmul.mubr.bf16.gmra.mrb[0].mxu0 %v537
      %v1377 = vpop.f32.mrb[0].mxu0
      %v1378 = vadd.f32 %v1313, %v1377
      %v1379 = vpop.f32.mrb[0].mxu0
      %v1380 = vpop.f32.mrb[0].mxu0
      %v1381 = vadd.f32 %v1316, %v1380
      %v1382 = vpop.f32.mrb[0].mxu0
      %1383 = vmatprep.mubr.bf16.mxu0 %v550
      %1384 = vmatmul.mubr.bf16.gmra.mrb[0].mxu0 %v538
      %v1385 = vpop.f32.mrb[0].mxu0
      %v1386 = vadd.f32 %v1321, %v1385
      %v1387 = vpop.f32.mrb[0].mxu0
      %v1388 = vpop.f32.mrb[0].mxu0
      %v1389 = vadd.f32 %v1324, %v1388
      %v1390 = vpop.f32.mrb[0].mxu0
      %1391 = vmatprep.mubr.bf16.mxu0 %v551
      %1392 = vmatmul.mubr.bf16.gmra.mrb[0].mxu0 %v539
      %v1393 = vpop.f32.mrb[0].mxu0
      %v1394 = vadd.f32 %v1329, %v1393
      %v1395 = vpop.f32.mrb[0].mxu0
      %v1396 = vpop.f32.mrb[0].mxu0
      %v1397 = vadd.f32 %v1332, %v1396
      %v1398 = vpop.f32.mrb[0].mxu0
      %1399 = vmatprep.mubr.bf16.mxu0 %v552
      %1400 = vmatmul.mubr.bf16.gmra.mrb[0].mxu0 %v540
      %v1401 = vpop.f32.mrb[0].mxu0
      %v1402 = vadd.f32 %v1337, %v1401
      %v1403 = vpop.f32.mrb[0].mxu0
      %v1404 = vpop.f32.mrb[0].mxu0
      %v1405 = vadd.f32 %v1340, %v1404
      %v1406 = vpop.f32.mrb[0].mxu0
      %1407 = vdwg.mxu0
      %1408 = vmatprep.subr.bf16.mxu0 0
      %1409 = vmatpush1.bf16.msra.mxu0 %v1068
      %1410 = vmatprep.subr.bf16.mxu0 0
      %1411 = vmatpush1.bf16.msra.mxu0 %v1069
      %1412 = vmatprep.subr.bf16.mxu0 0
      %1413 = vmatpush1.bf16.msra.mxu0 %v1070
      %1414 = vmatprep.subr.bf16.mxu0 0
      %1415 = vmatpush1.bf16.msra.mxu0 %v1071
      %1416 = vmatprep.subr.bf16.mxu0 0
      %1417 = vmatpush1.bf16.msra.mxu0 %v1072
      %1418 = vmatprep.subr.bf16.mxu0 0
      %1419 = vmatpush1.bf16.msra.mxu0 %v1073
      %1420 = vmatprep.subr.bf16.mxu0 0
      %1421 = vmatpush1.bf16.msra.mxu0 %v1074
      %1422 = vmatprep.subr.bf16.mxu0 0
      %1423 = vmatpush1.bf16.msra.mxu0 %v1075
      %1424 = vmatprep.subr.bf16.mxu0 0
      %1425 = vmatpush1.bf16.msra.mxu0 0
      %1426 = vmatprep.subr.bf16.mxu0 0
      %1427 = vmatpush1.bf16.msra.mxu0 0
      %1428 = vmatprep.subr.bf16.mxu0 0
      %1429 = vmatpush1.bf16.msra.mxu0 0
      %1430 = vmatprep.subr.bf16.mxu0 0
      %1431 = vmatpush1.bf16.msra.mxu0 0
      %1432 = vmatprep.subr.bf16.mxu0 0
      %1433 = vmatpush1.bf16.msra.mxu0 0
      %1434 = vmatprep.subr.bf16.mxu0 0
      %1435 = vmatpush1.bf16.msra.mxu0 0
      %1436 = vmatprep.subr.bf16.mxu0 0
      %1437 = vmatpush1.bf16.msra.mxu0 0
      %1438 = vmatprep.subr.bf16.mxu0 0
      %1439 = vmatpush1.bf16.msra.mxu0 0
      %1440 = vmatprep.mubr.bf16.mxu0 0
      %1441 = vmatmul.mubr.bf16.gmra.mrb[0].mxu0 %v561
      %v1442 = vpop.f32.mrb[0].mxu0
      %v1443 = vadd.f32 %v1378, %v1442
      %v1444 = vpop.f32.mrb[0].mxu0
      %v1445 = vpop.f32.mrb[0].mxu0
      %v1446 = vadd.f32 %v1381, %v1445
      %v1447 = vpop.f32.mrb[0].mxu0
      %1448 = vmatprep.mubr.bf16.mxu0 0
      %1449 = vmatmul.mubr.bf16.gmra.mrb[0].mxu0 %v562
      %v1450 = vpop.f32.mrb[0].mxu0
      %v1451 = vadd.f32 %v1386, %v1450
      %v1452 = vpop.f32.mrb[0].mxu0
      %v1453 = vpop.f32.mrb[0].mxu0
      %v1454 = vadd.f32 %v1389, %v1453
      %v1455 = vpop.f32.mrb[0].mxu0
      %1456 = vmatprep.mubr.bf16.mxu0 0
      %1457 = vmatmul.mubr.bf16.gmra.mrb[0].mxu0 %v563
      %v1458 = vpop.f32.mrb[0].mxu0
      %v1459 = vadd.f32 %v1394, %v1458
      %v1460 = vpop.f32.mrb[0].mxu0
      %v1461 = vpop.f32.mrb[0].mxu0
      %v1462 = vadd.f32 %v1397, %v1461
      %v1463 = vpop.f32.mrb[0].mxu0
      %1464 = vmatprep.mubr.bf16.mxu0 0
      %1465 = vmatmul.mubr.bf16.gmra.mrb[0].mxu0 %v564
      %v1466 = vpop.f32.mrb[0].mxu0
      %v1467 = vadd.f32 %v1402, %v1466
      %v1468 = vpop.f32.mrb[0].mxu0
      %v1469 = vpop.f32.mrb[0].mxu0
      %v1470 = vadd.f32 %v1405, %v1469
      %v1471 = vpop.f32.mrb[0].mxu0
      %1472 = vdwg.mxu0
      %vm1473 = vcmp.ge.f32.partialorder %v1443, 0.0
      %vm1474 = vcmp.ge.f32.partialorder %v1446, 0.0
      %vm1475 = vcmp.ge.f32.partialorder %v1451, 0.0
      %vm1476 = vcmp.ge.f32.partialorder %v1454, 0.0
      %vm1477 = vcmp.ge.f32.partialorder %v1459, 0.0
      %vm1478 = vcmp.ge.f32.partialorder %v1462, 0.0
      %vm1479 = vcmp.ge.f32.partialorder %v1467, 0.0
      %vm1480 = vcmp.ge.f32.partialorder %v1470, 0.0
      %v1481 = vmul.f32 %v1443, 0.1
      %v1482 = vmul.f32 %v1446, 0.1
      %v1483 = vmul.f32 %v1451, 0.1
      %v1484 = vmul.f32 %v1454, 0.1
      %v1485 = vmul.f32 %v1459, 0.1
      %v1486 = vmul.f32 %v1462, 0.1
      %v1487 = vmul.f32 %v1467, 0.1
      %v1488 = vmul.f32 %v1470, 0.1
      %v1489 = vsel %vm1473, %v1443, %v1481
      %v1490 = vsel %vm1474, %v1446, %v1482
      %v1491 = vsel %vm1475, %v1451, %v1483
      %v1492 = vsel %vm1476, %v1454, %v1484
      %v1493 = vsel %vm1477, %v1459, %v1485
      %v1494 = vsel %vm1478, %v1462, %v1486
      %v1495 = vsel %vm1479, %v1467, %v1487
      %v1496 = vsel %vm1480, %v1470, %v1488
      %1497 = vst [vmem:[%s447 + $0x1] sm:$0xff] %v1489
      %1498 = vst [vmem:[%s447 + $0x11] sm:$0xff] %v1490
      %1499 = vst [vmem:[%s447 + $0x21] sm:$0xff] %v1491
      %1500 = vst [vmem:[%s447 + $0x31] sm:$0xff] %v1492
      %1501 = vst [vmem:[%s447 + $0x41] sm:$0xff] %v1493
      %1502 = vst [vmem:[%s447 + $0x51] sm:$0xff] %v1494
      %1503 = vst [vmem:[%s447 + $0x61] sm:$0xff] %v1495
      %1504 = vst [vmem:[%s447 + $0x71] sm:$0xff] %v1496
      %v1505 = vld [vmem:[#allocation2] sm:$0xff]
      %v1506 = vld [vmem:[#allocation2 + $0x10] sm:$0xff]
      %v1507 = vld [vmem:[#allocation2 + $0x20] sm:$0xff]
      %v1508 = vld [vmem:[#allocation2 + $0x30] sm:$0xff]
      %v1509 = vld [vmem:[#allocation2 + $0x40] sm:$0xff]
      %v1510 = vld [vmem:[#allocation2 + $0x50] sm:$0xff]
      %v1511 = vld [vmem:[#allocation2 + $0x60] sm:$0xff]
      %v1512 = vld [vmem:[#allocation2 + $0x70] sm:$0xff]
      %v1513 = vpack.c.bf16 %v1506, %v1505
      %v1514 = vpack.c.bf16 %v1508, %v1507
      %v1515 = vpack.c.bf16 %v1510, %v1509
      %v1516 = vpack.c.bf16 %v1512, %v1511
      %v1517 = vld [vmem:[#allocation2 + $0x1] sm:$0xff]
      %v1518 = vld [vmem:[#allocation2 + $0x11] sm:$0xff]
      %v1519 = vld [vmem:[#allocation2 + $0x21] sm:$0xff]
      %v1520 = vld [vmem:[#allocation2 + $0x31] sm:$0xff]
      %v1521 = vld [vmem:[#allocation2 + $0x41] sm:$0xff]
      %v1522 = vld [vmem:[#allocation2 + $0x51] sm:$0xff]
      %v1523 = vld [vmem:[#allocation2 + $0x61] sm:$0xff]
      %v1524 = vld [vmem:[#allocation2 + $0x71] sm:$0xff]
      %v1525 = vpack.c.bf16 %v1518, %v1517
      %v1526 = vpack.c.bf16 %v1520, %v1519
      %v1527 = vpack.c.bf16 %v1522, %v1521
      %v1528 = vpack.c.bf16 %v1524, %v1523
      %v1529 = vld [vmem:[#allocation2 + $0x2] sm:$0xff]
      %v1530 = vld [vmem:[#allocation2 + $0x12] sm:$0xff]
      %v1531 = vld [vmem:[#allocation2 + $0x22] sm:$0xff]
      %v1532 = vld [vmem:[#allocation2 + $0x32] sm:$0xff]
      %v1533 = vld [vmem:[#allocation2 + $0x42] sm:$0xff]
      %v1534 = vld [vmem:[#allocation2 + $0x52] sm:$0xff]
      %v1535 = vld [vmem:[#allocation2 + $0x62] sm:$0xff]
      %v1536 = vld [vmem:[#allocation2 + $0x72] sm:$0xff]
      %v1537 = vpack.c.bf16 %v1530, %v1529
      %v1538 = vpack.c.bf16 %v1532, %v1531
      %v1539 = vpack.c.bf16 %v1534, %v1533
      %v1540 = vpack.c.bf16 %v1536, %v1535
      %v1541 = vld [vmem:[%s447] sm:$0xff]
      %v1542 = vld [vmem:[%s447 + $0x10] sm:$0xff]
      %v1543 = vld [vmem:[%s447 + $0x20] sm:$0xff]
      %v1544 = vld [vmem:[%s447 + $0x30] sm:$0xff]
      %v1545 = vld [vmem:[%s447 + $0x40] sm:$0xff]
      %v1546 = vld [vmem:[%s447 + $0x50] sm:$0xff]
      %v1547 = vld [vmem:[%s447 + $0x60] sm:$0xff]
      %v1548 = vld [vmem:[%s447 + $0x70] sm:$0xff]
      %v1549 = vpack.c.bf16 %v1542, %v1541
      %v1550 = vpack.c.bf16 %v1544, %v1543
      %v1551 = vpack.c.bf16 %v1546, %v1545
      %v1552 = vpack.c.bf16 %v1548, %v1547
      %v1553 = vld [vmem:[%s447 + $0x1] sm:$0xff]
      %v1554 = vld [vmem:[%s447 + $0x11] sm:$0xff]
      %v1555 = vld [vmem:[%s447 + $0x21] sm:$0xff]
      %v1556 = vld [vmem:[%s447 + $0x31] sm:$0xff]
      %v1557 = vld [vmem:[%s447 + $0x41] sm:$0xff]
      %v1558 = vld [vmem:[%s447 + $0x51] sm:$0xff]
      %v1559 = vld [vmem:[%s447 + $0x61] sm:$0xff]
      %v1560 = vld [vmem:[%s447 + $0x71] sm:$0xff]
      %v1561 = vpack.c.bf16 %v1554, %v1553
      %v1562 = vpack.c.bf16 %v1556, %v1555
      %v1563 = vpack.c.bf16 %v1558, %v1557
      %v1564 = vpack.c.bf16 %v1560, %v1559
      %v1565 = vld [vmem:[%s447 + $0x2] sm:$0xff]
      %v1566 = vld [vmem:[%s447 + $0x12] sm:$0xff]
      %v1567 = vld [vmem:[%s447 + $0x22] sm:$0xff]
      %v1568 = vld [vmem:[%s447 + $0x32] sm:$0xff]
      %v1569 = vld [vmem:[%s447 + $0x42] sm:$0xff]
      %v1570 = vld [vmem:[%s447 + $0x52] sm:$0xff]
      %v1571 = vld [vmem:[%s447 + $0x62] sm:$0xff]
      %v1572 = vld [vmem:[%s447 + $0x72] sm:$0xff]
      %v1573 = vpack.c.bf16 %v1566, %v1565
      %v1574 = vpack.c.bf16 %v1568, %v1567
      %v1575 = vpack.c.bf16 %v1570, %v1569
      %v1576 = vpack.c.bf16 %v1572, %v1571
      %v1577 = vld [vmem:[%s528] sm:$0xff]
      %v1578 = vld [vmem:[%s528 + $0x10] sm:$0xff]
      %v1579 = vld [vmem:[%s528 + $0x20] sm:$0xff]
      %v1580 = vld [vmem:[%s528 + $0x30] sm:$0xff]
      %v1581 = vld [vmem:[%s528 + $0x40] sm:$0xff]
      %v1582 = vld [vmem:[%s528 + $0x50] sm:$0xff]
      %v1583 = vld [vmem:[%s528 + $0x60] sm:$0xff]
      %v1584 = vld [vmem:[%s528 + $0x70] sm:$0xff]
      %v1585 = vpack.c.bf16 %v1578, %v1577
      %v1586 = vpack.c.bf16 %v1580, %v1579
      %v1587 = vpack.c.bf16 %v1582, %v1581
      %v1588 = vpack.c.bf16 %v1584, %v1583
      %v1589 = vld [vmem:[%s528 + $0x1] sm:$0xff]
      %v1590 = vld [vmem:[%s528 + $0x11] sm:$0xff]
      %v1591 = vld [vmem:[%s528 + $0x21] sm:$0xff]
      %v1592 = vld [vmem:[%s528 + $0x31] sm:$0xff]
      %v1593 = vld [vmem:[%s528 + $0x41] sm:$0xff]
      %v1594 = vld [vmem:[%s528 + $0x51] sm:$0xff]
      %v1595 = vld [vmem:[%s528 + $0x61] sm:$0xff]
      %v1596 = vld [vmem:[%s528 + $0x71] sm:$0xff]
      %v1597 = vpack.c.bf16 %v1590, %v1589
      %v1598 = vpack.c.bf16 %v1592, %v1591
      %v1599 = vpack.c.bf16 %v1594, %v1593
      %v1600 = vpack.c.bf16 %v1596, %v1595
      %v1601 = vld [vmem:[%s528 + $0x2] sm:$0xff]
      %v1602 = vld [vmem:[%s528 + $0x12] sm:$0xff]
      %v1603 = vld [vmem:[%s528 + $0x22] sm:$0xff]
      %v1604 = vld [vmem:[%s528 + $0x32] sm:$0xff]
      %v1605 = vld [vmem:[%s528 + $0x42] sm:$0xff]
      %v1606 = vld [vmem:[%s528 + $0x52] sm:$0xff]
      %v1607 = vld [vmem:[%s528 + $0x62] sm:$0xff]
      %v1608 = vld [vmem:[%s528 + $0x72] sm:$0xff]
      %v1609 = vpack.c.bf16 %v1602, %v1601
      %v1610 = vpack.c.bf16 %v1604, %v1603
      %v1611 = vpack.c.bf16 %v1606, %v1605
      %v1612 = vpack.c.bf16 %v1608, %v1607
      %v1613 = vld [vmem:[%s3] sm:$0xf]
      %v1614 = vld [vmem:[%s3 + $0x4] sm:$0xf]
      %v1615 = vld [vmem:[%s3 + $0x8] sm:$0xf]
      %v1616 = vld [vmem:[%s3 + $0xc] sm:$0xf]
      %v1617 = vld [vmem:[%s3 + $0x10] sm:$0xf]
      %v1618 = vld [vmem:[%s3 + $0x14] sm:$0xf]
      %v1619 = vld [vmem:[%s3 + $0x18] sm:$0xf]
      %v1620 = vld [vmem:[%s3 + $0x1c] sm:$0xf]
      %v1621 = vld [vmem:[%s3 + $0x20] sm:$0xf]
      %v1622 = vld [vmem:[%s3 + $0x24] sm:$0xf]
      %v1623 = vld [vmem:[%s3 + $0x28] sm:$0xf]
      %v1624 = vld [vmem:[%s3 + $0x2c] sm:$0xf]
      %v1625 = vld [vmem:[%s3 + $0x30] sm:$0xf]
      %v1626 = vld [vmem:[%s3 + $0x34] sm:$0xf]
      %v1627 = vld [vmem:[%s3 + $0x38] sm:$0xf]
      %v1628 = vld [vmem:[%s3 + $0x3c] sm:$0xf]
      %v1629 = vld [vmem:[%s3 + $0x40] sm:$0xf]
      %v1630 = vld [vmem:[%s3 + $0x44] sm:$0xf]
      %v1631 = vld [vmem:[%s3 + $0x48] sm:$0xf]
      %v1632 = vld [vmem:[%s3 + $0x4c] sm:$0xf]
      %v1633 = vld [vmem:[%s3 + $0x50] sm:$0xf]
      %v1634 = vld [vmem:[%s3 + $0x54] sm:$0xf]
      %v1635 = vld [vmem:[%s3 + $0x58] sm:$0xf]
      %v1636 = vld [vmem:[%s3 + $0x5c] sm:$0xf]
      %v1637 = vld [vmem:[%s3 + $0x60] sm:$0xf]
      %v1638 = vld [vmem:[%s3 + $0x64] sm:$0xf]
      %v1639 = vld [vmem:[%s3 + $0x68] sm:$0xf]
      %v1640 = vld [vmem:[%s3 + $0x6c] sm:$0xf]
      %v1641 = vld [vmem:[%s3 + $0x70] sm:$0xf]
      %v1642 = vld [vmem:[%s3 + $0x74] sm:$0xf]
      %v1643 = vld [vmem:[%s3 + $0x78] sm:$0xf]
      %v1644 = vld [vmem:[%s3 + $0x7c] sm:$0xf]
      %v1645 = vld [vmem:[%s3 + $0x80] sm:$0xf]
      %v1646 = vld [vmem:[%s3 + $0x84] sm:$0xf]
      %v1647 = vld [vmem:[%s3 + $0x88] sm:$0xf]
      %v1648 = vld [vmem:[%s3 + $0x8c] sm:$0xf]
      %v1649 = vld [vmem:[%s3 + $0x90] sm:$0xf]
      %v1650 = vld [vmem:[%s3 + $0x94] sm:$0xf]
      %v1651 = vld [vmem:[%s3 + $0x98] sm:$0xf]
      %v1652 = vld [vmem:[%s3 + $0x9c] sm:$0xf]
      %v1653 = vld [vmem:[%s3 + $0xa0] sm:$0xf]
      %v1654 = vld [vmem:[%s3 + $0xa4] sm:$0xf]
      %v1655 = vld [vmem:[%s3 + $0xa8] sm:$0xf]
      %v1656 = vld [vmem:[%s3 + $0xac] sm:$0xf]
      %v1657 = vld [vmem:[%s3 + $0xb0] sm:$0xf]
      %v1658 = vld [vmem:[%s3 + $0xb4] sm:$0xf]
      %v1659 = vld [vmem:[%s3 + $0xb8] sm:$0xf]
      %v1660 = vld [vmem:[%s3 + $0xbc] sm:$0xf]
      %v1661 = vld [vmem:[%s3 + $0xc0] sm:$0xf]
      %v1662 = vld [vmem:[%s3 + $0xc4] sm:$0xf]
      %v1663 = vld [vmem:[%s3 + $0xc8] sm:$0xf]
      %v1664 = vld [vmem:[%s3 + $0xcc] sm:$0xf]
      %v1665 = vld [vmem:[%s3 + $0xd0] sm:$0xf]
      %v1666 = vld [vmem:[%s3 + $0xd4] sm:$0xf]
      %v1667 = vld [vmem:[%s3 + $0xd8] sm:$0xf]
      %v1668 = vld [vmem:[%s3 + $0xdc] sm:$0xf]
      %v1669 = vld [vmem:[%s3 + $0xe0] sm:$0xf]
      %v1670 = vld [vmem:[%s3 + $0xe4] sm:$0xf]
      %v1671 = vld [vmem:[%s3 + $0xe8] sm:$0xf]
      %v1672 = vld [vmem:[%s3 + $0xec] sm:$0xf]
      %v1673 = vld [vmem:[%s3 + $0xf0] sm:$0xf]
      %v1674 = vld [vmem:[%s3 + $0xf4] sm:$0xf]
      %v1675 = vld [vmem:[%s3 + $0xf8] sm:$0xf]
      %v1676 = vld [vmem:[%s3 + $0xfc] sm:$0xf]
      %v1677 = vld [vmem:[%s3 + $0x100] sm:$0xf]
      %v1678 = vld [vmem:[%s3 + $0x104] sm:$0xf]
      %v1679 = vld [vmem:[%s3 + $0x108] sm:$0xf]
      %v1680 = vld [vmem:[%s3 + $0x10c] sm:$0xf]
      %v1681 = vld [vmem:[%s3 + $0x110] sm:$0xf]
      %v1682 = vld [vmem:[%s3 + $0x114] sm:$0xf]
      %v1683 = vld [vmem:[%s3 + $0x118] sm:$0xf]
      %v1684 = vld [vmem:[%s3 + $0x11c] sm:$0xf]
      %v1685 = vld [vmem:[%s3 + $0x120] sm:$0xf]
      %v1686 = vld [vmem:[%s3 + $0x124] sm:$0xf]
      %v1687 = vld [vmem:[%s3 + $0x128] sm:$0xf]
      %v1688 = vld [vmem:[%s3 + $0x12c] sm:$0xf]
      %v1689 = vld [vmem:[%s3 + $0x130] sm:$0xf]
      %v1690 = vld [vmem:[%s3 + $0x134] sm:$0xf]
      %v1691 = vld [vmem:[%s3 + $0x138] sm:$0xf]
      %v1692 = vld [vmem:[%s3 + $0x13c] sm:$0xf]
      %v1693 = vld [vmem:[%s3 + $0x140] sm:$0xf]
      %v1694 = vld [vmem:[%s3 + $0x144] sm:$0xf]
      %v1695 = vld [vmem:[%s3 + $0x148] sm:$0xf]
      %v1696 = vld [vmem:[%s3 + $0x14c] sm:$0xf]
      %v1697 = vld [vmem:[%s3 + $0x150] sm:$0xf]
      %v1698 = vld [vmem:[%s3 + $0x154] sm:$0xf]
      %v1699 = vld [vmem:[%s3 + $0x158] sm:$0xf]
      %v1700 = vld [vmem:[%s3 + $0x15c] sm:$0xf]
      %v1701 = vld [vmem:[%s3 + $0x160] sm:$0xf]
      %v1702 = vld [vmem:[%s3 + $0x164] sm:$0xf]
      %v1703 = vld [vmem:[%s3 + $0x168] sm:$0xf]
      %v1704 = vld [vmem:[%s3 + $0x16c] sm:$0xf]
      %v1705 = vld [vmem:[%s3 + $0x170] sm:$0xf]
      %v1706 = vld [vmem:[%s3 + $0x174] sm:$0xf]
      %v1707 = vld [vmem:[%s3 + $0x178] sm:$0xf]
      %v1708 = vld [vmem:[%s3 + $0x17c] sm:$0xf]
      %v1709 = vld [vmem:[%s3 + $0x180] sm:$0xf]
      %v1710 = vld [vmem:[%s3 + $0x184] sm:$0xf]
      %v1711 = vld [vmem:[%s3 + $0x188] sm:$0xf]
      %v1712 = vld [vmem:[%s3 + $0x18c] sm:$0xf]
      %v1713 = vld [vmem:[%s3 + $0x190] sm:$0xf]
      %v1714 = vld [vmem:[%s3 + $0x194] sm:$0xf]
      %v1715 = vld [vmem:[%s3 + $0x198] sm:$0xf]
      %v1716 = vld [vmem:[%s3 + $0x19c] sm:$0xf]
      %v1717 = vld [vmem:[%s3 + $0x1a0] sm:$0xf]
      %v1718 = vld [vmem:[%s3 + $0x1a4] sm:$0xf]
      %v1719 = vld [vmem:[%s3 + $0x1a8] sm:$0xf]
      %v1720 = vld [vmem:[%s3 + $0x1ac] sm:$0xf]
      %v1721 = vld [vmem:[%s3 + $0x1b0] sm:$0xf]
      %v1722 = vld [vmem:[%s3 + $0x1b4] sm:$0xf]
      %v1723 = vld [vmem:[%s3 + $0x1b8] sm:$0xf]
      %v1724 = vld [vmem:[%s3 + $0x1bc] sm:$0xf]
      %v1725 = vld [vmem:[%s3 + $0x1c0] sm:$0xf]
      %v1726 = vld [vmem:[%s3 + $0x1c4] sm:$0xf]
      %v1727 = vld [vmem:[%s3 + $0x1c8] sm:$0xf]
      %v1728 = vld [vmem:[%s3 + $0x1cc] sm:$0xf]
      %v1729 = vld [vmem:[%s3 + $0x1d0] sm:$0xf]
      %v1730 = vld [vmem:[%s3 + $0x1d4] sm:$0xf]
      %v1731 = vld [vmem:[%s3 + $0x1d8] sm:$0xf]
      %v1732 = vld [vmem:[%s3 + $0x1dc] sm:$0xf]
      %v1733 = vld [vmem:[%s3 + $0x1e0] sm:$0xf]
      %v1734 = vld [vmem:[%s3 + $0x1e4] sm:$0xf]
      %v1735 = vld [vmem:[%s3 + $0x1e8] sm:$0xf]
      %v1736 = vld [vmem:[%s3 + $0x1ec] sm:$0xf]
      %v1737 = vld [vmem:[%s3 + $0x1f0] sm:$0xf]
      %v1738 = vld [vmem:[%s3 + $0x1f4] sm:$0xf]
      %v1739 = vld [vmem:[%s3 + $0x1f8] sm:$0xf]
      %v1740 = vld [vmem:[%s3 + $0x1fc] sm:$0xf]
      %v1741 = vld [vmem:[%s3 + $0x200] sm:$0xf]
      %v1742 = vld [vmem:[%s3 + $0x204] sm:$0xf]
      %v1743 = vld [vmem:[%s3 + $0x208] sm:$0xf]
      %v1744 = vld [vmem:[%s3 + $0x20c] sm:$0xf]
      %v1745 = vld [vmem:[%s3 + $0x210] sm:$0xf]
      %v1746 = vld [vmem:[%s3 + $0x214] sm:$0xf]
      %v1747 = vld [vmem:[%s3 + $0x218] sm:$0xf]
      %v1748 = vld [vmem:[%s3 + $0x21c] sm:$0xf]
      %v1749 = vld [vmem:[%s3 + $0x220] sm:$0xf]
      %v1750 = vld [vmem:[%s3 + $0x224] sm:$0xf]
      %v1751 = vld [vmem:[%s3 + $0x228] sm:$0xf]
      %v1752 = vld [vmem:[%s3 + $0x22c] sm:$0xf]
      %v1753 = vld [vmem:[%s3 + $0x230] sm:$0xf]
      %v1754 = vld [vmem:[%s3 + $0x234] sm:$0xf]
      %v1755 = vld [vmem:[%s3 + $0x238] sm:$0xf]
      %v1756 = vld [vmem:[%s3 + $0x23c] sm:$0xf]
      %v1757 = vld [vmem:[%s4] sm:$0x1]
      %v1759 = vlaneseq
      %v1760 = vshrl.u32 %v1759, 7
      %v1761 = vsub.s32 0, %v1760
      %v1762 = vrot.slane %v1757, %v1761
      %v1908 = vunpack.c.l.b16 %v1613
      %v1909 = vunpack.c.l.b16 %v1614
      %v1910 = vunpack.c.l.b16 %v1615
      %v1911 = vunpack.c.l.b16 %v1616
      %v1912 = vunpack.c.l.b16 %v1617
      %v1913 = vunpack.c.l.b16 %v1618
      %v1914 = vunpack.c.l.b16 %v1619
      %v1915 = vunpack.c.l.b16 %v1620
      %v1916 = vunpack.c.l.b16 %v1621
      %v1917 = vunpack.c.l.b16 %v1622
      %v1918 = vunpack.c.l.b16 %v1623
      %v1919 = vunpack.c.l.b16 %v1624
      %v1920 = vunpack.c.l.b16 %v1625
      %v1921 = vunpack.c.l.b16 %v1626
      %v1922 = vunpack.c.l.b16 %v1627
      %v1923 = vunpack.c.l.b16 %v1628
      %v1924 = vunpack.c.l.b16 %v1629
      %v1925 = vunpack.c.l.b16 %v1630
      %v1926 = vunpack.c.l.b16 %v1631
      %v1927 = vunpack.c.l.b16 %v1632
      %v1928 = vunpack.c.l.b16 %v1633
      %v1929 = vunpack.c.l.b16 %v1634
      %v1930 = vunpack.c.l.b16 %v1635
      %v1931 = vunpack.c.l.b16 %v1636
      %v1932 = vunpack.c.l.b16 %v1637
      %v1933 = vunpack.c.l.b16 %v1638
      %v1934 = vunpack.c.l.b16 %v1639
      %v1935 = vunpack.c.l.b16 %v1640
      %v1936 = vunpack.c.l.b16 %v1641
      %v1937 = vunpack.c.l.b16 %v1642
      %v1938 = vunpack.c.l.b16 %v1643
      %v1939 = vunpack.c.l.b16 %v1644
      %v1940 = vunpack.c.l.b16 %v1645
      %v1941 = vunpack.c.l.b16 %v1646
      %v1942 = vunpack.c.l.b16 %v1647
      %v1943 = vunpack.c.l.b16 %v1648
      %v1944 = vunpack.c.l.b16 %v1649
      %v1945 = vunpack.c.l.b16 %v1650
      %v1946 = vunpack.c.l.b16 %v1651
      %v1947 = vunpack.c.l.b16 %v1652
      %v1948 = vunpack.c.l.b16 %v1653
      %v1949 = vunpack.c.l.b16 %v1654
      %v1950 = vunpack.c.l.b16 %v1655
      %v1951 = vunpack.c.l.b16 %v1656
      %v1952 = vunpack.c.l.b16 %v1657
      %v1953 = vunpack.c.l.b16 %v1658
      %v1954 = vunpack.c.l.b16 %v1659
      %v1955 = vunpack.c.l.b16 %v1660
      %v1956 = vunpack.c.l.b16 %v1661
      %v1957 = vunpack.c.l.b16 %v1662
      %v1958 = vunpack.c.l.b16 %v1663
      %v1959 = vunpack.c.l.b16 %v1664
      %v1960 = vunpack.c.l.b16 %v1665
      %v1961 = vunpack.c.l.b16 %v1666
      %v1962 = vunpack.c.l.b16 %v1667
      %v1963 = vunpack.c.l.b16 %v1668
      %v1964 = vunpack.c.l.b16 %v1669
      %v1965 = vunpack.c.l.b16 %v1670
      %v1966 = vunpack.c.l.b16 %v1671
      %v1967 = vunpack.c.l.b16 %v1672
      %v1968 = vunpack.c.l.b16 %v1673
      %v1969 = vunpack.c.l.b16 %v1674
      %v1970 = vunpack.c.l.b16 %v1675
      %v1971 = vunpack.c.l.b16 %v1676
      %v1972 = vunpack.c.l.b16 %v1677
      %v1973 = vunpack.c.l.b16 %v1678
      %v1974 = vunpack.c.l.b16 %v1679
      %v1975 = vunpack.c.l.b16 %v1680
      %v1976 = vunpack.c.l.b16 %v1681
      %v1977 = vunpack.c.l.b16 %v1682
      %v1978 = vunpack.c.l.b16 %v1683
      %v1979 = vunpack.c.l.b16 %v1684
      %v1980 = vunpack.c.l.b16 %v1685
      %v1981 = vunpack.c.l.b16 %v1686
      %v1982 = vunpack.c.l.b16 %v1687
      %v1983 = vunpack.c.l.b16 %v1688
      %v1984 = vunpack.c.l.b16 %v1689
      %v1985 = vunpack.c.l.b16 %v1690
      %v1986 = vunpack.c.l.b16 %v1691
      %v1987 = vunpack.c.l.b16 %v1692
      %v1988 = vunpack.c.l.b16 %v1693
      %v1989 = vunpack.c.l.b16 %v1694
      %v1990 = vunpack.c.l.b16 %v1695
      %v1991 = vunpack.c.l.b16 %v1696
      %v1992 = vunpack.c.l.b16 %v1697
      %v1993 = vunpack.c.l.b16 %v1698
      %v1994 = vunpack.c.l.b16 %v1699
      %v1995 = vunpack.c.l.b16 %v1700
      %v1996 = vunpack.c.l.b16 %v1701
      %v1997 = vunpack.c.l.b16 %v1702
      %v1998 = vunpack.c.l.b16 %v1703
      %v1999 = vunpack.c.l.b16 %v1704
      %v2000 = vunpack.c.l.b16 %v1705
      %v2001 = vunpack.c.l.b16 %v1706
      %v2002 = vunpack.c.l.b16 %v1707
      %v2003 = vunpack.c.l.b16 %v1708
      %v2004 = vunpack.c.l.b16 %v1709
      %v2005 = vunpack.c.l.b16 %v1710
      %v2006 = vunpack.c.l.b16 %v1711
      %v2007 = vunpack.c.l.b16 %v1712
      %v2008 = vunpack.c.l.b16 %v1713
      %v2009 = vunpack.c.l.b16 %v1714
      %v2010 = vunpack.c.l.b16 %v1715
      %v2011 = vunpack.c.l.b16 %v1716
      %v2012 = vunpack.c.l.b16 %v1717
      %v2013 = vunpack.c.l.b16 %v1718
      %v2014 = vunpack.c.l.b16 %v1719
      %v2015 = vunpack.c.l.b16 %v1720
      %v2016 = vunpack.c.l.b16 %v1721
      %v2017 = vunpack.c.l.b16 %v1722
      %v2018 = vunpack.c.l.b16 %v1723
      %v2019 = vunpack.c.l.b16 %v1724
      %v2020 = vunpack.c.l.b16 %v1725
      %v2021 = vunpack.c.l.b16 %v1726
      %v2022 = vunpack.c.l.b16 %v1727
      %v2023 = vunpack.c.l.b16 %v1728
      %v2024 = vunpack.c.l.b16 %v1729
      %v2025 = vunpack.c.l.b16 %v1730
      %v2026 = vunpack.c.l.b16 %v1731
      %v2027 = vunpack.c.l.b16 %v1732
      %v2028 = vunpack.c.l.b16 %v1733
      %v2029 = vunpack.c.l.b16 %v1734
      %v2030 = vunpack.c.l.b16 %v1735
      %v2031 = vunpack.c.l.b16 %v1736
      %v2032 = vunpack.c.l.b16 %v1737
      %v2033 = vunpack.c.l.b16 %v1738
      %v2034 = vunpack.c.l.b16 %v1739
      %v2035 = vunpack.c.l.b16 %v1740
      %v2036 = vunpack.c.l.b16 %v1741
      %v2037 = vunpack.c.l.b16 %v1742
      %v2038 = vunpack.c.l.b16 %v1743
      %v2039 = vunpack.c.l.b16 %v1744
      %v2040 = vunpack.c.l.b16 %v1745
      %v2041 = vunpack.c.l.b16 %v1746
      %v2042 = vunpack.c.l.b16 %v1747
      %v2043 = vunpack.c.l.b16 %v1748
      %v2044 = vunpack.c.l.b16 %v1749
      %v2045 = vunpack.c.l.b16 %v1750
      %v2046 = vunpack.c.l.b16 %v1751
      %v2047 = vunpack.c.l.b16 %v1752
      %v2048 = vunpack.c.l.b16 %v1753
      %v2049 = vunpack.c.l.b16 %v1754
      %v2050 = vunpack.c.l.b16 %v1755
      %v2051 = vunpack.c.l.b16 %v1756
      %v2052 = vpack.c.b16 %v1909, %v1908
      %v2053 = vpack.c.b16 %v1911, %v1910
      %v2054 = vpack.c.b16 %v1913, %v1912
      %v2055 = vpack.c.b16 %v1915, %v1914
      %v2056 = vpack.c.b16 %v1917, %v1916
      %v2057 = vpack.c.b16 %v1919, %v1918
      %v2058 = vpack.c.b16 %v1921, %v1920
      %v2059 = vpack.c.b16 %v1923, %v1922
      %v2060 = vpack.c.b16 %v1925, %v1924
      %v2061 = vpack.c.b16 %v1927, %v1926
      %v2062 = vpack.c.b16 %v1929, %v1928
      %v2063 = vpack.c.b16 %v1931, %v1930
      %v2064 = vpack.c.b16 %v1933, %v1932
      %v2065 = vpack.c.b16 %v1935, %v1934
      %v2066 = vpack.c.b16 %v1937, %v1936
      %v2067 = vpack.c.b16 %v1939, %v1938
      %v2068 = vpack.c.b16 %v1941, %v1940
      %v2069 = vpack.c.b16 %v1943, %v1942
      %v2070 = vpack.c.b16 %v1945, %v1944
      %v2071 = vpack.c.b16 %v1947, %v1946
      %v2072 = vpack.c.b16 %v1949, %v1948
      %v2073 = vpack.c.b16 %v1951, %v1950
      %v2074 = vpack.c.b16 %v1953, %v1952
      %v2075 = vpack.c.b16 %v1955, %v1954
      %v2076 = vpack.c.b16 %v1957, %v1956
      %v2077 = vpack.c.b16 %v1959, %v1958
      %v2078 = vpack.c.b16 %v1961, %v1960
      %v2079 = vpack.c.b16 %v1963, %v1962
      %v2080 = vpack.c.b16 %v1965, %v1964
      %v2081 = vpack.c.b16 %v1967, %v1966
      %v2082 = vpack.c.b16 %v1969, %v1968
      %v2083 = vpack.c.b16 %v1971, %v1970
      %v2084 = vpack.c.b16 %v1973, %v1972
      %v2085 = vpack.c.b16 %v1975, %v1974
      %v2086 = vpack.c.b16 %v1977, %v1976
      %v2087 = vpack.c.b16 %v1979, %v1978
      %v2088 = vpack.c.b16 %v1981, %v1980
      %v2089 = vpack.c.b16 %v1983, %v1982
      %v2090 = vpack.c.b16 %v1985, %v1984
      %v2091 = vpack.c.b16 %v1987, %v1986
      %v2092 = vpack.c.b16 %v1989, %v1988
      %v2093 = vpack.c.b16 %v1991, %v1990
      %v2094 = vpack.c.b16 %v1993, %v1992
      %v2095 = vpack.c.b16 %v1995, %v1994
      %v2096 = vpack.c.b16 %v1997, %v1996
      %v2097 = vpack.c.b16 %v1999, %v1998
      %v2098 = vpack.c.b16 %v2001, %v2000
      %v2099 = vpack.c.b16 %v2003, %v2002
      %v2100 = vpack.c.b16 %v2005, %v2004
      %v2101 = vpack.c.b16 %v2007, %v2006
      %v2102 = vpack.c.b16 %v2009, %v2008
      %v2103 = vpack.c.b16 %v2011, %v2010
      %v2104 = vpack.c.b16 %v2013, %v2012
      %v2105 = vpack.c.b16 %v2015, %v2014
      %v2106 = vpack.c.b16 %v2017, %v2016
      %v2107 = vpack.c.b16 %v2019, %v2018
      %v2108 = vpack.c.b16 %v2021, %v2020
      %v2109 = vpack.c.b16 %v2023, %v2022
      %v2110 = vpack.c.b16 %v2025, %v2024
      %v2111 = vpack.c.b16 %v2027, %v2026
      %v2112 = vpack.c.b16 %v2029, %v2028
      %v2113 = vpack.c.b16 %v2031, %v2030
      %v2114 = vpack.c.b16 %v2033, %v2032
      %v2115 = vpack.c.b16 %v2035, %v2034
      %v2116 = vpack.c.b16 %v2037, %v2036
      %v2117 = vpack.c.b16 %v2039, %v2038
      %v2118 = vpack.c.b16 %v2041, %v2040
      %v2119 = vpack.c.b16 %v2043, %v2042
      %v2120 = vpack.c.b16 %v2045, %v2044
      %v2121 = vpack.c.b16 %v2047, %v2046
      %v2122 = vpack.c.b16 %v2049, %v2048
      %v2123 = vpack.c.b16 %v2051, %v2050
      %2196 = vmatprep.subr.bf16.mxu0 0
      %2197 = vmatpush1.bf16.msra.mxu0 %v2052
      %2198 = vmatprep.subr.bf16.mxu0 0
      %2199 = vmatpush1.bf16.msra.mxu0 %v2053
      %2200 = vmatprep.subr.bf16.mxu0 0
      %2201 = vmatpush1.bf16.msra.mxu0 %v2054
      %2202 = vmatprep.subr.bf16.mxu0 0
      %2203 = vmatpush1.bf16.msra.mxu0 %v2055
      %2204 = vmatprep.subr.bf16.mxu0 0
      %2205 = vmatpush1.bf16.msra.mxu0 %v2056
      %2206 = vmatprep.subr.bf16.mxu0 0
      %2207 = vmatpush1.bf16.msra.mxu0 %v2057
      %2208 = vmatprep.subr.bf16.mxu0 0
      %2209 = vmatpush1.bf16.msra.mxu0 %v2058
      %2210 = vmatprep.subr.bf16.mxu0 0
      %2211 = vmatpush1.bf16.msra.mxu0 %v2059
      %2212 = vmatprep.subr.bf16.mxu0 0
      %2213 = vmatpush1.bf16.msra.mxu0 %v2060
      %2214 = vmatprep.subr.bf16.mxu0 0
      %2215 = vmatpush1.bf16.msra.mxu0 %v2061
      %2216 = vmatprep.subr.bf16.mxu0 0
      %2217 = vmatpush1.bf16.msra.mxu0 %v2062
      %2218 = vmatprep.subr.bf16.mxu0 0
      %2219 = vmatpush1.bf16.msra.mxu0 %v2063
      %2220 = vmatprep.subr.bf16.mxu0 0
      %2221 = vmatpush1.bf16.msra.mxu0 %v2064
      %2222 = vmatprep.subr.bf16.mxu0 0
      %2223 = vmatpush1.bf16.msra.mxu0 %v2065
      %2224 = vmatprep.subr.bf16.mxu0 0
      %2225 = vmatpush1.bf16.msra.mxu0 %v2066
      %2226 = vmatprep.subr.bf16.mxu0 0
      %2227 = vmatpush1.bf16.msra.mxu0 %v2067
      %2228 = vmatprep.mubr.bf16.mxu0 %v1525
      %2229 = vmatmul.mubr.bf16.gmra.mrb[0].mxu0 %v1513
      %v2230 = vpop.f32.mrb[0].mxu0
      %v2231 = vadd.f32 %v1762, %v2230
      %v2232 = vpop.f32.mrb[0].mxu0
      %v2233 = vpop.f32.mrb[0].mxu0
      %v2234 = vadd.f32 %v1762, %v2233
      %v2235 = vpop.f32.mrb[0].mxu0
      %2236 = vmatprep.mubr.bf16.mxu0 %v1526
      %2237 = vmatmul.mubr.bf16.gmra.mrb[0].mxu0 %v1514
      %v2238 = vpop.f32.mrb[0].mxu0
      %v2239 = vadd.f32 %v1762, %v2238
      %v2240 = vpop.f32.mrb[0].mxu0
      %v2241 = vpop.f32.mrb[0].mxu0
      %v2242 = vadd.f32 %v1762, %v2241
      %v2243 = vpop.f32.mrb[0].mxu0
      %2244 = vmatprep.mubr.bf16.mxu0 %v1527
      %2245 = vmatmul.mubr.bf16.gmra.mrb[0].mxu0 %v1515
      %v2246 = vpop.f32.mrb[0].mxu0
      %v2247 = vadd.f32 %v1762, %v2246
      %v2248 = vpop.f32.mrb[0].mxu0
      %v2249 = vpop.f32.mrb[0].mxu0
      %v2250 = vadd.f32 %v1762, %v2249
      %v2251 = vpop.f32.mrb[0].mxu0
      %2252 = vmatprep.mubr.bf16.mxu0 %v1528
      %2253 = vmatmul.mubr.bf16.gmra.mrb[0].mxu0 %v1516
      %v2254 = vpop.f32.mrb[0].mxu0
      %v2255 = vadd.f32 %v1762, %v2254
      %v2256 = vpop.f32.mrb[0].mxu0
      %v2257 = vpop.f32.mrb[0].mxu0
      %v2258 = vadd.f32 %v1762, %v2257
      %v2259 = vpop.f32.mrb[0].mxu0
      %2260 = vdwg.mxu0
      %2261 = vmatprep.subr.bf16.mxu0 0
      %2262 = vmatpush1.bf16.msra.mxu0 %v2068
      %2263 = vmatprep.subr.bf16.mxu0 0
      %2264 = vmatpush1.bf16.msra.mxu0 %v2069
      %2265 = vmatprep.subr.bf16.mxu0 0
      %2266 = vmatpush1.bf16.msra.mxu0 %v2070
      %2267 = vmatprep.subr.bf16.mxu0 0
      %2268 = vmatpush1.bf16.msra.mxu0 %v2071
      %2269 = vmatprep.subr.bf16.mxu0 0
      %2270 = vmatpush1.bf16.msra.mxu0 %v2072
      %2271 = vmatprep.subr.bf16.mxu0 0
      %2272 = vmatpush1.bf16.msra.mxu0 %v2073
      %2273 = vmatprep.subr.bf16.mxu0 0
      %2274 = vmatpush1.bf16.msra.mxu0 %v2074
      %2275 = vmatprep.subr.bf16.mxu0 0
      %2276 = vmatpush1.bf16.msra.mxu0 %v2075
      %2277 = vmatprep.subr.bf16.mxu0 0
      %2278 = vmatpush1.bf16.msra.mxu0 %v2076
      %2279 = vmatprep.subr.bf16.mxu0 0
      %2280 = vmatpush1.bf16.msra.mxu0 %v2077
      %2281 = vmatprep.subr.bf16.mxu0 0
      %2282 = vmatpush1.bf16.msra.mxu0 %v2078
      %2283 = vmatprep.subr.bf16.mxu0 0
      %2284 = vmatpush1.bf16.msra.mxu0 %v2079
      %2285 = vmatprep.subr.bf16.mxu0 0
      %2286 = vmatpush1.bf16.msra.mxu0 %v2080
      %2287 = vmatprep.subr.bf16.mxu0 0
      %2288 = vmatpush1.bf16.msra.mxu0 %v2081
      %2289 = vmatprep.subr.bf16.mxu0 0
      %2290 = vmatpush1.bf16.msra.mxu0 %v2082
      %2291 = vmatprep.subr.bf16.mxu0 0
      %2292 = vmatpush1.bf16.msra.mxu0 %v2083
      %2293 = vmatprep.mubr.bf16.mxu0 %v1549
      %2294 = vmatmul.mubr.bf16.gmra.mrb[0].mxu0 %v1537
      %v2295 = vpop.f32.mrb[0].mxu0
      %v2296 = vadd.f32 %v2231, %v2295
      %v2297 = vpop.f32.mrb[0].mxu0
      %v2298 = vpop.f32.mrb[0].mxu0
      %v2299 = vadd.f32 %v2234, %v2298
      %v2300 = vpop.f32.mrb[0].mxu0
      %2301 = vmatprep.mubr.bf16.mxu0 %v1550
      %2302 = vmatmul.mubr.bf16.gmra.mrb[0].mxu0 %v1538
      %v2303 = vpop.f32.mrb[0].mxu0
      %v2304 = vadd.f32 %v2239, %v2303
      %v2305 = vpop.f32.mrb[0].mxu0
      %v2306 = vpop.f32.mrb[0].mxu0
      %v2307 = vadd.f32 %v2242, %v2306
      %v2308 = vpop.f32.mrb[0].mxu0
      %2309 = vmatprep.mubr.bf16.mxu0 %v1551
      %2310 = vmatmul.mubr.bf16.gmra.mrb[0].mxu0 %v1539
      %v2311 = vpop.f32.mrb[0].mxu0
      %v2312 = vadd.f32 %v2247, %v2311
      %v2313 = vpop.f32.mrb[0].mxu0
      %v2314 = vpop.f32.mrb[0].mxu0
      %v2315 = vadd.f32 %v2250, %v2314
      %v2316 = vpop.f32.mrb[0].mxu0
      %2317 = vmatprep.mubr.bf16.mxu0 %v1552
      %2318 = vmatmul.mubr.bf16.gmra.mrb[0].mxu0 %v1540
      %v2319 = vpop.f32.mrb[0].mxu0
      %v2320 = vadd.f32 %v2255, %v2319
      %v2321 = vpop.f32.mrb[0].mxu0
      %v2322 = vpop.f32.mrb[0].mxu0
      %v2323 = vadd.f32 %v2258, %v2322
      %v2324 = vpop.f32.mrb[0].mxu0
      %2325 = vdwg.mxu0
      %2326 = vmatprep.subr.bf16.mxu0 0
      %2327 = vmatpush1.bf16.msra.mxu0 %v2084
      %2328 = vmatprep.subr.bf16.mxu0 0
      %2329 = vmatpush1.bf16.msra.mxu0 %v2085
      %2330 = vmatprep.subr.bf16.mxu0 0
      %2331 = vmatpush1.bf16.msra.mxu0 %v2086
      %2332 = vmatprep.subr.bf16.mxu0 0
      %2333 = vmatpush1.bf16.msra.mxu0 %v2087
      %2334 = vmatprep.subr.bf16.mxu0 0
      %2335 = vmatpush1.bf16.msra.mxu0 %v2088
      %2336 = vmatprep.subr.bf16.mxu0 0
      %2337 = vmatpush1.bf16.msra.mxu0 %v2089
      %2338 = vmatprep.subr.bf16.mxu0 0
      %2339 = vmatpush1.bf16.msra.mxu0 %v2090
      %2340 = vmatprep.subr.bf16.mxu0 0
      %2341 = vmatpush1.bf16.msra.mxu0 %v2091
      %2342 = vmatprep.subr.bf16.mxu0 0
      %2343 = vmatpush1.bf16.msra.mxu0 %v2092
      %2344 = vmatprep.subr.bf16.mxu0 0
      %2345 = vmatpush1.bf16.msra.mxu0 %v2093
      %2346 = vmatprep.subr.bf16.mxu0 0
      %2347 = vmatpush1.bf16.msra.mxu0 %v2094
      %2348 = vmatprep.subr.bf16.mxu0 0
      %2349 = vmatpush1.bf16.msra.mxu0 %v2095
      %2350 = vmatprep.subr.bf16.mxu0 0
      %2351 = vmatpush1.bf16.msra.mxu0 %v2096
      %2352 = vmatprep.subr.bf16.mxu0 0
      %2353 = vmatpush1.bf16.msra.mxu0 %v2097
      %2354 = vmatprep.subr.bf16.mxu0 0
      %2355 = vmatpush1.bf16.msra.mxu0 %v2098
      %2356 = vmatprep.subr.bf16.mxu0 0
      %2357 = vmatpush1.bf16.msra.mxu0 %v2099
      %2358 = vmatprep.mubr.bf16.mxu0 %v1573
      %2359 = vmatmul.mubr.bf16.gmra.mrb[0].mxu0 %v1561
      %v2360 = vpop.f32.mrb[0].mxu0
      %v2361 = vadd.f32 %v2296, %v2360
      %v2362 = vpop.f32.mrb[0].mxu0
      %v2363 = vpop.f32.mrb[0].mxu0
      %v2364 = vadd.f32 %v2299, %v2363
      %v2365 = vpop.f32.mrb[0].mxu0
      %2366 = vmatprep.mubr.bf16.mxu0 %v1574
      %2367 = vmatmul.mubr.bf16.gmra.mrb[0].mxu0 %v1562
      %v2368 = vpop.f32.mrb[0].mxu0
      %v2369 = vadd.f32 %v2304, %v2368
      %v2370 = vpop.f32.mrb[0].mxu0
      %v2371 = vpop.f32.mrb[0].mxu0
      %v2372 = vadd.f32 %v2307, %v2371
      %v2373 = vpop.f32.mrb[0].mxu0
      %2374 = vmatprep.mubr.bf16.mxu0 %v1575
      %2375 = vmatmul.mubr.bf16.gmra.mrb[0].mxu0 %v1563
      %v2376 = vpop.f32.mrb[0].mxu0
      %v2377 = vadd.f32 %v2312, %v2376
      %v2378 = vpop.f32.mrb[0].mxu0
      %v2379 = vpop.f32.mrb[0].mxu0
      %v2380 = vadd.f32 %v2315, %v2379
      %v2381 = vpop.f32.mrb[0].mxu0
      %2382 = vmatprep.mubr.bf16.mxu0 %v1576
      %2383 = vmatmul.mubr.bf16.gmra.mrb[0].mxu0 %v1564
      %v2384 = vpop.f32.mrb[0].mxu0
      %v2385 = vadd.f32 %v2320, %v2384
      %v2386 = vpop.f32.mrb[0].mxu0
      %v2387 = vpop.f32.mrb[0].mxu0
      %v2388 = vadd.f32 %v2323, %v2387
      %v2389 = vpop.f32.mrb[0].mxu0
      %2390 = vdwg.mxu0
      %2391 = vmatprep.subr.bf16.mxu0 0
      %2392 = vmatpush1.bf16.msra.mxu0 %v2100
      %2393 = vmatprep.subr.bf16.mxu0 0
      %2394 = vmatpush1.bf16.msra.mxu0 %v2101
      %2395 = vmatprep.subr.bf16.mxu0 0
      %2396 = vmatpush1.bf16.msra.mxu0 %v2102
      %2397 = vmatprep.subr.bf16.mxu0 0
      %2398 = vmatpush1.bf16.msra.mxu0 %v2103
      %2399 = vmatprep.subr.bf16.mxu0 0
      %2400 = vmatpush1.bf16.msra.mxu0 %v2104
      %2401 = vmatprep.subr.bf16.mxu0 0
      %2402 = vmatpush1.bf16.msra.mxu0 %v2105
      %2403 = vmatprep.subr.bf16.mxu0 0
      %2404 = vmatpush1.bf16.msra.mxu0 %v2106
      %2405 = vmatprep.subr.bf16.mxu0 0
      %2406 = vmatpush1.bf16.msra.mxu0 %v2107
      %2407 = vmatprep.subr.bf16.mxu0 0
      %2408 = vmatpush1.bf16.msra.mxu0 %v2108
      %2409 = vmatprep.subr.bf16.mxu0 0
      %2410 = vmatpush1.bf16.msra.mxu0 %v2109
      %2411 = vmatprep.subr.bf16.mxu0 0
      %2412 = vmatpush1.bf16.msra.mxu0 %v2110
      %2413 = vmatprep.subr.bf16.mxu0 0
      %2414 = vmatpush1.bf16.msra.mxu0 %v2111
      %2415 = vmatprep.subr.bf16.mxu0 0
      %2416 = vmatpush1.bf16.msra.mxu0 %v2112
      %2417 = vmatprep.subr.bf16.mxu0 0
      %2418 = vmatpush1.bf16.msra.mxu0 %v2113
      %2419 = vmatprep.subr.bf16.mxu0 0
      %2420 = vmatpush1.bf16.msra.mxu0 %v2114
      %2421 = vmatprep.subr.bf16.mxu0 0
      %2422 = vmatpush1.bf16.msra.mxu0 %v2115
      %2423 = vmatprep.mubr.bf16.mxu0 %v1597
      %2424 = vmatmul.mubr.bf16.gmra.mrb[0].mxu0 %v1585
      %v2425 = vpop.f32.mrb[0].mxu0
      %v2426 = vadd.f32 %v2361, %v2425
      %v2427 = vpop.f32.mrb[0].mxu0
      %v2428 = vpop.f32.mrb[0].mxu0
      %v2429 = vadd.f32 %v2364, %v2428
      %v2430 = vpop.f32.mrb[0].mxu0
      %2431 = vmatprep.mubr.bf16.mxu0 %v1598
      %2432 = vmatmul.mubr.bf16.gmra.mrb[0].mxu0 %v1586
      %v2433 = vpop.f32.mrb[0].mxu0
      %v2434 = vadd.f32 %v2369, %v2433
      %v2435 = vpop.f32.mrb[0].mxu0
      %v2436 = vpop.f32.mrb[0].mxu0
      %v2437 = vadd.f32 %v2372, %v2436
      %v2438 = vpop.f32.mrb[0].mxu0
      %2439 = vmatprep.mubr.bf16.mxu0 %v1599
      %2440 = vmatmul.mubr.bf16.gmra.mrb[0].mxu0 %v1587
      %v2441 = vpop.f32.mrb[0].mxu0
      %v2442 = vadd.f32 %v2377, %v2441
      %v2443 = vpop.f32.mrb[0].mxu0
      %v2444 = vpop.f32.mrb[0].mxu0
      %v2445 = vadd.f32 %v2380, %v2444
      %v2446 = vpop.f32.mrb[0].mxu0
      %2447 = vmatprep.mubr.bf16.mxu0 %v1600
      %2448 = vmatmul.mubr.bf16.gmra.mrb[0].mxu0 %v1588
      %v2449 = vpop.f32.mrb[0].mxu0
      %v2450 = vadd.f32 %v2385, %v2449
      %v2451 = vpop.f32.mrb[0].mxu0
      %v2452 = vpop.f32.mrb[0].mxu0
      %v2453 = vadd.f32 %v2388, %v2452
      %v2454 = vpop.f32.mrb[0].mxu0
      %2455 = vdwg.mxu0
      %2456 = vmatprep.subr.bf16.mxu0 0
      %2457 = vmatpush1.bf16.msra.mxu0 %v2116
      %2458 = vmatprep.subr.bf16.mxu0 0
      %2459 = vmatpush1.bf16.msra.mxu0 %v2117
      %2460 = vmatprep.subr.bf16.mxu0 0
      %2461 = vmatpush1.bf16.msra.mxu0 %v2118
      %2462 = vmatprep.subr.bf16.mxu0 0
      %2463 = vmatpush1.bf16.msra.mxu0 %v2119
      %2464 = vmatprep.subr.bf16.mxu0 0
      %2465 = vmatpush1.bf16.msra.mxu0 %v2120
      %2466 = vmatprep.subr.bf16.mxu0 0
      %2467 = vmatpush1.bf16.msra.mxu0 %v2121
      %2468 = vmatprep.subr.bf16.mxu0 0
      %2469 = vmatpush1.bf16.msra.mxu0 %v2122
      %2470 = vmatprep.subr.bf16.mxu0 0
      %2471 = vmatpush1.bf16.msra.mxu0 %v2123
      %2472 = vmatprep.subr.bf16.mxu0 0
      %2473 = vmatpush1.bf16.msra.mxu0 0
      %2474 = vmatprep.subr.bf16.mxu0 0
      %2475 = vmatpush1.bf16.msra.mxu0 0
      %2476 = vmatprep.subr.bf16.mxu0 0
      %2477 = vmatpush1.bf16.msra.mxu0 0
      %2478 = vmatprep.subr.bf16.mxu0 0
      %2479 = vmatpush1.bf16.msra.mxu0 0
      %2480 = vmatprep.subr.bf16.mxu0 0
      %2481 = vmatpush1.bf16.msra.mxu0 0
      %2482 = vmatprep.subr.bf16.mxu0 0
      %2483 = vmatpush1.bf16.msra.mxu0 0
      %2484 = vmatprep.subr.bf16.mxu0 0
      %2485 = vmatpush1.bf16.msra.mxu0 0
      %2486 = vmatprep.subr.bf16.mxu0 0
      %2487 = vmatpush1.bf16.msra.mxu0 0
      %2488 = vmatprep.mubr.bf16.mxu0 0
      %2489 = vmatmul.mubr.bf16.gmra.mrb[0].mxu0 %v1609
      %v2490 = vpop.f32.mrb[0].mxu0
      %v2491 = vadd.f32 %v2426, %v2490
      %v2492 = vpop.f32.mrb[0].mxu0
      %v2493 = vpop.f32.mrb[0].mxu0
      %v2494 = vadd.f32 %v2429, %v2493
      %v2495 = vpop.f32.mrb[0].mxu0
      %2496 = vmatprep.mubr.bf16.mxu0 0
      %2497 = vmatmul.mubr.bf16.gmra.mrb[0].mxu0 %v1610
      %v2498 = vpop.f32.mrb[0].mxu0
      %v2499 = vadd.f32 %v2434, %v2498
      %v2500 = vpop.f32.mrb[0].mxu0
      %v2501 = vpop.f32.mrb[0].mxu0
      %v2502 = vadd.f32 %v2437, %v2501
      %v2503 = vpop.f32.mrb[0].mxu0
      %2504 = vmatprep.mubr.bf16.mxu0 0
      %2505 = vmatmul.mubr.bf16.gmra.mrb[0].mxu0 %v1611
      %v2506 = vpop.f32.mrb[0].mxu0
      %v2507 = vadd.f32 %v2442, %v2506
      %v2508 = vpop.f32.mrb[0].mxu0
      %v2509 = vpop.f32.mrb[0].mxu0
      %v2510 = vadd.f32 %v2445, %v2509
      %v2511 = vpop.f32.mrb[0].mxu0
      %2512 = vmatprep.mubr.bf16.mxu0 0
      %2513 = vmatmul.mubr.bf16.gmra.mrb[0].mxu0 %v1612
      %v2514 = vpop.f32.mrb[0].mxu0
      %v2515 = vadd.f32 %v2450, %v2514
      %v2516 = vpop.f32.mrb[0].mxu0
      %v2517 = vpop.f32.mrb[0].mxu0
      %v2518 = vadd.f32 %v2453, %v2517
      %v2519 = vpop.f32.mrb[0].mxu0
      %2520 = vdwg.mxu0
      %vm2521 = vcmp.ge.f32.partialorder %v2491, 0.0
      %vm2522 = vcmp.ge.f32.partialorder %v2494, 0.0
      %vm2523 = vcmp.ge.f32.partialorder %v2499, 0.0
      %vm2524 = vcmp.ge.f32.partialorder %v2502, 0.0
      %vm2525 = vcmp.ge.f32.partialorder %v2507, 0.0
      %vm2526 = vcmp.ge.f32.partialorder %v2510, 0.0
      %vm2527 = vcmp.ge.f32.partialorder %v2515, 0.0
      %vm2528 = vcmp.ge.f32.partialorder %v2518, 0.0
      %v2529 = vmul.f32 %v2491, 0.1
      %v2530 = vmul.f32 %v2494, 0.1
      %v2531 = vmul.f32 %v2499, 0.1
      %v2532 = vmul.f32 %v2502, 0.1
      %v2533 = vmul.f32 %v2507, 0.1
      %v2534 = vmul.f32 %v2510, 0.1
      %v2535 = vmul.f32 %v2515, 0.1
      %v2536 = vmul.f32 %v2518, 0.1
      %v2537 = vsel %vm2521, %v2491, %v2529
      %v2538 = vsel %vm2522, %v2494, %v2530
      %v2539 = vsel %vm2523, %v2499, %v2531
      %v2540 = vsel %vm2524, %v2502, %v2532
      %v2541 = vsel %vm2525, %v2507, %v2533
      %v2542 = vsel %vm2526, %v2510, %v2534
      %v2543 = vsel %vm2527, %v2515, %v2535
      %v2544 = vsel %vm2528, %v2518, %v2536
      %2545 = vst [vmem:[%s447 + $0x1] sm:$0xff] %v2537
      %2546 = vst [vmem:[%s447 + $0x11] sm:$0xff] %v2538
      %2547 = vst [vmem:[%s447 + $0x21] sm:$0xff] %v2539
      %2548 = vst [vmem:[%s447 + $0x31] sm:$0xff] %v2540
      %2549 = vst [vmem:[%s447 + $0x41] sm:$0xff] %v2541
      %2550 = vst [vmem:[%s447 + $0x51] sm:$0xff] %v2542
      %2551 = vst [vmem:[%s447 + $0x61] sm:$0xff] %v2543
      %2552 = vst [vmem:[%s447 + $0x71] sm:$0xff] %v2544
      %v2553 = vld [vmem:[%s447 + $0x1] sm:$0xff]
      %v2554 = vld [vmem:[%s447 + $0x11] sm:$0xff]
      %v2555 = vld [vmem:[%s447 + $0x21] sm:$0xff]
      %v2556 = vld [vmem:[%s447 + $0x31] sm:$0xff]
      %v2557 = vld [vmem:[%s447 + $0x41] sm:$0xff]
      %v2558 = vld [vmem:[%s447 + $0x51] sm:$0xff]
      %v2559 = vld [vmem:[%s447 + $0x61] sm:$0xff]
      %v2560 = vld [vmem:[%s447 + $0x71] sm:$0xff]
      %v2561 = vpack.c.bf16 %v2554, %v2553
      %v2562 = vpack.c.bf16 %v2556, %v2555
      %v2563 = vpack.c.bf16 %v2558, %v2557
      %v2564 = vpack.c.bf16 %v2560, %v2559
      %v2565 = vld [vmem:[%s447] sm:$0xff]
      %v2566 = vld [vmem:[%s447 + $0x10] sm:$0xff]
      %v2567 = vld [vmem:[%s447 + $0x20] sm:$0xff]
      %v2568 = vld [vmem:[%s447 + $0x30] sm:$0xff]
      %v2569 = vld [vmem:[%s447 + $0x40] sm:$0xff]
      %v2570 = vld [vmem:[%s447 + $0x50] sm:$0xff]
      %v2571 = vld [vmem:[%s447 + $0x60] sm:$0xff]
      %v2572 = vld [vmem:[%s447 + $0x70] sm:$0xff]
      %v2573 = vpack.c.bf16 %v2566, %v2565
      %v2574 = vpack.c.bf16 %v2568, %v2567
      %v2575 = vpack.c.bf16 %v2570, %v2569
      %v2576 = vpack.c.bf16 %v2572, %v2571
      %v2577 = vld [vmem:[#allocation2 + $0x1] sm:$0xff]
      %v2578 = vld [vmem:[#allocation2 + $0x11] sm:$0xff]
      %v2579 = vld [vmem:[#allocation2 + $0x21] sm:$0xff]
      %v2580 = vld [vmem:[#allocation2 + $0x31] sm:$0xff]
      %v2581 = vld [vmem:[#allocation2 + $0x41] sm:$0xff]
      %v2582 = vld [vmem:[#allocation2 + $0x51] sm:$0xff]
      %v2583 = vld [vmem:[#allocation2 + $0x61] sm:$0xff]
      %v2584 = vld [vmem:[#allocation2 + $0x71] sm:$0xff]
      %v2585 = vpack.c.bf16 %v2578, %v2577
      %v2586 = vpack.c.bf16 %v2580, %v2579
      %v2587 = vpack.c.bf16 %v2582, %v2581
      %v2588 = vpack.c.bf16 %v2584, %v2583
      %v2589 = vld [vmem:[#allocation2] sm:$0xff]
      %v2590 = vld [vmem:[#allocation2 + $0x10] sm:$0xff]
      %v2591 = vld [vmem:[#allocation2 + $0x20] sm:$0xff]
      %v2592 = vld [vmem:[#allocation2 + $0x30] sm:$0xff]
      %v2593 = vld [vmem:[#allocation2 + $0x40] sm:$0xff]
      %v2594 = vld [vmem:[#allocation2 + $0x50] sm:$0xff]
      %v2595 = vld [vmem:[#allocation2 + $0x60] sm:$0xff]
      %v2596 = vld [vmem:[#allocation2 + $0x70] sm:$0xff]
      %v2597 = vpack.c.bf16 %v2590, %v2589
      %v2598 = vpack.c.bf16 %v2592, %v2591
      %v2599 = vpack.c.bf16 %v2594, %v2593
      %v2600 = vpack.c.bf16 %v2596, %v2595
      %v2601 = vld [vmem:[%s5] sm:$0xf]
      %v2602 = vld [vmem:[%s5 + $0x4] sm:$0xf]
      %v2603 = vld [vmem:[%s5 + $0x8] sm:$0xf]
      %v2604 = vld [vmem:[%s5 + $0xc] sm:$0xf]
      %v2605 = vld [vmem:[%s5 + $0x10] sm:$0xf]
      %v2606 = vld [vmem:[%s5 + $0x14] sm:$0xf]
      %v2607 = vld [vmem:[%s5 + $0x18] sm:$0xf]
      %v2608 = vld [vmem:[%s5 + $0x1c] sm:$0xf]
      %v2609 = vld [vmem:[%s5 + $0x20] sm:$0xf]
      %v2610 = vld [vmem:[%s5 + $0x24] sm:$0xf]
      %v2611 = vld [vmem:[%s5 + $0x28] sm:$0xf]
      %v2612 = vld [vmem:[%s5 + $0x2c] sm:$0xf]
      %v2613 = vld [vmem:[%s5 + $0x30] sm:$0xf]
      %v2614 = vld [vmem:[%s5 + $0x34] sm:$0xf]
      %v2615 = vld [vmem:[%s5 + $0x38] sm:$0xf]
      %v2616 = vld [vmem:[%s5 + $0x3c] sm:$0xf]
      %v2617 = vld [vmem:[%s5 + $0x40] sm:$0xf]
      %v2618 = vld [vmem:[%s5 + $0x44] sm:$0xf]
      %v2619 = vld [vmem:[%s5 + $0x48] sm:$0xf]
      %v2620 = vld [vmem:[%s5 + $0x4c] sm:$0xf]
      %v2621 = vld [vmem:[%s5 + $0x50] sm:$0xf]
      %v2622 = vld [vmem:[%s5 + $0x54] sm:$0xf]
      %v2623 = vld [vmem:[%s5 + $0x58] sm:$0xf]
      %v2624 = vld [vmem:[%s5 + $0x5c] sm:$0xf]
      %v2625 = vld [vmem:[%s5 + $0x60] sm:$0xf]
      %v2626 = vld [vmem:[%s5 + $0x64] sm:$0xf]
      %v2627 = vld [vmem:[%s5 + $0x68] sm:$0xf]
      %v2628 = vld [vmem:[%s5 + $0x6c] sm:$0xf]
      %v2629 = vld [vmem:[%s5 + $0x70] sm:$0xf]
      %v2630 = vld [vmem:[%s5 + $0x74] sm:$0xf]
      %v2631 = vld [vmem:[%s5 + $0x78] sm:$0xf]
      %v2632 = vld [vmem:[%s5 + $0x7c] sm:$0xf]
      %v2633 = vld [vmem:[%s5 + $0x80] sm:$0xf]
      %v2634 = vld [vmem:[%s5 + $0x84] sm:$0xf]
      %v2635 = vld [vmem:[%s5 + $0x88] sm:$0xf]
      %v2636 = vld [vmem:[%s5 + $0x8c] sm:$0xf]
      %v2637 = vld [vmem:[%s5 + $0x90] sm:$0xf]
      %v2638 = vld [vmem:[%s5 + $0x94] sm:$0xf]
      %v2639 = vld [vmem:[%s5 + $0x98] sm:$0xf]
      %v2640 = vld [vmem:[%s5 + $0x9c] sm:$0xf]
      %v2641 = vld [vmem:[%s5 + $0xa0] sm:$0xf]
      %v2642 = vld [vmem:[%s5 + $0xa4] sm:$0xf]
      %v2643 = vld [vmem:[%s5 + $0xa8] sm:$0xf]
      %v2644 = vld [vmem:[%s5 + $0xac] sm:$0xf]
      %v2645 = vld [vmem:[%s5 + $0xb0] sm:$0xf]
      %v2646 = vld [vmem:[%s5 + $0xb4] sm:$0xf]
      %v2647 = vld [vmem:[%s5 + $0xb8] sm:$0xf]
      %v2648 = vld [vmem:[%s5 + $0xbc] sm:$0xf]
      %v2649 = vld [vmem:[%s5 + $0xc0] sm:$0xf]
      %v2650 = vld [vmem:[%s5 + $0xc4] sm:$0xf]
      %v2651 = vld [vmem:[%s5 + $0xc8] sm:$0xf]
      %v2652 = vld [vmem:[%s5 + $0xcc] sm:$0xf]
      %v2653 = vld [vmem:[%s5 + $0xd0] sm:$0xf]
      %v2654 = vld [vmem:[%s5 + $0xd4] sm:$0xf]
      %v2655 = vld [vmem:[%s5 + $0xd8] sm:$0xf]
      %v2656 = vld [vmem:[%s5 + $0xdc] sm:$0xf]
      %v2657 = vld [vmem:[%s5 + $0xe0] sm:$0xf]
      %v2658 = vld [vmem:[%s5 + $0xe4] sm:$0xf]
      %v2659 = vld [vmem:[%s5 + $0xe8] sm:$0xf]
      %v2660 = vld [vmem:[%s5 + $0xec] sm:$0xf]
      %v2661 = vld [vmem:[%s5 + $0xf0] sm:$0xf]
      %v2662 = vld [vmem:[%s5 + $0xf4] sm:$0xf]
      %v2663 = vld [vmem:[%s5 + $0xf8] sm:$0xf]
      %v2664 = vld [vmem:[%s5 + $0xfc] sm:$0xf]
      %v2729 = vunpack.c.l.b16 %v2601
      %v2730 = vunpack.c.l.b16 %v2602
      %v2731 = vunpack.c.l.b16 %v2603
      %v2732 = vunpack.c.l.b16 %v2604
      %v2733 = vunpack.c.l.b16 %v2605
      %v2734 = vunpack.c.l.b16 %v2606
      %v2735 = vunpack.c.l.b16 %v2607
      %v2736 = vunpack.c.l.b16 %v2608
      %v2737 = vunpack.c.l.b16 %v2609
      %v2738 = vunpack.c.l.b16 %v2610
      %v2739 = vunpack.c.l.b16 %v2611
      %v2740 = vunpack.c.l.b16 %v2612
      %v2741 = vunpack.c.l.b16 %v2613
      %v2742 = vunpack.c.l.b16 %v2614
      %v2743 = vunpack.c.l.b16 %v2615
      %v2744 = vunpack.c.l.b16 %v2616
      %v2745 = vunpack.c.l.b16 %v2617
      %v2746 = vunpack.c.l.b16 %v2618
      %v2747 = vunpack.c.l.b16 %v2619
      %v2748 = vunpack.c.l.b16 %v2620
      %v2749 = vunpack.c.l.b16 %v2621
      %v2750 = vunpack.c.l.b16 %v2622
      %v2751 = vunpack.c.l.b16 %v2623
      %v2752 = vunpack.c.l.b16 %v2624
      %v2753 = vunpack.c.l.b16 %v2625
      %v2754 = vunpack.c.l.b16 %v2626
      %v2755 = vunpack.c.l.b16 %v2627
      %v2756 = vunpack.c.l.b16 %v2628
      %v2757 = vunpack.c.l.b16 %v2629
      %v2758 = vunpack.c.l.b16 %v2630
      %v2759 = vunpack.c.l.b16 %v2631
      %v2760 = vunpack.c.l.b16 %v2632
      %v2761 = vunpack.c.l.b16 %v2633
      %v2762 = vunpack.c.l.b16 %v2634
      %v2763 = vunpack.c.l.b16 %v2635
      %v2764 = vunpack.c.l.b16 %v2636
      %v2765 = vunpack.c.l.b16 %v2637
      %v2766 = vunpack.c.l.b16 %v2638
      %v2767 = vunpack.c.l.b16 %v2639
      %v2768 = vunpack.c.l.b16 %v2640
      %v2769 = vunpack.c.l.b16 %v2641
      %v2770 = vunpack.c.l.b16 %v2642
      %v2771 = vunpack.c.l.b16 %v2643
      %v2772 = vunpack.c.l.b16 %v2644
      %v2773 = vunpack.c.l.b16 %v2645
      %v2774 = vunpack.c.l.b16 %v2646
      %v2775 = vunpack.c.l.b16 %v2647
      %v2776 = vunpack.c.l.b16 %v2648
      %v2777 = vunpack.c.l.b16 %v2649
      %v2778 = vunpack.c.l.b16 %v2650
      %v2779 = vunpack.c.l.b16 %v2651
      %v2780 = vunpack.c.l.b16 %v2652
      %v2781 = vunpack.c.l.b16 %v2653
      %v2782 = vunpack.c.l.b16 %v2654
      %v2783 = vunpack.c.l.b16 %v2655
      %v2784 = vunpack.c.l.b16 %v2656
      %v2785 = vunpack.c.l.b16 %v2657
      %v2786 = vunpack.c.l.b16 %v2658
      %v2787 = vunpack.c.l.b16 %v2659
      %v2788 = vunpack.c.l.b16 %v2660
      %v2789 = vunpack.c.l.b16 %v2661
      %v2790 = vunpack.c.l.b16 %v2662
      %v2791 = vunpack.c.l.b16 %v2663
      %v2792 = vunpack.c.l.b16 %v2664
      %v2793 = vpack.c.b16 %v2730, %v2729
      %v2794 = vpack.c.b16 %v2732, %v2731
      %v2795 = vpack.c.b16 %v2734, %v2733
      %v2796 = vpack.c.b16 %v2736, %v2735
      %v2797 = vpack.c.b16 %v2738, %v2737
      %v2798 = vpack.c.b16 %v2740, %v2739
      %v2799 = vpack.c.b16 %v2742, %v2741
      %v2800 = vpack.c.b16 %v2744, %v2743
      %v2801 = vpack.c.b16 %v2746, %v2745
      %v2802 = vpack.c.b16 %v2748, %v2747
      %v2803 = vpack.c.b16 %v2750, %v2749
      %v2804 = vpack.c.b16 %v2752, %v2751
      %v2805 = vpack.c.b16 %v2754, %v2753
      %v2806 = vpack.c.b16 %v2756, %v2755
      %v2807 = vpack.c.b16 %v2758, %v2757
      %v2808 = vpack.c.b16 %v2760, %v2759
      %v2809 = vpack.c.b16 %v2762, %v2761
      %v2810 = vpack.c.b16 %v2764, %v2763
      %v2811 = vpack.c.b16 %v2766, %v2765
      %v2812 = vpack.c.b16 %v2768, %v2767
      %v2813 = vpack.c.b16 %v2770, %v2769
      %v2814 = vpack.c.b16 %v2772, %v2771
      %v2815 = vpack.c.b16 %v2774, %v2773
      %v2816 = vpack.c.b16 %v2776, %v2775
      %v2817 = vpack.c.b16 %v2778, %v2777
      %v2818 = vpack.c.b16 %v2780, %v2779
      %v2819 = vpack.c.b16 %v2782, %v2781
      %v2820 = vpack.c.b16 %v2784, %v2783
      %v2821 = vpack.c.b16 %v2786, %v2785
      %v2822 = vpack.c.b16 %v2788, %v2787
      %v2823 = vpack.c.b16 %v2790, %v2789
      %v2824 = vpack.c.b16 %v2792, %v2791
      %2857 = vmatprep.subr.bf16.mxu0 0
      %2858 = vmatpush1.bf16.msra.mxu0 %v2793
      %2859 = vmatprep.subr.bf16.mxu0 0
      %2860 = vmatpush1.bf16.msra.mxu0 %v2794
      %2861 = vmatprep.subr.bf16.mxu0 0
      %2862 = vmatpush1.bf16.msra.mxu0 %v2795
      %2863 = vmatprep.subr.bf16.mxu0 0
      %2864 = vmatpush1.bf16.msra.mxu0 %v2796
      %2865 = vmatprep.subr.bf16.mxu0 0
      %2866 = vmatpush1.bf16.msra.mxu0 %v2797
      %2867 = vmatprep.subr.bf16.mxu0 0
      %2868 = vmatpush1.bf16.msra.mxu0 %v2798
      %2869 = vmatprep.subr.bf16.mxu0 0
      %2870 = vmatpush1.bf16.msra.mxu0 %v2799
      %2871 = vmatprep.subr.bf16.mxu0 0
      %2872 = vmatpush1.bf16.msra.mxu0 %v2800
      %2873 = vmatprep.subr.bf16.mxu0 0
      %2874 = vmatpush1.bf16.msra.mxu0 %v2801
      %2875 = vmatprep.subr.bf16.mxu0 0
      %2876 = vmatpush1.bf16.msra.mxu0 %v2802
      %2877 = vmatprep.subr.bf16.mxu0 0
      %2878 = vmatpush1.bf16.msra.mxu0 %v2803
      %2879 = vmatprep.subr.bf16.mxu0 0
      %2880 = vmatpush1.bf16.msra.mxu0 %v2804
      %2881 = vmatprep.subr.bf16.mxu0 0
      %2882 = vmatpush1.bf16.msra.mxu0 %v2805
      %2883 = vmatprep.subr.bf16.mxu0 0
      %2884 = vmatpush1.bf16.msra.mxu0 %v2806
      %2885 = vmatprep.subr.bf16.mxu0 0
      %2886 = vmatpush1.bf16.msra.mxu0 %v2807
      %2887 = vmatprep.subr.bf16.mxu0 0
      %2888 = vmatpush1.bf16.msra.mxu0 %v2808
      %2889 = vmatprep.mubr.bf16.mxu0 %v2573
      %2890 = vmatmul.mubr.bf16.gmra.mrb[0].mxu0 %v2561
      %v2891 = vpop.f32.mrb[0].mxu0
      %v2892 = vadd.f32 0.0, %v2891
      %v2893 = vpop.f32.mrb[0].mxu0
      %v2894 = vpop.f32.mrb[0].mxu0
      %v2895 = vadd.f32 0.0, %v2894
      %v2896 = vpop.f32.mrb[0].mxu0
      %2897 = vmatprep.mubr.bf16.mxu0 %v2574
      %2898 = vmatmul.mubr.bf16.gmra.mrb[0].mxu0 %v2562
      %v2899 = vpop.f32.mrb[0].mxu0
      %v2900 = vadd.f32 0.0, %v2899
      %v2901 = vpop.f32.mrb[0].mxu0
      %v2902 = vpop.f32.mrb[0].mxu0
      %v2903 = vadd.f32 0.0, %v2902
      %v2904 = vpop.f32.mrb[0].mxu0
      %2905 = vmatprep.mubr.bf16.mxu0 %v2575
      %2906 = vmatmul.mubr.bf16.gmra.mrb[0].mxu0 %v2563
      %v2907 = vpop.f32.mrb[0].mxu0
      %v2908 = vadd.f32 0.0, %v2907
      %v2909 = vpop.f32.mrb[0].mxu0
      %v2910 = vpop.f32.mrb[0].mxu0
      %v2911 = vadd.f32 0.0, %v2910
      %v2912 = vpop.f32.mrb[0].mxu0
      %2913 = vmatprep.mubr.bf16.mxu0 %v2576
      %2914 = vmatmul.mubr.bf16.gmra.mrb[0].mxu0 %v2564
      %v2915 = vpop.f32.mrb[0].mxu0
      %v2916 = vadd.f32 0.0, %v2915
      %v2917 = vpop.f32.mrb[0].mxu0
      %v2918 = vpop.f32.mrb[0].mxu0
      %v2919 = vadd.f32 0.0, %v2918
      %v2920 = vpop.f32.mrb[0].mxu0
      %2921 = vdwg.mxu0
      %2922 = vmatprep.subr.bf16.mxu0 0
      %2923 = vmatpush1.bf16.msra.mxu0 %v2809
      %2924 = vmatprep.subr.bf16.mxu0 0
      %2925 = vmatpush1.bf16.msra.mxu0 %v2810
      %2926 = vmatprep.subr.bf16.mxu0 0
      %2927 = vmatpush1.bf16.msra.mxu0 %v2811
      %2928 = vmatprep.subr.bf16.mxu0 0
      %2929 = vmatpush1.bf16.msra.mxu0 %v2812
      %2930 = vmatprep.subr.bf16.mxu0 0
      %2931 = vmatpush1.bf16.msra.mxu0 %v2813
      %2932 = vmatprep.subr.bf16.mxu0 0
      %2933 = vmatpush1.bf16.msra.mxu0 %v2814
      %2934 = vmatprep.subr.bf16.mxu0 0
      %2935 = vmatpush1.bf16.msra.mxu0 %v2815
      %2936 = vmatprep.subr.bf16.mxu0 0
      %2937 = vmatpush1.bf16.msra.mxu0 %v2816
      %2938 = vmatprep.subr.bf16.mxu0 0
      %2939 = vmatpush1.bf16.msra.mxu0 %v2817
      %2940 = vmatprep.subr.bf16.mxu0 0
      %2941 = vmatpush1.bf16.msra.mxu0 %v2818
      %2942 = vmatprep.subr.bf16.mxu0 0
      %2943 = vmatpush1.bf16.msra.mxu0 %v2819
      %2944 = vmatprep.subr.bf16.mxu0 0
      %2945 = vmatpush1.bf16.msra.mxu0 %v2820
      %2946 = vmatprep.subr.bf16.mxu0 0
      %2947 = vmatpush1.bf16.msra.mxu0 %v2821
      %2948 = vmatprep.subr.bf16.mxu0 0
      %2949 = vmatpush1.bf16.msra.mxu0 %v2822
      %2950 = vmatprep.subr.bf16.mxu0 0
      %2951 = vmatpush1.bf16.msra.mxu0 %v2823
      %2952 = vmatprep.subr.bf16.mxu0 0
      %2953 = vmatpush1.bf16.msra.mxu0 %v2824
      %2954 = vmatprep.mubr.bf16.mxu0 %v2597
      %2955 = vmatmul.mubr.bf16.gmra.mrb[0].mxu0 %v2585
      %v2956 = vpop.f32.mrb[0].mxu0
      %v2957 = vadd.f32 %v2892, %v2956
      %v2958 = vpop.f32.mrb[0].mxu0
      %v2959 = vpop.f32.mrb[0].mxu0
      %v2960 = vadd.f32 %v2895, %v2959
      %v2961 = vpop.f32.mrb[0].mxu0
      %2962 = vmatprep.mubr.bf16.mxu0 %v2598
      %2963 = vmatmul.mubr.bf16.gmra.mrb[0].mxu0 %v2586
      %v2964 = vpop.f32.mrb[0].mxu0
      %v2965 = vadd.f32 %v2900, %v2964
      %v2966 = vpop.f32.mrb[0].mxu0
      %v2967 = vpop.f32.mrb[0].mxu0
      %v2968 = vadd.f32 %v2903, %v2967
      %v2969 = vpop.f32.mrb[0].mxu0
      %2970 = vmatprep.mubr.bf16.mxu0 %v2599
      %2971 = vmatmul.mubr.bf16.gmra.mrb[0].mxu0 %v2587
      %v2972 = vpop.f32.mrb[0].mxu0
      %v2973 = vadd.f32 %v2908, %v2972
      %v2974 = vpop.f32.mrb[0].mxu0
      %v2975 = vpop.f32.mrb[0].mxu0
      %v2976 = vadd.f32 %v2911, %v2975
      %v2977 = vpop.f32.mrb[0].mxu0
      %2978 = vmatprep.mubr.bf16.mxu0 %v2600
      %2979 = vmatmul.mubr.bf16.gmra.mrb[0].mxu0 %v2588
      %v2980 = vpop.f32.mrb[0].mxu0
      %v2981 = vadd.f32 %v2916, %v2980
      %v2982 = vpop.f32.mrb[0].mxu0
      %v2983 = vpop.f32.mrb[0].mxu0
      %v2984 = vadd.f32 %v2919, %v2983
      %v2985 = vpop.f32.mrb[0].mxu0
      %2986 = vdwg.mxu0
      %vm2987 = vcmp.ge.f32.partialorder %v2957, 0.0
      %vm2988 = vcmp.ge.f32.partialorder %v2960, 0.0
      %vm2989 = vcmp.ge.f32.partialorder %v2965, 0.0
      %vm2990 = vcmp.ge.f32.partialorder %v2968, 0.0
      %vm2991 = vcmp.ge.f32.partialorder %v2973, 0.0
      %vm2992 = vcmp.ge.f32.partialorder %v2976, 0.0
      %vm2993 = vcmp.ge.f32.partialorder %v2981, 0.0
      %vm2994 = vcmp.ge.f32.partialorder %v2984, 0.0
      %v2995 = vmul.f32 %v2957, 0.1
      %v2996 = vmul.f32 %v2960, 0.1
      %v2997 = vmul.f32 %v2965, 0.1
      %v2998 = vmul.f32 %v2968, 0.1
      %v2999 = vmul.f32 %v2973, 0.1
      %v3000 = vmul.f32 %v2976, 0.1
      %v3001 = vmul.f32 %v2981, 0.1
      %v3002 = vmul.f32 %v2984, 0.1
      %v3003 = vsel %vm2987, %v2957, %v2995
      %v3004 = vsel %vm2988, %v2960, %v2996
      %v3005 = vsel %vm2989, %v2965, %v2997
      %v3006 = vsel %vm2990, %v2968, %v2998
      %v3007 = vsel %vm2991, %v2973, %v2999
      %v3008 = vsel %vm2992, %v2976, %v3000
      %v3009 = vsel %vm2993, %v2981, %v3001
      %v3010 = vsel %vm2994, %v2984, %v3002
      %s3011 = scalar_lea.vmem [#allocation3], 16
      %3012 = vst.msk [vmem:[%s3011 + $0x1] sm:$0xff] %vm300, %v3003
      %3013 = vst.msk [vmem:[%s3011 + $0x11] sm:$0xff] %vm300, %v3004
      %3014 = vst.msk [vmem:[%s3011 + $0x21] sm:$0xff] %vm300, %v3005
      %3015 = vst.msk [vmem:[%s3011 + $0x31] sm:$0xff] %vm300, %v3006
      %3016 = vst.msk [vmem:[%s3011 + $0x41] sm:$0xff] %vm300, %v3007
      %3017 = vst.msk [vmem:[%s3011 + $0x51] sm:$0xff] %vm300, %v3008
      %3018 = vst.msk [vmem:[%s3011 + $0x61] sm:$0xff] %vm300, %v3009
      %3019 = vst.msk [vmem:[%s3011 + $0x71] sm:$0xff] %vm300, %v3010
      %v3020 = vld [vmem:[%s447 + $0x2] sm:$0xff]
      %v3021 = vld [vmem:[%s447 + $0x12] sm:$0xff]
      %v3022 = vld [vmem:[%s447 + $0x22] sm:$0xff]
      %v3023 = vld [vmem:[%s447 + $0x32] sm:$0xff]
      %v3024 = vld [vmem:[%s447 + $0x42] sm:$0xff]
      %v3025 = vld [vmem:[%s447 + $0x52] sm:$0xff]
      %v3026 = vld [vmem:[%s447 + $0x62] sm:$0xff]
      %v3027 = vld [vmem:[%s447 + $0x72] sm:$0xff]
      %v3028 = vpack.c.bf16 %v3021, %v3020
      %v3029 = vpack.c.bf16 %v3023, %v3022
      %v3030 = vpack.c.bf16 %v3025, %v3024
      %v3031 = vpack.c.bf16 %v3027, %v3026
      %v3032 = vld [vmem:[%s447 + $0x1] sm:$0xff]
      %v3033 = vld [vmem:[%s447 + $0x11] sm:$0xff]
      %v3034 = vld [vmem:[%s447 + $0x21] sm:$0xff]
      %v3035 = vld [vmem:[%s447 + $0x31] sm:$0xff]
      %v3036 = vld [vmem:[%s447 + $0x41] sm:$0xff]
      %v3037 = vld [vmem:[%s447 + $0x51] sm:$0xff]
      %v3038 = vld [vmem:[%s447 + $0x61] sm:$0xff]
      %v3039 = vld [vmem:[%s447 + $0x71] sm:$0xff]
      %v3040 = vpack.c.bf16 %v3033, %v3032
      %v3041 = vpack.c.bf16 %v3035, %v3034
      %v3042 = vpack.c.bf16 %v3037, %v3036
      %v3043 = vpack.c.bf16 %v3039, %v3038
      %v3044 = vld [vmem:[#allocation2 + $0x2] sm:$0xff]
      %v3045 = vld [vmem:[#allocation2 + $0x12] sm:$0xff]
      %v3046 = vld [vmem:[#allocation2 + $0x22] sm:$0xff]
      %v3047 = vld [vmem:[#allocation2 + $0x32] sm:$0xff]
      %v3048 = vld [vmem:[#allocation2 + $0x42] sm:$0xff]
      %v3049 = vld [vmem:[#allocation2 + $0x52] sm:$0xff]
      %v3050 = vld [vmem:[#allocation2 + $0x62] sm:$0xff]
      %v3051 = vld [vmem:[#allocation2 + $0x72] sm:$0xff]
      %v3052 = vpack.c.bf16 %v3045, %v3044
      %v3053 = vpack.c.bf16 %v3047, %v3046
      %v3054 = vpack.c.bf16 %v3049, %v3048
      %v3055 = vpack.c.bf16 %v3051, %v3050
      %v3056 = vld [vmem:[#allocation2 + $0x1] sm:$0xff]
      %v3057 = vld [vmem:[#allocation2 + $0x11] sm:$0xff]
      %v3058 = vld [vmem:[#allocation2 + $0x21] sm:$0xff]
      %v3059 = vld [vmem:[#allocation2 + $0x31] sm:$0xff]
      %v3060 = vld [vmem:[#allocation2 + $0x41] sm:$0xff]
      %v3061 = vld [vmem:[#allocation2 + $0x51] sm:$0xff]
      %v3062 = vld [vmem:[#allocation2 + $0x61] sm:$0xff]
      %v3063 = vld [vmem:[#allocation2 + $0x71] sm:$0xff]
      %v3064 = vpack.c.bf16 %v3057, %v3056
      %v3065 = vpack.c.bf16 %v3059, %v3058
      %v3066 = vpack.c.bf16 %v3061, %v3060
      %v3067 = vpack.c.bf16 %v3063, %v3062
      %s3068 = scalar_lea.vmem %s5, 256
      %v3069 = vld [vmem:[%s3068] sm:$0xf]
      %v3070 = vld [vmem:[%s3068 + $0x4] sm:$0xf]
      %v3071 = vld [vmem:[%s3068 + $0x8] sm:$0xf]
      %v3072 = vld [vmem:[%s3068 + $0xc] sm:$0xf]
      %v3073 = vld [vmem:[%s3068 + $0x10] sm:$0xf]
      %v3074 = vld [vmem:[%s3068 + $0x14] sm:$0xf]
      %v3075 = vld [vmem:[%s3068 + $0x18] sm:$0xf]
      %v3076 = vld [vmem:[%s3068 + $0x1c] sm:$0xf]
      %v3077 = vld [vmem:[%s3068 + $0x20] sm:$0xf]
      %v3078 = vld [vmem:[%s3068 + $0x24] sm:$0xf]
      %v3079 = vld [vmem:[%s3068 + $0x28] sm:$0xf]
      %v3080 = vld [vmem:[%s3068 + $0x2c] sm:$0xf]
      %v3081 = vld [vmem:[%s3068 + $0x30] sm:$0xf]
      %v3082 = vld [vmem:[%s3068 + $0x34] sm:$0xf]
      %v3083 = vld [vmem:[%s3068 + $0x38] sm:$0xf]
      %v3084 = vld [vmem:[%s3068 + $0x3c] sm:$0xf]
      %v3085 = vld [vmem:[%s3068 + $0x40] sm:$0xf]
      %v3086 = vld [vmem:[%s3068 + $0x44] sm:$0xf]
      %v3087 = vld [vmem:[%s3068 + $0x48] sm:$0xf]
      %v3088 = vld [vmem:[%s3068 + $0x4c] sm:$0xf]
      %v3089 = vld [vmem:[%s3068 + $0x50] sm:$0xf]
      %v3090 = vld [vmem:[%s3068 + $0x54] sm:$0xf]
      %v3091 = vld [vmem:[%s3068 + $0x58] sm:$0xf]
      %v3092 = vld [vmem:[%s3068 + $0x5c] sm:$0xf]
      %v3093 = vld [vmem:[%s3068 + $0x60] sm:$0xf]
      %v3094 = vld [vmem:[%s3068 + $0x64] sm:$0xf]
      %v3095 = vld [vmem:[%s3068 + $0x68] sm:$0xf]
      %v3096 = vld [vmem:[%s3068 + $0x6c] sm:$0xf]
      %v3097 = vld [vmem:[%s3068 + $0x70] sm:$0xf]
      %v3098 = vld [vmem:[%s3068 + $0x74] sm:$0xf]
      %v3099 = vld [vmem:[%s3068 + $0x78] sm:$0xf]
      %v3100 = vld [vmem:[%s3068 + $0x7c] sm:$0xf]
      %v3101 = vld [vmem:[%s3068 + $0x80] sm:$0xf]
      %v3102 = vld [vmem:[%s3068 + $0x84] sm:$0xf]
      %v3103 = vld [vmem:[%s3068 + $0x88] sm:$0xf]
      %v3104 = vld [vmem:[%s3068 + $0x8c] sm:$0xf]
      %v3105 = vld [vmem:[%s3068 + $0x90] sm:$0xf]
      %v3106 = vld [vmem:[%s3068 + $0x94] sm:$0xf]
      %v3107 = vld [vmem:[%s3068 + $0x98] sm:$0xf]
      %v3108 = vld [vmem:[%s3068 + $0x9c] sm:$0xf]
      %v3109 = vld [vmem:[%s3068 + $0xa0] sm:$0xf]
      %v3110 = vld [vmem:[%s3068 + $0xa4] sm:$0xf]
      %v3111 = vld [vmem:[%s3068 + $0xa8] sm:$0xf]
      %v3112 = vld [vmem:[%s3068 + $0xac] sm:$0xf]
      %v3113 = vld [vmem:[%s3068 + $0xb0] sm:$0xf]
      %v3114 = vld [vmem:[%s3068 + $0xb4] sm:$0xf]
      %v3115 = vld [vmem:[%s3068 + $0xb8] sm:$0xf]
      %v3116 = vld [vmem:[%s3068 + $0xbc] sm:$0xf]
      %v3117 = vld [vmem:[%s3068 + $0xc0] sm:$0xf]
      %v3118 = vld [vmem:[%s3068 + $0xc4] sm:$0xf]
      %v3119 = vld [vmem:[%s3068 + $0xc8] sm:$0xf]
      %v3120 = vld [vmem:[%s3068 + $0xcc] sm:$0xf]
      %v3121 = vld [vmem:[%s3068 + $0xd0] sm:$0xf]
      %v3122 = vld [vmem:[%s3068 + $0xd4] sm:$0xf]
      %v3123 = vld [vmem:[%s3068 + $0xd8] sm:$0xf]
      %v3124 = vld [vmem:[%s3068 + $0xdc] sm:$0xf]
      %v3125 = vld [vmem:[%s3068 + $0xe0] sm:$0xf]
      %v3126 = vld [vmem:[%s3068 + $0xe4] sm:$0xf]
      %v3127 = vld [vmem:[%s3068 + $0xe8] sm:$0xf]
      %v3128 = vld [vmem:[%s3068 + $0xec] sm:$0xf]
      %v3129 = vld [vmem:[%s3068 + $0xf0] sm:$0xf]
      %v3130 = vld [vmem:[%s3068 + $0xf4] sm:$0xf]
      %v3131 = vld [vmem:[%s3068 + $0xf8] sm:$0xf]
      %v3132 = vld [vmem:[%s3068 + $0xfc] sm:$0xf]
      %v3197 = vunpack.c.l.b16 %v3069
      %v3198 = vunpack.c.l.b16 %v3070
      %v3199 = vunpack.c.l.b16 %v3071
      %v3200 = vunpack.c.l.b16 %v3072
      %v3201 = vunpack.c.l.b16 %v3073
      %v3202 = vunpack.c.l.b16 %v3074
      %v3203 = vunpack.c.l.b16 %v3075
      %v3204 = vunpack.c.l.b16 %v3076
      %v3205 = vunpack.c.l.b16 %v3077
      %v3206 = vunpack.c.l.b16 %v3078
      %v3207 = vunpack.c.l.b16 %v3079
      %v3208 = vunpack.c.l.b16 %v3080
      %v3209 = vunpack.c.l.b16 %v3081
      %v3210 = vunpack.c.l.b16 %v3082
      %v3211 = vunpack.c.l.b16 %v3083
      %v3212 = vunpack.c.l.b16 %v3084
      %v3213 = vunpack.c.l.b16 %v3085
      %v3214 = vunpack.c.l.b16 %v3086
      %v3215 = vunpack.c.l.b16 %v3087
      %v3216 = vunpack.c.l.b16 %v3088
      %v3217 = vunpack.c.l.b16 %v3089
      %v3218 = vunpack.c.l.b16 %v3090
      %v3219 = vunpack.c.l.b16 %v3091
      %v3220 = vunpack.c.l.b16 %v3092
      %v3221 = vunpack.c.l.b16 %v3093
      %v3222 = vunpack.c.l.b16 %v3094
      %v3223 = vunpack.c.l.b16 %v3095
      %v3224 = vunpack.c.l.b16 %v3096
      %v3225 = vunpack.c.l.b16 %v3097
      %v3226 = vunpack.c.l.b16 %v3098
      %v3227 = vunpack.c.l.b16 %v3099
      %v3228 = vunpack.c.l.b16 %v3100
      %v3229 = vunpack.c.l.b16 %v3101
      %v3230 = vunpack.c.l.b16 %v3102
      %v3231 = vunpack.c.l.b16 %v3103
      %v3232 = vunpack.c.l.b16 %v3104
      %v3233 = vunpack.c.l.b16 %v3105
      %v3234 = vunpack.c.l.b16 %v3106
      %v3235 = vunpack.c.l.b16 %v3107
      %v3236 = vunpack.c.l.b16 %v3108
      %v3237 = vunpack.c.l.b16 %v3109
      %v3238 = vunpack.c.l.b16 %v3110
      %v3239 = vunpack.c.l.b16 %v3111
      %v3240 = vunpack.c.l.b16 %v3112
      %v3241 = vunpack.c.l.b16 %v3113
      %v3242 = vunpack.c.l.b16 %v3114
      %v3243 = vunpack.c.l.b16 %v3115
      %v3244 = vunpack.c.l.b16 %v3116
      %v3245 = vunpack.c.l.b16 %v3117
      %v3246 = vunpack.c.l.b16 %v3118
      %v3247 = vunpack.c.l.b16 %v3119
      %v3248 = vunpack.c.l.b16 %v3120
      %v3249 = vunpack.c.l.b16 %v3121
      %v3250 = vunpack.c.l.b16 %v3122
      %v3251 = vunpack.c.l.b16 %v3123
      %v3252 = vunpack.c.l.b16 %v3124
      %v3253 = vunpack.c.l.b16 %v3125
      %v3254 = vunpack.c.l.b16 %v3126
      %v3255 = vunpack.c.l.b16 %v3127
      %v3256 = vunpack.c.l.b16 %v3128
      %v3257 = vunpack.c.l.b16 %v3129
      %v3258 = vunpack.c.l.b16 %v3130
      %v3259 = vunpack.c.l.b16 %v3131
      %v3260 = vunpack.c.l.b16 %v3132
      %v3261 = vpack.c.b16 %v3198, %v3197
      %v3262 = vpack.c.b16 %v3200, %v3199
      %v3263 = vpack.c.b16 %v3202, %v3201
      %v3264 = vpack.c.b16 %v3204, %v3203
      %v3265 = vpack.c.b16 %v3206, %v3205
      %v3266 = vpack.c.b16 %v3208, %v3207
      %v3267 = vpack.c.b16 %v3210, %v3209
      %v3268 = vpack.c.b16 %v3212, %v3211
      %v3269 = vpack.c.b16 %v3214, %v3213
      %v3270 = vpack.c.b16 %v3216, %v3215
      %v3271 = vpack.c.b16 %v3218, %v3217
      %v3272 = vpack.c.b16 %v3220, %v3219
      %v3273 = vpack.c.b16 %v3222, %v3221
      %v3274 = vpack.c.b16 %v3224, %v3223
      %v3275 = vpack.c.b16 %v3226, %v3225
      %v3276 = vpack.c.b16 %v3228, %v3227
      %v3277 = vpack.c.b16 %v3230, %v3229
      %v3278 = vpack.c.b16 %v3232, %v3231
      %v3279 = vpack.c.b16 %v3234, %v3233
      %v3280 = vpack.c.b16 %v3236, %v3235
      %v3281 = vpack.c.b16 %v3238, %v3237
      %v3282 = vpack.c.b16 %v3240, %v3239
      %v3283 = vpack.c.b16 %v3242, %v3241
      %v3284 = vpack.c.b16 %v3244, %v3243
      %v3285 = vpack.c.b16 %v3246, %v3245
      %v3286 = vpack.c.b16 %v3248, %v3247
      %v3287 = vpack.c.b16 %v3250, %v3249
      %v3288 = vpack.c.b16 %v3252, %v3251
      %v3289 = vpack.c.b16 %v3254, %v3253
      %v3290 = vpack.c.b16 %v3256, %v3255
      %v3291 = vpack.c.b16 %v3258, %v3257
      %v3292 = vpack.c.b16 %v3260, %v3259
      %3325 = vmatprep.subr.bf16.mxu0 0
      %3326 = vmatpush1.bf16.msra.mxu0 %v3261
      %3327 = vmatprep.subr.bf16.mxu0 0
      %3328 = vmatpush1.bf16.msra.mxu0 %v3262
      %3329 = vmatprep.subr.bf16.mxu0 0
      %3330 = vmatpush1.bf16.msra.mxu0 %v3263
      %3331 = vmatprep.subr.bf16.mxu0 0
      %3332 = vmatpush1.bf16.msra.mxu0 %v3264
      %3333 = vmatprep.subr.bf16.mxu0 0
      %3334 = vmatpush1.bf16.msra.mxu0 %v3265
      %3335 = vmatprep.subr.bf16.mxu0 0
      %3336 = vmatpush1.bf16.msra.mxu0 %v3266
      %3337 = vmatprep.subr.bf16.mxu0 0
      %3338 = vmatpush1.bf16.msra.mxu0 %v3267
      %3339 = vmatprep.subr.bf16.mxu0 0
      %3340 = vmatpush1.bf16.msra.mxu0 %v3268
      %3341 = vmatprep.subr.bf16.mxu0 0
      %3342 = vmatpush1.bf16.msra.mxu0 %v3269
      %3343 = vmatprep.subr.bf16.mxu0 0
      %3344 = vmatpush1.bf16.msra.mxu0 %v3270
      %3345 = vmatprep.subr.bf16.mxu0 0
      %3346 = vmatpush1.bf16.msra.mxu0 %v3271
      %3347 = vmatprep.subr.bf16.mxu0 0
      %3348 = vmatpush1.bf16.msra.mxu0 %v3272
      %3349 = vmatprep.subr.bf16.mxu0 0
      %3350 = vmatpush1.bf16.msra.mxu0 %v3273
      %3351 = vmatprep.subr.bf16.mxu0 0
      %3352 = vmatpush1.bf16.msra.mxu0 %v3274
      %3353 = vmatprep.subr.bf16.mxu0 0
      %3354 = vmatpush1.bf16.msra.mxu0 %v3275
      %3355 = vmatprep.subr.bf16.mxu0 0
      %3356 = vmatpush1.bf16.msra.mxu0 %v3276
      %3357 = vmatprep.mubr.bf16.mxu0 %v3040
      %3358 = vmatmul.mubr.bf16.gmra.mrb[0].mxu0 %v3028
      %v3359 = vpop.f32.mrb[0].mxu0
      %v3360 = vadd.f32 0.0, %v3359
      %v3361 = vpop.f32.mrb[0].mxu0
      %v3362 = vpop.f32.mrb[0].mxu0
      %v3363 = vadd.f32 0.0, %v3362
      %v3364 = vpop.f32.mrb[0].mxu0
      %3365 = vmatprep.mubr.bf16.mxu0 %v3041
      %3366 = vmatmul.mubr.bf16.gmra.mrb[0].mxu0 %v3029
      %v3367 = vpop.f32.mrb[0].mxu0
      %v3368 = vadd.f32 0.0, %v3367
      %v3369 = vpop.f32.mrb[0].mxu0
      %v3370 = vpop.f32.mrb[0].mxu0
      %v3371 = vadd.f32 0.0, %v3370
      %v3372 = vpop.f32.mrb[0].mxu0
      %3373 = vmatprep.mubr.bf16.mxu0 %v3042
      %3374 = vmatmul.mubr.bf16.gmra.mrb[0].mxu0 %v3030
      %v3375 = vpop.f32.mrb[0].mxu0
      %v3376 = vadd.f32 0.0, %v3375
      %v3377 = vpop.f32.mrb[0].mxu0
      %v3378 = vpop.f32.mrb[0].mxu0
      %v3379 = vadd.f32 0.0, %v3378
      %v3380 = vpop.f32.mrb[0].mxu0
      %3381 = vmatprep.mubr.bf16.mxu0 %v3043
      %3382 = vmatmul.mubr.bf16.gmra.mrb[0].mxu0 %v3031
      %v3383 = vpop.f32.mrb[0].mxu0
      %v3384 = vadd.f32 0.0, %v3383
      %v3385 = vpop.f32.mrb[0].mxu0
      %v3386 = vpop.f32.mrb[0].mxu0
      %v3387 = vadd.f32 0.0, %v3386
      %v3388 = vpop.f32.mrb[0].mxu0
      %3389 = vdwg.mxu0
      %3390 = vmatprep.subr.bf16.mxu0 0
      %3391 = vmatpush1.bf16.msra.mxu0 %v3277
      %3392 = vmatprep.subr.bf16.mxu0 0
      %3393 = vmatpush1.bf16.msra.mxu0 %v3278
      %3394 = vmatprep.subr.bf16.mxu0 0
      %3395 = vmatpush1.bf16.msra.mxu0 %v3279
      %3396 = vmatprep.subr.bf16.mxu0 0
      %3397 = vmatpush1.bf16.msra.mxu0 %v3280
      %3398 = vmatprep.subr.bf16.mxu0 0
      %3399 = vmatpush1.bf16.msra.mxu0 %v3281
      %3400 = vmatprep.subr.bf16.mxu0 0
      %3401 = vmatpush1.bf16.msra.mxu0 %v3282
      %3402 = vmatprep.subr.bf16.mxu0 0
      %3403 = vmatpush1.bf16.msra.mxu0 %v3283
      %3404 = vmatprep.subr.bf16.mxu0 0
      %3405 = vmatpush1.bf16.msra.mxu0 %v3284
      %3406 = vmatprep.subr.bf16.mxu0 0
      %3407 = vmatpush1.bf16.msra.mxu0 %v3285
      %3408 = vmatprep.subr.bf16.mxu0 0
      %3409 = vmatpush1.bf16.msra.mxu0 %v3286
      %3410 = vmatprep.subr.bf16.mxu0 0
      %3411 = vmatpush1.bf16.msra.mxu0 %v3287
      %3412 = vmatprep.subr.bf16.mxu0 0
      %3413 = vmatpush1.bf16.msra.mxu0 %v3288
      %3414 = vmatprep.subr.bf16.mxu0 0
      %3415 = vmatpush1.bf16.msra.mxu0 %v3289
      %3416 = vmatprep.subr.bf16.mxu0 0
      %3417 = vmatpush1.bf16.msra.mxu0 %v3290
      %3418 = vmatprep.subr.bf16.mxu0 0
      %3419 = vmatpush1.bf16.msra.mxu0 %v3291
      %3420 = vmatprep.subr.bf16.mxu0 0
      %3421 = vmatpush1.bf16.msra.mxu0 %v3292
      %3422 = vmatprep.mubr.bf16.mxu0 %v3064
      %3423 = vmatmul.mubr.bf16.gmra.mrb[0].mxu0 %v3052
      %v3424 = vpop.f32.mrb[0].mxu0
      %v3425 = vadd.f32 %v3360, %v3424
      %v3426 = vpop.f32.mrb[0].mxu0
      %v3427 = vpop.f32.mrb[0].mxu0
      %v3428 = vadd.f32 %v3363, %v3427
      %v3429 = vpop.f32.mrb[0].mxu0
      %3430 = vmatprep.mubr.bf16.mxu0 %v3065
      %3431 = vmatmul.mubr.bf16.gmra.mrb[0].mxu0 %v3053
      %v3432 = vpop.f32.mrb[0].mxu0
      %v3433 = vadd.f32 %v3368, %v3432
      %v3434 = vpop.f32.mrb[0].mxu0
      %v3435 = vpop.f32.mrb[0].mxu0
      %v3436 = vadd.f32 %v3371, %v3435
      %v3437 = vpop.f32.mrb[0].mxu0
      %3438 = vmatprep.mubr.bf16.mxu0 %v3066
      %3439 = vmatmul.mubr.bf16.gmra.mrb[0].mxu0 %v3054
      %v3440 = vpop.f32.mrb[0].mxu0
      %v3441 = vadd.f32 %v3376, %v3440
      %v3442 = vpop.f32.mrb[0].mxu0
      %v3443 = vpop.f32.mrb[0].mxu0
      %v3444 = vadd.f32 %v3379, %v3443
      %v3445 = vpop.f32.mrb[0].mxu0
      %3446 = vmatprep.mubr.bf16.mxu0 %v3067
      %3447 = vmatmul.mubr.bf16.gmra.mrb[0].mxu0 %v3055
      %v3448 = vpop.f32.mrb[0].mxu0
      %v3449 = vadd.f32 %v3384, %v3448
      %v3450 = vpop.f32.mrb[0].mxu0
      %v3451 = vpop.f32.mrb[0].mxu0
      %v3452 = vadd.f32 %v3387, %v3451
      %v3453 = vpop.f32.mrb[0].mxu0
      %3454 = vdwg.mxu0
      %vm3455 = vcmp.ge.f32.partialorder %v3425, 0.0
      %vm3456 = vcmp.ge.f32.partialorder %v3428, 0.0
      %vm3457 = vcmp.ge.f32.partialorder %v3433, 0.0
      %vm3458 = vcmp.ge.f32.partialorder %v3436, 0.0
      %vm3459 = vcmp.ge.f32.partialorder %v3441, 0.0
      %vm3460 = vcmp.ge.f32.partialorder %v3444, 0.0
      %vm3461 = vcmp.ge.f32.partialorder %v3449, 0.0
      %vm3462 = vcmp.ge.f32.partialorder %v3452, 0.0
      %v3463 = vmul.f32 %v3425, 0.1
      %v3464 = vmul.f32 %v3428, 0.1
      %v3465 = vmul.f32 %v3433, 0.1
      %v3466 = vmul.f32 %v3436, 0.1
      %v3467 = vmul.f32 %v3441, 0.1
      %v3468 = vmul.f32 %v3444, 0.1
      %v3469 = vmul.f32 %v3449, 0.1
      %v3470 = vmul.f32 %v3452, 0.1
      %v3471 = vsel %vm3455, %v3425, %v3463
      %v3472 = vsel %vm3456, %v3428, %v3464
      %v3473 = vsel %vm3457, %v3433, %v3465
      %v3474 = vsel %vm3458, %v3436, %v3466
      %v3475 = vsel %vm3459, %v3441, %v3467
      %v3476 = vsel %vm3460, %v3444, %v3468
      %v3477 = vsel %vm3461, %v3449, %v3469
      %v3478 = vsel %vm3462, %v3452, %v3470
      %s3479 = scalar_lea.vmem [#allocation3], 176
      %3480 = vst.msk [vmem:[%s3479 + $0x1] sm:$0xff] %vm300, %v3471
      %3481 = vst.msk [vmem:[%s3479 + $0x11] sm:$0xff] %vm300, %v3472
      %3482 = vst.msk [vmem:[%s3479 + $0x21] sm:$0xff] %vm300, %v3473
      %3483 = vst.msk [vmem:[%s3479 + $0x31] sm:$0xff] %vm300, %v3474
      %3484 = vst.msk [vmem:[%s3479 + $0x41] sm:$0xff] %vm300, %v3475
      %3485 = vst.msk [vmem:[%s3479 + $0x51] sm:$0xff] %vm300, %v3476
      %3486 = vst.msk [vmem:[%s3479 + $0x61] sm:$0xff] %vm300, %v3477
      %3487 = vst.msk [vmem:[%s3479 + $0x71] sm:$0xff] %vm300, %v3478
      %v3488 = vld [vmem:[%s528 + $0x1] sm:$0xff]
      %v3489 = vld [vmem:[%s528 + $0x11] sm:$0xff]
      %v3490 = vld [vmem:[%s528 + $0x21] sm:$0xff]
      %v3491 = vld [vmem:[%s528 + $0x31] sm:$0xff]
      %v3492 = vld [vmem:[%s528 + $0x41] sm:$0xff]
      %v3493 = vld [vmem:[%s528 + $0x51] sm:$0xff]
      %v3494 = vld [vmem:[%s528 + $0x61] sm:$0xff]
      %v3495 = vld [vmem:[%s528 + $0x71] sm:$0xff]
      %v3496 = vpack.c.bf16 %v3489, %v3488
      %v3497 = vpack.c.bf16 %v3491, %v3490
      %v3498 = vpack.c.bf16 %v3493, %v3492
      %v3499 = vpack.c.bf16 %v3495, %v3494
      %v3500 = vld [vmem:[%s528] sm:$0xff]
      %v3501 = vld [vmem:[%s528 + $0x10] sm:$0xff]
      %v3502 = vld [vmem:[%s528 + $0x20] sm:$0xff]
      %v3503 = vld [vmem:[%s528 + $0x30] sm:$0xff]
      %v3504 = vld [vmem:[%s528 + $0x40] sm:$0xff]
      %v3505 = vld [vmem:[%s528 + $0x50] sm:$0xff]
      %v3506 = vld [vmem:[%s528 + $0x60] sm:$0xff]
      %v3507 = vld [vmem:[%s528 + $0x70] sm:$0xff]
      %v3508 = vpack.c.bf16 %v3501, %v3500
      %v3509 = vpack.c.bf16 %v3503, %v3502
      %v3510 = vpack.c.bf16 %v3505, %v3504
      %v3511 = vpack.c.bf16 %v3507, %v3506
      %v3512 = vld [vmem:[%s447 + $0x1] sm:$0xff]
      %v3513 = vld [vmem:[%s447 + $0x11] sm:$0xff]
      %v3514 = vld [vmem:[%s447 + $0x21] sm:$0xff]
      %v3515 = vld [vmem:[%s447 + $0x31] sm:$0xff]
      %v3516 = vld [vmem:[%s447 + $0x41] sm:$0xff]
      %v3517 = vld [vmem:[%s447 + $0x51] sm:$0xff]
      %v3518 = vld [vmem:[%s447 + $0x61] sm:$0xff]
      %v3519 = vld [vmem:[%s447 + $0x71] sm:$0xff]
      %v3520 = vpack.c.bf16 %v3513, %v3512
      %v3521 = vpack.c.bf16 %v3515, %v3514
      %v3522 = vpack.c.bf16 %v3517, %v3516
      %v3523 = vpack.c.bf16 %v3519, %v3518
      %v3524 = vld [vmem:[%s447] sm:$0xff]
      %v3525 = vld [vmem:[%s447 + $0x10] sm:$0xff]
      %v3526 = vld [vmem:[%s447 + $0x20] sm:$0xff]
      %v3527 = vld [vmem:[%s447 + $0x30] sm:$0xff]
      %v3528 = vld [vmem:[%s447 + $0x40] sm:$0xff]
      %v3529 = vld [vmem:[%s447 + $0x50] sm:$0xff]
      %v3530 = vld [vmem:[%s447 + $0x60] sm:$0xff]
      %v3531 = vld [vmem:[%s447 + $0x70] sm:$0xff]
      %v3532 = vpack.c.bf16 %v3525, %v3524
      %v3533 = vpack.c.bf16 %v3527, %v3526
      %v3534 = vpack.c.bf16 %v3529, %v3528
      %v3535 = vpack.c.bf16 %v3531, %v3530
      %s3536 = scalar_lea.vmem %s5, 512
      %v3537 = vld [vmem:[%s3536] sm:$0xf]
      %v3538 = vld [vmem:[%s3536 + $0x4] sm:$0xf]
      %v3539 = vld [vmem:[%s3536 + $0x8] sm:$0xf]
      %v3540 = vld [vmem:[%s3536 + $0xc] sm:$0xf]
      %v3541 = vld [vmem:[%s3536 + $0x10] sm:$0xf]
      %v3542 = vld [vmem:[%s3536 + $0x14] sm:$0xf]
      %v3543 = vld [vmem:[%s3536 + $0x18] sm:$0xf]
      %v3544 = vld [vmem:[%s3536 + $0x1c] sm:$0xf]
      %v3545 = vld [vmem:[%s3536 + $0x20] sm:$0xf]
      %v3546 = vld [vmem:[%s3536 + $0x24] sm:$0xf]
      %v3547 = vld [vmem:[%s3536 + $0x28] sm:$0xf]
      %v3548 = vld [vmem:[%s3536 + $0x2c] sm:$0xf]
      %v3549 = vld [vmem:[%s3536 + $0x30] sm:$0xf]
      %v3550 = vld [vmem:[%s3536 + $0x34] sm:$0xf]
      %v3551 = vld [vmem:[%s3536 + $0x38] sm:$0xf]
      %v3552 = vld [vmem:[%s3536 + $0x3c] sm:$0xf]
      %v3553 = vld [vmem:[%s3536 + $0x40] sm:$0xf]
      %v3554 = vld [vmem:[%s3536 + $0x44] sm:$0xf]
      %v3555 = vld [vmem:[%s3536 + $0x48] sm:$0xf]
      %v3556 = vld [vmem:[%s3536 + $0x4c] sm:$0xf]
      %v3557 = vld [vmem:[%s3536 + $0x50] sm:$0xf]
      %v3558 = vld [vmem:[%s3536 + $0x54] sm:$0xf]
      %v3559 = vld [vmem:[%s3536 + $0x58] sm:$0xf]
      %v3560 = vld [vmem:[%s3536 + $0x5c] sm:$0xf]
      %v3561 = vld [vmem:[%s3536 + $0x60] sm:$0xf]
      %v3562 = vld [vmem:[%s3536 + $0x64] sm:$0xf]
      %v3563 = vld [vmem:[%s3536 + $0x68] sm:$0xf]
      %v3564 = vld [vmem:[%s3536 + $0x6c] sm:$0xf]
      %v3565 = vld [vmem:[%s3536 + $0x70] sm:$0xf]
      %v3566 = vld [vmem:[%s3536 + $0x74] sm:$0xf]
      %v3567 = vld [vmem:[%s3536 + $0x78] sm:$0xf]
      %v3568 = vld [vmem:[%s3536 + $0x7c] sm:$0xf]
      %v3569 = vld [vmem:[%s3536 + $0x80] sm:$0xf]
      %v3570 = vld [vmem:[%s3536 + $0x84] sm:$0xf]
      %v3571 = vld [vmem:[%s3536 + $0x88] sm:$0xf]
      %v3572 = vld [vmem:[%s3536 + $0x8c] sm:$0xf]
      %v3573 = vld [vmem:[%s3536 + $0x90] sm:$0xf]
      %v3574 = vld [vmem:[%s3536 + $0x94] sm:$0xf]
      %v3575 = vld [vmem:[%s3536 + $0x98] sm:$0xf]
      %v3576 = vld [vmem:[%s3536 + $0x9c] sm:$0xf]
      %v3577 = vld [vmem:[%s3536 + $0xa0] sm:$0xf]
      %v3578 = vld [vmem:[%s3536 + $0xa4] sm:$0xf]
      %v3579 = vld [vmem:[%s3536 + $0xa8] sm:$0xf]
      %v3580 = vld [vmem:[%s3536 + $0xac] sm:$0xf]
      %v3581 = vld [vmem:[%s3536 + $0xb0] sm:$0xf]
      %v3582 = vld [vmem:[%s3536 + $0xb4] sm:$0xf]
      %v3583 = vld [vmem:[%s3536 + $0xb8] sm:$0xf]
      %v3584 = vld [vmem:[%s3536 + $0xbc] sm:$0xf]
      %v3585 = vld [vmem:[%s3536 + $0xc0] sm:$0xf]
      %v3586 = vld [vmem:[%s3536 + $0xc4] sm:$0xf]
      %v3587 = vld [vmem:[%s3536 + $0xc8] sm:$0xf]
      %v3588 = vld [vmem:[%s3536 + $0xcc] sm:$0xf]
      %v3589 = vld [vmem:[%s3536 + $0xd0] sm:$0xf]
      %v3590 = vld [vmem:[%s3536 + $0xd4] sm:$0xf]
      %v3591 = vld [vmem:[%s3536 + $0xd8] sm:$0xf]
      %v3592 = vld [vmem:[%s3536 + $0xdc] sm:$0xf]
      %v3593 = vld [vmem:[%s3536 + $0xe0] sm:$0xf]
      %v3594 = vld [vmem:[%s3536 + $0xe4] sm:$0xf]
      %v3595 = vld [vmem:[%s3536 + $0xe8] sm:$0xf]
      %v3596 = vld [vmem:[%s3536 + $0xec] sm:$0xf]
      %v3597 = vld [vmem:[%s3536 + $0xf0] sm:$0xf]
      %v3598 = vld [vmem:[%s3536 + $0xf4] sm:$0xf]
      %v3599 = vld [vmem:[%s3536 + $0xf8] sm:$0xf]
      %v3600 = vld [vmem:[%s3536 + $0xfc] sm:$0xf]
      %v3665 = vunpack.c.l.b16 %v3537
      %v3666 = vunpack.c.l.b16 %v3538
      %v3667 = vunpack.c.l.b16 %v3539
      %v3668 = vunpack.c.l.b16 %v3540
      %v3669 = vunpack.c.l.b16 %v3541
      %v3670 = vunpack.c.l.b16 %v3542
      %v3671 = vunpack.c.l.b16 %v3543
      %v3672 = vunpack.c.l.b16 %v3544
      %v3673 = vunpack.c.l.b16 %v3545
      %v3674 = vunpack.c.l.b16 %v3546
      %v3675 = vunpack.c.l.b16 %v3547
      %v3676 = vunpack.c.l.b16 %v3548
      %v3677 = vunpack.c.l.b16 %v3549
      %v3678 = vunpack.c.l.b16 %v3550
      %v3679 = vunpack.c.l.b16 %v3551
      %v3680 = vunpack.c.l.b16 %v3552
      %v3681 = vunpack.c.l.b16 %v3553
      %v3682 = vunpack.c.l.b16 %v3554
      %v3683 = vunpack.c.l.b16 %v3555
      %v3684 = vunpack.c.l.b16 %v3556
      %v3685 = vunpack.c.l.b16 %v3557
      %v3686 = vunpack.c.l.b16 %v3558
      %v3687 = vunpack.c.l.b16 %v3559
      %v3688 = vunpack.c.l.b16 %v3560
      %v3689 = vunpack.c.l.b16 %v3561
      %v3690 = vunpack.c.l.b16 %v3562
      %v3691 = vunpack.c.l.b16 %v3563
      %v3692 = vunpack.c.l.b16 %v3564
      %v3693 = vunpack.c.l.b16 %v3565
      %v3694 = vunpack.c.l.b16 %v3566
      %v3695 = vunpack.c.l.b16 %v3567
      %v3696 = vunpack.c.l.b16 %v3568
      %v3697 = vunpack.c.l.b16 %v3569
      %v3698 = vunpack.c.l.b16 %v3570
      %v3699 = vunpack.c.l.b16 %v3571
      %v3700 = vunpack.c.l.b16 %v3572
      %v3701 = vunpack.c.l.b16 %v3573
      %v3702 = vunpack.c.l.b16 %v3574
      %v3703 = vunpack.c.l.b16 %v3575
      %v3704 = vunpack.c.l.b16 %v3576
      %v3705 = vunpack.c.l.b16 %v3577
      %v3706 = vunpack.c.l.b16 %v3578
      %v3707 = vunpack.c.l.b16 %v3579
      %v3708 = vunpack.c.l.b16 %v3580
      %v3709 = vunpack.c.l.b16 %v3581
      %v3710 = vunpack.c.l.b16 %v3582
      %v3711 = vunpack.c.l.b16 %v3583
      %v3712 = vunpack.c.l.b16 %v3584
      %v3713 = vunpack.c.l.b16 %v3585
      %v3714 = vunpack.c.l.b16 %v3586
      %v3715 = vunpack.c.l.b16 %v3587
      %v3716 = vunpack.c.l.b16 %v3588
      %v3717 = vunpack.c.l.b16 %v3589
      %v3718 = vunpack.c.l.b16 %v3590
      %v3719 = vunpack.c.l.b16 %v3591
      %v3720 = vunpack.c.l.b16 %v3592
      %v3721 = vunpack.c.l.b16 %v3593
      %v3722 = vunpack.c.l.b16 %v3594
      %v3723 = vunpack.c.l.b16 %v3595
      %v3724 = vunpack.c.l.b16 %v3596
      %v3725 = vunpack.c.l.b16 %v3597
      %v3726 = vunpack.c.l.b16 %v3598
      %v3727 = vunpack.c.l.b16 %v3599
      %v3728 = vunpack.c.l.b16 %v3600
      %v3729 = vpack.c.b16 %v3666, %v3665
      %v3730 = vpack.c.b16 %v3668, %v3667
      %v3731 = vpack.c.b16 %v3670, %v3669
      %v3732 = vpack.c.b16 %v3672, %v3671
      %v3733 = vpack.c.b16 %v3674, %v3673
      %v3734 = vpack.c.b16 %v3676, %v3675
      %v3735 = vpack.c.b16 %v3678, %v3677
      %v3736 = vpack.c.b16 %v3680, %v3679
      %v3737 = vpack.c.b16 %v3682, %v3681
      %v3738 = vpack.c.b16 %v3684, %v3683
      %v3739 = vpack.c.b16 %v3686, %v3685
      %v3740 = vpack.c.b16 %v3688, %v3687
      %v3741 = vpack.c.b16 %v3690, %v3689
      %v3742 = vpack.c.b16 %v3692, %v3691
      %v3743 = vpack.c.b16 %v3694, %v3693
      %v3744 = vpack.c.b16 %v3696, %v3695
      %v3745 = vpack.c.b16 %v3698, %v3697
      %v3746 = vpack.c.b16 %v3700, %v3699
      %v3747 = vpack.c.b16 %v3702, %v3701
      %v3748 = vpack.c.b16 %v3704, %v3703
      %v3749 = vpack.c.b16 %v3706, %v3705
      %v3750 = vpack.c.b16 %v3708, %v3707
      %v3751 = vpack.c.b16 %v3710, %v3709
      %v3752 = vpack.c.b16 %v3712, %v3711
      %v3753 = vpack.c.b16 %v3714, %v3713
      %v3754 = vpack.c.b16 %v3716, %v3715
      %v3755 = vpack.c.b16 %v3718, %v3717
      %v3756 = vpack.c.b16 %v3720, %v3719
      %v3757 = vpack.c.b16 %v3722, %v3721
      %v3758 = vpack.c.b16 %v3724, %v3723
      %v3759 = vpack.c.b16 %v3726, %v3725
      %v3760 = vpack.c.b16 %v3728, %v3727
      %3793 = vmatprep.subr.bf16.mxu0 0
      %3794 = vmatpush1.bf16.msra.mxu0 %v3729
      %3795 = vmatprep.subr.bf16.mxu0 0
      %3796 = vmatpush1.bf16.msra.mxu0 %v3730
      %3797 = vmatprep.subr.bf16.mxu0 0
      %3798 = vmatpush1.bf16.msra.mxu0 %v3731
      %3799 = vmatprep.subr.bf16.mxu0 0
      %3800 = vmatpush1.bf16.msra.mxu0 %v3732
      %3801 = vmatprep.subr.bf16.mxu0 0
      %3802 = vmatpush1.bf16.msra.mxu0 %v3733
      %3803 = vmatprep.subr.bf16.mxu0 0
      %3804 = vmatpush1.bf16.msra.mxu0 %v3734
      %3805 = vmatprep.subr.bf16.mxu0 0
      %3806 = vmatpush1.bf16.msra.mxu0 %v3735
      %3807 = vmatprep.subr.bf16.mxu0 0
      %3808 = vmatpush1.bf16.msra.mxu0 %v3736
      %3809 = vmatprep.subr.bf16.mxu0 0
      %3810 = vmatpush1.bf16.msra.mxu0 %v3737
      %3811 = vmatprep.subr.bf16.mxu0 0
      %3812 = vmatpush1.bf16.msra.mxu0 %v3738
      %3813 = vmatprep.subr.bf16.mxu0 0
      %3814 = vmatpush1.bf16.msra.mxu0 %v3739
      %3815 = vmatprep.subr.bf16.mxu0 0
      %3816 = vmatpush1.bf16.msra.mxu0 %v3740
      %3817 = vmatprep.subr.bf16.mxu0 0
      %3818 = vmatpush1.bf16.msra.mxu0 %v3741
      %3819 = vmatprep.subr.bf16.mxu0 0
      %3820 = vmatpush1.bf16.msra.mxu0 %v3742
      %3821 = vmatprep.subr.bf16.mxu0 0
      %3822 = vmatpush1.bf16.msra.mxu0 %v3743
      %3823 = vmatprep.subr.bf16.mxu0 0
      %3824 = vmatpush1.bf16.msra.mxu0 %v3744
      %3825 = vmatprep.mubr.bf16.mxu0 %v3508
      %3826 = vmatmul.mubr.bf16.gmra.mrb[0].mxu0 %v3496
      %v3827 = vpop.f32.mrb[0].mxu0
      %v3828 = vadd.f32 0.0, %v3827
      %v3829 = vpop.f32.mrb[0].mxu0
      %v3830 = vpop.f32.mrb[0].mxu0
      %v3831 = vadd.f32 0.0, %v3830
      %v3832 = vpop.f32.mrb[0].mxu0
      %3833 = vmatprep.mubr.bf16.mxu0 %v3509
      %3834 = vmatmul.mubr.bf16.gmra.mrb[0].mxu0 %v3497
      %v3835 = vpop.f32.mrb[0].mxu0
      %v3836 = vadd.f32 0.0, %v3835
      %v3837 = vpop.f32.mrb[0].mxu0
      %v3838 = vpop.f32.mrb[0].mxu0
      %v3839 = vadd.f32 0.0, %v3838
      %v3840 = vpop.f32.mrb[0].mxu0
      %3841 = vmatprep.mubr.bf16.mxu0 %v3510
      %3842 = vmatmul.mubr.bf16.gmra.mrb[0].mxu0 %v3498
      %v3843 = vpop.f32.mrb[0].mxu0
      %v3844 = vadd.f32 0.0, %v3843
      %v3845 = vpop.f32.mrb[0].mxu0
      %v3846 = vpop.f32.mrb[0].mxu0
      %v3847 = vadd.f32 0.0, %v3846
      %v3848 = vpop.f32.mrb[0].mxu0
      %3849 = vmatprep.mubr.bf16.mxu0 %v3511
      %3850 = vmatmul.mubr.bf16.gmra.mrb[0].mxu0 %v3499
      %v3851 = vpop.f32.mrb[0].mxu0
      %v3852 = vadd.f32 0.0, %v3851
      %v3853 = vpop.f32.mrb[0].mxu0
      %v3854 = vpop.f32.mrb[0].mxu0
      %v3855 = vadd.f32 0.0, %v3854
      %v3856 = vpop.f32.mrb[0].mxu0
      %3857 = vdwg.mxu0
      %3858 = vmatprep.subr.bf16.mxu0 0
      %3859 = vmatpush1.bf16.msra.mxu0 %v3745
      %3860 = vmatprep.subr.bf16.mxu0 0
      %3861 = vmatpush1.bf16.msra.mxu0 %v3746
      %3862 = vmatprep.subr.bf16.mxu0 0
      %3863 = vmatpush1.bf16.msra.mxu0 %v3747
      %3864 = vmatprep.subr.bf16.mxu0 0
      %3865 = vmatpush1.bf16.msra.mxu0 %v3748
      %3866 = vmatprep.subr.bf16.mxu0 0
      %3867 = vmatpush1.bf16.msra.mxu0 %v3749
      %3868 = vmatprep.subr.bf16.mxu0 0
      %3869 = vmatpush1.bf16.msra.mxu0 %v3750
      %3870 = vmatprep.subr.bf16.mxu0 0
      %3871 = vmatpush1.bf16.msra.mxu0 %v3751
      %3872 = vmatprep.subr.bf16.mxu0 0
      %3873 = vmatpush1.bf16.msra.mxu0 %v3752
      %3874 = vmatprep.subr.bf16.mxu0 0
      %3875 = vmatpush1.bf16.msra.mxu0 %v3753
      %3876 = vmatprep.subr.bf16.mxu0 0
      %3877 = vmatpush1.bf16.msra.mxu0 %v3754
      %3878 = vmatprep.subr.bf16.mxu0 0
      %3879 = vmatpush1.bf16.msra.mxu0 %v3755
      %3880 = vmatprep.subr.bf16.mxu0 0
      %3881 = vmatpush1.bf16.msra.mxu0 %v3756
      %3882 = vmatprep.subr.bf16.mxu0 0
      %3883 = vmatpush1.bf16.msra.mxu0 %v3757
      %3884 = vmatprep.subr.bf16.mxu0 0
      %3885 = vmatpush1.bf16.msra.mxu0 %v3758
      %3886 = vmatprep.subr.bf16.mxu0 0
      %3887 = vmatpush1.bf16.msra.mxu0 %v3759
      %3888 = vmatprep.subr.bf16.mxu0 0
      %3889 = vmatpush1.bf16.msra.mxu0 %v3760
      %3890 = vmatprep.mubr.bf16.mxu0 %v3532
      %3891 = vmatmul.mubr.bf16.gmra.mrb[0].mxu0 %v3520
      %v3892 = vpop.f32.mrb[0].mxu0
      %v3893 = vadd.f32 %v3828, %v3892
      %v3894 = vpop.f32.mrb[0].mxu0
      %v3895 = vpop.f32.mrb[0].mxu0
      %v3896 = vadd.f32 %v3831, %v3895
      %v3897 = vpop.f32.mrb[0].mxu0
      %3898 = vmatprep.mubr.bf16.mxu0 %v3533
      %3899 = vmatmul.mubr.bf16.gmra.mrb[0].mxu0 %v3521
      %v3900 = vpop.f32.mrb[0].mxu0
      %v3901 = vadd.f32 %v3836, %v3900
      %v3902 = vpop.f32.mrb[0].mxu0
      %v3903 = vpop.f32.mrb[0].mxu0
      %v3904 = vadd.f32 %v3839, %v3903
      %v3905 = vpop.f32.mrb[0].mxu0
      %3906 = vmatprep.mubr.bf16.mxu0 %v3534
      %3907 = vmatmul.mubr.bf16.gmra.mrb[0].mxu0 %v3522
      %v3908 = vpop.f32.mrb[0].mxu0
      %v3909 = vadd.f32 %v3844, %v3908
      %v3910 = vpop.f32.mrb[0].mxu0
      %v3911 = vpop.f32.mrb[0].mxu0
      %v3912 = vadd.f32 %v3847, %v3911
      %v3913 = vpop.f32.mrb[0].mxu0
      %3914 = vmatprep.mubr.bf16.mxu0 %v3535
      %3915 = vmatmul.mubr.bf16.gmra.mrb[0].mxu0 %v3523
      %v3916 = vpop.f32.mrb[0].mxu0
      %v3917 = vadd.f32 %v3852, %v3916
      %v3918 = vpop.f32.mrb[0].mxu0
      %v3919 = vpop.f32.mrb[0].mxu0
      %v3920 = vadd.f32 %v3855, %v3919
      %v3921 = vpop.f32.mrb[0].mxu0
      %3922 = vdwg.mxu0
      %vm3923 = vcmp.ge.f32.partialorder %v3893, 0.0
      %vm3924 = vcmp.ge.f32.partialorder %v3896, 0.0
      %vm3925 = vcmp.ge.f32.partialorder %v3901, 0.0
      %vm3926 = vcmp.ge.f32.partialorder %v3904, 0.0
      %vm3927 = vcmp.ge.f32.partialorder %v3909, 0.0
      %vm3928 = vcmp.ge.f32.partialorder %v3912, 0.0
      %vm3929 = vcmp.ge.f32.partialorder %v3917, 0.0
      %vm3930 = vcmp.ge.f32.partialorder %v3920, 0.0
      %v3931 = vmul.f32 %v3893, 0.1
      %v3932 = vmul.f32 %v3896, 0.1
      %v3933 = vmul.f32 %v3901, 0.1
      %v3934 = vmul.f32 %v3904, 0.1
      %v3935 = vmul.f32 %v3909, 0.1
      %v3936 = vmul.f32 %v3912, 0.1
      %v3937 = vmul.f32 %v3917, 0.1
      %v3938 = vmul.f32 %v3920, 0.1
      %v3939 = vsel %vm3923, %v3893, %v3931
      %v3940 = vsel %vm3924, %v3896, %v3932
      %v3941 = vsel %vm3925, %v3901, %v3933
      %v3942 = vsel %vm3926, %v3904, %v3934
      %v3943 = vsel %vm3927, %v3909, %v3935
      %v3944 = vsel %vm3928, %v3912, %v3936
      %v3945 = vsel %vm3929, %v3917, %v3937
      %v3946 = vsel %vm3930, %v3920, %v3938
      %s3947 = scalar_lea.vmem [#allocation3], 336
      %3948 = vst.msk [vmem:[%s3947 + $0x1] sm:$0xff] %vm300, %v3939
      %3949 = vst.msk [vmem:[%s3947 + $0x11] sm:$0xff] %vm300, %v3940
      %3950 = vst.msk [vmem:[%s3947 + $0x21] sm:$0xff] %vm300, %v3941
      %3951 = vst.msk [vmem:[%s3947 + $0x31] sm:$0xff] %vm300, %v3942
      %3952 = vst.msk [vmem:[%s3947 + $0x41] sm:$0xff] %vm300, %v3943
      %3953 = vst.msk [vmem:[%s3947 + $0x51] sm:$0xff] %vm300, %v3944
      %3954 = vst.msk [vmem:[%s3947 + $0x61] sm:$0xff] %vm300, %v3945
      %3955 = vst.msk [vmem:[%s3947 + $0x71] sm:$0xff] %vm300, %v3946
      %v3956 = vld [vmem:[%s528 + $0x2] sm:$0xff]
      %v3957 = vld [vmem:[%s528 + $0x12] sm:$0xff]
      %v3958 = vld [vmem:[%s528 + $0x22] sm:$0xff]
      %v3959 = vld [vmem:[%s528 + $0x32] sm:$0xff]
      %v3960 = vld [vmem:[%s528 + $0x42] sm:$0xff]
      %v3961 = vld [vmem:[%s528 + $0x52] sm:$0xff]
      %v3962 = vld [vmem:[%s528 + $0x62] sm:$0xff]
      %v3963 = vld [vmem:[%s528 + $0x72] sm:$0xff]
      %v3964 = vpack.c.bf16 %v3957, %v3956
      %v3965 = vpack.c.bf16 %v3959, %v3958
      %v3966 = vpack.c.bf16 %v3961, %v3960
      %v3967 = vpack.c.bf16 %v3963, %v3962
      %v3968 = vld [vmem:[%s528 + $0x1] sm:$0xff]
      %v3969 = vld [vmem:[%s528 + $0x11] sm:$0xff]
      %v3970 = vld [vmem:[%s528 + $0x21] sm:$0xff]
      %v3971 = vld [vmem:[%s528 + $0x31] sm:$0xff]
      %v3972 = vld [vmem:[%s528 + $0x41] sm:$0xff]
      %v3973 = vld [vmem:[%s528 + $0x51] sm:$0xff]
      %v3974 = vld [vmem:[%s528 + $0x61] sm:$0xff]
      %v3975 = vld [vmem:[%s528 + $0x71] sm:$0xff]
      %v3976 = vpack.c.bf16 %v3969, %v3968
      %v3977 = vpack.c.bf16 %v3971, %v3970
      %v3978 = vpack.c.bf16 %v3973, %v3972
      %v3979 = vpack.c.bf16 %v3975, %v3974
      %v3980 = vld [vmem:[%s447 + $0x2] sm:$0xff]
      %v3981 = vld [vmem:[%s447 + $0x12] sm:$0xff]
      %v3982 = vld [vmem:[%s447 + $0x22] sm:$0xff]
      %v3983 = vld [vmem:[%s447 + $0x32] sm:$0xff]
      %v3984 = vld [vmem:[%s447 + $0x42] sm:$0xff]
      %v3985 = vld [vmem:[%s447 + $0x52] sm:$0xff]
      %v3986 = vld [vmem:[%s447 + $0x62] sm:$0xff]
      %v3987 = vld [vmem:[%s447 + $0x72] sm:$0xff]
      %v3988 = vpack.c.bf16 %v3981, %v3980
      %v3989 = vpack.c.bf16 %v3983, %v3982
      %v3990 = vpack.c.bf16 %v3985, %v3984
      %v3991 = vpack.c.bf16 %v3987, %v3986
      %v3992 = vld [vmem:[%s447 + $0x1] sm:$0xff]
      %v3993 = vld [vmem:[%s447 + $0x11] sm:$0xff]
      %v3994 = vld [vmem:[%s447 + $0x21] sm:$0xff]
      %v3995 = vld [vmem:[%s447 + $0x31] sm:$0xff]
      %v3996 = vld [vmem:[%s447 + $0x41] sm:$0xff]
      %v3997 = vld [vmem:[%s447 + $0x51] sm:$0xff]
      %v3998 = vld [vmem:[%s447 + $0x61] sm:$0xff]
      %v3999 = vld [vmem:[%s447 + $0x71] sm:$0xff]
      %v4000 = vpack.c.bf16 %v3993, %v3992
      %v4001 = vpack.c.bf16 %v3995, %v3994
      %v4002 = vpack.c.bf16 %v3997, %v3996
      %v4003 = vpack.c.bf16 %v3999, %v3998
      %s4004 = scalar_lea.vmem %s5, 768
      %v4005 = vld [vmem:[%s4004] sm:$0xf]
      %v4006 = vld [vmem:[%s4004 + $0x4] sm:$0xf]
      %v4007 = vld [vmem:[%s4004 + $0x8] sm:$0xf]
      %v4008 = vld [vmem:[%s4004 + $0xc] sm:$0xf]
      %v4009 = vld [vmem:[%s4004 + $0x10] sm:$0xf]
      %v4010 = vld [vmem:[%s4004 + $0x14] sm:$0xf]
      %v4011 = vld [vmem:[%s4004 + $0x18] sm:$0xf]
      %v4012 = vld [vmem:[%s4004 + $0x1c] sm:$0xf]
      %v4013 = vld [vmem:[%s4004 + $0x20] sm:$0xf]
      %v4014 = vld [vmem:[%s4004 + $0x24] sm:$0xf]
      %v4015 = vld [vmem:[%s4004 + $0x28] sm:$0xf]
      %v4016 = vld [vmem:[%s4004 + $0x2c] sm:$0xf]
      %v4017 = vld [vmem:[%s4004 + $0x30] sm:$0xf]
      %v4018 = vld [vmem:[%s4004 + $0x34] sm:$0xf]
      %v4019 = vld [vmem:[%s4004 + $0x38] sm:$0xf]
      %v4020 = vld [vmem:[%s4004 + $0x3c] sm:$0xf]
      %v4021 = vld [vmem:[%s4004 + $0x40] sm:$0xf]
      %v4022 = vld [vmem:[%s4004 + $0x44] sm:$0xf]
      %v4023 = vld [vmem:[%s4004 + $0x48] sm:$0xf]
      %v4024 = vld [vmem:[%s4004 + $0x4c] sm:$0xf]
      %v4025 = vld [vmem:[%s4004 + $0x50] sm:$0xf]
      %v4026 = vld [vmem:[%s4004 + $0x54] sm:$0xf]
      %v4027 = vld [vmem:[%s4004 + $0x58] sm:$0xf]
      %v4028 = vld [vmem:[%s4004 + $0x5c] sm:$0xf]
      %v4029 = vld [vmem:[%s4004 + $0x60] sm:$0xf]
      %v4030 = vld [vmem:[%s4004 + $0x64] sm:$0xf]
      %v4031 = vld [vmem:[%s4004 + $0x68] sm:$0xf]
      %v4032 = vld [vmem:[%s4004 + $0x6c] sm:$0xf]
      %v4033 = vld [vmem:[%s4004 + $0x70] sm:$0xf]
      %v4034 = vld [vmem:[%s4004 + $0x74] sm:$0xf]
      %v4035 = vld [vmem:[%s4004 + $0x78] sm:$0xf]
      %v4036 = vld [vmem:[%s4004 + $0x7c] sm:$0xf]
      %v4037 = vld [vmem:[%s4004 + $0x80] sm:$0xf]
      %v4038 = vld [vmem:[%s4004 + $0x84] sm:$0xf]
      %v4039 = vld [vmem:[%s4004 + $0x88] sm:$0xf]
      %v4040 = vld [vmem:[%s4004 + $0x8c] sm:$0xf]
      %v4041 = vld [vmem:[%s4004 + $0x90] sm:$0xf]
      %v4042 = vld [vmem:[%s4004 + $0x94] sm:$0xf]
      %v4043 = vld [vmem:[%s4004 + $0x98] sm:$0xf]
      %v4044 = vld [vmem:[%s4004 + $0x9c] sm:$0xf]
      %v4045 = vld [vmem:[%s4004 + $0xa0] sm:$0xf]
      %v4046 = vld [vmem:[%s4004 + $0xa4] sm:$0xf]
      %v4047 = vld [vmem:[%s4004 + $0xa8] sm:$0xf]
      %v4048 = vld [vmem:[%s4004 + $0xac] sm:$0xf]
      %v4049 = vld [vmem:[%s4004 + $0xb0] sm:$0xf]
      %v4050 = vld [vmem:[%s4004 + $0xb4] sm:$0xf]
      %v4051 = vld [vmem:[%s4004 + $0xb8] sm:$0xf]
      %v4052 = vld [vmem:[%s4004 + $0xbc] sm:$0xf]
      %v4053 = vld [vmem:[%s4004 + $0xc0] sm:$0xf]
      %v4054 = vld [vmem:[%s4004 + $0xc4] sm:$0xf]
      %v4055 = vld [vmem:[%s4004 + $0xc8] sm:$0xf]
      %v4056 = vld [vmem:[%s4004 + $0xcc] sm:$0xf]
      %v4057 = vld [vmem:[%s4004 + $0xd0] sm:$0xf]
      %v4058 = vld [vmem:[%s4004 + $0xd4] sm:$0xf]
      %v4059 = vld [vmem:[%s4004 + $0xd8] sm:$0xf]
      %v4060 = vld [vmem:[%s4004 + $0xdc] sm:$0xf]
      %v4061 = vld [vmem:[%s4004 + $0xe0] sm:$0xf]
      %v4062 = vld [vmem:[%s4004 + $0xe4] sm:$0xf]
      %v4063 = vld [vmem:[%s4004 + $0xe8] sm:$0xf]
      %v4064 = vld [vmem:[%s4004 + $0xec] sm:$0xf]
      %v4065 = vld [vmem:[%s4004 + $0xf0] sm:$0xf]
      %v4066 = vld [vmem:[%s4004 + $0xf4] sm:$0xf]
      %v4067 = vld [vmem:[%s4004 + $0xf8] sm:$0xf]
      %v4068 = vld [vmem:[%s4004 + $0xfc] sm:$0xf]
      %v4133 = vunpack.c.l.b16 %v4005
      %v4134 = vunpack.c.l.b16 %v4006
      %v4135 = vunpack.c.l.b16 %v4007
      %v4136 = vunpack.c.l.b16 %v4008
      %v4137 = vunpack.c.l.b16 %v4009
      %v4138 = vunpack.c.l.b16 %v4010
      %v4139 = vunpack.c.l.b16 %v4011
      %v4140 = vunpack.c.l.b16 %v4012
      %v4141 = vunpack.c.l.b16 %v4013
      %v4142 = vunpack.c.l.b16 %v4014
      %v4143 = vunpack.c.l.b16 %v4015
      %v4144 = vunpack.c.l.b16 %v4016
      %v4145 = vunpack.c.l.b16 %v4017
      %v4146 = vunpack.c.l.b16 %v4018
      %v4147 = vunpack.c.l.b16 %v4019
      %v4148 = vunpack.c.l.b16 %v4020
      %v4149 = vunpack.c.l.b16 %v4021
      %v4150 = vunpack.c.l.b16 %v4022
      %v4151 = vunpack.c.l.b16 %v4023
      %v4152 = vunpack.c.l.b16 %v4024
      %v4153 = vunpack.c.l.b16 %v4025
      %v4154 = vunpack.c.l.b16 %v4026
      %v4155 = vunpack.c.l.b16 %v4027
      %v4156 = vunpack.c.l.b16 %v4028
      %v4157 = vunpack.c.l.b16 %v4029
      %v4158 = vunpack.c.l.b16 %v4030
      %v4159 = vunpack.c.l.b16 %v4031
      %v4160 = vunpack.c.l.b16 %v4032
      %v4161 = vunpack.c.l.b16 %v4033
      %v4162 = vunpack.c.l.b16 %v4034
      %v4163 = vunpack.c.l.b16 %v4035
      %v4164 = vunpack.c.l.b16 %v4036
      %v4165 = vunpack.c.l.b16 %v4037
      %v4166 = vunpack.c.l.b16 %v4038
      %v4167 = vunpack.c.l.b16 %v4039
      %v4168 = vunpack.c.l.b16 %v4040
      %v4169 = vunpack.c.l.b16 %v4041
      %v4170 = vunpack.c.l.b16 %v4042
      %v4171 = vunpack.c.l.b16 %v4043
      %v4172 = vunpack.c.l.b16 %v4044
      %v4173 = vunpack.c.l.b16 %v4045
      %v4174 = vunpack.c.l.b16 %v4046
      %v4175 = vunpack.c.l.b16 %v4047
      %v4176 = vunpack.c.l.b16 %v4048
      %v4177 = vunpack.c.l.b16 %v4049
      %v4178 = vunpack.c.l.b16 %v4050
      %v4179 = vunpack.c.l.b16 %v4051
      %v4180 = vunpack.c.l.b16 %v4052
      %v4181 = vunpack.c.l.b16 %v4053
      %v4182 = vunpack.c.l.b16 %v4054
      %v4183 = vunpack.c.l.b16 %v4055
      %v4184 = vunpack.c.l.b16 %v4056
      %v4185 = vunpack.c.l.b16 %v4057
      %v4186 = vunpack.c.l.b16 %v4058
      %v4187 = vunpack.c.l.b16 %v4059
      %v4188 = vunpack.c.l.b16 %v4060
      %v4189 = vunpack.c.l.b16 %v4061
      %v4190 = vunpack.c.l.b16 %v4062
      %v4191 = vunpack.c.l.b16 %v4063
      %v4192 = vunpack.c.l.b16 %v4064
      %v4193 = vunpack.c.l.b16 %v4065
      %v4194 = vunpack.c.l.b16 %v4066
      %v4195 = vunpack.c.l.b16 %v4067
      %v4196 = vunpack.c.l.b16 %v4068
      %v4197 = vpack.c.b16 %v4134, %v4133
      %v4198 = vpack.c.b16 %v4136, %v4135
      %v4199 = vpack.c.b16 %v4138, %v4137
      %v4200 = vpack.c.b16 %v4140, %v4139
      %v4201 = vpack.c.b16 %v4142, %v4141
      %v4202 = vpack.c.b16 %v4144, %v4143
      %v4203 = vpack.c.b16 %v4146, %v4145
      %v4204 = vpack.c.b16 %v4148, %v4147
      %v4205 = vpack.c.b16 %v4150, %v4149
      %v4206 = vpack.c.b16 %v4152, %v4151
      %v4207 = vpack.c.b16 %v4154, %v4153
      %v4208 = vpack.c.b16 %v4156, %v4155
      %v4209 = vpack.c.b16 %v4158, %v4157
      %v4210 = vpack.c.b16 %v4160, %v4159
      %v4211 = vpack.c.b16 %v4162, %v4161
      %v4212 = vpack.c.b16 %v4164, %v4163
      %v4213 = vpack.c.b16 %v4166, %v4165
      %v4214 = vpack.c.b16 %v4168, %v4167
      %v4215 = vpack.c.b16 %v4170, %v4169
      %v4216 = vpack.c.b16 %v4172, %v4171
      %v4217 = vpack.c.b16 %v4174, %v4173
      %v4218 = vpack.c.b16 %v4176, %v4175
      %v4219 = vpack.c.b16 %v4178, %v4177
      %v4220 = vpack.c.b16 %v4180, %v4179
      %v4221 = vpack.c.b16 %v4182, %v4181
      %v4222 = vpack.c.b16 %v4184, %v4183
      %v4223 = vpack.c.b16 %v4186, %v4185
      %v4224 = vpack.c.b16 %v4188, %v4187
      %v4225 = vpack.c.b16 %v4190, %v4189
      %v4226 = vpack.c.b16 %v4192, %v4191
      %v4227 = vpack.c.b16 %v4194, %v4193
      %v4228 = vpack.c.b16 %v4196, %v4195
      %4261 = vmatprep.subr.bf16.mxu0 0
      %4262 = vmatpush1.bf16.msra.mxu0 %v4197
      %4263 = vmatprep.subr.bf16.mxu0 0
      %4264 = vmatpush1.bf16.msra.mxu0 %v4198
      %4265 = vmatprep.subr.bf16.mxu0 0
      %4266 = vmatpush1.bf16.msra.mxu0 %v4199
      %4267 = vmatprep.subr.bf16.mxu0 0
      %4268 = vmatpush1.bf16.msra.mxu0 %v4200
      %4269 = vmatprep.subr.bf16.mxu0 0
      %4270 = vmatpush1.bf16.msra.mxu0 %v4201
      %4271 = vmatprep.subr.bf16.mxu0 0
      %4272 = vmatpush1.bf16.msra.mxu0 %v4202
      %4273 = vmatprep.subr.bf16.mxu0 0
      %4274 = vmatpush1.bf16.msra.mxu0 %v4203
      %4275 = vmatprep.subr.bf16.mxu0 0
      %4276 = vmatpush1.bf16.msra.mxu0 %v4204
      %4277 = vmatprep.subr.bf16.mxu0 0
      %4278 = vmatpush1.bf16.msra.mxu0 %v4205
      %4279 = vmatprep.subr.bf16.mxu0 0
      %4280 = vmatpush1.bf16.msra.mxu0 %v4206
      %4281 = vmatprep.subr.bf16.mxu0 0
      %4282 = vmatpush1.bf16.msra.mxu0 %v4207
      %4283 = vmatprep.subr.bf16.mxu0 0
      %4284 = vmatpush1.bf16.msra.mxu0 %v4208
      %4285 = vmatprep.subr.bf16.mxu0 0
      %4286 = vmatpush1.bf16.msra.mxu0 %v4209
      %4287 = vmatprep.subr.bf16.mxu0 0
      %4288 = vmatpush1.bf16.msra.mxu0 %v4210
      %4289 = vmatprep.subr.bf16.mxu0 0
      %4290 = vmatpush1.bf16.msra.mxu0 %v4211
      %4291 = vmatprep.subr.bf16.mxu0 0
      %4292 = vmatpush1.bf16.msra.mxu0 %v4212
      %4293 = vmatprep.mubr.bf16.mxu0 %v3976
      %4294 = vmatmul.mubr.bf16.gmra.mrb[0].mxu0 %v3964
      %v4295 = vpop.f32.mrb[0].mxu0
      %v4296 = vadd.f32 0.0, %v4295
      %v4297 = vpop.f32.mrb[0].mxu0
      %v4298 = vpop.f32.mrb[0].mxu0
      %v4299 = vadd.f32 0.0, %v4298
      %v4300 = vpop.f32.mrb[0].mxu0
      %4301 = vmatprep.mubr.bf16.mxu0 %v3977
      %4302 = vmatmul.mubr.bf16.gmra.mrb[0].mxu0 %v3965
      %v4303 = vpop.f32.mrb[0].mxu0
      %v4304 = vadd.f32 0.0, %v4303
      %v4305 = vpop.f32.mrb[0].mxu0
      %v4306 = vpop.f32.mrb[0].mxu0
      %v4307 = vadd.f32 0.0, %v4306
      %v4308 = vpop.f32.mrb[0].mxu0
      %4309 = vmatprep.mubr.bf16.mxu0 %v3978
      %4310 = vmatmul.mubr.bf16.gmra.mrb[0].mxu0 %v3966
      %v4311 = vpop.f32.mrb[0].mxu0
      %v4312 = vadd.f32 0.0, %v4311
      %v4313 = vpop.f32.mrb[0].mxu0
      %v4314 = vpop.f32.mrb[0].mxu0
      %v4315 = vadd.f32 0.0, %v4314
      %v4316 = vpop.f32.mrb[0].mxu0
      %4317 = vmatprep.mubr.bf16.mxu0 %v3979
      %4318 = vmatmul.mubr.bf16.gmra.mrb[0].mxu0 %v3967
      %v4319 = vpop.f32.mrb[0].mxu0
      %v4320 = vadd.f32 0.0, %v4319
      %v4321 = vpop.f32.mrb[0].mxu0
      %v4322 = vpop.f32.mrb[0].mxu0
      %v4323 = vadd.f32 0.0, %v4322
      %v4324 = vpop.f32.mrb[0].mxu0
      %4325 = vdwg.mxu0
      %4326 = vmatprep.subr.bf16.mxu0 0
      %4327 = vmatpush1.bf16.msra.mxu0 %v4213
      %4328 = vmatprep.subr.bf16.mxu0 0
      %4329 = vmatpush1.bf16.msra.mxu0 %v4214
      %4330 = vmatprep.subr.bf16.mxu0 0
      %4331 = vmatpush1.bf16.msra.mxu0 %v4215
      %4332 = vmatprep.subr.bf16.mxu0 0
      %4333 = vmatpush1.bf16.msra.mxu0 %v4216
      %4334 = vmatprep.subr.bf16.mxu0 0
      %4335 = vmatpush1.bf16.msra.mxu0 %v4217
      %4336 = vmatprep.subr.bf16.mxu0 0
      %4337 = vmatpush1.bf16.msra.mxu0 %v4218
      %4338 = vmatprep.subr.bf16.mxu0 0
      %4339 = vmatpush1.bf16.msra.mxu0 %v4219
      %4340 = vmatprep.subr.bf16.mxu0 0
      %4341 = vmatpush1.bf16.msra.mxu0 %v4220
      %4342 = vmatprep.subr.bf16.mxu0 0
      %4343 = vmatpush1.bf16.msra.mxu0 %v4221
      %4344 = vmatprep.subr.bf16.mxu0 0
      %4345 = vmatpush1.bf16.msra.mxu0 %v4222
      %4346 = vmatprep.subr.bf16.mxu0 0
      %4347 = vmatpush1.bf16.msra.mxu0 %v4223
      %4348 = vmatprep.subr.bf16.mxu0 0
      %4349 = vmatpush1.bf16.msra.mxu0 %v4224
      %4350 = vmatprep.subr.bf16.mxu0 0
      %4351 = vmatpush1.bf16.msra.mxu0 %v4225
      %4352 = vmatprep.subr.bf16.mxu0 0
      %4353 = vmatpush1.bf16.msra.mxu0 %v4226
      %4354 = vmatprep.subr.bf16.mxu0 0
      %4355 = vmatpush1.bf16.msra.mxu0 %v4227
      %4356 = vmatprep.subr.bf16.mxu0 0
      %4357 = vmatpush1.bf16.msra.mxu0 %v4228
      %4358 = vmatprep.mubr.bf16.mxu0 %v4000
      %4359 = vmatmul.mubr.bf16.gmra.mrb[0].mxu0 %v3988
      %v4360 = vpop.f32.mrb[0].mxu0
      %v4361 = vadd.f32 %v4296, %v4360
      %v4362 = vpop.f32.mrb[0].mxu0
      %v4363 = vpop.f32.mrb[0].mxu0
      %v4364 = vadd.f32 %v4299, %v4363
      %v4365 = vpop.f32.mrb[0].mxu0
      %4366 = vmatprep.mubr.bf16.mxu0 %v4001
      %4367 = vmatmul.mubr.bf16.gmra.mrb[0].mxu0 %v3989
      %v4368 = vpop.f32.mrb[0].mxu0
      %v4369 = vadd.f32 %v4304, %v4368
      %v4370 = vpop.f32.mrb[0].mxu0
      %v4371 = vpop.f32.mrb[0].mxu0
      %v4372 = vadd.f32 %v4307, %v4371
      %v4373 = vpop.f32.mrb[0].mxu0
      %4374 = vmatprep.mubr.bf16.mxu0 %v4002
      %4375 = vmatmul.mubr.bf16.gmra.mrb[0].mxu0 %v3990
      %v4376 = vpop.f32.mrb[0].mxu0
      %v4377 = vadd.f32 %v4312, %v4376
      %v4378 = vpop.f32.mrb[0].mxu0
      %v4379 = vpop.f32.mrb[0].mxu0
      %v4380 = vadd.f32 %v4315, %v4379
      %v4381 = vpop.f32.mrb[0].mxu0
      %4382 = vmatprep.mubr.bf16.mxu0 %v4003
      %4383 = vmatmul.mubr.bf16.gmra.mrb[0].mxu0 %v3991
      %v4384 = vpop.f32.mrb[0].mxu0
      %v4385 = vadd.f32 %v4320, %v4384
      %v4386 = vpop.f32.mrb[0].mxu0
      %v4387 = vpop.f32.mrb[0].mxu0
      %v4388 = vadd.f32 %v4323, %v4387
      %v4389 = vpop.f32.mrb[0].mxu0
      %4390 = vdwg.mxu0
      %vm4391 = vcmp.ge.f32.partialorder %v4361, 0.0
      %vm4392 = vcmp.ge.f32.partialorder %v4364, 0.0
      %vm4393 = vcmp.ge.f32.partialorder %v4369, 0.0
      %vm4394 = vcmp.ge.f32.partialorder %v4372, 0.0
      %vm4395 = vcmp.ge.f32.partialorder %v4377, 0.0
      %vm4396 = vcmp.ge.f32.partialorder %v4380, 0.0
      %vm4397 = vcmp.ge.f32.partialorder %v4385, 0.0
      %vm4398 = vcmp.ge.f32.partialorder %v4388, 0.0
      %v4399 = vmul.f32 %v4361, 0.1
      %v4400 = vmul.f32 %v4364, 0.1
      %v4401 = vmul.f32 %v4369, 0.1
      %v4402 = vmul.f32 %v4372, 0.1
      %v4403 = vmul.f32 %v4377, 0.1
      %v4404 = vmul.f32 %v4380, 0.1
      %v4405 = vmul.f32 %v4385, 0.1
      %v4406 = vmul.f32 %v4388, 0.1
      %v4407 = vsel %vm4391, %v4361, %v4399
      %v4408 = vsel %vm4392, %v4364, %v4400
      %v4409 = vsel %vm4393, %v4369, %v4401
      %v4410 = vsel %vm4394, %v4372, %v4402
      %v4411 = vsel %vm4395, %v4377, %v4403
      %v4412 = vsel %vm4396, %v4380, %v4404
      %v4413 = vsel %vm4397, %v4385, %v4405
      %v4414 = vsel %vm4398, %v4388, %v4406
      %s4415 = scalar_lea.vmem [#allocation3], 496
      %4416 = vst.msk [vmem:[%s4415 + $0x1] sm:$0xff] %vm300, %v4407
      %4417 = vst.msk [vmem:[%s4415 + $0x11] sm:$0xff] %vm300, %v4408
      %4418 = vst.msk [vmem:[%s4415 + $0x21] sm:$0xff] %vm300, %v4409
      %4419 = vst.msk [vmem:[%s4415 + $0x31] sm:$0xff] %vm300, %v4410
      %4420 = vst.msk [vmem:[%s4415 + $0x41] sm:$0xff] %vm300, %v4411
      %4421 = vst.msk [vmem:[%s4415 + $0x51] sm:$0xff] %vm300, %v4412
      %4422 = vst.msk [vmem:[%s4415 + $0x61] sm:$0xff] %vm300, %v4413
      %4423 = vst.msk [vmem:[%s4415 + $0x71] sm:$0xff] %vm300, %v4414
      %s4424 = scalar_lea.vmem [#allocation3], 480
      %v4425 = vld [vmem:[%s4424] sm:$0xff]
      %v4426 = vld [vmem:[%s4424 + $0x10] sm:$0xff]
      %v4427 = vld [vmem:[%s4424 + $0x20] sm:$0xff]
      %v4428 = vld [vmem:[%s4424 + $0x30] sm:$0xff]
      %v4429 = vld [vmem:[%s4424 + $0x40] sm:$0xff]
      %v4430 = vld [vmem:[%s4424 + $0x50] sm:$0xff]
      %v4431 = vld [vmem:[%s4424 + $0x60] sm:$0xff]
      %v4432 = vld [vmem:[%s4424 + $0x70] sm:$0xff]
      %v4433 = vpack.c.bf16 %v4426, %v4425
      %v4434 = vpack.c.bf16 %v4428, %v4427
      %v4435 = vpack.c.bf16 %v4430, %v4429
      %v4436 = vpack.c.bf16 %v4432, %v4431
      %s4437 = scalar_lea.vmem [#allocation3], 320
      %v4438 = vld [vmem:[%s4437 + $0x1] sm:$0xff]
      %v4439 = vld [vmem:[%s4437 + $0x11] sm:$0xff]
      %v4440 = vld [vmem:[%s4437 + $0x21] sm:$0xff]
      %v4441 = vld [vmem:[%s4437 + $0x31] sm:$0xff]
      %v4442 = vld [vmem:[%s4437 + $0x41] sm:$0xff]
      %v4443 = vld [vmem:[%s4437 + $0x51] sm:$0xff]
      %v4444 = vld [vmem:[%s4437 + $0x61] sm:$0xff]
      %v4445 = vld [vmem:[%s4437 + $0x71] sm:$0xff]
      %v4446 = vpack.c.bf16 %v4439, %v4438
      %v4447 = vpack.c.bf16 %v4441, %v4440
      %v4448 = vpack.c.bf16 %v4443, %v4442
      %v4449 = vpack.c.bf16 %v4445, %v4444
      %v4450 = vld [vmem:[%s4424 + $0x1] sm:$0xff]
      %v4451 = vld [vmem:[%s4424 + $0x11] sm:$0xff]
      %v4452 = vld [vmem:[%s4424 + $0x21] sm:$0xff]
      %v4453 = vld [vmem:[%s4424 + $0x31] sm:$0xff]
      %v4454 = vld [vmem:[%s4424 + $0x41] sm:$0xff]
      %v4455 = vld [vmem:[%s4424 + $0x51] sm:$0xff]
      %v4456 = vld [vmem:[%s4424 + $0x61] sm:$0xff]
      %v4457 = vld [vmem:[%s4424 + $0x71] sm:$0xff]
      %v4458 = vpack.c.bf16 %v4451, %v4450
      %v4459 = vpack.c.bf16 %v4453, %v4452
      %v4460 = vpack.c.bf16 %v4455, %v4454
      %v4461 = vpack.c.bf16 %v4457, %v4456
      %v4462 = vld [vmem:[%s3479] sm:$0xff]
      %v4463 = vld [vmem:[%s3479 + $0x10] sm:$0xff]
      %v4464 = vld [vmem:[%s3479 + $0x20] sm:$0xff]
      %v4465 = vld [vmem:[%s3479 + $0x30] sm:$0xff]
      %v4466 = vld [vmem:[%s3479 + $0x40] sm:$0xff]
      %v4467 = vld [vmem:[%s3479 + $0x50] sm:$0xff]
      %v4468 = vld [vmem:[%s3479 + $0x60] sm:$0xff]
      %v4469 = vld [vmem:[%s3479 + $0x70] sm:$0xff]
      %v4470 = vpack.c.bf16 %v4463, %v4462
      %v4471 = vpack.c.bf16 %v4465, %v4464
      %v4472 = vpack.c.bf16 %v4467, %v4466
      %v4473 = vpack.c.bf16 %v4469, %v4468
      %v4474 = vld [vmem:[%s3011 + $0x1] sm:$0xff]
      %v4475 = vld [vmem:[%s3011 + $0x11] sm:$0xff]
      %v4476 = vld [vmem:[%s3011 + $0x21] sm:$0xff]
      %v4477 = vld [vmem:[%s3011 + $0x31] sm:$0xff]
      %v4478 = vld [vmem:[%s3011 + $0x41] sm:$0xff]
      %v4479 = vld [vmem:[%s3011 + $0x51] sm:$0xff]
      %v4480 = vld [vmem:[%s3011 + $0x61] sm:$0xff]
      %v4481 = vld [vmem:[%s3011 + $0x71] sm:$0xff]
      %v4482 = vpack.c.bf16 %v4475, %v4474
      %v4483 = vpack.c.bf16 %v4477, %v4476
      %v4484 = vpack.c.bf16 %v4479, %v4478
      %v4485 = vpack.c.bf16 %v4481, %v4480
      %v4486 = vld [vmem:[%s3479 + $0x1] sm:$0xff]
      %v4487 = vld [vmem:[%s3479 + $0x11] sm:$0xff]
      %v4488 = vld [vmem:[%s3479 + $0x21] sm:$0xff]
      %v4489 = vld [vmem:[%s3479 + $0x31] sm:$0xff]
      %v4490 = vld [vmem:[%s3479 + $0x41] sm:$0xff]
      %v4491 = vld [vmem:[%s3479 + $0x51] sm:$0xff]
      %v4492 = vld [vmem:[%s3479 + $0x61] sm:$0xff]
      %v4493 = vld [vmem:[%s3479 + $0x71] sm:$0xff]
      %v4494 = vpack.c.bf16 %v4487, %v4486
      %v4495 = vpack.c.bf16 %v4489, %v4488
      %v4496 = vpack.c.bf16 %v4491, %v4490
      %v4497 = vpack.c.bf16 %v4493, %v4492
      %v4498 = vld [vmem:[%s4415] sm:$0xff]
      %v4499 = vld [vmem:[%s4415 + $0x10] sm:$0xff]
      %v4500 = vld [vmem:[%s4415 + $0x20] sm:$0xff]
      %v4501 = vld [vmem:[%s4415 + $0x30] sm:$0xff]
      %v4502 = vld [vmem:[%s4415 + $0x40] sm:$0xff]
      %v4503 = vld [vmem:[%s4415 + $0x50] sm:$0xff]
      %v4504 = vld [vmem:[%s4415 + $0x60] sm:$0xff]
      %v4505 = vld [vmem:[%s4415 + $0x70] sm:$0xff]
      %v4506 = vpack.c.bf16 %v4499, %v4498
      %v4507 = vpack.c.bf16 %v4501, %v4500
      %v4508 = vpack.c.bf16 %v4503, %v4502
      %v4509 = vpack.c.bf16 %v4505, %v4504
      %v4510 = vld [vmem:[%s3947 + $0x1] sm:$0xff]
      %v4511 = vld [vmem:[%s3947 + $0x11] sm:$0xff]
      %v4512 = vld [vmem:[%s3947 + $0x21] sm:$0xff]
      %v4513 = vld [vmem:[%s3947 + $0x31] sm:$0xff]
      %v4514 = vld [vmem:[%s3947 + $0x41] sm:$0xff]
      %v4515 = vld [vmem:[%s3947 + $0x51] sm:$0xff]
      %v4516 = vld [vmem:[%s3947 + $0x61] sm:$0xff]
      %v4517 = vld [vmem:[%s3947 + $0x71] sm:$0xff]
      %v4518 = vpack.c.bf16 %v4511, %v4510
      %v4519 = vpack.c.bf16 %v4513, %v4512
      %v4520 = vpack.c.bf16 %v4515, %v4514
      %v4521 = vpack.c.bf16 %v4517, %v4516
      %v4522 = vld [vmem:[%s4415 + $0x1] sm:$0xff]
      %v4523 = vld [vmem:[%s4415 + $0x11] sm:$0xff]
      %v4524 = vld [vmem:[%s4415 + $0x21] sm:$0xff]
      %v4525 = vld [vmem:[%s4415 + $0x31] sm:$0xff]
      %v4526 = vld [vmem:[%s4415 + $0x41] sm:$0xff]
      %v4527 = vld [vmem:[%s4415 + $0x51] sm:$0xff]
      %v4528 = vld [vmem:[%s4415 + $0x61] sm:$0xff]
      %v4529 = vld [vmem:[%s4415 + $0x71] sm:$0xff]
      %v4530 = vpack.c.bf16 %v4523, %v4522
      %v4531 = vpack.c.bf16 %v4525, %v4524
      %v4532 = vpack.c.bf16 %v4527, %v4526
      %v4533 = vpack.c.bf16 %v4529, %v4528
      %4538 = vrot.lane.b32.xlu0 %v4446, 64
      %v4539 = vpop.permute.xlu0 %4538
      %4540 = vrot.lane.b32.xlu0 %v4447, 64
      %v4541 = vpop.permute.xlu0 %4540
      %4542 = vrot.lane.b32.xlu0 %v4448, 64
      %v4543 = vpop.permute.xlu0 %4542
      %4544 = vrot.lane.b32.xlu0 %v4449, 64
      %v4545 = vpop.permute.xlu0 %4544
      %4550 = vrot.lane.b32.xlu0 %v4470, 64
      %v4551 = vpop.permute.xlu0 %4550
      %4552 = vrot.lane.b32.xlu0 %v4471, 64
      %v4553 = vpop.permute.xlu0 %4552
      %4554 = vrot.lane.b32.xlu0 %v4472, 64
      %v4555 = vpop.permute.xlu0 %4554
      %4556 = vrot.lane.b32.xlu0 %v4473, 64
      %v4557 = vpop.permute.xlu0 %4556
      %4562 = vrot.lane.b32.xlu0 %v4494, 64
      %v4563 = vpop.permute.xlu0 %4562
      %4564 = vrot.lane.b32.xlu0 %v4495, 64
      %v4565 = vpop.permute.xlu0 %4564
      %4566 = vrot.lane.b32.xlu0 %v4496, 64
      %v4567 = vpop.permute.xlu0 %4566
      %4568 = vrot.lane.b32.xlu0 %v4497, 64
      %v4569 = vpop.permute.xlu0 %4568
      %4574 = vrot.lane.b32.xlu0 %v4518, 64
      %v4575 = vpop.permute.xlu0 %4574
      %4576 = vrot.lane.b32.xlu0 %v4519, 64
      %v4577 = vpop.permute.xlu0 %4576
      %4578 = vrot.lane.b32.xlu0 %v4520, 64
      %v4579 = vpop.permute.xlu0 %4578
      %4580 = vrot.lane.b32.xlu0 %v4521, 64
      %v4581 = vpop.permute.xlu0 %4580
      %v4584 = vsel %vm300, %v4433, %v4539
      %v4588 = vsel %vm300, %v4434, %v4541
      %v4592 = vsel %vm300, %v4435, %v4543
      %v4596 = vsel %vm300, %v4436, %v4545
      %v4600 = vsel %vm300, %v4458, %v4551
      %v4604 = vsel %vm300, %v4459, %v4553
      %v4608 = vsel %vm300, %v4460, %v4555
      %v4612 = vsel %vm300, %v4461, %v4557
      %v4616 = vsel %vm300, %v4482, %v4563
      %v4620 = vsel %vm300, %v4483, %v4565
      %v4624 = vsel %vm300, %v4484, %v4567
      %v4628 = vsel %vm300, %v4485, %v4569
      %v4632 = vsel %vm300, %v4506, %v4575
      %v4636 = vsel %vm300, %v4507, %v4577
      %v4640 = vsel %vm300, %v4508, %v4579
      %v4644 = vsel %vm300, %v4509, %v4581
      %v4646 = vld [vmem:[%s6] sm:$0xf]
      %v4647 = vld [vmem:[%s6 + $0x4] sm:$0xf]
      %v4648 = vld [vmem:[%s6 + $0x8] sm:$0xf]
      %v4649 = vld [vmem:[%s6 + $0xc] sm:$0xf]
      %v4650 = vld [vmem:[%s6 + $0x10] sm:$0xf]
      %v4651 = vld [vmem:[%s6 + $0x14] sm:$0xf]
      %v4652 = vld [vmem:[%s6 + $0x18] sm:$0xf]
      %v4653 = vld [vmem:[%s6 + $0x1c] sm:$0xf]
      %v4654 = vld [vmem:[%s6 + $0x20] sm:$0xf]
      %v4655 = vld [vmem:[%s6 + $0x24] sm:$0xf]
      %v4656 = vld [vmem:[%s6 + $0x28] sm:$0xf]
      %v4657 = vld [vmem:[%s6 + $0x2c] sm:$0xf]
      %v4658 = vld [vmem:[%s6 + $0x30] sm:$0xf]
      %v4659 = vld [vmem:[%s6 + $0x34] sm:$0xf]
      %v4660 = vld [vmem:[%s6 + $0x38] sm:$0xf]
      %v4661 = vld [vmem:[%s6 + $0x3c] sm:$0xf]
      %v4662 = vld [vmem:[%s6 + $0x40] sm:$0xf]
      %v4663 = vld [vmem:[%s6 + $0x44] sm:$0xf]
      %v4664 = vld [vmem:[%s6 + $0x48] sm:$0xf]
      %v4665 = vld [vmem:[%s6 + $0x4c] sm:$0xf]
      %v4666 = vld [vmem:[%s6 + $0x50] sm:$0xf]
      %v4667 = vld [vmem:[%s6 + $0x54] sm:$0xf]
      %v4668 = vld [vmem:[%s6 + $0x58] sm:$0xf]
      %v4669 = vld [vmem:[%s6 + $0x5c] sm:$0xf]
      %v4670 = vld [vmem:[%s6 + $0x60] sm:$0xf]
      %v4671 = vld [vmem:[%s6 + $0x64] sm:$0xf]
      %v4672 = vld [vmem:[%s6 + $0x68] sm:$0xf]
      %v4673 = vld [vmem:[%s6 + $0x6c] sm:$0xf]
      %v4674 = vld [vmem:[%s6 + $0x70] sm:$0xf]
      %v4675 = vld [vmem:[%s6 + $0x74] sm:$0xf]
      %v4676 = vld [vmem:[%s6 + $0x78] sm:$0xf]
      %v4677 = vld [vmem:[%s6 + $0x7c] sm:$0xf]
      %v4678 = vld [vmem:[%s6 + $0x80] sm:$0xf]
      %v4679 = vld [vmem:[%s6 + $0x84] sm:$0xf]
      %v4680 = vld [vmem:[%s6 + $0x88] sm:$0xf]
      %v4681 = vld [vmem:[%s6 + $0x8c] sm:$0xf]
      %v4682 = vld [vmem:[%s6 + $0x90] sm:$0xf]
      %v4683 = vld [vmem:[%s6 + $0x94] sm:$0xf]
      %v4684 = vld [vmem:[%s6 + $0x98] sm:$0xf]
      %v4685 = vld [vmem:[%s6 + $0x9c] sm:$0xf]
      %v4686 = vld [vmem:[%s6 + $0xa0] sm:$0xf]
      %v4687 = vld [vmem:[%s6 + $0xa4] sm:$0xf]
      %v4688 = vld [vmem:[%s6 + $0xa8] sm:$0xf]
      %v4689 = vld [vmem:[%s6 + $0xac] sm:$0xf]
      %v4690 = vld [vmem:[%s6 + $0xb0] sm:$0xf]
      %v4691 = vld [vmem:[%s6 + $0xb4] sm:$0xf]
      %v4692 = vld [vmem:[%s6 + $0xb8] sm:$0xf]
      %v4693 = vld [vmem:[%s6 + $0xbc] sm:$0xf]
      %v4694 = vld [vmem:[%s6 + $0xc0] sm:$0xf]
      %v4695 = vld [vmem:[%s6 + $0xc4] sm:$0xf]
      %v4696 = vld [vmem:[%s6 + $0xc8] sm:$0xf]
      %v4697 = vld [vmem:[%s6 + $0xcc] sm:$0xf]
      %v4698 = vld [vmem:[%s6 + $0xd0] sm:$0xf]
      %v4699 = vld [vmem:[%s6 + $0xd4] sm:$0xf]
      %v4700 = vld [vmem:[%s6 + $0xd8] sm:$0xf]
      %v4701 = vld [vmem:[%s6 + $0xdc] sm:$0xf]
      %v4702 = vld [vmem:[%s6 + $0xe0] sm:$0xf]
      %v4703 = vld [vmem:[%s6 + $0xe4] sm:$0xf]
      %v4704 = vld [vmem:[%s6 + $0xe8] sm:$0xf]
      %v4705 = vld [vmem:[%s6 + $0xec] sm:$0xf]
      %v4706 = vld [vmem:[%s6 + $0xf0] sm:$0xf]
      %v4707 = vld [vmem:[%s6 + $0xf4] sm:$0xf]
      %v4708 = vld [vmem:[%s6 + $0xf8] sm:$0xf]
      %v4709 = vld [vmem:[%s6 + $0xfc] sm:$0xf]
      %v4710 = vld [vmem:[%s6 + $0x100] sm:$0xf]
      %v4711 = vld [vmem:[%s6 + $0x104] sm:$0xf]
      %v4712 = vld [vmem:[%s6 + $0x108] sm:$0xf]
      %v4713 = vld [vmem:[%s6 + $0x10c] sm:$0xf]
      %v4714 = vld [vmem:[%s6 + $0x110] sm:$0xf]
      %v4715 = vld [vmem:[%s6 + $0x114] sm:$0xf]
      %v4716 = vld [vmem:[%s6 + $0x118] sm:$0xf]
      %v4717 = vld [vmem:[%s6 + $0x11c] sm:$0xf]
      %v4790 = vunpack.c.l.b16 %v4646
      %v4791 = vunpack.c.l.b16 %v4647
      %v4792 = vunpack.c.l.b16 %v4648
      %v4793 = vunpack.c.l.b16 %v4649
      %v4794 = vunpack.c.l.b16 %v4650
      %v4795 = vunpack.c.l.b16 %v4651
      %v4796 = vunpack.c.l.b16 %v4652
      %v4797 = vunpack.c.l.b16 %v4653
      %v4798 = vunpack.c.l.b16 %v4654
      %v4799 = vunpack.c.l.b16 %v4655
      %v4800 = vunpack.c.l.b16 %v4656
      %v4801 = vunpack.c.l.b16 %v4657
      %v4802 = vunpack.c.l.b16 %v4658
      %v4803 = vunpack.c.l.b16 %v4659
      %v4804 = vunpack.c.l.b16 %v4660
      %v4805 = vunpack.c.l.b16 %v4661
      %v4806 = vunpack.c.l.b16 %v4662
      %v4807 = vunpack.c.l.b16 %v4663
      %v4808 = vunpack.c.l.b16 %v4664
      %v4809 = vunpack.c.l.b16 %v4665
      %v4810 = vunpack.c.l.b16 %v4666
      %v4811 = vunpack.c.l.b16 %v4667
      %v4812 = vunpack.c.l.b16 %v4668
      %v4813 = vunpack.c.l.b16 %v4669
      %v4814 = vunpack.c.l.b16 %v4670
      %v4815 = vunpack.c.l.b16 %v4671
      %v4816 = vunpack.c.l.b16 %v4672
      %v4817 = vunpack.c.l.b16 %v4673
      %v4818 = vunpack.c.l.b16 %v4674
      %v4819 = vunpack.c.l.b16 %v4675
      %v4820 = vunpack.c.l.b16 %v4676
      %v4821 = vunpack.c.l.b16 %v4677
      %v4822 = vunpack.c.l.b16 %v4678
      %v4823 = vunpack.c.l.b16 %v4679
      %v4824 = vunpack.c.l.b16 %v4680
      %v4825 = vunpack.c.l.b16 %v4681
      %v4826 = vunpack.c.l.b16 %v4682
      %v4827 = vunpack.c.l.b16 %v4683
      %v4828 = vunpack.c.l.b16 %v4684
      %v4829 = vunpack.c.l.b16 %v4685
      %v4830 = vunpack.c.l.b16 %v4686
      %v4831 = vunpack.c.l.b16 %v4687
      %v4832 = vunpack.c.l.b16 %v4688
      %v4833 = vunpack.c.l.b16 %v4689
      %v4834 = vunpack.c.l.b16 %v4690
      %v4835 = vunpack.c.l.b16 %v4691
      %v4836 = vunpack.c.l.b16 %v4692
      %v4837 = vunpack.c.l.b16 %v4693
      %v4838 = vunpack.c.l.b16 %v4694
      %v4839 = vunpack.c.l.b16 %v4695
      %v4840 = vunpack.c.l.b16 %v4696
      %v4841 = vunpack.c.l.b16 %v4697
      %v4842 = vunpack.c.l.b16 %v4698
      %v4843 = vunpack.c.l.b16 %v4699
      %v4844 = vunpack.c.l.b16 %v4700
      %v4845 = vunpack.c.l.b16 %v4701
      %v4846 = vunpack.c.l.b16 %v4702
      %v4847 = vunpack.c.l.b16 %v4703
      %v4848 = vunpack.c.l.b16 %v4704
      %v4849 = vunpack.c.l.b16 %v4705
      %v4850 = vunpack.c.l.b16 %v4706
      %v4851 = vunpack.c.l.b16 %v4707
      %v4852 = vunpack.c.l.b16 %v4708
      %v4853 = vunpack.c.l.b16 %v4709
      %v4854 = vunpack.c.l.b16 %v4710
      %v4855 = vunpack.c.l.b16 %v4711
      %v4856 = vunpack.c.l.b16 %v4712
      %v4857 = vunpack.c.l.b16 %v4713
      %v4858 = vunpack.c.l.b16 %v4714
      %v4859 = vunpack.c.l.b16 %v4715
      %v4860 = vunpack.c.l.b16 %v4716
      %v4861 = vunpack.c.l.b16 %v4717
      %v4862 = vpack.c.b16 %v4791, %v4790
      %v4863 = vpack.c.b16 %v4793, %v4792
      %v4864 = vpack.c.b16 %v4795, %v4794
      %v4865 = vpack.c.b16 %v4797, %v4796
      %v4866 = vpack.c.b16 %v4799, %v4798
      %v4867 = vpack.c.b16 %v4801, %v4800
      %v4868 = vpack.c.b16 %v4803, %v4802
      %v4869 = vpack.c.b16 %v4805, %v4804
      %v4870 = vpack.c.b16 %v4807, %v4806
      %v4871 = vpack.c.b16 %v4809, %v4808
      %v4872 = vpack.c.b16 %v4811, %v4810
      %v4873 = vpack.c.b16 %v4813, %v4812
      %v4874 = vpack.c.b16 %v4815, %v4814
      %v4875 = vpack.c.b16 %v4817, %v4816
      %v4876 = vpack.c.b16 %v4819, %v4818
      %v4877 = vpack.c.b16 %v4821, %v4820
      %v4878 = vpack.c.b16 %v4823, %v4822
      %v4879 = vpack.c.b16 %v4825, %v4824
      %v4880 = vpack.c.b16 %v4827, %v4826
      %v4881 = vpack.c.b16 %v4829, %v4828
      %v4882 = vpack.c.b16 %v4831, %v4830
      %v4883 = vpack.c.b16 %v4833, %v4832
      %v4884 = vpack.c.b16 %v4835, %v4834
      %v4885 = vpack.c.b16 %v4837, %v4836
      %v4886 = vpack.c.b16 %v4839, %v4838
      %v4887 = vpack.c.b16 %v4841, %v4840
      %v4888 = vpack.c.b16 %v4843, %v4842
      %v4889 = vpack.c.b16 %v4845, %v4844
      %v4890 = vpack.c.b16 %v4847, %v4846
      %v4891 = vpack.c.b16 %v4849, %v4848
      %v4892 = vpack.c.b16 %v4851, %v4850
      %v4893 = vpack.c.b16 %v4853, %v4852
      %v4894 = vpack.c.b16 %v4855, %v4854
      %v4895 = vpack.c.b16 %v4857, %v4856
      %v4896 = vpack.c.b16 %v4859, %v4858
      %v4897 = vpack.c.b16 %v4861, %v4860
      %v4935 = vsel %vm300, %v4530, 0
      %v4938 = vsel %vm300, %v4531, 0
      %v4941 = vsel %vm300, %v4532, 0
      %v4944 = vsel %vm300, %v4533, 0
      %4946 = vmatprep.subr.bf16.mxu0 0
      %4947 = vmatpush1.bf16.msra.mxu0 %v4862
      %4948 = vmatprep.subr.bf16.mxu0 0
      %4949 = vmatpush1.bf16.msra.mxu0 %v4863
      %4950 = vmatprep.subr.bf16.mxu0 0
      %4951 = vmatpush1.bf16.msra.mxu0 %v4864
      %4952 = vmatprep.subr.bf16.mxu0 0
      %4953 = vmatpush1.bf16.msra.mxu0 %v4865
      %4954 = vmatprep.subr.bf16.mxu0 0
      %4955 = vmatpush1.bf16.msra.mxu0 %v4866
      %4956 = vmatprep.subr.bf16.mxu0 0
      %4957 = vmatpush1.bf16.msra.mxu0 %v4867
      %4958 = vmatprep.subr.bf16.mxu0 0
      %4959 = vmatpush1.bf16.msra.mxu0 %v4868
      %4960 = vmatprep.subr.bf16.mxu0 0
      %4961 = vmatpush1.bf16.msra.mxu0 %v4869
      %4962 = vmatprep.subr.bf16.mxu0 0
      %4963 = vmatpush1.bf16.msra.mxu0 %v4870
      %4964 = vmatprep.subr.bf16.mxu0 0
      %4965 = vmatpush1.bf16.msra.mxu0 %v4871
      %4966 = vmatprep.subr.bf16.mxu0 0
      %4967 = vmatpush1.bf16.msra.mxu0 %v4872
      %4968 = vmatprep.subr.bf16.mxu0 0
      %4969 = vmatpush1.bf16.msra.mxu0 %v4873
      %4970 = vmatprep.subr.bf16.mxu0 0
      %4971 = vmatpush1.bf16.msra.mxu0 %v4874
      %4972 = vmatprep.subr.bf16.mxu0 0
      %4973 = vmatpush1.bf16.msra.mxu0 %v4875
      %4974 = vmatprep.subr.bf16.mxu0 0
      %4975 = vmatpush1.bf16.msra.mxu0 %v4876
      %4976 = vmatprep.subr.bf16.mxu0 0
      %4977 = vmatpush1.bf16.msra.mxu0 %v4877
      %4978 = vmatprep.mubr.bf16.mxu0 %v4600
      %4979 = vmatmul.mubr.bf16.gmra.mrb[0].mxu0 %v4584
      %v4980 = vpop.f32.mrb[0].mxu0
      %v4981 = vadd.f32 0.0, %v4980
      %v4982 = vpop.f32.mrb[0].mxu0
      %v4983 = vpop.f32.mrb[0].mxu0
      %v4984 = vadd.f32 0.0, %v4983
      %v4985 = vpop.f32.mrb[0].mxu0
      %4986 = vmatprep.mubr.bf16.mxu0 %v4604
      %4987 = vmatmul.mubr.bf16.gmra.mrb[0].mxu0 %v4588
      %v4988 = vpop.f32.mrb[0].mxu0
      %v4989 = vadd.f32 0.0, %v4988
      %v4990 = vpop.f32.mrb[0].mxu0
      %v4991 = vpop.f32.mrb[0].mxu0
      %v4992 = vadd.f32 0.0, %v4991
      %v4993 = vpop.f32.mrb[0].mxu0
      %4994 = vmatprep.mubr.bf16.mxu0 %v4608
      %4995 = vmatmul.mubr.bf16.gmra.mrb[0].mxu0 %v4592
      %v4996 = vpop.f32.mrb[0].mxu0
      %v4997 = vadd.f32 0.0, %v4996
      %v4998 = vpop.f32.mrb[0].mxu0
      %v4999 = vpop.f32.mrb[0].mxu0
      %v5000 = vadd.f32 0.0, %v4999
      %v5001 = vpop.f32.mrb[0].mxu0
      %5002 = vmatprep.mubr.bf16.mxu0 %v4612
      %5003 = vmatmul.mubr.bf16.gmra.mrb[0].mxu0 %v4596
      %v5004 = vpop.f32.mrb[0].mxu0
      %v5005 = vadd.f32 0.0, %v5004
      %v5006 = vpop.f32.mrb[0].mxu0
      %v5007 = vpop.f32.mrb[0].mxu0
      %v5008 = vadd.f32 0.0, %v5007
      %v5009 = vpop.f32.mrb[0].mxu0
      %5010 = vdwg.mxu0
      %5011 = vmatprep.subr.bf16.mxu0 0
      %5012 = vmatpush1.bf16.msra.mxu0 %v4878
      %5013 = vmatprep.subr.bf16.mxu0 0
      %5014 = vmatpush1.bf16.msra.mxu0 %v4879
      %5015 = vmatprep.subr.bf16.mxu0 0
      %5016 = vmatpush1.bf16.msra.mxu0 %v4880
      %5017 = vmatprep.subr.bf16.mxu0 0
      %5018 = vmatpush1.bf16.msra.mxu0 %v4881
      %5019 = vmatprep.subr.bf16.mxu0 0
      %5020 = vmatpush1.bf16.msra.mxu0 %v4882
      %5021 = vmatprep.subr.bf16.mxu0 0
      %5022 = vmatpush1.bf16.msra.mxu0 %v4883
      %5023 = vmatprep.subr.bf16.mxu0 0
      %5024 = vmatpush1.bf16.msra.mxu0 %v4884
      %5025 = vmatprep.subr.bf16.mxu0 0
      %5026 = vmatpush1.bf16.msra.mxu0 %v4885
      %5027 = vmatprep.subr.bf16.mxu0 0
      %5028 = vmatpush1.bf16.msra.mxu0 %v4886
      %5029 = vmatprep.subr.bf16.mxu0 0
      %5030 = vmatpush1.bf16.msra.mxu0 %v4887
      %5031 = vmatprep.subr.bf16.mxu0 0
      %5032 = vmatpush1.bf16.msra.mxu0 %v4888
      %5033 = vmatprep.subr.bf16.mxu0 0
      %5034 = vmatpush1.bf16.msra.mxu0 %v4889
      %5035 = vmatprep.subr.bf16.mxu0 0
      %5036 = vmatpush1.bf16.msra.mxu0 %v4890
      %5037 = vmatprep.subr.bf16.mxu0 0
      %5038 = vmatpush1.bf16.msra.mxu0 %v4891
      %5039 = vmatprep.subr.bf16.mxu0 0
      %5040 = vmatpush1.bf16.msra.mxu0 %v4892
      %5041 = vmatprep.subr.bf16.mxu0 0
      %5042 = vmatpush1.bf16.msra.mxu0 %v4893
      %5043 = vmatprep.mubr.bf16.mxu0 %v4632
      %5044 = vmatmul.mubr.bf16.gmra.mrb[0].mxu0 %v4616
      %v5045 = vpop.f32.mrb[0].mxu0
      %v5046 = vadd.f32 %v4981, %v5045
      %v5047 = vpop.f32.mrb[0].mxu0
      %v5048 = vpop.f32.mrb[0].mxu0
      %v5049 = vadd.f32 %v4984, %v5048
      %v5050 = vpop.f32.mrb[0].mxu0
      %5051 = vmatprep.mubr.bf16.mxu0 %v4636
      %5052 = vmatmul.mubr.bf16.gmra.mrb[0].mxu0 %v4620
      %v5053 = vpop.f32.mrb[0].mxu0
      %v5054 = vadd.f32 %v4989, %v5053
      %v5055 = vpop.f32.mrb[0].mxu0
      %v5056 = vpop.f32.mrb[0].mxu0
      %v5057 = vadd.f32 %v4992, %v5056
      %v5058 = vpop.f32.mrb[0].mxu0
      %5059 = vmatprep.mubr.bf16.mxu0 %v4640
      %5060 = vmatmul.mubr.bf16.gmra.mrb[0].mxu0 %v4624
      %v5061 = vpop.f32.mrb[0].mxu0
      %v5062 = vadd.f32 %v4997, %v5061
      %v5063 = vpop.f32.mrb[0].mxu0
      %v5064 = vpop.f32.mrb[0].mxu0
      %v5065 = vadd.f32 %v5000, %v5064
      %v5066 = vpop.f32.mrb[0].mxu0
      %5067 = vmatprep.mubr.bf16.mxu0 %v4644
      %5068 = vmatmul.mubr.bf16.gmra.mrb[0].mxu0 %v4628
      %v5069 = vpop.f32.mrb[0].mxu0
      %v5070 = vadd.f32 %v5005, %v5069
      %v5071 = vpop.f32.mrb[0].mxu0
      %v5072 = vpop.f32.mrb[0].mxu0
      %v5073 = vadd.f32 %v5008, %v5072
      %v5074 = vpop.f32.mrb[0].mxu0
      %5075 = vdwg.mxu0
      %5076 = vmatprep.subr.bf16.mxu0 0
      %5077 = vmatpush1.bf16.msra.mxu0 %v4894
      %5078 = vmatprep.subr.bf16.mxu0 0
      %5079 = vmatpush1.bf16.msra.mxu0 %v4895
      %5080 = vmatprep.subr.bf16.mxu0 0
      %5081 = vmatpush1.bf16.msra.mxu0 %v4896
      %5082 = vmatprep.subr.bf16.mxu0 0
      %5083 = vmatpush1.bf16.msra.mxu0 %v4897
      %5084 = vmatprep.subr.bf16.mxu0 0
      %5085 = vmatpush1.bf16.msra.mxu0 0
      %5086 = vmatprep.subr.bf16.mxu0 0
      %5087 = vmatpush1.bf16.msra.mxu0 0
      %5088 = vmatprep.subr.bf16.mxu0 0
      %5089 = vmatpush1.bf16.msra.mxu0 0
      %5090 = vmatprep.subr.bf16.mxu0 0
      %5091 = vmatpush1.bf16.msra.mxu0 0
      %5092 = vmatprep.subr.bf16.mxu0 0
      %5093 = vmatpush1.bf16.msra.mxu0 0
      %5094 = vmatprep.subr.bf16.mxu0 0
      %5095 = vmatpush1.bf16.msra.mxu0 0
      %5096 = vmatprep.subr.bf16.mxu0 0
      %5097 = vmatpush1.bf16.msra.mxu0 0
      %5098 = vmatprep.subr.bf16.mxu0 0
      %5099 = vmatpush1.bf16.msra.mxu0 0
      %5100 = vmatprep.subr.bf16.mxu0 0
      %5101 = vmatpush1.bf16.msra.mxu0 0
      %5102 = vmatprep.subr.bf16.mxu0 0
      %5103 = vmatpush1.bf16.msra.mxu0 0
      %5104 = vmatprep.subr.bf16.mxu0 0
      %5105 = vmatpush1.bf16.msra.mxu0 0
      %5106 = vmatprep.subr.bf16.mxu0 0
      %5107 = vmatpush1.bf16.msra.mxu0 0
      %5108 = vmatprep.mubr.bf16.mxu0 0
      %5109 = vmatmul.mubr.bf16.gmra.mrb[0].mxu0 %v4935
      %v5110 = vpop.f32.mrb[0].mxu0
      %v5111 = vadd.f32 %v5046, %v5110
      %v5112 = vpop.f32.mrb[0].mxu0
      %v5113 = vpop.f32.mrb[0].mxu0
      %v5114 = vadd.f32 %v5049, %v5113
      %v5115 = vpop.f32.mrb[0].mxu0
      %5116 = vmatprep.mubr.bf16.mxu0 0
      %5117 = vmatmul.mubr.bf16.gmra.mrb[0].mxu0 %v4938
      %v5118 = vpop.f32.mrb[0].mxu0
      %v5119 = vadd.f32 %v5054, %v5118
      %v5120 = vpop.f32.mrb[0].mxu0
      %v5121 = vpop.f32.mrb[0].mxu0
      %v5122 = vadd.f32 %v5057, %v5121
      %v5123 = vpop.f32.mrb[0].mxu0
      %5124 = vmatprep.mubr.bf16.mxu0 0
      %5125 = vmatmul.mubr.bf16.gmra.mrb[0].mxu0 %v4941
      %v5126 = vpop.f32.mrb[0].mxu0
      %v5127 = vadd.f32 %v5062, %v5126
      %v5128 = vpop.f32.mrb[0].mxu0
      %v5129 = vpop.f32.mrb[0].mxu0
      %v5130 = vadd.f32 %v5065, %v5129
      %v5131 = vpop.f32.mrb[0].mxu0
      %5132 = vmatprep.mubr.bf16.mxu0 0
      %5133 = vmatmul.mubr.bf16.gmra.mrb[0].mxu0 %v4944
      %v5134 = vpop.f32.mrb[0].mxu0
      %v5135 = vadd.f32 %v5070, %v5134
      %v5136 = vpop.f32.mrb[0].mxu0
      %v5137 = vpop.f32.mrb[0].mxu0
      %v5138 = vadd.f32 %v5073, %v5137
      %v5139 = vpop.f32.mrb[0].mxu0
      %5140 = vdwg.mxu0
      %v5141 = vmul.f32 %v5111, %v5111
      %v5142 = vmul.f32 %v5114, %v5114
      %v5143 = vmul.f32 %v5119, %v5119
      %v5144 = vmul.f32 %v5122, %v5122
      %v5145 = vmul.f32 %v5127, %v5127
      %v5146 = vmul.f32 %v5130, %v5130
      %v5147 = vmul.f32 %v5135, %v5135
      %v5148 = vmul.f32 %v5138, %v5138
      %vm5149 = vcmask 23552
      %v5150 = vsel %vm5149, %v5141, 0.0
      %5151 = vadd.xlane.f32.xlu0 %v5150
      %v5152 = vpop.xlane.xlu0 %5151
      %v5153 = vsel %vm5149, %v5142, 0.0
      %5154 = vadd.xlane.f32.xlu0 %v5153
      %v5155 = vpop.xlane.xlu0 %5154
      %v5156 = vsel %vm5149, %v5143, 0.0
      %5157 = vadd.xlane.f32.xlu0 %v5156
      %v5158 = vpop.xlane.xlu0 %5157
      %v5159 = vsel %vm5149, %v5144, 0.0
      %5160 = vadd.xlane.f32.xlu0 %v5159
      %v5161 = vpop.xlane.xlu0 %5160
      %v5162 = vsel %vm5149, %v5145, 0.0
      %5163 = vadd.xlane.f32.xlu0 %v5162
      %v5164 = vpop.xlane.xlu0 %5163
      %v5165 = vsel %vm5149, %v5146, 0.0
      %5166 = vadd.xlane.f32.xlu0 %v5165
      %v5167 = vpop.xlane.xlu0 %5166
      %v5168 = vsel %vm5149, %v5147, 0.0
      %5169 = vadd.xlane.f32.xlu0 %v5168
      %v5170 = vpop.xlane.xlu0 %5169
      %v5171 = vsel %vm5149, %v5148, 0.0
      %5172 = vadd.xlane.f32.xlu0 %v5171
      %v5173 = vpop.xlane.xlu0 %5172
      %v5174 = vmax.f32 %v5152, 1e-24
      %v5175 = vmax.f32 %v5155, 1e-24
      %v5176 = vmax.f32 %v5158, 1e-24
      %v5177 = vmax.f32 %v5161, 1e-24
      %v5178 = vmax.f32 %v5164, 1e-24
      %v5179 = vmax.f32 %v5167, 1e-24
      %v5180 = vmax.f32 %v5170, 1e-24
      %v5181 = vmax.f32 %v5173, 1e-24
      %v5182 = vrsqrt.pop %v5174
      %v5183 = vrsqrt.pop %v5175
      %v5184 = vrsqrt.pop %v5176
      %v5185 = vrsqrt.pop %v5177
      %v5186 = vrsqrt.pop %v5178
      %v5187 = vrsqrt.pop %v5179
      %v5188 = vrsqrt.pop %v5180
      %v5189 = vrsqrt.pop %v5181
      %v5190 = vmul.f32 %v5111, %v5182
      %v5191 = vmul.f32 %v5114, %v5183
      %v5192 = vmul.f32 %v5119, %v5184
      %v5193 = vmul.f32 %v5122, %v5185
      %v5194 = vmul.f32 %v5127, %v5186
      %v5195 = vmul.f32 %v5130, %v5187
      %v5196 = vmul.f32 %v5135, %v5188
      %v5197 = vmul.f32 %v5138, %v5189
      %5198 = vst.msk [vmem:[%s278] sm:$0xff] %vm5149, %v5190
      %5199 = vst.msk [vmem:[%s278 + $0x8] sm:$0xff] %vm5149, %v5191
      %5200 = vst.msk [vmem:[%s278 + $0x10] sm:$0xff] %vm5149, %v5192
      %5201 = vst.msk [vmem:[%s278 + $0x18] sm:$0xff] %vm5149, %v5193
      %5202 = vst.msk [vmem:[%s278 + $0x20] sm:$0xff] %vm5149, %v5194
      %5203 = vst.msk [vmem:[%s278 + $0x28] sm:$0xff] %vm5149, %v5195
      %5204 = vst.msk [vmem:[%s278 + $0x30] sm:$0xff] %vm5149, %v5196
      %5205 = vst.msk [vmem:[%s278 + $0x38] sm:$0xff] %vm5149, %v5197
      %v5206 = vld [vmem:[%s4437 + $0x1] sm:$0xff]
      %v5207 = vld [vmem:[%s4437 + $0x11] sm:$0xff]
      %v5208 = vld [vmem:[%s4437 + $0x21] sm:$0xff]
      %v5209 = vld [vmem:[%s4437 + $0x31] sm:$0xff]
      %v5210 = vld [vmem:[%s4437 + $0x41] sm:$0xff]
      %v5211 = vld [vmem:[%s4437 + $0x51] sm:$0xff]
      %v5212 = vld [vmem:[%s4437 + $0x61] sm:$0xff]
      %v5213 = vld [vmem:[%s4437 + $0x71] sm:$0xff]
      %v5214 = vpack.c.bf16 %v5207, %v5206
      %v5215 = vpack.c.bf16 %v5209, %v5208
      %v5216 = vpack.c.bf16 %v5211, %v5210
      %v5217 = vpack.c.bf16 %v5213, %v5212
      %v5218 = vld [vmem:[%s4424 + $0x1] sm:$0xff]
      %v5219 = vld [vmem:[%s4424 + $0x11] sm:$0xff]
      %v5220 = vld [vmem:[%s4424 + $0x21] sm:$0xff]
      %v5221 = vld [vmem:[%s4424 + $0x31] sm:$0xff]
      %v5222 = vld [vmem:[%s4424 + $0x41] sm:$0xff]
      %v5223 = vld [vmem:[%s4424 + $0x51] sm:$0xff]
      %v5224 = vld [vmem:[%s4424 + $0x61] sm:$0xff]
      %v5225 = vld [vmem:[%s4424 + $0x71] sm:$0xff]
      %v5226 = vpack.c.bf16 %v5219, %v5218
      %v5227 = vpack.c.bf16 %v5221, %v5220
      %v5228 = vpack.c.bf16 %v5223, %v5222
      %v5229 = vpack.c.bf16 %v5225, %v5224
      %v5230 = vld [vmem:[%s4437 + $0x2] sm:$0xff]
      %v5231 = vld [vmem:[%s4437 + $0x12] sm:$0xff]
      %v5232 = vld [vmem:[%s4437 + $0x22] sm:$0xff]
      %v5233 = vld [vmem:[%s4437 + $0x32] sm:$0xff]
      %v5234 = vld [vmem:[%s4437 + $0x42] sm:$0xff]
      %v5235 = vld [vmem:[%s4437 + $0x52] sm:$0xff]
      %v5236 = vld [vmem:[%s4437 + $0x62] sm:$0xff]
      %v5237 = vld [vmem:[%s4437 + $0x72] sm:$0xff]
      %v5238 = vpack.c.bf16 %v5231, %v5230
      %v5239 = vpack.c.bf16 %v5233, %v5232
      %v5240 = vpack.c.bf16 %v5235, %v5234
      %v5241 = vpack.c.bf16 %v5237, %v5236
      %v5242 = vld [vmem:[%s3011 + $0x1] sm:$0xff]
      %v5243 = vld [vmem:[%s3011 + $0x11] sm:$0xff]
      %v5244 = vld [vmem:[%s3011 + $0x21] sm:$0xff]
      %v5245 = vld [vmem:[%s3011 + $0x31] sm:$0xff]
      %v5246 = vld [vmem:[%s3011 + $0x41] sm:$0xff]
      %v5247 = vld [vmem:[%s3011 + $0x51] sm:$0xff]
      %v5248 = vld [vmem:[%s3011 + $0x61] sm:$0xff]
      %v5249 = vld [vmem:[%s3011 + $0x71] sm:$0xff]
      %v5250 = vpack.c.bf16 %v5243, %v5242
      %v5251 = vpack.c.bf16 %v5245, %v5244
      %v5252 = vpack.c.bf16 %v5247, %v5246
      %v5253 = vpack.c.bf16 %v5249, %v5248
      %v5254 = vld [vmem:[%s3479 + $0x1] sm:$0xff]
      %v5255 = vld [vmem:[%s3479 + $0x11] sm:$0xff]
      %v5256 = vld [vmem:[%s3479 + $0x21] sm:$0xff]
      %v5257 = vld [vmem:[%s3479 + $0x31] sm:$0xff]
      %v5258 = vld [vmem:[%s3479 + $0x41] sm:$0xff]
      %v5259 = vld [vmem:[%s3479 + $0x51] sm:$0xff]
      %v5260 = vld [vmem:[%s3479 + $0x61] sm:$0xff]
      %v5261 = vld [vmem:[%s3479 + $0x71] sm:$0xff]
      %v5262 = vpack.c.bf16 %v5255, %v5254
      %v5263 = vpack.c.bf16 %v5257, %v5256
      %v5264 = vpack.c.bf16 %v5259, %v5258
      %v5265 = vpack.c.bf16 %v5261, %v5260
      %v5266 = vld [vmem:[%s3011 + $0x2] sm:$0xff]
      %v5267 = vld [vmem:[%s3011 + $0x12] sm:$0xff]
      %v5268 = vld [vmem:[%s3011 + $0x22] sm:$0xff]
      %v5269 = vld [vmem:[%s3011 + $0x32] sm:$0xff]
      %v5270 = vld [vmem:[%s3011 + $0x42] sm:$0xff]
      %v5271 = vld [vmem:[%s3011 + $0x52] sm:$0xff]
      %v5272 = vld [vmem:[%s3011 + $0x62] sm:$0xff]
      %v5273 = vld [vmem:[%s3011 + $0x72] sm:$0xff]
      %v5274 = vpack.c.bf16 %v5267, %v5266
      %v5275 = vpack.c.bf16 %v5269, %v5268
      %v5276 = vpack.c.bf16 %v5271, %v5270
      %v5277 = vpack.c.bf16 %v5273, %v5272
      %v5278 = vld [vmem:[%s3947 + $0x1] sm:$0xff]
      %v5279 = vld [vmem:[%s3947 + $0x11] sm:$0xff]
      %v5280 = vld [vmem:[%s3947 + $0x21] sm:$0xff]
      %v5281 = vld [vmem:[%s3947 + $0x31] sm:$0xff]
      %v5282 = vld [vmem:[%s3947 + $0x41] sm:$0xff]
      %v5283 = vld [vmem:[%s3947 + $0x51] sm:$0xff]
      %v5284 = vld [vmem:[%s3947 + $0x61] sm:$0xff]
      %v5285 = vld [vmem:[%s3947 + $0x71] sm:$0xff]
      %v5286 = vpack.c.bf16 %v5279, %v5278
      %v5287 = vpack.c.bf16 %v5281, %v5280
      %v5288 = vpack.c.bf16 %v5283, %v5282
      %v5289 = vpack.c.bf16 %v5285, %v5284
      %v5290 = vld [vmem:[%s4415 + $0x1] sm:$0xff]
      %v5291 = vld [vmem:[%s4415 + $0x11] sm:$0xff]
      %v5292 = vld [vmem:[%s4415 + $0x21] sm:$0xff]
      %v5293 = vld [vmem:[%s4415 + $0x31] sm:$0xff]
      %v5294 = vld [vmem:[%s4415 + $0x41] sm:$0xff]
      %v5295 = vld [vmem:[%s4415 + $0x51] sm:$0xff]
      %v5296 = vld [vmem:[%s4415 + $0x61] sm:$0xff]
      %v5297 = vld [vmem:[%s4415 + $0x71] sm:$0xff]
      %v5298 = vpack.c.bf16 %v5291, %v5290
      %v5299 = vpack.c.bf16 %v5293, %v5292
      %v5300 = vpack.c.bf16 %v5295, %v5294
      %v5301 = vpack.c.bf16 %v5297, %v5296
      %v5302 = vld [vmem:[%s3947 + $0x2] sm:$0xff]
      %v5303 = vld [vmem:[%s3947 + $0x12] sm:$0xff]
      %v5304 = vld [vmem:[%s3947 + $0x22] sm:$0xff]
      %v5305 = vld [vmem:[%s3947 + $0x32] sm:$0xff]
      %v5306 = vld [vmem:[%s3947 + $0x42] sm:$0xff]
      %v5307 = vld [vmem:[%s3947 + $0x52] sm:$0xff]
      %v5308 = vld [vmem:[%s3947 + $0x62] sm:$0xff]
      %v5309 = vld [vmem:[%s3947 + $0x72] sm:$0xff]
      %v5310 = vpack.c.bf16 %v5303, %v5302
      %v5311 = vpack.c.bf16 %v5305, %v5304
      %v5312 = vpack.c.bf16 %v5307, %v5306
      %v5313 = vpack.c.bf16 %v5309, %v5308
      %5318 = vrot.lane.b32.xlu0 %v5226, 64
      %v5319 = vpop.permute.xlu0 %5318
      %5320 = vrot.lane.b32.xlu0 %v5227, 64
      %v5321 = vpop.permute.xlu0 %5320
      %5322 = vrot.lane.b32.xlu0 %v5228, 64
      %v5323 = vpop.permute.xlu0 %5322
      %5324 = vrot.lane.b32.xlu0 %v5229, 64
      %v5325 = vpop.permute.xlu0 %5324
      %5330 = vrot.lane.b32.xlu0 %v5250, 64
      %v5331 = vpop.permute.xlu0 %5330
      %5332 = vrot.lane.b32.xlu0 %v5251, 64
      %v5333 = vpop.permute.xlu0 %5332
      %5334 = vrot.lane.b32.xlu0 %v5252, 64
      %v5335 = vpop.permute.xlu0 %5334
      %5336 = vrot.lane.b32.xlu0 %v5253, 64
      %v5337 = vpop.permute.xlu0 %5336
      %5342 = vrot.lane.b32.xlu0 %v5274, 64
      %v5343 = vpop.permute.xlu0 %5342
      %5344 = vrot.lane.b32.xlu0 %v5275, 64
      %v5345 = vpop.permute.xlu0 %5344
      %5346 = vrot.lane.b32.xlu0 %v5276, 64
      %v5347 = vpop.permute.xlu0 %5346
      %5348 = vrot.lane.b32.xlu0 %v5277, 64
      %v5349 = vpop.permute.xlu0 %5348
      %5354 = vrot.lane.b32.xlu0 %v5298, 64
      %v5355 = vpop.permute.xlu0 %5354
      %5356 = vrot.lane.b32.xlu0 %v5299, 64
      %v5357 = vpop.permute.xlu0 %5356
      %5358 = vrot.lane.b32.xlu0 %v5300, 64
      %v5359 = vpop.permute.xlu0 %5358
      %5360 = vrot.lane.b32.xlu0 %v5301, 64
      %v5361 = vpop.permute.xlu0 %5360
      %v5364 = vsel %vm300, %v5214, %v5319
      %v5368 = vsel %vm300, %v5215, %v5321
      %v5372 = vsel %vm300, %v5216, %v5323
      %v5376 = vsel %vm300, %v5217, %v5325
      %v5380 = vsel %vm300, %v5238, %v5331
      %v5384 = vsel %vm300, %v5239, %v5333
      %v5388 = vsel %vm300, %v5240, %v5335
      %v5392 = vsel %vm300, %v5241, %v5337
      %v5396 = vsel %vm300, %v5262, %v5343
      %v5400 = vsel %vm300, %v5263, %v5345
      %v5404 = vsel %vm300, %v5264, %v5347
      %v5408 = vsel %vm300, %v5265, %v5349
      %v5412 = vsel %vm300, %v5286, %v5355
      %v5416 = vsel %vm300, %v5287, %v5357
      %v5420 = vsel %vm300, %v5288, %v5359
      %v5424 = vsel %vm300, %v5289, %v5361
      %v5426 = vld [vmem:[%s6] sm:$0xf]
      %v5427 = vld [vmem:[%s6 + $0x4] sm:$0xf]
      %v5428 = vld [vmem:[%s6 + $0x8] sm:$0xf]
      %v5429 = vld [vmem:[%s6 + $0xc] sm:$0xf]
      %v5430 = vld [vmem:[%s6 + $0x10] sm:$0xf]
      %v5431 = vld [vmem:[%s6 + $0x14] sm:$0xf]
      %v5432 = vld [vmem:[%s6 + $0x18] sm:$0xf]
      %v5433 = vld [vmem:[%s6 + $0x1c] sm:$0xf]
      %v5434 = vld [vmem:[%s6 + $0x20] sm:$0xf]
      %v5435 = vld [vmem:[%s6 + $0x24] sm:$0xf]
      %v5436 = vld [vmem:[%s6 + $0x28] sm:$0xf]
      %v5437 = vld [vmem:[%s6 + $0x2c] sm:$0xf]
      %v5438 = vld [vmem:[%s6 + $0x30] sm:$0xf]
      %v5439 = vld [vmem:[%s6 + $0x34] sm:$0xf]
      %v5440 = vld [vmem:[%s6 + $0x38] sm:$0xf]
      %v5441 = vld [vmem:[%s6 + $0x3c] sm:$0xf]
      %v5442 = vld [vmem:[%s6 + $0x40] sm:$0xf]
      %v5443 = vld [vmem:[%s6 + $0x44] sm:$0xf]
      %v5444 = vld [vmem:[%s6 + $0x48] sm:$0xf]
      %v5445 = vld [vmem:[%s6 + $0x4c] sm:$0xf]
      %v5446 = vld [vmem:[%s6 + $0x50] sm:$0xf]
      %v5447 = vld [vmem:[%s6 + $0x54] sm:$0xf]
      %v5448 = vld [vmem:[%s6 + $0x58] sm:$0xf]
      %v5449 = vld [vmem:[%s6 + $0x5c] sm:$0xf]
      %v5450 = vld [vmem:[%s6 + $0x60] sm:$0xf]
      %v5451 = vld [vmem:[%s6 + $0x64] sm:$0xf]
      %v5452 = vld [vmem:[%s6 + $0x68] sm:$0xf]
      %v5453 = vld [vmem:[%s6 + $0x6c] sm:$0xf]
      %v5454 = vld [vmem:[%s6 + $0x70] sm:$0xf]
      %v5455 = vld [vmem:[%s6 + $0x74] sm:$0xf]
      %v5456 = vld [vmem:[%s6 + $0x78] sm:$0xf]
      %v5457 = vld [vmem:[%s6 + $0x7c] sm:$0xf]
      %v5458 = vld [vmem:[%s6 + $0x80] sm:$0xf]
      %v5459 = vld [vmem:[%s6 + $0x84] sm:$0xf]
      %v5460 = vld [vmem:[%s6 + $0x88] sm:$0xf]
      %v5461 = vld [vmem:[%s6 + $0x8c] sm:$0xf]
      %v5462 = vld [vmem:[%s6 + $0x90] sm:$0xf]
      %v5463 = vld [vmem:[%s6 + $0x94] sm:$0xf]
      %v5464 = vld [vmem:[%s6 + $0x98] sm:$0xf]
      %v5465 = vld [vmem:[%s6 + $0x9c] sm:$0xf]
      %v5466 = vld [vmem:[%s6 + $0xa0] sm:$0xf]
      %v5467 = vld [vmem:[%s6 + $0xa4] sm:$0xf]
      %v5468 = vld [vmem:[%s6 + $0xa8] sm:$0xf]
      %v5469 = vld [vmem:[%s6 + $0xac] sm:$0xf]
      %v5470 = vld [vmem:[%s6 + $0xb0] sm:$0xf]
      %v5471 = vld [vmem:[%s6 + $0xb4] sm:$0xf]
      %v5472 = vld [vmem:[%s6 + $0xb8] sm:$0xf]
      %v5473 = vld [vmem:[%s6 + $0xbc] sm:$0xf]
      %v5474 = vld [vmem:[%s6 + $0xc0] sm:$0xf]
      %v5475 = vld [vmem:[%s6 + $0xc4] sm:$0xf]
      %v5476 = vld [vmem:[%s6 + $0xc8] sm:$0xf]
      %v5477 = vld [vmem:[%s6 + $0xcc] sm:$0xf]
      %v5478 = vld [vmem:[%s6 + $0xd0] sm:$0xf]
      %v5479 = vld [vmem:[%s6 + $0xd4] sm:$0xf]
      %v5480 = vld [vmem:[%s6 + $0xd8] sm:$0xf]
      %v5481 = vld [vmem:[%s6 + $0xdc] sm:$0xf]
      %v5482 = vld [vmem:[%s6 + $0xe0] sm:$0xf]
      %v5483 = vld [vmem:[%s6 + $0xe4] sm:$0xf]
      %v5484 = vld [vmem:[%s6 + $0xe8] sm:$0xf]
      %v5485 = vld [vmem:[%s6 + $0xec] sm:$0xf]
      %v5486 = vld [vmem:[%s6 + $0xf0] sm:$0xf]
      %v5487 = vld [vmem:[%s6 + $0xf4] sm:$0xf]
      %v5488 = vld [vmem:[%s6 + $0xf8] sm:$0xf]
      %v5489 = vld [vmem:[%s6 + $0xfc] sm:$0xf]
      %v5490 = vld [vmem:[%s6 + $0x100] sm:$0xf]
      %v5491 = vld [vmem:[%s6 + $0x104] sm:$0xf]
      %v5492 = vld [vmem:[%s6 + $0x108] sm:$0xf]
      %v5493 = vld [vmem:[%s6 + $0x10c] sm:$0xf]
      %v5494 = vld [vmem:[%s6 + $0x110] sm:$0xf]
      %v5495 = vld [vmem:[%s6 + $0x114] sm:$0xf]
      %v5496 = vld [vmem:[%s6 + $0x118] sm:$0xf]
      %v5497 = vld [vmem:[%s6 + $0x11c] sm:$0xf]
      %v5570 = vunpack.c.l.b16 %v5426
      %v5571 = vunpack.c.l.b16 %v5427
      %v5572 = vunpack.c.l.b16 %v5428
      %v5573 = vunpack.c.l.b16 %v5429
      %v5574 = vunpack.c.l.b16 %v5430
      %v5575 = vunpack.c.l.b16 %v5431
      %v5576 = vunpack.c.l.b16 %v5432
      %v5577 = vunpack.c.l.b16 %v5433
      %v5578 = vunpack.c.l.b16 %v5434
      %v5579 = vunpack.c.l.b16 %v5435
      %v5580 = vunpack.c.l.b16 %v5436
      %v5581 = vunpack.c.l.b16 %v5437
      %v5582 = vunpack.c.l.b16 %v5438
      %v5583 = vunpack.c.l.b16 %v5439
      %v5584 = vunpack.c.l.b16 %v5440
      %v5585 = vunpack.c.l.b16 %v5441
      %v5586 = vunpack.c.l.b16 %v5442
      %v5587 = vunpack.c.l.b16 %v5443
      %v5588 = vunpack.c.l.b16 %v5444
      %v5589 = vunpack.c.l.b16 %v5445
      %v5590 = vunpack.c.l.b16 %v5446
      %v5591 = vunpack.c.l.b16 %v5447
      %v5592 = vunpack.c.l.b16 %v5448
      %v5593 = vunpack.c.l.b16 %v5449
      %v5594 = vunpack.c.l.b16 %v5450
      %v5595 = vunpack.c.l.b16 %v5451
      %v5596 = vunpack.c.l.b16 %v5452
      %v5597 = vunpack.c.l.b16 %v5453
      %v5598 = vunpack.c.l.b16 %v5454
      %v5599 = vunpack.c.l.b16 %v5455
      %v5600 = vunpack.c.l.b16 %v5456
      %v5601 = vunpack.c.l.b16 %v5457
      %v5602 = vunpack.c.l.b16 %v5458
      %v5603 = vunpack.c.l.b16 %v5459
      %v5604 = vunpack.c.l.b16 %v5460
      %v5605 = vunpack.c.l.b16 %v5461
      %v5606 = vunpack.c.l.b16 %v5462
      %v5607 = vunpack.c.l.b16 %v5463
      %v5608 = vunpack.c.l.b16 %v5464
      %v5609 = vunpack.c.l.b16 %v5465
      %v5610 = vunpack.c.l.b16 %v5466
      %v5611 = vunpack.c.l.b16 %v5467
      %v5612 = vunpack.c.l.b16 %v5468
      %v5613 = vunpack.c.l.b16 %v5469
      %v5614 = vunpack.c.l.b16 %v5470
      %v5615 = vunpack.c.l.b16 %v5471
      %v5616 = vunpack.c.l.b16 %v5472
      %v5617 = vunpack.c.l.b16 %v5473
      %v5618 = vunpack.c.l.b16 %v5474
      %v5619 = vunpack.c.l.b16 %v5475
      %v5620 = vunpack.c.l.b16 %v5476
      %v5621 = vunpack.c.l.b16 %v5477
      %v5622 = vunpack.c.l.b16 %v5478
      %v5623 = vunpack.c.l.b16 %v5479
      %v5624 = vunpack.c.l.b16 %v5480
      %v5625 = vunpack.c.l.b16 %v5481
      %v5626 = vunpack.c.l.b16 %v5482
      %v5627 = vunpack.c.l.b16 %v5483
      %v5628 = vunpack.c.l.b16 %v5484
      %v5629 = vunpack.c.l.b16 %v5485
      %v5630 = vunpack.c.l.b16 %v5486
      %v5631 = vunpack.c.l.b16 %v5487
      %v5632 = vunpack.c.l.b16 %v5488
      %v5633 = vunpack.c.l.b16 %v5489
      %v5634 = vunpack.c.l.b16 %v5490
      %v5635 = vunpack.c.l.b16 %v5491
      %v5636 = vunpack.c.l.b16 %v5492
      %v5637 = vunpack.c.l.b16 %v5493
      %v5638 = vunpack.c.l.b16 %v5494
      %v5639 = vunpack.c.l.b16 %v5495
      %v5640 = vunpack.c.l.b16 %v5496
      %v5641 = vunpack.c.l.b16 %v5497
      %v5642 = vpack.c.b16 %v5571, %v5570
      %v5643 = vpack.c.b16 %v5573, %v5572
      %v5644 = vpack.c.b16 %v5575, %v5574
      %v5645 = vpack.c.b16 %v5577, %v5576
      %v5646 = vpack.c.b16 %v5579, %v5578
      %v5647 = vpack.c.b16 %v5581, %v5580
      %v5648 = vpack.c.b16 %v5583, %v5582
      %v5649 = vpack.c.b16 %v5585, %v5584
      %v5650 = vpack.c.b16 %v5587, %v5586
      %v5651 = vpack.c.b16 %v5589, %v5588
      %v5652 = vpack.c.b16 %v5591, %v5590
      %v5653 = vpack.c.b16 %v5593, %v5592
      %v5654 = vpack.c.b16 %v5595, %v5594
      %v5655 = vpack.c.b16 %v5597, %v5596
      %v5656 = vpack.c.b16 %v5599, %v5598
      %v5657 = vpack.c.b16 %v5601, %v5600
      %v5658 = vpack.c.b16 %v5603, %v5602
      %v5659 = vpack.c.b16 %v5605, %v5604
      %v5660 = vpack.c.b16 %v5607, %v5606
      %v5661 = vpack.c.b16 %v5609, %v5608
      %v5662 = vpack.c.b16 %v5611, %v5610
      %v5663 = vpack.c.b16 %v5613, %v5612
      %v5664 = vpack.c.b16 %v5615, %v5614
      %v5665 = vpack.c.b16 %v5617, %v5616
      %v5666 = vpack.c.b16 %v5619, %v5618
      %v5667 = vpack.c.b16 %v5621, %v5620
      %v5668 = vpack.c.b16 %v5623, %v5622
      %v5669 = vpack.c.b16 %v5625, %v5624
      %v5670 = vpack.c.b16 %v5627, %v5626
      %v5671 = vpack.c.b16 %v5629, %v5628
      %v5672 = vpack.c.b16 %v5631, %v5630
      %v5673 = vpack.c.b16 %v5633, %v5632
      %v5674 = vpack.c.b16 %v5635, %v5634
      %v5675 = vpack.c.b16 %v5637, %v5636
      %v5676 = vpack.c.b16 %v5639, %v5638
      %v5677 = vpack.c.b16 %v5641, %v5640
      %v5715 = vsel %vm300, %v5310, 0
      %v5718 = vsel %vm300, %v5311, 0
      %v5721 = vsel %vm300, %v5312, 0
      %v5724 = vsel %vm300, %v5313, 0
      %5726 = vmatprep.subr.bf16.mxu0 0
      %5727 = vmatpush1.bf16.msra.mxu0 %v5642
      %5728 = vmatprep.subr.bf16.mxu0 0
      %5729 = vmatpush1.bf16.msra.mxu0 %v5643
      %5730 = vmatprep.subr.bf16.mxu0 0
      %5731 = vmatpush1.bf16.msra.mxu0 %v5644
      %5732 = vmatprep.subr.bf16.mxu0 0
      %5733 = vmatpush1.bf16.msra.mxu0 %v5645
      %5734 = vmatprep.subr.bf16.mxu0 0
      %5735 = vmatpush1.bf16.msra.mxu0 %v5646
      %5736 = vmatprep.subr.bf16.mxu0 0
      %5737 = vmatpush1.bf16.msra.mxu0 %v5647
      %5738 = vmatprep.subr.bf16.mxu0 0
      %5739 = vmatpush1.bf16.msra.mxu0 %v5648
      %5740 = vmatprep.subr.bf16.mxu0 0
      %5741 = vmatpush1.bf16.msra.mxu0 %v5649
      %5742 = vmatprep.subr.bf16.mxu0 0
      %5743 = vmatpush1.bf16.msra.mxu0 %v5650
      %5744 = vmatprep.subr.bf16.mxu0 0
      %5745 = vmatpush1.bf16.msra.mxu0 %v5651
      %5746 = vmatprep.subr.bf16.mxu0 0
      %5747 = vmatpush1.bf16.msra.mxu0 %v5652
      %5748 = vmatprep.subr.bf16.mxu0 0
      %5749 = vmatpush1.bf16.msra.mxu0 %v5653
      %5750 = vmatprep.subr.bf16.mxu0 0
      %5751 = vmatpush1.bf16.msra.mxu0 %v5654
      %5752 = vmatprep.subr.bf16.mxu0 0
      %5753 = vmatpush1.bf16.msra.mxu0 %v5655
      %5754 = vmatprep.subr.bf16.mxu0 0
      %5755 = vmatpush1.bf16.msra.mxu0 %v5656
      %5756 = vmatprep.subr.bf16.mxu0 0
      %5757 = vmatpush1.bf16.msra.mxu0 %v5657
      %5758 = vmatprep.mubr.bf16.mxu0 %v5380
      %5759 = vmatmul.mubr.bf16.gmra.mrb[0].mxu0 %v5364
      %v5760 = vpop.f32.mrb[0].mxu0
      %v5761 = vadd.f32 0.0, %v5760
      %v5762 = vpop.f32.mrb[0].mxu0
      %v5763 = vpop.f32.mrb[0].mxu0
      %v5764 = vadd.f32 0.0, %v5763
      %v5765 = vpop.f32.mrb[0].mxu0
      %5766 = vmatprep.mubr.bf16.mxu0 %v5384
      %5767 = vmatmul.mubr.bf16.gmra.mrb[0].mxu0 %v5368
      %v5768 = vpop.f32.mrb[0].mxu0
      %v5769 = vadd.f32 0.0, %v5768
      %v5770 = vpop.f32.mrb[0].mxu0
      %v5771 = vpop.f32.mrb[0].mxu0
      %v5772 = vadd.f32 0.0, %v5771
      %v5773 = vpop.f32.mrb[0].mxu0
      %5774 = vmatprep.mubr.bf16.mxu0 %v5388
      %5775 = vmatmul.mubr.bf16.gmra.mrb[0].mxu0 %v5372
      %v5776 = vpop.f32.mrb[0].mxu0
      %v5777 = vadd.f32 0.0, %v5776
      %v5778 = vpop.f32.mrb[0].mxu0
      %v5779 = vpop.f32.mrb[0].mxu0
      %v5780 = vadd.f32 0.0, %v5779
      %v5781 = vpop.f32.mrb[0].mxu0
      %5782 = vmatprep.mubr.bf16.mxu0 %v5392
      %5783 = vmatmul.mubr.bf16.gmra.mrb[0].mxu0 %v5376
      %v5784 = vpop.f32.mrb[0].mxu0
      %v5785 = vadd.f32 0.0, %v5784
      %v5786 = vpop.f32.mrb[0].mxu0
      %v5787 = vpop.f32.mrb[0].mxu0
      %v5788 = vadd.f32 0.0, %v5787
      %v5789 = vpop.f32.mrb[0].mxu0
      %5790 = vdwg.mxu0
      %5791 = vmatprep.subr.bf16.mxu0 0
      %5792 = vmatpush1.bf16.msra.mxu0 %v5658
      %5793 = vmatprep.subr.bf16.mxu0 0
      %5794 = vmatpush1.bf16.msra.mxu0 %v5659
      %5795 = vmatprep.subr.bf16.mxu0 0
      %5796 = vmatpush1.bf16.msra.mxu0 %v5660
      %5797 = vmatprep.subr.bf16.mxu0 0
      %5798 = vmatpush1.bf16.msra.mxu0 %v5661
      %5799 = vmatprep.subr.bf16.mxu0 0
      %5800 = vmatpush1.bf16.msra.mxu0 %v5662
      %5801 = vmatprep.subr.bf16.mxu0 0
      %5802 = vmatpush1.bf16.msra.mxu0 %v5663
      %5803 = vmatprep.subr.bf16.mxu0 0
      %5804 = vmatpush1.bf16.msra.mxu0 %v5664
      %5805 = vmatprep.subr.bf16.mxu0 0
      %5806 = vmatpush1.bf16.msra.mxu0 %v5665
      %5807 = vmatprep.subr.bf16.mxu0 0
      %5808 = vmatpush1.bf16.msra.mxu0 %v5666
      %5809 = vmatprep.subr.bf16.mxu0 0
      %5810 = vmatpush1.bf16.msra.mxu0 %v5667
      %5811 = vmatprep.subr.bf16.mxu0 0
      %5812 = vmatpush1.bf16.msra.mxu0 %v5668
      %5813 = vmatprep.subr.bf16.mxu0 0
      %5814 = vmatpush1.bf16.msra.mxu0 %v5669
      %5815 = vmatprep.subr.bf16.mxu0 0
      %5816 = vmatpush1.bf16.msra.mxu0 %v5670
      %5817 = vmatprep.subr.bf16.mxu0 0
      %5818 = vmatpush1.bf16.msra.mxu0 %v5671
      %5819 = vmatprep.subr.bf16.mxu0 0
      %5820 = vmatpush1.bf16.msra.mxu0 %v5672
      %5821 = vmatprep.subr.bf16.mxu0 0
      %5822 = vmatpush1.bf16.msra.mxu0 %v5673
      %5823 = vmatprep.mubr.bf16.mxu0 %v5412
      %5824 = vmatmul.mubr.bf16.gmra.mrb[0].mxu0 %v5396
      %v5825 = vpop.f32.mrb[0].mxu0
      %v5826 = vadd.f32 %v5761, %v5825
      %v5827 = vpop.f32.mrb[0].mxu0
      %v5828 = vpop.f32.mrb[0].mxu0
      %v5829 = vadd.f32 %v5764, %v5828
      %v5830 = vpop.f32.mrb[0].mxu0
      %5831 = vmatprep.mubr.bf16.mxu0 %v5416
      %5832 = vmatmul.mubr.bf16.gmra.mrb[0].mxu0 %v5400
      %v5833 = vpop.f32.mrb[0].mxu0
      %v5834 = vadd.f32 %v5769, %v5833
      %v5835 = vpop.f32.mrb[0].mxu0
      %v5836 = vpop.f32.mrb[0].mxu0
      %v5837 = vadd.f32 %v5772, %v5836
      %v5838 = vpop.f32.mrb[0].mxu0
      %5839 = vmatprep.mubr.bf16.mxu0 %v5420
      %5840 = vmatmul.mubr.bf16.gmra.mrb[0].mxu0 %v5404
      %v5841 = vpop.f32.mrb[0].mxu0
      %v5842 = vadd.f32 %v5777, %v5841
      %v5843 = vpop.f32.mrb[0].mxu0
      %v5844 = vpop.f32.mrb[0].mxu0
      %v5845 = vadd.f32 %v5780, %v5844
      %v5846 = vpop.f32.mrb[0].mxu0
      %5847 = vmatprep.mubr.bf16.mxu0 %v5424
      %5848 = vmatmul.mubr.bf16.gmra.mrb[0].mxu0 %v5408
      %v5849 = vpop.f32.mrb[0].mxu0
      %v5850 = vadd.f32 %v5785, %v5849
      %v5851 = vpop.f32.mrb[0].mxu0
      %v5852 = vpop.f32.mrb[0].mxu0
      %v5853 = vadd.f32 %v5788, %v5852
      %v5854 = vpop.f32.mrb[0].mxu0
      %5855 = vdwg.mxu0
      %5856 = vmatprep.subr.bf16.mxu0 0
      %5857 = vmatpush1.bf16.msra.mxu0 %v5674
      %5858 = vmatprep.subr.bf16.mxu0 0
      %5859 = vmatpush1.bf16.msra.mxu0 %v5675
      %5860 = vmatprep.subr.bf16.mxu0 0
      %5861 = vmatpush1.bf16.msra.mxu0 %v5676
      %5862 = vmatprep.subr.bf16.mxu0 0
      %5863 = vmatpush1.bf16.msra.mxu0 %v5677
      %5864 = vmatprep.subr.bf16.mxu0 0
      %5865 = vmatpush1.bf16.msra.mxu0 0
      %5866 = vmatprep.subr.bf16.mxu0 0
      %5867 = vmatpush1.bf16.msra.mxu0 0
      %5868 = vmatprep.subr.bf16.mxu0 0
      %5869 = vmatpush1.bf16.msra.mxu0 0
      %5870 = vmatprep.subr.bf16.mxu0 0
      %5871 = vmatpush1.bf16.msra.mxu0 0
      %5872 = vmatprep.subr.bf16.mxu0 0
      %5873 = vmatpush1.bf16.msra.mxu0 0
      %5874 = vmatprep.subr.bf16.mxu0 0
      %5875 = vmatpush1.bf16.msra.mxu0 0
      %5876 = vmatprep.subr.bf16.mxu0 0
      %5877 = vmatpush1.bf16.msra.mxu0 0
      %5878 = vmatprep.subr.bf16.mxu0 0
      %5879 = vmatpush1.bf16.msra.mxu0 0
      %5880 = vmatprep.subr.bf16.mxu0 0
      %5881 = vmatpush1.bf16.msra.mxu0 0
      %5882 = vmatprep.subr.bf16.mxu0 0
      %5883 = vmatpush1.bf16.msra.mxu0 0
      %5884 = vmatprep.subr.bf16.mxu0 0
      %5885 = vmatpush1.bf16.msra.mxu0 0
      %5886 = vmatprep.subr.bf16.mxu0 0
      %5887 = vmatpush1.bf16.msra.mxu0 0
      %5888 = vmatprep.mubr.bf16.mxu0 0
      %5889 = vmatmul.mubr.bf16.gmra.mrb[0].mxu0 %v5715
      %v5890 = vpop.f32.mrb[0].mxu0
      %v5891 = vadd.f32 %v5826, %v5890
      %v5892 = vpop.f32.mrb[0].mxu0
      %v5893 = vpop.f32.mrb[0].mxu0
      %v5894 = vadd.f32 %v5829, %v5893
      %v5895 = vpop.f32.mrb[0].mxu0
      %5896 = vmatprep.mubr.bf16.mxu0 0
      %5897 = vmatmul.mubr.bf16.gmra.mrb[0].mxu0 %v5718
      %v5898 = vpop.f32.mrb[0].mxu0
      %v5899 = vadd.f32 %v5834, %v5898
      %v5900 = vpop.f32.mrb[0].mxu0
      %v5901 = vpop.f32.mrb[0].mxu0
      %v5902 = vadd.f32 %v5837, %v5901
      %v5903 = vpop.f32.mrb[0].mxu0
      %5904 = vmatprep.mubr.bf16.mxu0 0
      %5905 = vmatmul.mubr.bf16.gmra.mrb[0].mxu0 %v5721
      %v5906 = vpop.f32.mrb[0].mxu0
      %v5907 = vadd.f32 %v5842, %v5906
      %v5908 = vpop.f32.mrb[0].mxu0
      %v5909 = vpop.f32.mrb[0].mxu0
      %v5910 = vadd.f32 %v5845, %v5909
      %v5911 = vpop.f32.mrb[0].mxu0
      %5912 = vmatprep.mubr.bf16.mxu0 0
      %5913 = vmatmul.mubr.bf16.gmra.mrb[0].mxu0 %v5724
      %v5914 = vpop.f32.mrb[0].mxu0
      %v5915 = vadd.f32 %v5850, %v5914
      %v5916 = vpop.f32.mrb[0].mxu0
      %v5917 = vpop.f32.mrb[0].mxu0
      %v5918 = vadd.f32 %v5853, %v5917
      %v5919 = vpop.f32.mrb[0].mxu0
      %5920 = vdwg.mxu0
      %v5921 = vmul.f32 %v5891, %v5891
      %v5922 = vmul.f32 %v5894, %v5894
      %v5923 = vmul.f32 %v5899, %v5899
      %v5924 = vmul.f32 %v5902, %v5902
      %v5925 = vmul.f32 %v5907, %v5907
      %v5926 = vmul.f32 %v5910, %v5910
      %v5927 = vmul.f32 %v5915, %v5915
      %v5928 = vmul.f32 %v5918, %v5918
      %v5929 = vsel %vm5149, %v5921, 0.0
      %5930 = vadd.xlane.f32.xlu0 %v5929
      %v5931 = vpop.xlane.xlu0 %5930
      %v5932 = vsel %vm5149, %v5922, 0.0
      %5933 = vadd.xlane.f32.xlu0 %v5932
      %v5934 = vpop.xlane.xlu0 %5933
      %v5935 = vsel %vm5149, %v5923, 0.0
      %5936 = vadd.xlane.f32.xlu0 %v5935
      %v5937 = vpop.xlane.xlu0 %5936
      %v5938 = vsel %vm5149, %v5924, 0.0
      %5939 = vadd.xlane.f32.xlu0 %v5938
      %v5940 = vpop.xlane.xlu0 %5939
      %v5941 = vsel %vm5149, %v5925, 0.0
      %5942 = vadd.xlane.f32.xlu0 %v5941
      %v5943 = vpop.xlane.xlu0 %5942
      %v5944 = vsel %vm5149, %v5926, 0.0
      %5945 = vadd.xlane.f32.xlu0 %v5944
      %v5946 = vpop.xlane.xlu0 %5945
      %v5947 = vsel %vm5149, %v5927, 0.0
      %5948 = vadd.xlane.f32.xlu0 %v5947
      %v5949 = vpop.xlane.xlu0 %5948
      %v5950 = vsel %vm5149, %v5928, 0.0
      %5951 = vadd.xlane.f32.xlu0 %v5950
      %v5952 = vpop.xlane.xlu0 %5951
      %v5953 = vmax.f32 %v5931, 1e-24
      %v5954 = vmax.f32 %v5934, 1e-24
      %v5955 = vmax.f32 %v5937, 1e-24
      %v5956 = vmax.f32 %v5940, 1e-24
      %v5957 = vmax.f32 %v5943, 1e-24
      %v5958 = vmax.f32 %v5946, 1e-24
      %v5959 = vmax.f32 %v5949, 1e-24
      %v5960 = vmax.f32 %v5952, 1e-24
      %v5961 = vrsqrt.pop %v5953
      %v5962 = vrsqrt.pop %v5954
      %v5963 = vrsqrt.pop %v5955
      %v5964 = vrsqrt.pop %v5956
      %v5965 = vrsqrt.pop %v5957
      %v5966 = vrsqrt.pop %v5958
      %v5967 = vrsqrt.pop %v5959
      %v5968 = vrsqrt.pop %v5960
      %v5969 = vmul.f32 %v5891, %v5961
      %v5970 = vmul.f32 %v5894, %v5962
      %v5971 = vmul.f32 %v5899, %v5963
      %v5972 = vmul.f32 %v5902, %v5964
      %v5973 = vmul.f32 %v5907, %v5965
      %v5974 = vmul.f32 %v5910, %v5966
      %v5975 = vmul.f32 %v5915, %v5967
      %v5976 = vmul.f32 %v5918, %v5968
      %s5977 = scalar_lea.vmem %s278, 64
      %5978 = vst.msk [vmem:[%s5977] sm:$0xff] %vm5149, %v5969
      %5979 = vst.msk [vmem:[%s5977 + $0x8] sm:$0xff] %vm5149, %v5970
      %5980 = vst.msk [vmem:[%s5977 + $0x10] sm:$0xff] %vm5149, %v5971
      %5981 = vst.msk [vmem:[%s5977 + $0x18] sm:$0xff] %vm5149, %v5972
      %5982 = vst.msk [vmem:[%s5977 + $0x20] sm:$0xff] %vm5149, %v5973
      %5983 = vst.msk [vmem:[%s5977 + $0x28] sm:$0xff] %vm5149, %v5974
      %5984 = vst.msk [vmem:[%s5977 + $0x30] sm:$0xff] %vm5149, %v5975
      %5985 = vst.msk [vmem:[%s5977 + $0x38] sm:$0xff] %vm5149, %v5976
      %v5986 = vld [vmem:[%s3479] sm:$0xff]
      %v5987 = vld [vmem:[%s3479 + $0x10] sm:$0xff]
      %v5988 = vld [vmem:[%s3479 + $0x20] sm:$0xff]
      %v5989 = vld [vmem:[%s3479 + $0x30] sm:$0xff]
      %v5990 = vld [vmem:[%s3479 + $0x40] sm:$0xff]
      %v5991 = vld [vmem:[%s3479 + $0x50] sm:$0xff]
      %v5992 = vld [vmem:[%s3479 + $0x60] sm:$0xff]
      %v5993 = vld [vmem:[%s3479 + $0x70] sm:$0xff]
      %v5994 = vpack.c.bf16 %v5987, %v5986
      %v5995 = vpack.c.bf16 %v5989, %v5988
      %v5996 = vpack.c.bf16 %v5991, %v5990
      %v5997 = vpack.c.bf16 %v5993, %v5992
      %v5998 = vld [vmem:[%s3011 + $0x1] sm:$0xff]
      %v5999 = vld [vmem:[%s3011 + $0x11] sm:$0xff]
      %v6000 = vld [vmem:[%s3011 + $0x21] sm:$0xff]
      %v6001 = vld [vmem:[%s3011 + $0x31] sm:$0xff]
      %v6002 = vld [vmem:[%s3011 + $0x41] sm:$0xff]
      %v6003 = vld [vmem:[%s3011 + $0x51] sm:$0xff]
      %v6004 = vld [vmem:[%s3011 + $0x61] sm:$0xff]
      %v6005 = vld [vmem:[%s3011 + $0x71] sm:$0xff]
      %v6006 = vpack.c.bf16 %v5999, %v5998
      %v6007 = vpack.c.bf16 %v6001, %v6000
      %v6008 = vpack.c.bf16 %v6003, %v6002
      %v6009 = vpack.c.bf16 %v6005, %v6004
      %v6010 = vld [vmem:[%s3479 + $0x1] sm:$0xff]
      %v6011 = vld [vmem:[%s3479 + $0x11] sm:$0xff]
      %v6012 = vld [vmem:[%s3479 + $0x21] sm:$0xff]
      %v6013 = vld [vmem:[%s3479 + $0x31] sm:$0xff]
      %v6014 = vld [vmem:[%s3479 + $0x41] sm:$0xff]
      %v6015 = vld [vmem:[%s3479 + $0x51] sm:$0xff]
      %v6016 = vld [vmem:[%s3479 + $0x61] sm:$0xff]
      %v6017 = vld [vmem:[%s3479 + $0x71] sm:$0xff]
      %v6018 = vpack.c.bf16 %v6011, %v6010
      %v6019 = vpack.c.bf16 %v6013, %v6012
      %v6020 = vpack.c.bf16 %v6015, %v6014
      %v6021 = vpack.c.bf16 %v6017, %v6016
      %v6022 = vld [vmem:[%s4415] sm:$0xff]
      %v6023 = vld [vmem:[%s4415 + $0x10] sm:$0xff]
      %v6024 = vld [vmem:[%s4415 + $0x20] sm:$0xff]
      %v6025 = vld [vmem:[%s4415 + $0x30] sm:$0xff]
      %v6026 = vld [vmem:[%s4415 + $0x40] sm:$0xff]
      %v6027 = vld [vmem:[%s4415 + $0x50] sm:$0xff]
      %v6028 = vld [vmem:[%s4415 + $0x60] sm:$0xff]
      %v6029 = vld [vmem:[%s4415 + $0x70] sm:$0xff]
      %v6030 = vpack.c.bf16 %v6023, %v6022
      %v6031 = vpack.c.bf16 %v6025, %v6024
      %v6032 = vpack.c.bf16 %v6027, %v6026
      %v6033 = vpack.c.bf16 %v6029, %v6028
      %v6034 = vld [vmem:[%s3947 + $0x1] sm:$0xff]
      %v6035 = vld [vmem:[%s3947 + $0x11] sm:$0xff]
      %v6036 = vld [vmem:[%s3947 + $0x21] sm:$0xff]
      %v6037 = vld [vmem:[%s3947 + $0x31] sm:$0xff]
      %v6038 = vld [vmem:[%s3947 + $0x41] sm:$0xff]
      %v6039 = vld [vmem:[%s3947 + $0x51] sm:$0xff]
      %v6040 = vld [vmem:[%s3947 + $0x61] sm:$0xff]
      %v6041 = vld [vmem:[%s3947 + $0x71] sm:$0xff]
      %v6042 = vpack.c.bf16 %v6035, %v6034
      %v6043 = vpack.c.bf16 %v6037, %v6036
      %v6044 = vpack.c.bf16 %v6039, %v6038
      %v6045 = vpack.c.bf16 %v6041, %v6040
      %v6046 = vld [vmem:[%s4415 + $0x1] sm:$0xff]
      %v6047 = vld [vmem:[%s4415 + $0x11] sm:$0xff]
      %v6048 = vld [vmem:[%s4415 + $0x21] sm:$0xff]
      %v6049 = vld [vmem:[%s4415 + $0x31] sm:$0xff]
      %v6050 = vld [vmem:[%s4415 + $0x41] sm:$0xff]
      %v6051 = vld [vmem:[%s4415 + $0x51] sm:$0xff]
      %v6052 = vld [vmem:[%s4415 + $0x61] sm:$0xff]
      %v6053 = vld [vmem:[%s4415 + $0x71] sm:$0xff]
      %v6054 = vpack.c.bf16 %v6047, %v6046
      %v6055 = vpack.c.bf16 %v6049, %v6048
      %v6056 = vpack.c.bf16 %v6051, %v6050
      %v6057 = vpack.c.bf16 %v6053, %v6052
      %s6058 = scalar_lea.vmem [#allocation3], 192
      %v6059 = vld [vmem:[%s6058] sm:$0xff]
      %v6060 = vld [vmem:[%s6058 + $0x10] sm:$0xff]
      %v6061 = vld [vmem:[%s6058 + $0x20] sm:$0xff]
      %v6062 = vld [vmem:[%s6058 + $0x30] sm:$0xff]
      %v6063 = vld [vmem:[%s6058 + $0x40] sm:$0xff]
      %v6064 = vld [vmem:[%s6058 + $0x50] sm:$0xff]
      %v6065 = vld [vmem:[%s6058 + $0x60] sm:$0xff]
      %v6066 = vld [vmem:[%s6058 + $0x70] sm:$0xff]
      %v6067 = vpack.c.bf16 %v6060, %v6059
      %v6068 = vpack.c.bf16 %v6062, %v6061
      %v6069 = vpack.c.bf16 %v6064, %v6063
      %v6070 = vpack.c.bf16 %v6066, %v6065
      %s6071 = scalar_lea.vmem [#allocation3], 32
      %v6072 = vld [vmem:[%s6071 + $0x1] sm:$0xff]
      %v6073 = vld [vmem:[%s6071 + $0x11] sm:$0xff]
      %v6074 = vld [vmem:[%s6071 + $0x21] sm:$0xff]
      %v6075 = vld [vmem:[%s6071 + $0x31] sm:$0xff]
      %v6076 = vld [vmem:[%s6071 + $0x41] sm:$0xff]
      %v6077 = vld [vmem:[%s6071 + $0x51] sm:$0xff]
      %v6078 = vld [vmem:[%s6071 + $0x61] sm:$0xff]
      %v6079 = vld [vmem:[%s6071 + $0x71] sm:$0xff]
      %v6080 = vpack.c.bf16 %v6073, %v6072
      %v6081 = vpack.c.bf16 %v6075, %v6074
      %v6082 = vpack.c.bf16 %v6077, %v6076
      %v6083 = vpack.c.bf16 %v6079, %v6078
      %v6084 = vld [vmem:[%s6058 + $0x1] sm:$0xff]
      %v6085 = vld [vmem:[%s6058 + $0x11] sm:$0xff]
      %v6086 = vld [vmem:[%s6058 + $0x21] sm:$0xff]
      %v6087 = vld [vmem:[%s6058 + $0x31] sm:$0xff]
      %v6088 = vld [vmem:[%s6058 + $0x41] sm:$0xff]
      %v6089 = vld [vmem:[%s6058 + $0x51] sm:$0xff]
      %v6090 = vld [vmem:[%s6058 + $0x61] sm:$0xff]
      %v6091 = vld [vmem:[%s6058 + $0x71] sm:$0xff]
      %v6092 = vpack.c.bf16 %v6085, %v6084
      %v6093 = vpack.c.bf16 %v6087, %v6086
      %v6094 = vpack.c.bf16 %v6089, %v6088
      %v6095 = vpack.c.bf16 %v6091, %v6090
      %6100 = vrot.lane.b32.xlu0 %v6006, 64
      %v6101 = vpop.permute.xlu0 %6100
      %6102 = vrot.lane.b32.xlu0 %v6007, 64
      %v6103 = vpop.permute.xlu0 %6102
      %6104 = vrot.lane.b32.xlu0 %v6008, 64
      %v6105 = vpop.permute.xlu0 %6104
      %6106 = vrot.lane.b32.xlu0 %v6009, 64
      %v6107 = vpop.permute.xlu0 %6106
      %6112 = vrot.lane.b32.xlu0 %v6030, 64
      %v6113 = vpop.permute.xlu0 %6112
      %6114 = vrot.lane.b32.xlu0 %v6031, 64
      %v6115 = vpop.permute.xlu0 %6114
      %6116 = vrot.lane.b32.xlu0 %v6032, 64
      %v6117 = vpop.permute.xlu0 %6116
      %6118 = vrot.lane.b32.xlu0 %v6033, 64
      %v6119 = vpop.permute.xlu0 %6118
      %6124 = vrot.lane.b32.xlu0 %v6054, 64
      %v6125 = vpop.permute.xlu0 %6124
      %6126 = vrot.lane.b32.xlu0 %v6055, 64
      %v6127 = vpop.permute.xlu0 %6126
      %6128 = vrot.lane.b32.xlu0 %v6056, 64
      %v6129 = vpop.permute.xlu0 %6128
      %6130 = vrot.lane.b32.xlu0 %v6057, 64
      %v6131 = vpop.permute.xlu0 %6130
      %6136 = vrot.lane.b32.xlu0 %v6080, 64
      %v6137 = vpop.permute.xlu0 %6136
      %6138 = vrot.lane.b32.xlu0 %v6081, 64
      %v6139 = vpop.permute.xlu0 %6138
      %6140 = vrot.lane.b32.xlu0 %v6082, 64
      %v6141 = vpop.permute.xlu0 %6140
      %6142 = vrot.lane.b32.xlu0 %v6083, 64
      %v6143 = vpop.permute.xlu0 %6142
      %v6146 = vsel %vm300, %v5994, %v6101
      %v6150 = vsel %vm300, %v5995, %v6103
      %v6154 = vsel %vm300, %v5996, %v6105
      %v6158 = vsel %vm300, %v5997, %v6107
      %v6162 = vsel %vm300, %v6018, %v6113
      %v6166 = vsel %vm300, %v6019, %v6115
      %v6170 = vsel %vm300, %v6020, %v6117
      %v6174 = vsel %vm300, %v6021, %v6119
      %v6178 = vsel %vm300, %v6042, %v6125
      %v6182 = vsel %vm300, %v6043, %v6127
      %v6186 = vsel %vm300, %v6044, %v6129
      %v6190 = vsel %vm300, %v6045, %v6131
      %v6194 = vsel %vm300, %v6067, %v6137
      %v6198 = vsel %vm300, %v6068, %v6139
      %v6202 = vsel %vm300, %v6069, %v6141
      %v6206 = vsel %vm300, %v6070, %v6143
      %v6208 = vld [vmem:[%s6] sm:$0xf]
      %v6209 = vld [vmem:[%s6 + $0x4] sm:$0xf]
      %v6210 = vld [vmem:[%s6 + $0x8] sm:$0xf]
      %v6211 = vld [vmem:[%s6 + $0xc] sm:$0xf]
      %v6212 = vld [vmem:[%s6 + $0x10] sm:$0xf]
      %v6213 = vld [vmem:[%s6 + $0x14] sm:$0xf]
      %v6214 = vld [vmem:[%s6 + $0x18] sm:$0xf]
      %v6215 = vld [vmem:[%s6 + $0x1c] sm:$0xf]
      %v6216 = vld [vmem:[%s6 + $0x20] sm:$0xf]
      %v6217 = vld [vmem:[%s6 + $0x24] sm:$0xf]
      %v6218 = vld [vmem:[%s6 + $0x28] sm:$0xf]
      %v6219 = vld [vmem:[%s6 + $0x2c] sm:$0xf]
      %v6220 = vld [vmem:[%s6 + $0x30] sm:$0xf]
      %v6221 = vld [vmem:[%s6 + $0x34] sm:$0xf]
      %v6222 = vld [vmem:[%s6 + $0x38] sm:$0xf]
      %v6223 = vld [vmem:[%s6 + $0x3c] sm:$0xf]
      %v6224 = vld [vmem:[%s6 + $0x40] sm:$0xf]
      %v6225 = vld [vmem:[%s6 + $0x44] sm:$0xf]
      %v6226 = vld [vmem:[%s6 + $0x48] sm:$0xf]
      %v6227 = vld [vmem:[%s6 + $0x4c] sm:$0xf]
      %v6228 = vld [vmem:[%s6 + $0x50] sm:$0xf]
      %v6229 = vld [vmem:[%s6 + $0x54] sm:$0xf]
      %v6230 = vld [vmem:[%s6 + $0x58] sm:$0xf]
      %v6231 = vld [vmem:[%s6 + $0x5c] sm:$0xf]
      %v6232 = vld [vmem:[%s6 + $0x60] sm:$0xf]
      %v6233 = vld [vmem:[%s6 + $0x64] sm:$0xf]
      %v6234 = vld [vmem:[%s6 + $0x68] sm:$0xf]
      %v6235 = vld [vmem:[%s6 + $0x6c] sm:$0xf]
      %v6236 = vld [vmem:[%s6 + $0x70] sm:$0xf]
      %v6237 = vld [vmem:[%s6 + $0x74] sm:$0xf]
      %v6238 = vld [vmem:[%s6 + $0x78] sm:$0xf]
      %v6239 = vld [vmem:[%s6 + $0x7c] sm:$0xf]
      %v6240 = vld [vmem:[%s6 + $0x80] sm:$0xf]
      %v6241 = vld [vmem:[%s6 + $0x84] sm:$0xf]
      %v6242 = vld [vmem:[%s6 + $0x88] sm:$0xf]
      %v6243 = vld [vmem:[%s6 + $0x8c] sm:$0xf]
      %v6244 = vld [vmem:[%s6 + $0x90] sm:$0xf]
      %v6245 = vld [vmem:[%s6 + $0x94] sm:$0xf]
      %v6246 = vld [vmem:[%s6 + $0x98] sm:$0xf]
      %v6247 = vld [vmem:[%s6 + $0x9c] sm:$0xf]
      %v6248 = vld [vmem:[%s6 + $0xa0] sm:$0xf]
      %v6249 = vld [vmem:[%s6 + $0xa4] sm:$0xf]
      %v6250 = vld [vmem:[%s6 + $0xa8] sm:$0xf]
      %v6251 = vld [vmem:[%s6 + $0xac] sm:$0xf]
      %v6252 = vld [vmem:[%s6 + $0xb0] sm:$0xf]
      %v6253 = vld [vmem:[%s6 + $0xb4] sm:$0xf]
      %v6254 = vld [vmem:[%s6 + $0xb8] sm:$0xf]
      %v6255 = vld [vmem:[%s6 + $0xbc] sm:$0xf]
      %v6256 = vld [vmem:[%s6 + $0xc0] sm:$0xf]
      %v6257 = vld [vmem:[%s6 + $0xc4] sm:$0xf]
      %v6258 = vld [vmem:[%s6 + $0xc8] sm:$0xf]
      %v6259 = vld [vmem:[%s6 + $0xcc] sm:$0xf]
      %v6260 = vld [vmem:[%s6 + $0xd0] sm:$0xf]
      %v6261 = vld [vmem:[%s6 + $0xd4] sm:$0xf]
      %v6262 = vld [vmem:[%s6 + $0xd8] sm:$0xf]
      %v6263 = vld [vmem:[%s6 + $0xdc] sm:$0xf]
      %v6264 = vld [vmem:[%s6 + $0xe0] sm:$0xf]
      %v6265 = vld [vmem:[%s6 + $0xe4] sm:$0xf]
      %v6266 = vld [vmem:[%s6 + $0xe8] sm:$0xf]
      %v6267 = vld [vmem:[%s6 + $0xec] sm:$0xf]
      %v6268 = vld [vmem:[%s6 + $0xf0] sm:$0xf]
      %v6269 = vld [vmem:[%s6 + $0xf4] sm:$0xf]
      %v6270 = vld [vmem:[%s6 + $0xf8] sm:$0xf]
      %v6271 = vld [vmem:[%s6 + $0xfc] sm:$0xf]
      %v6272 = vld [vmem:[%s6 + $0x100] sm:$0xf]
      %v6273 = vld [vmem:[%s6 + $0x104] sm:$0xf]
      %v6274 = vld [vmem:[%s6 + $0x108] sm:$0xf]
      %v6275 = vld [vmem:[%s6 + $0x10c] sm:$0xf]
      %v6276 = vld [vmem:[%s6 + $0x110] sm:$0xf]
      %v6277 = vld [vmem:[%s6 + $0x114] sm:$0xf]
      %v6278 = vld [vmem:[%s6 + $0x118] sm:$0xf]
      %v6279 = vld [vmem:[%s6 + $0x11c] sm:$0xf]
      %v6352 = vunpack.c.l.b16 %v6208
      %v6353 = vunpack.c.l.b16 %v6209
      %v6354 = vunpack.c.l.b16 %v6210
      %v6355 = vunpack.c.l.b16 %v6211
      %v6356 = vunpack.c.l.b16 %v6212
      %v6357 = vunpack.c.l.b16 %v6213
      %v6358 = vunpack.c.l.b16 %v6214
      %v6359 = vunpack.c.l.b16 %v6215
      %v6360 = vunpack.c.l.b16 %v6216
      %v6361 = vunpack.c.l.b16 %v6217
      %v6362 = vunpack.c.l.b16 %v6218
      %v6363 = vunpack.c.l.b16 %v6219
      %v6364 = vunpack.c.l.b16 %v6220
      %v6365 = vunpack.c.l.b16 %v6221
      %v6366 = vunpack.c.l.b16 %v6222
      %v6367 = vunpack.c.l.b16 %v6223
      %v6368 = vunpack.c.l.b16 %v6224
      %v6369 = vunpack.c.l.b16 %v6225
      %v6370 = vunpack.c.l.b16 %v6226
      %v6371 = vunpack.c.l.b16 %v6227
      %v6372 = vunpack.c.l.b16 %v6228
      %v6373 = vunpack.c.l.b16 %v6229
      %v6374 = vunpack.c.l.b16 %v6230
      %v6375 = vunpack.c.l.b16 %v6231
      %v6376 = vunpack.c.l.b16 %v6232
      %v6377 = vunpack.c.l.b16 %v6233
      %v6378 = vunpack.c.l.b16 %v6234
      %v6379 = vunpack.c.l.b16 %v6235
      %v6380 = vunpack.c.l.b16 %v6236
      %v6381 = vunpack.c.l.b16 %v6237
      %v6382 = vunpack.c.l.b16 %v6238
      %v6383 = vunpack.c.l.b16 %v6239
      %v6384 = vunpack.c.l.b16 %v6240
      %v6385 = vunpack.c.l.b16 %v6241
      %v6386 = vunpack.c.l.b16 %v6242
      %v6387 = vunpack.c.l.b16 %v6243
      %v6388 = vunpack.c.l.b16 %v6244
      %v6389 = vunpack.c.l.b16 %v6245
      %v6390 = vunpack.c.l.b16 %v6246
      %v6391 = vunpack.c.l.b16 %v6247
      %v6392 = vunpack.c.l.b16 %v6248
      %v6393 = vunpack.c.l.b16 %v6249
      %v6394 = vunpack.c.l.b16 %v6250
      %v6395 = vunpack.c.l.b16 %v6251
      %v6396 = vunpack.c.l.b16 %v6252
      %v6397 = vunpack.c.l.b16 %v6253
      %v6398 = vunpack.c.l.b16 %v6254
      %v6399 = vunpack.c.l.b16 %v6255
      %v6400 = vunpack.c.l.b16 %v6256
      %v6401 = vunpack.c.l.b16 %v6257
      %v6402 = vunpack.c.l.b16 %v6258
      %v6403 = vunpack.c.l.b16 %v6259
      %v6404 = vunpack.c.l.b16 %v6260
      %v6405 = vunpack.c.l.b16 %v6261
      %v6406 = vunpack.c.l.b16 %v6262
      %v6407 = vunpack.c.l.b16 %v6263
      %v6408 = vunpack.c.l.b16 %v6264
      %v6409 = vunpack.c.l.b16 %v6265
      %v6410 = vunpack.c.l.b16 %v6266
      %v6411 = vunpack.c.l.b16 %v6267
      %v6412 = vunpack.c.l.b16 %v6268
      %v6413 = vunpack.c.l.b16 %v6269
      %v6414 = vunpack.c.l.b16 %v6270
      %v6415 = vunpack.c.l.b16 %v6271
      %v6416 = vunpack.c.l.b16 %v6272
      %v6417 = vunpack.c.l.b16 %v6273
      %v6418 = vunpack.c.l.b16 %v6274
      %v6419 = vunpack.c.l.b16 %v6275
      %v6420 = vunpack.c.l.b16 %v6276
      %v6421 = vunpack.c.l.b16 %v6277
      %v6422 = vunpack.c.l.b16 %v6278
      %v6423 = vunpack.c.l.b16 %v6279
      %v6424 = vpack.c.b16 %v6353, %v6352
      %v6425 = vpack.c.b16 %v6355, %v6354
      %v6426 = vpack.c.b16 %v6357, %v6356
      %v6427 = vpack.c.b16 %v6359, %v6358
      %v6428 = vpack.c.b16 %v6361, %v6360
      %v6429 = vpack.c.b16 %v6363, %v6362
      %v6430 = vpack.c.b16 %v6365, %v6364
      %v6431 = vpack.c.b16 %v6367, %v6366
      %v6432 = vpack.c.b16 %v6369, %v6368
      %v6433 = vpack.c.b16 %v6371, %v6370
      %v6434 = vpack.c.b16 %v6373, %v6372
      %v6435 = vpack.c.b16 %v6375, %v6374
      %v6436 = vpack.c.b16 %v6377, %v6376
      %v6437 = vpack.c.b16 %v6379, %v6378
      %v6438 = vpack.c.b16 %v6381, %v6380
      %v6439 = vpack.c.b16 %v6383, %v6382
      %v6440 = vpack.c.b16 %v6385, %v6384
      %v6441 = vpack.c.b16 %v6387, %v6386
      %v6442 = vpack.c.b16 %v6389, %v6388
      %v6443 = vpack.c.b16 %v6391, %v6390
      %v6444 = vpack.c.b16 %v6393, %v6392
      %v6445 = vpack.c.b16 %v6395, %v6394
      %v6446 = vpack.c.b16 %v6397, %v6396
      %v6447 = vpack.c.b16 %v6399, %v6398
      %v6448 = vpack.c.b16 %v6401, %v6400
      %v6449 = vpack.c.b16 %v6403, %v6402
      %v6450 = vpack.c.b16 %v6405, %v6404
      %v6451 = vpack.c.b16 %v6407, %v6406
      %v6452 = vpack.c.b16 %v6409, %v6408
      %v6453 = vpack.c.b16 %v6411, %v6410
      %v6454 = vpack.c.b16 %v6413, %v6412
      %v6455 = vpack.c.b16 %v6415, %v6414
      %v6456 = vpack.c.b16 %v6417, %v6416
      %v6457 = vpack.c.b16 %v6419, %v6418
      %v6458 = vpack.c.b16 %v6421, %v6420
      %v6459 = vpack.c.b16 %v6423, %v6422
      %v6497 = vsel %vm300, %v6092, 0
      %v6500 = vsel %vm300, %v6093, 0
      %v6503 = vsel %vm300, %v6094, 0
      %v6506 = vsel %vm300, %v6095, 0
      %6508 = vmatprep.subr.bf16.mxu0 0
      %6509 = vmatpush1.bf16.msra.mxu0 %v6424
      %6510 = vmatprep.subr.bf16.mxu0 0
      %6511 = vmatpush1.bf16.msra.mxu0 %v6425
      %6512 = vmatprep.subr.bf16.mxu0 0
      %6513 = vmatpush1.bf16.msra.mxu0 %v6426
      %6514 = vmatprep.subr.bf16.mxu0 0
      %6515 = vmatpush1.bf16.msra.mxu0 %v6427
      %6516 = vmatprep.subr.bf16.mxu0 0
      %6517 = vmatpush1.bf16.msra.mxu0 %v6428
      %6518 = vmatprep.subr.bf16.mxu0 0
      %6519 = vmatpush1.bf16.msra.mxu0 %v6429
      %6520 = vmatprep.subr.bf16.mxu0 0
      %6521 = vmatpush1.bf16.msra.mxu0 %v6430
      %6522 = vmatprep.subr.bf16.mxu0 0
      %6523 = vmatpush1.bf16.msra.mxu0 %v6431
      %6524 = vmatprep.subr.bf16.mxu0 0
      %6525 = vmatpush1.bf16.msra.mxu0 %v6432
      %6526 = vmatprep.subr.bf16.mxu0 0
      %6527 = vmatpush1.bf16.msra.mxu0 %v6433
      %6528 = vmatprep.subr.bf16.mxu0 0
      %6529 = vmatpush1.bf16.msra.mxu0 %v6434
      %6530 = vmatprep.subr.bf16.mxu0 0
      %6531 = vmatpush1.bf16.msra.mxu0 %v6435
      %6532 = vmatprep.subr.bf16.mxu0 0
      %6533 = vmatpush1.bf16.msra.mxu0 %v6436
      %6534 = vmatprep.subr.bf16.mxu0 0
      %6535 = vmatpush1.bf16.msra.mxu0 %v6437
      %6536 = vmatprep.subr.bf16.mxu0 0
      %6537 = vmatpush1.bf16.msra.mxu0 %v6438
      %6538 = vmatprep.subr.bf16.mxu0 0
      %6539 = vmatpush1.bf16.msra.mxu0 %v6439
      %6540 = vmatprep.mubr.bf16.mxu0 %v6162
      %6541 = vmatmul.mubr.bf16.gmra.mrb[0].mxu0 %v6146
      %v6542 = vpop.f32.mrb[0].mxu0
      %v6543 = vadd.f32 0.0, %v6542
      %v6544 = vpop.f32.mrb[0].mxu0
      %v6545 = vpop.f32.mrb[0].mxu0
      %v6546 = vadd.f32 0.0, %v6545
      %v6547 = vpop.f32.mrb[0].mxu0
      %6548 = vmatprep.mubr.bf16.mxu0 %v6166
      %6549 = vmatmul.mubr.bf16.gmra.mrb[0].mxu0 %v6150
      %v6550 = vpop.f32.mrb[0].mxu0
      %v6551 = vadd.f32 0.0, %v6550
      %v6552 = vpop.f32.mrb[0].mxu0
      %v6553 = vpop.f32.mrb[0].mxu0
      %v6554 = vadd.f32 0.0, %v6553
      %v6555 = vpop.f32.mrb[0].mxu0
      %6556 = vmatprep.mubr.bf16.mxu0 %v6170
      %6557 = vmatmul.mubr.bf16.gmra.mrb[0].mxu0 %v6154
      %v6558 = vpop.f32.mrb[0].mxu0
      %v6559 = vadd.f32 0.0, %v6558
      %v6560 = vpop.f32.mrb[0].mxu0
      %v6561 = vpop.f32.mrb[0].mxu0
      %v6562 = vadd.f32 0.0, %v6561
      %v6563 = vpop.f32.mrb[0].mxu0
      %6564 = vmatprep.mubr.bf16.mxu0 %v6174
      %6565 = vmatmul.mubr.bf16.gmra.mrb[0].mxu0 %v6158
      %v6566 = vpop.f32.mrb[0].mxu0
      %v6567 = vadd.f32 0.0, %v6566
      %v6568 = vpop.f32.mrb[0].mxu0
      %v6569 = vpop.f32.mrb[0].mxu0
      %v6570 = vadd.f32 0.0, %v6569
      %v6571 = vpop.f32.mrb[0].mxu0
      %6572 = vdwg.mxu0
      %6573 = vmatprep.subr.bf16.mxu0 0
      %6574 = vmatpush1.bf16.msra.mxu0 %v6440
      %6575 = vmatprep.subr.bf16.mxu0 0
      %6576 = vmatpush1.bf16.msra.mxu0 %v6441
      %6577 = vmatprep.subr.bf16.mxu0 0
      %6578 = vmatpush1.bf16.msra.mxu0 %v6442
      %6579 = vmatprep.subr.bf16.mxu0 0
      %6580 = vmatpush1.bf16.msra.mxu0 %v6443
      %6581 = vmatprep.subr.bf16.mxu0 0
      %6582 = vmatpush1.bf16.msra.mxu0 %v6444
      %6583 = vmatprep.subr.bf16.mxu0 0
      %6584 = vmatpush1.bf16.msra.mxu0 %v6445
      %6585 = vmatprep.subr.bf16.mxu0 0
      %6586 = vmatpush1.bf16.msra.mxu0 %v6446
      %6587 = vmatprep.subr.bf16.mxu0 0
      %6588 = vmatpush1.bf16.msra.mxu0 %v6447
      %6589 = vmatprep.subr.bf16.mxu0 0
      %6590 = vmatpush1.bf16.msra.mxu0 %v6448
      %6591 = vmatprep.subr.bf16.mxu0 0
      %6592 = vmatpush1.bf16.msra.mxu0 %v6449
      %6593 = vmatprep.subr.bf16.mxu0 0
      %6594 = vmatpush1.bf16.msra.mxu0 %v6450
      %6595 = vmatprep.subr.bf16.mxu0 0
      %6596 = vmatpush1.bf16.msra.mxu0 %v6451
      %6597 = vmatprep.subr.bf16.mxu0 0
      %6598 = vmatpush1.bf16.msra.mxu0 %v6452
      %6599 = vmatprep.subr.bf16.mxu0 0
      %6600 = vmatpush1.bf16.msra.mxu0 %v6453
      %6601 = vmatprep.subr.bf16.mxu0 0
      %6602 = vmatpush1.bf16.msra.mxu0 %v6454
      %6603 = vmatprep.subr.bf16.mxu0 0
      %6604 = vmatpush1.bf16.msra.mxu0 %v6455
      %6605 = vmatprep.mubr.bf16.mxu0 %v6194
      %6606 = vmatmul.mubr.bf16.gmra.mrb[0].mxu0 %v6178
      %v6607 = vpop.f32.mrb[0].mxu0
      %v6608 = vadd.f32 %v6543, %v6607
      %v6609 = vpop.f32.mrb[0].mxu0
      %v6610 = vpop.f32.mrb[0].mxu0
      %v6611 = vadd.f32 %v6546, %v6610
      %v6612 = vpop.f32.mrb[0].mxu0
      %6613 = vmatprep.mubr.bf16.mxu0 %v6198
      %6614 = vmatmul.mubr.bf16.gmra.mrb[0].mxu0 %v6182
      %v6615 = vpop.f32.mrb[0].mxu0
      %v6616 = vadd.f32 %v6551, %v6615
      %v6617 = vpop.f32.mrb[0].mxu0
      %v6618 = vpop.f32.mrb[0].mxu0
      %v6619 = vadd.f32 %v6554, %v6618
      %v6620 = vpop.f32.mrb[0].mxu0
      %6621 = vmatprep.mubr.bf16.mxu0 %v6202
      %6622 = vmatmul.mubr.bf16.gmra.mrb[0].mxu0 %v6186
      %v6623 = vpop.f32.mrb[0].mxu0
      %v6624 = vadd.f32 %v6559, %v6623
      %v6625 = vpop.f32.mrb[0].mxu0
      %v6626 = vpop.f32.mrb[0].mxu0
      %v6627 = vadd.f32 %v6562, %v6626
      %v6628 = vpop.f32.mrb[0].mxu0
      %6629 = vmatprep.mubr.bf16.mxu0 %v6206
      %6630 = vmatmul.mubr.bf16.gmra.mrb[0].mxu0 %v6190
      %v6631 = vpop.f32.mrb[0].mxu0
      %v6632 = vadd.f32 %v6567, %v6631
      %v6633 = vpop.f32.mrb[0].mxu0
      %v6634 = vpop.f32.mrb[0].mxu0
      %v6635 = vadd.f32 %v6570, %v6634
      %v6636 = vpop.f32.mrb[0].mxu0
      %6637 = vdwg.mxu0
      %6638 = vmatprep.subr.bf16.mxu0 0
      %6639 = vmatpush1.bf16.msra.mxu0 %v6456
      %6640 = vmatprep.subr.bf16.mxu0 0
      %6641 = vmatpush1.bf16.msra.mxu0 %v6457
      %6642 = vmatprep.subr.bf16.mxu0 0
      %6643 = vmatpush1.bf16.msra.mxu0 %v6458
      %6644 = vmatprep.subr.bf16.mxu0 0
      %6645 = vmatpush1.bf16.msra.mxu0 %v6459
      %6646 = vmatprep.subr.bf16.mxu0 0
      %6647 = vmatpush1.bf16.msra.mxu0 0
      %6648 = vmatprep.subr.bf16.mxu0 0
      %6649 = vmatpush1.bf16.msra.mxu0 0
      %6650 = vmatprep.subr.bf16.mxu0 0
      %6651 = vmatpush1.bf16.msra.mxu0 0
      %6652 = vmatprep.subr.bf16.mxu0 0
      %6653 = vmatpush1.bf16.msra.mxu0 0
      %6654 = vmatprep.subr.bf16.mxu0 0
      %6655 = vmatpush1.bf16.msra.mxu0 0
      %6656 = vmatprep.subr.bf16.mxu0 0
      %6657 = vmatpush1.bf16.msra.mxu0 0
      %6658 = vmatprep.subr.bf16.mxu0 0
      %6659 = vmatpush1.bf16.msra.mxu0 0
      %6660 = vmatprep.subr.bf16.mxu0 0
      %6661 = vmatpush1.bf16.msra.mxu0 0
      %6662 = vmatprep.subr.bf16.mxu0 0
      %6663 = vmatpush1.bf16.msra.mxu0 0
      %6664 = vmatprep.subr.bf16.mxu0 0
      %6665 = vmatpush1.bf16.msra.mxu0 0
      %6666 = vmatprep.subr.bf16.mxu0 0
      %6667 = vmatpush1.bf16.msra.mxu0 0
      %6668 = vmatprep.subr.bf16.mxu0 0
      %6669 = vmatpush1.bf16.msra.mxu0 0
      %6670 = vmatprep.mubr.bf16.mxu0 0
      %6671 = vmatmul.mubr.bf16.gmra.mrb[0].mxu0 %v6497
      %v6672 = vpop.f32.mrb[0].mxu0
      %v6673 = vadd.f32 %v6608, %v6672
      %v6674 = vpop.f32.mrb[0].mxu0
      %v6675 = vpop.f32.mrb[0].mxu0
      %v6676 = vadd.f32 %v6611, %v6675
      %v6677 = vpop.f32.mrb[0].mxu0
      %6678 = vmatprep.mubr.bf16.mxu0 0
      %6679 = vmatmul.mubr.bf16.gmra.mrb[0].mxu0 %v6500
      %v6680 = vpop.f32.mrb[0].mxu0
      %v6681 = vadd.f32 %v6616, %v6680
      %v6682 = vpop.f32.mrb[0].mxu0
      %v6683 = vpop.f32.mrb[0].mxu0
      %v6684 = vadd.f32 %v6619, %v6683
      %v6685 = vpop.f32.mrb[0].mxu0
      %6686 = vmatprep.mubr.bf16.mxu0 0
      %6687 = vmatmul.mubr.bf16.gmra.mrb[0].mxu0 %v6503
      %v6688 = vpop.f32.mrb[0].mxu0
      %v6689 = vadd.f32 %v6624, %v6688
      %v6690 = vpop.f32.mrb[0].mxu0
      %v6691 = vpop.f32.mrb[0].mxu0
      %v6692 = vadd.f32 %v6627, %v6691
      %v6693 = vpop.f32.mrb[0].mxu0
      %6694 = vmatprep.mubr.bf16.mxu0 0
      %6695 = vmatmul.mubr.bf16.gmra.mrb[0].mxu0 %v6506
      %v6696 = vpop.f32.mrb[0].mxu0
      %v6697 = vadd.f32 %v6632, %v6696
      %v6698 = vpop.f32.mrb[0].mxu0
      %v6699 = vpop.f32.mrb[0].mxu0
      %v6700 = vadd.f32 %v6635, %v6699
      %v6701 = vpop.f32.mrb[0].mxu0
      %6702 = vdwg.mxu0
      %v6703 = vmul.f32 %v6673, %v6673
      %v6704 = vmul.f32 %v6676, %v6676
      %v6705 = vmul.f32 %v6681, %v6681
      %v6706 = vmul.f32 %v6684, %v6684
      %v6707 = vmul.f32 %v6689, %v6689
      %v6708 = vmul.f32 %v6692, %v6692
      %v6709 = vmul.f32 %v6697, %v6697
      %v6710 = vmul.f32 %v6700, %v6700
      %v6711 = vsel %vm5149, %v6703, 0.0
      %6712 = vadd.xlane.f32.xlu0 %v6711
      %v6713 = vpop.xlane.xlu0 %6712
      %v6714 = vsel %vm5149, %v6704, 0.0
      %6715 = vadd.xlane.f32.xlu0 %v6714
      %v6716 = vpop.xlane.xlu0 %6715
      %v6717 = vsel %vm5149, %v6705, 0.0
      %6718 = vadd.xlane.f32.xlu0 %v6717
      %v6719 = vpop.xlane.xlu0 %6718
      %v6720 = vsel %vm5149, %v6706, 0.0
      %6721 = vadd.xlane.f32.xlu0 %v6720
      %v6722 = vpop.xlane.xlu0 %6721
      %v6723 = vsel %vm5149, %v6707, 0.0
      %6724 = vadd.xlane.f32.xlu0 %v6723
      %v6725 = vpop.xlane.xlu0 %6724
      %v6726 = vsel %vm5149, %v6708, 0.0
      %6727 = vadd.xlane.f32.xlu0 %v6726
      %v6728 = vpop.xlane.xlu0 %6727
      %v6729 = vsel %vm5149, %v6709, 0.0
      %6730 = vadd.xlane.f32.xlu0 %v6729
      %v6731 = vpop.xlane.xlu0 %6730
      %v6732 = vsel %vm5149, %v6710, 0.0
      %6733 = vadd.xlane.f32.xlu0 %v6732
      %v6734 = vpop.xlane.xlu0 %6733
      %v6735 = vmax.f32 %v6713, 1e-24
      %v6736 = vmax.f32 %v6716, 1e-24
      %v6737 = vmax.f32 %v6719, 1e-24
      %v6738 = vmax.f32 %v6722, 1e-24
      %v6739 = vmax.f32 %v6725, 1e-24
      %v6740 = vmax.f32 %v6728, 1e-24
      %v6741 = vmax.f32 %v6731, 1e-24
      %v6742 = vmax.f32 %v6734, 1e-24
      %v6743 = vrsqrt.pop %v6735
      %v6744 = vrsqrt.pop %v6736
      %v6745 = vrsqrt.pop %v6737
      %v6746 = vrsqrt.pop %v6738
      %v6747 = vrsqrt.pop %v6739
      %v6748 = vrsqrt.pop %v6740
      %v6749 = vrsqrt.pop %v6741
      %v6750 = vrsqrt.pop %v6742
      %v6751 = vmul.f32 %v6673, %v6743
      %v6752 = vmul.f32 %v6676, %v6744
      %v6753 = vmul.f32 %v6681, %v6745
      %v6754 = vmul.f32 %v6684, %v6746
      %v6755 = vmul.f32 %v6689, %v6747
      %v6756 = vmul.f32 %v6692, %v6748
      %v6757 = vmul.f32 %v6697, %v6749
      %v6758 = vmul.f32 %v6700, %v6750
      %s6759 = scalar_lea.vmem %s278, 128
      %6760 = vst.msk [vmem:[%s6759] sm:$0xff] %vm5149, %v6751
      %6761 = vst.msk [vmem:[%s6759 + $0x8] sm:$0xff] %vm5149, %v6752
      %6762 = vst.msk [vmem:[%s6759 + $0x10] sm:$0xff] %vm5149, %v6753
      %6763 = vst.msk [vmem:[%s6759 + $0x18] sm:$0xff] %vm5149, %v6754
      %6764 = vst.msk [vmem:[%s6759 + $0x20] sm:$0xff] %vm5149, %v6755
      %6765 = vst.msk [vmem:[%s6759 + $0x28] sm:$0xff] %vm5149, %v6756
      %6766 = vst.msk [vmem:[%s6759 + $0x30] sm:$0xff] %vm5149, %v6757
      %6767 = vst.msk [vmem:[%s6759 + $0x38] sm:$0xff] %vm5149, %v6758
      %v6768 = vld [vmem:[%s3011 + $0x1] sm:$0xff]
      %v6769 = vld [vmem:[%s3011 + $0x11] sm:$0xff]
      %v6770 = vld [vmem:[%s3011 + $0x21] sm:$0xff]
      %v6771 = vld [vmem:[%s3011 + $0x31] sm:$0xff]
      %v6772 = vld [vmem:[%s3011 + $0x41] sm:$0xff]
      %v6773 = vld [vmem:[%s3011 + $0x51] sm:$0xff]
      %v6774 = vld [vmem:[%s3011 + $0x61] sm:$0xff]
      %v6775 = vld [vmem:[%s3011 + $0x71] sm:$0xff]
      %v6776 = vpack.c.bf16 %v6769, %v6768
      %v6777 = vpack.c.bf16 %v6771, %v6770
      %v6778 = vpack.c.bf16 %v6773, %v6772
      %v6779 = vpack.c.bf16 %v6775, %v6774
      %v6780 = vld [vmem:[%s3479 + $0x1] sm:$0xff]
      %v6781 = vld [vmem:[%s3479 + $0x11] sm:$0xff]
      %v6782 = vld [vmem:[%s3479 + $0x21] sm:$0xff]
      %v6783 = vld [vmem:[%s3479 + $0x31] sm:$0xff]
      %v6784 = vld [vmem:[%s3479 + $0x41] sm:$0xff]
      %v6785 = vld [vmem:[%s3479 + $0x51] sm:$0xff]
      %v6786 = vld [vmem:[%s3479 + $0x61] sm:$0xff]
      %v6787 = vld [vmem:[%s3479 + $0x71] sm:$0xff]
      %v6788 = vpack.c.bf16 %v6781, %v6780
      %v6789 = vpack.c.bf16 %v6783, %v6782
      %v6790 = vpack.c.bf16 %v6785, %v6784
      %v6791 = vpack.c.bf16 %v6787, %v6786
      %v6792 = vld [vmem:[%s3011 + $0x2] sm:$0xff]
      %v6793 = vld [vmem:[%s3011 + $0x12] sm:$0xff]
      %v6794 = vld [vmem:[%s3011 + $0x22] sm:$0xff]
      %v6795 = vld [vmem:[%s3011 + $0x32] sm:$0xff]
      %v6796 = vld [vmem:[%s3011 + $0x42] sm:$0xff]
      %v6797 = vld [vmem:[%s3011 + $0x52] sm:$0xff]
      %v6798 = vld [vmem:[%s3011 + $0x62] sm:$0xff]
      %v6799 = vld [vmem:[%s3011 + $0x72] sm:$0xff]
      %v6800 = vpack.c.bf16 %v6793, %v6792
      %v6801 = vpack.c.bf16 %v6795, %v6794
      %v6802 = vpack.c.bf16 %v6797, %v6796
      %v6803 = vpack.c.bf16 %v6799, %v6798
      %v6804 = vld [vmem:[%s3947 + $0x1] sm:$0xff]
      %v6805 = vld [vmem:[%s3947 + $0x11] sm:$0xff]
      %v6806 = vld [vmem:[%s3947 + $0x21] sm:$0xff]
      %v6807 = vld [vmem:[%s3947 + $0x31] sm:$0xff]
      %v6808 = vld [vmem:[%s3947 + $0x41] sm:$0xff]
      %v6809 = vld [vmem:[%s3947 + $0x51] sm:$0xff]
      %v6810 = vld [vmem:[%s3947 + $0x61] sm:$0xff]
      %v6811 = vld [vmem:[%s3947 + $0x71] sm:$0xff]
      %v6812 = vpack.c.bf16 %v6805, %v6804
      %v6813 = vpack.c.bf16 %v6807, %v6806
      %v6814 = vpack.c.bf16 %v6809, %v6808
      %v6815 = vpack.c.bf16 %v6811, %v6810
      %v6816 = vld [vmem:[%s4415 + $0x1] sm:$0xff]
      %v6817 = vld [vmem:[%s4415 + $0x11] sm:$0xff]
      %v6818 = vld [vmem:[%s4415 + $0x21] sm:$0xff]
      %v6819 = vld [vmem:[%s4415 + $0x31] sm:$0xff]
      %v6820 = vld [vmem:[%s4415 + $0x41] sm:$0xff]
      %v6821 = vld [vmem:[%s4415 + $0x51] sm:$0xff]
      %v6822 = vld [vmem:[%s4415 + $0x61] sm:$0xff]
      %v6823 = vld [vmem:[%s4415 + $0x71] sm:$0xff]
      %v6824 = vpack.c.bf16 %v6817, %v6816
      %v6825 = vpack.c.bf16 %v6819, %v6818
      %v6826 = vpack.c.bf16 %v6821, %v6820
      %v6827 = vpack.c.bf16 %v6823, %v6822
      %v6828 = vld [vmem:[%s3947 + $0x2] sm:$0xff]
      %v6829 = vld [vmem:[%s3947 + $0x12] sm:$0xff]
      %v6830 = vld [vmem:[%s3947 + $0x22] sm:$0xff]
      %v6831 = vld [vmem:[%s3947 + $0x32] sm:$0xff]
      %v6832 = vld [vmem:[%s3947 + $0x42] sm:$0xff]
      %v6833 = vld [vmem:[%s3947 + $0x52] sm:$0xff]
      %v6834 = vld [vmem:[%s3947 + $0x62] sm:$0xff]
      %v6835 = vld [vmem:[%s3947 + $0x72] sm:$0xff]
      %v6836 = vpack.c.bf16 %v6829, %v6828
      %v6837 = vpack.c.bf16 %v6831, %v6830
      %v6838 = vpack.c.bf16 %v6833, %v6832
      %v6839 = vpack.c.bf16 %v6835, %v6834
      %v6840 = vld [vmem:[%s6071 + $0x1] sm:$0xff]
      %v6841 = vld [vmem:[%s6071 + $0x11] sm:$0xff]
      %v6842 = vld [vmem:[%s6071 + $0x21] sm:$0xff]
      %v6843 = vld [vmem:[%s6071 + $0x31] sm:$0xff]
      %v6844 = vld [vmem:[%s6071 + $0x41] sm:$0xff]
      %v6845 = vld [vmem:[%s6071 + $0x51] sm:$0xff]
      %v6846 = vld [vmem:[%s6071 + $0x61] sm:$0xff]
      %v6847 = vld [vmem:[%s6071 + $0x71] sm:$0xff]
      %v6848 = vpack.c.bf16 %v6841, %v6840
      %v6849 = vpack.c.bf16 %v6843, %v6842
      %v6850 = vpack.c.bf16 %v6845, %v6844
      %v6851 = vpack.c.bf16 %v6847, %v6846
      %v6852 = vld [vmem:[%s6058 + $0x1] sm:$0xff]
      %v6853 = vld [vmem:[%s6058 + $0x11] sm:$0xff]
      %v6854 = vld [vmem:[%s6058 + $0x21] sm:$0xff]
      %v6855 = vld [vmem:[%s6058 + $0x31] sm:$0xff]
      %v6856 = vld [vmem:[%s6058 + $0x41] sm:$0xff]
      %v6857 = vld [vmem:[%s6058 + $0x51] sm:$0xff]
      %v6858 = vld [vmem:[%s6058 + $0x61] sm:$0xff]
      %v6859 = vld [vmem:[%s6058 + $0x71] sm:$0xff]
      %v6860 = vpack.c.bf16 %v6853, %v6852
      %v6861 = vpack.c.bf16 %v6855, %v6854
      %v6862 = vpack.c.bf16 %v6857, %v6856
      %v6863 = vpack.c.bf16 %v6859, %v6858
      %v6864 = vld [vmem:[%s6071 + $0x2] sm:$0xff]
      %v6865 = vld [vmem:[%s6071 + $0x12] sm:$0xff]
      %v6866 = vld [vmem:[%s6071 + $0x22] sm:$0xff]
      %v6867 = vld [vmem:[%s6071 + $0x32] sm:$0xff]
      %v6868 = vld [vmem:[%s6071 + $0x42] sm:$0xff]
      %v6869 = vld [vmem:[%s6071 + $0x52] sm:$0xff]
      %v6870 = vld [vmem:[%s6071 + $0x62] sm:$0xff]
      %v6871 = vld [vmem:[%s6071 + $0x72] sm:$0xff]
      %v6872 = vpack.c.bf16 %v6865, %v6864
      %v6873 = vpack.c.bf16 %v6867, %v6866
      %v6874 = vpack.c.bf16 %v6869, %v6868
      %v6875 = vpack.c.bf16 %v6871, %v6870
      %6880 = vrot.lane.b32.xlu0 %v6788, 64
      %v6881 = vpop.permute.xlu0 %6880
      %6882 = vrot.lane.b32.xlu0 %v6789, 64
      %v6883 = vpop.permute.xlu0 %6882
      %6884 = vrot.lane.b32.xlu0 %v6790, 64
      %v6885 = vpop.permute.xlu0 %6884
      %6886 = vrot.lane.b32.xlu0 %v6791, 64
      %v6887 = vpop.permute.xlu0 %6886
      %6892 = vrot.lane.b32.xlu0 %v6812, 64
      %v6893 = vpop.permute.xlu0 %6892
      %6894 = vrot.lane.b32.xlu0 %v6813, 64
      %v6895 = vpop.permute.xlu0 %6894
      %6896 = vrot.lane.b32.xlu0 %v6814, 64
      %v6897 = vpop.permute.xlu0 %6896
      %6898 = vrot.lane.b32.xlu0 %v6815, 64
      %v6899 = vpop.permute.xlu0 %6898
      %6904 = vrot.lane.b32.xlu0 %v6836, 64
      %v6905 = vpop.permute.xlu0 %6904
      %6906 = vrot.lane.b32.xlu0 %v6837, 64
      %v6907 = vpop.permute.xlu0 %6906
      %6908 = vrot.lane.b32.xlu0 %v6838, 64
      %v6909 = vpop.permute.xlu0 %6908
      %6910 = vrot.lane.b32.xlu0 %v6839, 64
      %v6911 = vpop.permute.xlu0 %6910
      %6916 = vrot.lane.b32.xlu0 %v6860, 64
      %v6917 = vpop.permute.xlu0 %6916
      %6918 = vrot.lane.b32.xlu0 %v6861, 64
      %v6919 = vpop.permute.xlu0 %6918
      %6920 = vrot.lane.b32.xlu0 %v6862, 64
      %v6921 = vpop.permute.xlu0 %6920
      %6922 = vrot.lane.b32.xlu0 %v6863, 64
      %v6923 = vpop.permute.xlu0 %6922
      %v6926 = vsel %vm300, %v6776, %v6881
      %v6930 = vsel %vm300, %v6777, %v6883
      %v6934 = vsel %vm300, %v6778, %v6885
      %v6938 = vsel %vm300, %v6779, %v6887
      %v6942 = vsel %vm300, %v6800, %v6893
      %v6946 = vsel %vm300, %v6801, %v6895
      %v6950 = vsel %vm300, %v6802, %v6897
      %v6954 = vsel %vm300, %v6803, %v6899
      %v6958 = vsel %vm300, %v6824, %v6905
      %v6962 = vsel %vm300, %v6825, %v6907
      %v6966 = vsel %vm300, %v6826, %v6909
      %v6970 = vsel %vm300, %v6827, %v6911
      %v6974 = vsel %vm300, %v6848, %v6917
      %v6978 = vsel %vm300, %v6849, %v6919
      %v6982 = vsel %vm300, %v6850, %v6921
      %v6986 = vsel %vm300, %v6851, %v6923
      %v6988 = vld [vmem:[%s6] sm:$0xf]
      %v6989 = vld [vmem:[%s6 + $0x4] sm:$0xf]
      %v6990 = vld [vmem:[%s6 + $0x8] sm:$0xf]
      %v6991 = vld [vmem:[%s6 + $0xc] sm:$0xf]
      %v6992 = vld [vmem:[%s6 + $0x10] sm:$0xf]
      %v6993 = vld [vmem:[%s6 + $0x14] sm:$0xf]
      %v6994 = vld [vmem:[%s6 + $0x18] sm:$0xf]
      %v6995 = vld [vmem:[%s6 + $0x1c] sm:$0xf]
      %v6996 = vld [vmem:[%s6 + $0x20] sm:$0xf]
      %v6997 = vld [vmem:[%s6 + $0x24] sm:$0xf]
      %v6998 = vld [vmem:[%s6 + $0x28] sm:$0xf]
      %v6999 = vld [vmem:[%s6 + $0x2c] sm:$0xf]
      %v7000 = vld [vmem:[%s6 + $0x30] sm:$0xf]
      %v7001 = vld [vmem:[%s6 + $0x34] sm:$0xf]
      %v7002 = vld [vmem:[%s6 + $0x38] sm:$0xf]
      %v7003 = vld [vmem:[%s6 + $0x3c] sm:$0xf]
      %v7004 = vld [vmem:[%s6 + $0x40] sm:$0xf]
      %v7005 = vld [vmem:[%s6 + $0x44] sm:$0xf]
      %v7006 = vld [vmem:[%s6 + $0x48] sm:$0xf]
      %v7007 = vld [vmem:[%s6 + $0x4c] sm:$0xf]
      %v7008 = vld [vmem:[%s6 + $0x50] sm:$0xf]
      %v7009 = vld [vmem:[%s6 + $0x54] sm:$0xf]
      %v7010 = vld [vmem:[%s6 + $0x58] sm:$0xf]
      %v7011 = vld [vmem:[%s6 + $0x5c] sm:$0xf]
      %v7012 = vld [vmem:[%s6 + $0x60] sm:$0xf]
      %v7013 = vld [vmem:[%s6 + $0x64] sm:$0xf]
      %v7014 = vld [vmem:[%s6 + $0x68] sm:$0xf]
      %v7015 = vld [vmem:[%s6 + $0x6c] sm:$0xf]
      %v7016 = vld [vmem:[%s6 + $0x70] sm:$0xf]
      %v7017 = vld [vmem:[%s6 + $0x74] sm:$0xf]
      %v7018 = vld [vmem:[%s6 + $0x78] sm:$0xf]
      %v7019 = vld [vmem:[%s6 + $0x7c] sm:$0xf]
      %v7020 = vld [vmem:[%s6 + $0x80] sm:$0xf]
      %v7021 = vld [vmem:[%s6 + $0x84] sm:$0xf]
      %v7022 = vld [vmem:[%s6 + $0x88] sm:$0xf]
      %v7023 = vld [vmem:[%s6 + $0x8c] sm:$0xf]
      %v7024 = vld [vmem:[%s6 + $0x90] sm:$0xf]
      %v7025 = vld [vmem:[%s6 + $0x94] sm:$0xf]
      %v7026 = vld [vmem:[%s6 + $0x98] sm:$0xf]
      %v7027 = vld [vmem:[%s6 + $0x9c] sm:$0xf]
      %v7028 = vld [vmem:[%s6 + $0xa0] sm:$0xf]
      %v7029 = vld [vmem:[%s6 + $0xa4] sm:$0xf]
      %v7030 = vld [vmem:[%s6 + $0xa8] sm:$0xf]
      %v7031 = vld [vmem:[%s6 + $0xac] sm:$0xf]
      %v7032 = vld [vmem:[%s6 + $0xb0] sm:$0xf]
      %v7033 = vld [vmem:[%s6 + $0xb4] sm:$0xf]
      %v7034 = vld [vmem:[%s6 + $0xb8] sm:$0xf]
      %v7035 = vld [vmem:[%s6 + $0xbc] sm:$0xf]
      %v7036 = vld [vmem:[%s6 + $0xc0] sm:$0xf]
      %v7037 = vld [vmem:[%s6 + $0xc4] sm:$0xf]
      %v7038 = vld [vmem:[%s6 + $0xc8] sm:$0xf]
      %v7039 = vld [vmem:[%s6 + $0xcc] sm:$0xf]
      %v7040 = vld [vmem:[%s6 + $0xd0] sm:$0xf]
      %v7041 = vld [vmem:[%s6 + $0xd4] sm:$0xf]
      %v7042 = vld [vmem:[%s6 + $0xd8] sm:$0xf]
      %v7043 = vld [vmem:[%s6 + $0xdc] sm:$0xf]
      %v7044 = vld [vmem:[%s6 + $0xe0] sm:$0xf]
      %v7045 = vld [vmem:[%s6 + $0xe4] sm:$0xf]
      %v7046 = vld [vmem:[%s6 + $0xe8] sm:$0xf]
      %v7047 = vld [vmem:[%s6 + $0xec] sm:$0xf]
      %v7048 = vld [vmem:[%s6 + $0xf0] sm:$0xf]
      %v7049 = vld [vmem:[%s6 + $0xf4] sm:$0xf]
      %v7050 = vld [vmem:[%s6 + $0xf8] sm:$0xf]
      %v7051 = vld [vmem:[%s6 + $0xfc] sm:$0xf]
      %v7052 = vld [vmem:[%s6 + $0x100] sm:$0xf]
      %v7053 = vld [vmem:[%s6 + $0x104] sm:$0xf]
      %v7054 = vld [vmem:[%s6 + $0x108] sm:$0xf]
      %v7055 = vld [vmem:[%s6 + $0x10c] sm:$0xf]
      %v7056 = vld [vmem:[%s6 + $0x110] sm:$0xf]
      %v7057 = vld [vmem:[%s6 + $0x114] sm:$0xf]
      %v7058 = vld [vmem:[%s6 + $0x118] sm:$0xf]
      %v7059 = vld [vmem:[%s6 + $0x11c] sm:$0xf]
      %v7132 = vunpack.c.l.b16 %v6988
      %v7133 = vunpack.c.l.b16 %v6989
      %v7134 = vunpack.c.l.b16 %v6990
      %v7135 = vunpack.c.l.b16 %v6991
      %v7136 = vunpack.c.l.b16 %v6992
      %v7137 = vunpack.c.l.b16 %v6993
      %v7138 = vunpack.c.l.b16 %v6994
      %v7139 = vunpack.c.l.b16 %v6995
      %v7140 = vunpack.c.l.b16 %v6996
      %v7141 = vunpack.c.l.b16 %v6997
      %v7142 = vunpack.c.l.b16 %v6998
      %v7143 = vunpack.c.l.b16 %v6999
      %v7144 = vunpack.c.l.b16 %v7000
      %v7145 = vunpack.c.l.b16 %v7001
      %v7146 = vunpack.c.l.b16 %v7002
      %v7147 = vunpack.c.l.b16 %v7003
      %v7148 = vunpack.c.l.b16 %v7004
      %v7149 = vunpack.c.l.b16 %v7005
      %v7150 = vunpack.c.l.b16 %v7006
      %v7151 = vunpack.c.l.b16 %v7007
      %v7152 = vunpack.c.l.b16 %v7008
      %v7153 = vunpack.c.l.b16 %v7009
      %v7154 = vunpack.c.l.b16 %v7010
      %v7155 = vunpack.c.l.b16 %v7011
      %v7156 = vunpack.c.l.b16 %v7012
      %v7157 = vunpack.c.l.b16 %v7013
      %v7158 = vunpack.c.l.b16 %v7014
      %v7159 = vunpack.c.l.b16 %v7015
      %v7160 = vunpack.c.l.b16 %v7016
      %v7161 = vunpack.c.l.b16 %v7017
      %v7162 = vunpack.c.l.b16 %v7018
      %v7163 = vunpack.c.l.b16 %v7019
      %v7164 = vunpack.c.l.b16 %v7020
      %v7165 = vunpack.c.l.b16 %v7021
      %v7166 = vunpack.c.l.b16 %v7022
      %v7167 = vunpack.c.l.b16 %v7023
      %v7168 = vunpack.c.l.b16 %v7024
      %v7169 = vunpack.c.l.b16 %v7025
      %v7170 = vunpack.c.l.b16 %v7026
      %v7171 = vunpack.c.l.b16 %v7027
      %v7172 = vunpack.c.l.b16 %v7028
      %v7173 = vunpack.c.l.b16 %v7029
      %v7174 = vunpack.c.l.b16 %v7030
      %v7175 = vunpack.c.l.b16 %v7031
      %v7176 = vunpack.c.l.b16 %v7032
      %v7177 = vunpack.c.l.b16 %v7033
      %v7178 = vunpack.c.l.b16 %v7034
      %v7179 = vunpack.c.l.b16 %v7035
      %v7180 = vunpack.c.l.b16 %v7036
      %v7181 = vunpack.c.l.b16 %v7037
      %v7182 = vunpack.c.l.b16 %v7038
      %v7183 = vunpack.c.l.b16 %v7039
      %v7184 = vunpack.c.l.b16 %v7040
      %v7185 = vunpack.c.l.b16 %v7041
      %v7186 = vunpack.c.l.b16 %v7042
      %v7187 = vunpack.c.l.b16 %v7043
      %v7188 = vunpack.c.l.b16 %v7044
      %v7189 = vunpack.c.l.b16 %v7045
      %v7190 = vunpack.c.l.b16 %v7046
      %v7191 = vunpack.c.l.b16 %v7047
      %v7192 = vunpack.c.l.b16 %v7048
      %v7193 = vunpack.c.l.b16 %v7049
      %v7194 = vunpack.c.l.b16 %v7050
      %v7195 = vunpack.c.l.b16 %v7051
      %v7196 = vunpack.c.l.b16 %v7052
      %v7197 = vunpack.c.l.b16 %v7053
      %v7198 = vunpack.c.l.b16 %v7054
      %v7199 = vunpack.c.l.b16 %v7055
      %v7200 = vunpack.c.l.b16 %v7056
      %v7201 = vunpack.c.l.b16 %v7057
      %v7202 = vunpack.c.l.b16 %v7058
      %v7203 = vunpack.c.l.b16 %v7059
      %v7204 = vpack.c.b16 %v7133, %v7132
      %v7205 = vpack.c.b16 %v7135, %v7134
      %v7206 = vpack.c.b16 %v7137, %v7136
      %v7207 = vpack.c.b16 %v7139, %v7138
      %v7208 = vpack.c.b16 %v7141, %v7140
      %v7209 = vpack.c.b16 %v7143, %v7142
      %v7210 = vpack.c.b16 %v7145, %v7144
      %v7211 = vpack.c.b16 %v7147, %v7146
      %v7212 = vpack.c.b16 %v7149, %v7148
      %v7213 = vpack.c.b16 %v7151, %v7150
      %v7214 = vpack.c.b16 %v7153, %v7152
      %v7215 = vpack.c.b16 %v7155, %v7154
      %v7216 = vpack.c.b16 %v7157, %v7156
      %v7217 = vpack.c.b16 %v7159, %v7158
      %v7218 = vpack.c.b16 %v7161, %v7160
      %v7219 = vpack.c.b16 %v7163, %v7162
      %v7220 = vpack.c.b16 %v7165, %v7164
      %v7221 = vpack.c.b16 %v7167, %v7166
      %v7222 = vpack.c.b16 %v7169, %v7168
      %v7223 = vpack.c.b16 %v7171, %v7170
      %v7224 = vpack.c.b16 %v7173, %v7172
      %v7225 = vpack.c.b16 %v7175, %v7174
      %v7226 = vpack.c.b16 %v7177, %v7176
      %v7227 = vpack.c.b16 %v7179, %v7178
      %v7228 = vpack.c.b16 %v7181, %v7180
      %v7229 = vpack.c.b16 %v7183, %v7182
      %v7230 = vpack.c.b16 %v7185, %v7184
      %v7231 = vpack.c.b16 %v7187, %v7186
      %v7232 = vpack.c.b16 %v7189, %v7188
      %v7233 = vpack.c.b16 %v7191, %v7190
      %v7234 = vpack.c.b16 %v7193, %v7192
      %v7235 = vpack.c.b16 %v7195, %v7194
      %v7236 = vpack.c.b16 %v7197, %v7196
      %v7237 = vpack.c.b16 %v7199, %v7198
      %v7238 = vpack.c.b16 %v7201, %v7200
      %v7239 = vpack.c.b16 %v7203, %v7202
      %v7277 = vsel %vm300, %v6872, 0
      %v7280 = vsel %vm300, %v6873, 0
      %v7283 = vsel %vm300, %v6874, 0
      %v7286 = vsel %vm300, %v6875, 0
      %7288 = vmatprep.subr.bf16.mxu0 0
      %7289 = vmatpush1.bf16.msra.mxu0 %v7204
      %7290 = vmatprep.subr.bf16.mxu0 0
      %7291 = vmatpush1.bf16.msra.mxu0 %v7205
      %7292 = vmatprep.subr.bf16.mxu0 0
      %7293 = vmatpush1.bf16.msra.mxu0 %v7206
      %7294 = vmatprep.subr.bf16.mxu0 0
      %7295 = vmatpush1.bf16.msra.mxu0 %v7207
      %7296 = vmatprep.subr.bf16.mxu0 0
      %7297 = vmatpush1.bf16.msra.mxu0 %v7208
      %7298 = vmatprep.subr.bf16.mxu0 0
      %7299 = vmatpush1.bf16.msra.mxu0 %v7209
      %7300 = vmatprep.subr.bf16.mxu0 0
      %7301 = vmatpush1.bf16.msra.mxu0 %v7210
      %7302 = vmatprep.subr.bf16.mxu0 0
      %7303 = vmatpush1.bf16.msra.mxu0 %v7211
      %7304 = vmatprep.subr.bf16.mxu0 0
      %7305 = vmatpush1.bf16.msra.mxu0 %v7212
      %7306 = vmatprep.subr.bf16.mxu0 0
      %7307 = vmatpush1.bf16.msra.mxu0 %v7213
      %7308 = vmatprep.subr.bf16.mxu0 0
      %7309 = vmatpush1.bf16.msra.mxu0 %v7214
      %7310 = vmatprep.subr.bf16.mxu0 0
      %7311 = vmatpush1.bf16.msra.mxu0 %v7215
      %7312 = vmatprep.subr.bf16.mxu0 0
      %7313 = vmatpush1.bf16.msra.mxu0 %v7216
      %7314 = vmatprep.subr.bf16.mxu0 0
      %7315 = vmatpush1.bf16.msra.mxu0 %v7217
      %7316 = vmatprep.subr.bf16.mxu0 0
      %7317 = vmatpush1.bf16.msra.mxu0 %v7218
      %7318 = vmatprep.subr.bf16.mxu0 0
      %7319 = vmatpush1.bf16.msra.mxu0 %v7219
      %7320 = vmatprep.mubr.bf16.mxu0 %v6942
      %7321 = vmatmul.mubr.bf16.gmra.mrb[0].mxu0 %v6926
      %v7322 = vpop.f32.mrb[0].mxu0
      %v7323 = vadd.f32 0.0, %v7322
      %v7324 = vpop.f32.mrb[0].mxu0
      %v7325 = vpop.f32.mrb[0].mxu0
      %v7326 = vadd.f32 0.0, %v7325
      %v7327 = vpop.f32.mrb[0].mxu0
      %7328 = vmatprep.mubr.bf16.mxu0 %v6946
      %7329 = vmatmul.mubr.bf16.gmra.mrb[0].mxu0 %v6930
      %v7330 = vpop.f32.mrb[0].mxu0
      %v7331 = vadd.f32 0.0, %v7330
      %v7332 = vpop.f32.mrb[0].mxu0
      %v7333 = vpop.f32.mrb[0].mxu0
      %v7334 = vadd.f32 0.0, %v7333
      %v7335 = vpop.f32.mrb[0].mxu0
      %7336 = vmatprep.mubr.bf16.mxu0 %v6950
      %7337 = vmatmul.mubr.bf16.gmra.mrb[0].mxu0 %v6934
      %v7338 = vpop.f32.mrb[0].mxu0
      %v7339 = vadd.f32 0.0, %v7338
      %v7340 = vpop.f32.mrb[0].mxu0
      %v7341 = vpop.f32.mrb[0].mxu0
      %v7342 = vadd.f32 0.0, %v7341
      %v7343 = vpop.f32.mrb[0].mxu0
      %7344 = vmatprep.mubr.bf16.mxu0 %v6954
      %7345 = vmatmul.mubr.bf16.gmra.mrb[0].mxu0 %v6938
      %v7346 = vpop.f32.mrb[0].mxu0
      %v7347 = vadd.f32 0.0, %v7346
      %v7348 = vpop.f32.mrb[0].mxu0
      %v7349 = vpop.f32.mrb[0].mxu0
      %v7350 = vadd.f32 0.0, %v7349
      %v7351 = vpop.f32.mrb[0].mxu0
      %7352 = vdwg.mxu0
      %7353 = vmatprep.subr.bf16.mxu0 0
      %7354 = vmatpush1.bf16.msra.mxu0 %v7220
      %7355 = vmatprep.subr.bf16.mxu0 0
      %7356 = vmatpush1.bf16.msra.mxu0 %v7221
      %7357 = vmatprep.subr.bf16.mxu0 0
      %7358 = vmatpush1.bf16.msra.mxu0 %v7222
      %7359 = vmatprep.subr.bf16.mxu0 0
      %7360 = vmatpush1.bf16.msra.mxu0 %v7223
      %7361 = vmatprep.subr.bf16.mxu0 0
      %7362 = vmatpush1.bf16.msra.mxu0 %v7224
      %7363 = vmatprep.subr.bf16.mxu0 0
      %7364 = vmatpush1.bf16.msra.mxu0 %v7225
      %7365 = vmatprep.subr.bf16.mxu0 0
      %7366 = vmatpush1.bf16.msra.mxu0 %v7226
      %7367 = vmatprep.subr.bf16.mxu0 0
      %7368 = vmatpush1.bf16.msra.mxu0 %v7227
      %7369 = vmatprep.subr.bf16.mxu0 0
      %7370 = vmatpush1.bf16.msra.mxu0 %v7228
      %7371 = vmatprep.subr.bf16.mxu0 0
      %7372 = vmatpush1.bf16.msra.mxu0 %v7229
      %7373 = vmatprep.subr.bf16.mxu0 0
      %7374 = vmatpush1.bf16.msra.mxu0 %v7230
      %7375 = vmatprep.subr.bf16.mxu0 0
      %7376 = vmatpush1.bf16.msra.mxu0 %v7231
      %7377 = vmatprep.subr.bf16.mxu0 0
      %7378 = vmatpush1.bf16.msra.mxu0 %v7232
      %7379 = vmatprep.subr.bf16.mxu0 0
      %7380 = vmatpush1.bf16.msra.mxu0 %v7233
      %7381 = vmatprep.subr.bf16.mxu0 0
      %7382 = vmatpush1.bf16.msra.mxu0 %v7234
      %7383 = vmatprep.subr.bf16.mxu0 0
      %7384 = vmatpush1.bf16.msra.mxu0 %v7235
      %7385 = vmatprep.mubr.bf16.mxu0 %v6974
      %7386 = vmatmul.mubr.bf16.gmra.mrb[0].mxu0 %v6958
      %v7387 = vpop.f32.mrb[0].mxu0
      %v7388 = vadd.f32 %v7323, %v7387
      %v7389 = vpop.f32.mrb[0].mxu0
      %v7390 = vpop.f32.mrb[0].mxu0
      %v7391 = vadd.f32 %v7326, %v7390
      %v7392 = vpop.f32.mrb[0].mxu0
      %7393 = vmatprep.mubr.bf16.mxu0 %v6978
      %7394 = vmatmul.mubr.bf16.gmra.mrb[0].mxu0 %v6962
      %v7395 = vpop.f32.mrb[0].mxu0
      %v7396 = vadd.f32 %v7331, %v7395
      %v7397 = vpop.f32.mrb[0].mxu0
      %v7398 = vpop.f32.mrb[0].mxu0
      %v7399 = vadd.f32 %v7334, %v7398
      %v7400 = vpop.f32.mrb[0].mxu0
      %7401 = vmatprep.mubr.bf16.mxu0 %v6982
      %7402 = vmatmul.mubr.bf16.gmra.mrb[0].mxu0 %v6966
      %v7403 = vpop.f32.mrb[0].mxu0
      %v7404 = vadd.f32 %v7339, %v7403
      %v7405 = vpop.f32.mrb[0].mxu0
      %v7406 = vpop.f32.mrb[0].mxu0
      %v7407 = vadd.f32 %v7342, %v7406
      %v7408 = vpop.f32.mrb[0].mxu0
      %7409 = vmatprep.mubr.bf16.mxu0 %v6986
      %7410 = vmatmul.mubr.bf16.gmra.mrb[0].mxu0 %v6970
      %v7411 = vpop.f32.mrb[0].mxu0
      %v7412 = vadd.f32 %v7347, %v7411
      %v7413 = vpop.f32.mrb[0].mxu0
      %v7414 = vpop.f32.mrb[0].mxu0
      %v7415 = vadd.f32 %v7350, %v7414
      %v7416 = vpop.f32.mrb[0].mxu0
      %7417 = vdwg.mxu0
      %7418 = vmatprep.subr.bf16.mxu0 0
      %7419 = vmatpush1.bf16.msra.mxu0 %v7236
      %7420 = vmatprep.subr.bf16.mxu0 0
      %7421 = vmatpush1.bf16.msra.mxu0 %v7237
      %7422 = vmatprep.subr.bf16.mxu0 0
      %7423 = vmatpush1.bf16.msra.mxu0 %v7238
      %7424 = vmatprep.subr.bf16.mxu0 0
      %7425 = vmatpush1.bf16.msra.mxu0 %v7239
      %7426 = vmatprep.subr.bf16.mxu0 0
      %7427 = vmatpush1.bf16.msra.mxu0 0
      %7428 = vmatprep.subr.bf16.mxu0 0
      %7429 = vmatpush1.bf16.msra.mxu0 0
      %7430 = vmatprep.subr.bf16.mxu0 0
      %7431 = vmatpush1.bf16.msra.mxu0 0
      %7432 = vmatprep.subr.bf16.mxu0 0
      %7433 = vmatpush1.bf16.msra.mxu0 0
      %7434 = vmatprep.subr.bf16.mxu0 0
      %7435 = vmatpush1.bf16.msra.mxu0 0
      %7436 = vmatprep.subr.bf16.mxu0 0
      %7437 = vmatpush1.bf16.msra.mxu0 0
      %7438 = vmatprep.subr.bf16.mxu0 0
      %7439 = vmatpush1.bf16.msra.mxu0 0
      %7440 = vmatprep.subr.bf16.mxu0 0
      %7441 = vmatpush1.bf16.msra.mxu0 0
      %7442 = vmatprep.subr.bf16.mxu0 0
      %7443 = vmatpush1.bf16.msra.mxu0 0
      %7444 = vmatprep.subr.bf16.mxu0 0
      %7445 = vmatpush1.bf16.msra.mxu0 0
      %7446 = vmatprep.subr.bf16.mxu0 0
      %7447 = vmatpush1.bf16.msra.mxu0 0
      %7448 = vmatprep.subr.bf16.mxu0 0
      %7449 = vmatpush1.bf16.msra.mxu0 0
      %7450 = vmatprep.mubr.bf16.mxu0 0
      %7451 = vmatmul.mubr.bf16.gmra.mrb[0].mxu0 %v7277
      %v7452 = vpop.f32.mrb[0].mxu0
      %v7453 = vadd.f32 %v7388, %v7452
      %v7454 = vpop.f32.mrb[0].mxu0
      %v7455 = vpop.f32.mrb[0].mxu0
      %v7456 = vadd.f32 %v7391, %v7455
      %v7457 = vpop.f32.mrb[0].mxu0
      %7458 = vmatprep.mubr.bf16.mxu0 0
      %7459 = vmatmul.mubr.bf16.gmra.mrb[0].mxu0 %v7280
      %v7460 = vpop.f32.mrb[0].mxu0
      %v7461 = vadd.f32 %v7396, %v7460
      %v7462 = vpop.f32.mrb[0].mxu0
      %v7463 = vpop.f32.mrb[0].mxu0
      %v7464 = vadd.f32 %v7399, %v7463
      %v7465 = vpop.f32.mrb[0].mxu0
      %7466 = vmatprep.mubr.bf16.mxu0 0
      %7467 = vmatmul.mubr.bf16.gmra.mrb[0].mxu0 %v7283
      %v7468 = vpop.f32.mrb[0].mxu0
      %v7469 = vadd.f32 %v7404, %v7468
      %v7470 = vpop.f32.mrb[0].mxu0
      %v7471 = vpop.f32.mrb[0].mxu0
      %v7472 = vadd.f32 %v7407, %v7471
      %v7473 = vpop.f32.mrb[0].mxu0
      %7474 = vmatprep.mubr.bf16.mxu0 0
      %7475 = vmatmul.mubr.bf16.gmra.mrb[0].mxu0 %v7286
      %v7476 = vpop.f32.mrb[0].mxu0
      %v7477 = vadd.f32 %v7412, %v7476
      %v7478 = vpop.f32.mrb[0].mxu0
      %v7479 = vpop.f32.mrb[0].mxu0
      %v7480 = vadd.f32 %v7415, %v7479
      %v7481 = vpop.f32.mrb[0].mxu0
      %7482 = vdwg.mxu0
      %v7483 = vmul.f32 %v7453, %v7453
      %v7484 = vmul.f32 %v7456, %v7456
      %v7485 = vmul.f32 %v7461, %v7461
      %v7486 = vmul.f32 %v7464, %v7464
      %v7487 = vmul.f32 %v7469, %v7469
      %v7488 = vmul.f32 %v7472, %v7472
      %v7489 = vmul.f32 %v7477, %v7477
      %v7490 = vmul.f32 %v7480, %v7480
      %v7491 = vsel %vm5149, %v7483, 0.0
      %7492 = vadd.xlane.f32.xlu0 %v7491
      %v7493 = vpop.xlane.xlu0 %7492
      %v7494 = vsel %vm5149, %v7484, 0.0
      %7495 = vadd.xlane.f32.xlu0 %v7494
      %v7496 = vpop.xlane.xlu0 %7495
      %v7497 = vsel %vm5149, %v7485, 0.0
      %7498 = vadd.xlane.f32.xlu0 %v7497
      %v7499 = vpop.xlane.xlu0 %7498
      %v7500 = vsel %vm5149, %v7486, 0.0
      %7501 = vadd.xlane.f32.xlu0 %v7500
      %v7502 = vpop.xlane.xlu0 %7501
      %v7503 = vsel %vm5149, %v7487, 0.0
      %7504 = vadd.xlane.f32.xlu0 %v7503
      %v7505 = vpop.xlane.xlu0 %7504
      %v7506 = vsel %vm5149, %v7488, 0.0
      %7507 = vadd.xlane.f32.xlu0 %v7506
      %v7508 = vpop.xlane.xlu0 %7507
      %v7509 = vsel %vm5149, %v7489, 0.0
      %7510 = vadd.xlane.f32.xlu0 %v7509
      %v7511 = vpop.xlane.xlu0 %7510
      %v7512 = vsel %vm5149, %v7490, 0.0
      %7513 = vadd.xlane.f32.xlu0 %v7512
      %v7514 = vpop.xlane.xlu0 %7513
      %v7515 = vmax.f32 %v7493, 1e-24
      %v7516 = vmax.f32 %v7496, 1e-24
      %v7517 = vmax.f32 %v7499, 1e-24
      %v7518 = vmax.f32 %v7502, 1e-24
      %v7519 = vmax.f32 %v7505, 1e-24
      %v7520 = vmax.f32 %v7508, 1e-24
      %v7521 = vmax.f32 %v7511, 1e-24
      %v7522 = vmax.f32 %v7514, 1e-24
      %v7523 = vrsqrt.pop %v7515
      %v7524 = vrsqrt.pop %v7516
      %v7525 = vrsqrt.pop %v7517
      %v7526 = vrsqrt.pop %v7518
      %v7527 = vrsqrt.pop %v7519
      %v7528 = vrsqrt.pop %v7520
      %v7529 = vrsqrt.pop %v7521
      %v7530 = vrsqrt.pop %v7522
      %v7531 = vmul.f32 %v7453, %v7523
      %v7532 = vmul.f32 %v7456, %v7524
      %v7533 = vmul.f32 %v7461, %v7525
      %v7534 = vmul.f32 %v7464, %v7526
      %v7535 = vmul.f32 %v7469, %v7527
      %v7536 = vmul.f32 %v7472, %v7528
      %v7537 = vmul.f32 %v7477, %v7529
      %v7538 = vmul.f32 %v7480, %v7530
      %s7539 = scalar_lea.vmem %s278, 192
      %7540 = vst.msk [vmem:[%s7539] sm:$0xff] %vm5149, %v7531
      %7541 = vst.msk [vmem:[%s7539 + $0x8] sm:$0xff] %vm5149, %v7532
      %7542 = vst.msk [vmem:[%s7539 + $0x10] sm:$0xff] %vm5149, %v7533
      %7543 = vst.msk [vmem:[%s7539 + $0x18] sm:$0xff] %vm5149, %v7534
      %7544 = vst.msk [vmem:[%s7539 + $0x20] sm:$0xff] %vm5149, %v7535
      %7545 = vst.msk [vmem:[%s7539 + $0x28] sm:$0xff] %vm5149, %v7536
      %7546 = vst.msk [vmem:[%s7539 + $0x30] sm:$0xff] %vm5149, %v7537
      %7547 = vst.msk [vmem:[%s7539 + $0x38] sm:$0xff] %vm5149, %v7538
      %p7548 = scmp.lt.s32.totalorder %s18, 1
      %s7549 = scalar_select %p7548, %s18, 1
      %s7550 = smul.addr %s7549, 32
      %s7551 = smul.addr %s7550, 8
      %s7552 = scalar_lea.vmem %s7, %s7551
      // Predicated region
      $region49: #{regressor_pallas.1} parent=47 // pred_check
        %p7553 = pneg %p188
      $region50: #{regressor_pallas.1} parent=47 // pred_check_branch
        %7555 = sbr.rel (%p7553) target = $region52
      $region51: #{regressor_pallas.1} parent=47 // pred_region
        _
      $region52: #{regressor_pallas.1} parent=47 // pred_fallthru
        _
    $region48: #{regressor_pallas.1} parent=5 // pred_fallthru
      _
    %p7556 = scmp.le.s32.totalorder 2, %s13
    // Predicated region
    $region53: #{regressor_pallas.1} parent=5 // pred_check
      %p7557 = pneg %p7556
    $region54: #{regressor_pallas.1} parent=5 // pred_check_branch
      %7559 = sbr.rel (%p7557) target = $region56
    $region55: #{regressor_pallas.1} parent=5 // pred_region
      %s7560 = ssub.s32 %s13, 2
      // Predicated region
      $region57: #{regressor_pallas.1} parent=55 // pred_check
        %p7561 = pneg %p194
      $region58: #{regressor_pallas.1} parent=55 // pred_check_branch
        %7563 = sbr.rel (%p7561) target = $region60
      $region59: #{regressor_pallas.1} parent=55 // pred_region
        %p7564 = scmp.lt.s32.totalorder %s19, 1
        %s7565 = scalar_select %p7564, %s19, 1
        %s7566 = smul.addr %s7565, 32
        %s7567 = smul.addr %s7566, 8
        %s7568 = scalar_lea.vmem %s7, %s7567
      $region60: #{regressor_pallas.1} parent=55 // pred_fallthru
        _
    $region56: #{regressor_pallas.1} parent=5 // pred_fallthru
      _
  $region6: #{regressor_pallas.1} parent=0 // loop_footer
    %s17 = sadd.s32 1, %s13
  $region7: #{regressor_pallas.1} parent=0 // loop_footer_branch
    %12 = sbr.rel target = $region3
  $region8: #{regressor_pallas.1} parent=0 // loop_exit
    _

</llo_original>
